<compile_context>
chip_gen: v5e
topology: v5e:2x2
jax: 0.10.0
libtpu: 0.0.40
codegen_flags: <defaults>
</compile_context>

<pallas_src>
import jax
import jax.numpy as jnp
from jax.experimental import pallas as pl
from jax.experimental.pallas import tpu as pltpu

# ---------------- small config (full scale in comments) ----------------
B = 2              # batch
IMG = 64           # image size             (ref: 1024)
IN_CH = 3          # image channels
PATCH = 8          # patch size             (ref: 16)
HP = IMG // PATCH  # 8                      (ref: 64)
N = HP * HP        # 64 tokens              (ref: 4096)
D = 128            # transformer_dim        (ref: 768)   -- lane-dense
HEADS = 2          # heads                  (ref: 12)
DH = D // HEADS    # 64 = ref head dim
DEPTH = 2          # ViT blocks             (ref: 12)
MLP = 4 * D        # 512                    (ref: 3072)
C_NECK = 128       # neck channels          (ref: 256)   -- lane-dense
C_OUT = 128        # projector channels     (ref: 1024)  -- lane-dense
EPS = 1e-6         # SAM uses eps=1e-6 for its LayerNorms
PPF = IN_CH * PATCH * PATCH   # flattened patch feature size (192)
SCALE = 1.0 / (DH ** 0.5)

TMLP = 256         # lane-dense column chunk for the first MLP matmul
assert MLP % TMLP == 0

VMEM_LIMIT = 32 * 1024 * 1024   # <= default scoped VMEM on every generation


# ---------------- helpers ----------------
def _ln(x, g, b, eps=EPS):
    """LayerNorm over the last dim (f32).  g, b are (1, C)."""
    mu = jnp.mean(x, axis=-1, keepdims=True)
    var = jnp.mean(jnp.square(x - mu), axis=-1, keepdims=True)
    return (x - mu) * jax.lax.rsqrt(var + eps) * g + b


# ---------------- fused patch-embed + transformer (all DEPTH blocks) ----------------
def vit_encoder_kernel(xp_ref, mask_ref, pw_ref, pb_ref, ptok_ref, pos_ref,
                       ln1g_ref, ln1b_ref, wqkv_ref, bqkv_ref, wo_ref, bo_ref,
                       ln2g_ref, ln2b_ref, w1_ref, b1_ref, w2_ref, b2_ref,
                       o_ref, qkv_s, attn_s, hid_s):
    layer = pl.program_id(1)

    # ---- layer 0: patch embed + mask-token replacement + pos_embed ----
    # o_ref is the resident token buffer across the (arbitrary) DEPTH axis.
    @pl.when(layer == 0)
    def _patch_embed():
        xp = xp_ref[0].astype(jnp.bfloat16)                       # (N, PPF)
        emb = jnp.dot(xp, pw_ref[...],
                      preferred_element_type=jnp.float32) + pb_ref[...]
        emb = jnp.where(mask_ref[0] > 0.5, ptok_ref[...], emb)    # embed[mask]=token
        o_ref[0] = emb + pos_ref[...]                             # then + pos (ref order)

    # ---- attention: LN1 -> fused QKV -> per-head softmax -> fused out-proj ----
    x = o_ref[0]                                                  # (N, D) f32 resident
    h = _ln(x, ln1g_ref[0], ln1b_ref[0]).astype(jnp.bfloat16)
    qkv = jnp.dot(h, wqkv_ref[0],
                  preferred_element_type=jnp.float32) + bqkv_ref[0]   # (N, 3*D)
    qkv_s[...] = qkv.astype(jnp.bfloat16)

    for hd in range(HEADS):                                       # static unroll
        c = hd * DH
        q = qkv_s[:, c:c + DH]                                    # (N, DH) bf16
        k = qkv_s[:, D + c:D + c + DH]
        v = qkv_s[:, 2 * D + c:2 * D + c + DH]
        s = jax.lax.dot_general(q, k, (((1,), (1,)), ((), ())),
                                preferred_element_type=jnp.float32) * SCALE
        m = jnp.max(s, axis=-1, keepdims=True)
        p = jnp.exp(s - m)
        attn = p / jnp.sum(p, axis=-1, keepdims=True)             # exact softmax
        o_hd = jnp.dot(attn.astype(jnp.bfloat16), v,
                       preferred_element_type=jnp.float32)        # (N, DH)
        attn_s[:, c:c + DH] = o_hd.astype(jnp.bfloat16)           # concat heads in lanes

    proj = jnp.dot(attn_s[...], wo_ref[0],
                   preferred_element_type=jnp.float32) + bo_ref[0]
    x = x + proj                                                  # residual 1

    # ---- MLP: LN2 -> w1/GELU (chunked to bf16 scratch) -> one deep-K w2 ----
    h2 = _ln(x, ln2g_ref[0], ln2b_ref[0]).astype(jnp.bfloat16)
    for j in range(MLP // TMLP):                                  # static unroll
        c0 = j * TMLP
        m1 = jnp.dot(h2, w1_ref[0, :, c0:c0 + TMLP],
                     preferred_element_type=jnp.float32) + b1_ref[0, :, c0:c0 + TMLP]
        # TODO(synk): nn.GELU default is exact erf; tanh approximation used.
        m1 = jax.nn.gelu(m1, approximate=True)
        hid_s[:, c0:c0 + TMLP] = m1.astype(jnp.bfloat16)
    out = jnp.dot(hid_s[...], w2_ref[0],
                  preferred_element_type=jnp.float32) + b2_ref[0]
    o_ref[0] = x + out                                            # residual 2 -> next layer


def vit_encoder(xpatch, maskf, p):
    flops_layer = (2 * N * D * 3 * D          # fused QKV
                   + HEADS * 4 * N * N * DH   # scores + PV
                   + 2 * N * D * D            # output projection
                   + 4 * N * D * MLP)         # MLP
    flops = B * (DEPTH * flops_layer + 2 * N * PPF * D)
    transc = B * DEPTH * (HEADS * N * N + N * MLP)
    bytes_acc = (B * 4 * (N * PPF + N + N * D)                       # image in / tokens out
                 + 2 * (PPF * D) + 4 * (2 * D + N * D)               # patch weights / pos
                 + DEPTH * 2 * (3 * D * D + D * D + 2 * D * MLP)     # bf16 weights
                 + DEPTH * 4 * (8 * D + 2 * MLP))                    # f32 biases / LN
    return pl.pallas_call(
        vit_encoder_kernel,
        out_shape=jax.ShapeDtypeStruct((B, N, D), jnp.float32),
        grid=(B, DEPTH),
        in_specs=[
            pl.BlockSpec((1, N, PPF), lambda b, l: (b, 0, 0)),        # patched image
            pl.BlockSpec((1, N, 1), lambda b, l: (b, 0, 0)),          # mask (float)
            pl.BlockSpec((PPF, D), lambda b, l: (0, 0)),              # patch_w
            pl.BlockSpec((1, D), lambda b, l: (0, 0)),                # patch_b
            pl.BlockSpec((1, D), lambda b, l: (0, 0)),                # mask_token
            pl.BlockSpec((N, D), lambda b, l: (0, 0)),                # pos_embed
            pl.BlockSpec((1, 1, D), lambda b, l: (l, 0, 0)),          # ln1_g
            pl.BlockSpec((1, 1, D), lambda b, l: (l, 0, 0)),          # ln1_b
            pl.BlockSpec((1, D, 3 * D), lambda b, l: (l, 0, 0)),      # wqkv (fused)
            pl.BlockSpec((1, 1, 3 * D), lambda b, l: (l, 0, 0)),      # bqkv
            pl.BlockSpec((1, D, D), lambda b, l: (l, 0, 0)),          # wo (heads concat)
            pl.BlockSpec((1, 1, D), lambda b, l: (l, 0, 0)),          # bo
            pl.BlockSpec((1, 1, D), lambda b, l: (l, 0, 0)),          # ln2_g
            pl.BlockSpec((1, 1, D), lambda b, l: (l, 0, 0)),          # ln2_b
            pl.BlockSpec((1, D, MLP), lambda b, l: (l, 0, 0)),        # w1
            pl.BlockSpec((1, 1, MLP), lambda b, l: (l, 0, 0)),        # b1
            pl.BlockSpec((1, MLP, D), lambda b, l: (l, 0, 0)),        # w2
            pl.BlockSpec((1, 1, D), lambda b, l: (l, 0, 0)),          # b2
        ],
        out_specs=pl.BlockSpec((1, N, D), lambda b, l: (b, 0, 0)),    # resident tokens
        scratch_shapes=[
            pltpu.VMEM((N, 3 * D), jnp.bfloat16),    # qkv_s  (fused QKV, bf16)
            pltpu.VMEM((N, D), jnp.bfloat16),        # attn_s (heads concatenated)
            pltpu.VMEM((N, MLP), jnp.bfloat16),      # hid_s  (post-GELU MLP hidden)
        ],
        compiler_params=pltpu.CompilerParams(
            dimension_semantics=("parallel", "arbitrary"),
            vmem_limit_bytes=VMEM_LIMIT),
        cost_estimate=pl.CostEstimate(flops=flops, transcendentals=transc,
                                      bytes_accessed=bytes_acc),
    )(xpatch, maskf, p["patch_w"], p["patch_b"], p["mask_token"], p["pos_embed"],
      p["ln1_g"], p["ln1_b"], p["wqkv"], p["bqkv"], p["wo"], p["bo"],
      p["ln2_g"], p["ln2_b"], p["w1"], p["b1"], p["w2"], p["b2"])


# ---------------- fused neck (1x1 -> LN2d -> 3x3 -> LN2d) + projector ----------------
def neck_proj_kernel(tok_ref, w1_ref, g1_ref, b1_ref, w3_ref, g2_ref, b2_ref,
                     wp_ref, bp_ref, o_ref, xp_s):
    # tok_ref: (1, N, D)  w1: (D, C_NECK) bf16  w3: (9, C_NECK, C_NECK) bf16
    x = tok_ref[0]                                                 # (N, D) f32
    y = jnp.dot(x.astype(jnp.bfloat16), w1_ref[...],
                preferred_element_type=jnp.float32)                # 1x1 conv, no bias
    y = _ln(y, g1_ref[...], b1_ref[...])                           # LayerNorm2d (channel)

    # zero only the 1-px halo border; interior is fully overwritten below.
    zrow = jnp.zeros((1, HP + 2, C_NECK), jnp.bfloat16)
    zcol = jnp.zeros((HP, 1, C_NECK), jnp.bfloat16)
    xp_s[0:1, :, :] = zrow
    xp_s[HP + 1:HP + 2, :, :] = zrow
    xp_s[1:HP + 1, 0:1, :] = zcol
    xp_s[1:HP + 1, HP + 1:HP + 2, :] = zcol
    xp_s[1:HP + 1, 1:HP + 1, :] = y.reshape(HP, HP, C_NECK).astype(jnp.bfloat16)

    # 3x3 conv (pad=1, no bias) as 9 shifted accumulating matmuls (K = C_NECK).
    # TODO(synk): at ref scale tile over output rows so the map is not whole-image.
    acc = jnp.zeros((N, C_NECK), jnp.float32)
    for ky in range(3):
        for kx in range(3):
            win = xp_s[ky:ky + HP, kx:kx + HP, :].reshape(N, C_NECK)
            acc = acc + jnp.dot(win, w3_ref[ky * 3 + kx],
                                preferred_element_type=jnp.float32)
    z = _ln(acc, g2_ref[...], b2_ref[...])                         # LayerNorm2d (channel)

    out = jnp.dot(z.astype(jnp.bfloat16), wp_ref[...],
                  preferred_element_type=jnp.float32) + bp_ref[...]   # projector 1x1
    o_ref[0] = out.reshape(HP, HP, C_OUT)


def neck_proj(tokens, p):
    return pl.pallas_call(
        neck_proj_kernel,
        out_shape=jax.ShapeDtypeStruct((B, HP, HP, C_OUT), jnp.float32),
        grid=(B,),
        in_specs=[
            pl.BlockSpec((1, N, D), lambda b: (b, 0, 0)),
            pl.BlockSpec((D, C_NECK), lambda b: (0, 0)),
            pl.BlockSpec((1, C_NECK), lambda b: (0, 0)),
            pl.BlockSpec((1, C_NECK), lambda b: (0, 0)),
            pl.BlockSpec((9, C_NECK, C_NECK), lambda b: (0, 0, 0)),
            pl.BlockSpec((1, C_NECK), lambda b: (0, 0)),
            pl.BlockSpec((1, C_NECK), lambda b: (0, 0)),
            pl.BlockSpec((C_NECK, C_OUT), lambda b: (0, 0)),
            pl.BlockSpec((1, C_OUT), lambda b: (0, 0)),
        ],
        out_specs=pl.BlockSpec((1, HP, HP, C_OUT), lambda b: (b, 0, 0, 0)),
        scratch_shapes=[
            pltpu.VMEM((HP + 2, HP + 2, C_NECK), jnp.bfloat16),   # zero-halo padded map
        ],
        compiler_params=pltpu.CompilerParams(
            dimension_semantics=("parallel",),
            vmem_limit_bytes=VMEM_LIMIT),
    )(tokens, p["neck_w1"], p["neck_g1"], p["neck_b1"], p["neck_w3"],
      p["neck_g2"], p["neck_b2"], p["proj_w"], p["proj_b"])


# ---------------- parameter init (deterministic, synthetic) ----------------
# NOTE: weight layouts are synthetic-friendly; loading real PyTorch Conv2d /
# Linear weights would require explicit reshapes/transposes.
def init_params(key):
    ks = iter(jax.random.split(key, 24))

    def nrm(shape, dtype=jnp.float32, s=0.02):
        return (s * jax.random.normal(next(ks), shape, jnp.float32)).astype(dtype)

    return {
        # patch embed: Conv2d(3, D, kernel=P, stride=P) flattened (C,P,P)->D
        "patch_w": nrm((PPF, D), jnp.bfloat16),
        "patch_b": nrm((1, D)),
        "mask_token": jax.random.normal(next(ks), (1, D), jnp.float32),
        "pos_embed": nrm((N, D)),
        # transformer blocks, stacked over DEPTH (layer selected by index_map)
        "ln1_g": jnp.ones((DEPTH, 1, D), jnp.float32),
        "ln1_b": jnp.zeros((DEPTH, 1, D), jnp.float32),
        "wqkv": nrm((DEPTH, D, 3 * D), jnp.bfloat16),   # cols: [Q | K | V], heads packed
        "bqkv": nrm((DEPTH, 1, 3 * D)),
        "wo": nrm((DEPTH, D, D), jnp.bfloat16),         # concat-heads -> D projection
        "bo": nrm((DEPTH, 1, D)),
        "ln2_g": jnp.ones((DEPTH, 1, D), jnp.float32),
        "ln2_b": jnp.zeros((DEPTH, 1, D), jnp.float32),
        "w1": nrm((DEPTH, D, MLP), jnp.bfloat16),
        "b1": nrm((DEPTH, 1, MLP)),
        "w2": nrm((DEPTH, MLP, D), jnp.bfloat16),
        "b2": nrm((DEPTH, 1, D)),
        # neck: Conv1x1(D->C_NECK) -> LN2d -> Conv3x3(pad=1) -> LN2d ; proj: Conv1x1
        "neck_w1": nrm((D, C_NECK), jnp.bfloat16),
        "neck_g1": jnp.ones((1, C_NECK), jnp.float32),
        "neck_b1": jnp.zeros((1, C_NECK), jnp.float32),
        "neck_w3": nrm((9, C_NECK, C_NECK), jnp.bfloat16),   # index = ky*3 + kx
        "neck_g2": jnp.ones((1, C_NECK), jnp.float32),
        "neck_b2": jnp.zeros((1, C_NECK), jnp.float32),
        "proj_w": nrm((C_NECK, C_OUT), jnp.bfloat16),
        "proj_b": nrm((1, C_OUT)),
    }


# ---------------- forward (glue in plain JAX, hot paths in Pallas) ----------------
def forward(params, image, mask=None):
    # image: NCHW (B, 3, IMG, IMG);  mask: (B, HP, HP) bool or None
    # patch extraction (im2col), matching Conv2d(kernel=P, stride=P) semantics
    x = image.reshape(B, IN_CH, HP, PATCH, HP, PATCH)
    x = x.transpose(0, 2, 4, 1, 3, 5)                      # (B, HP, WP, C, P, P)
    xpatch = x.reshape(B, N, PPF).astype(jnp.float32)

    if mask is None:
        maskf = jnp.zeros((B, N, 1), jnp.float32)
    else:
        maskf = mask.reshape(B, N, 1).astype(jnp.float32)

    tokens = vit_encoder(xpatch, maskf, params)            # patch embed + all blocks
    out_nhwc = neck_proj(tokens, params)                   # neck + projector
    # back to PyTorch NCHW convention: (B, C_OUT, HP, HP)
    return jnp.transpose(out_nhwc, (0, 3, 1, 2))


if __name__ == "__main__":
    key = jax.random.PRNGKey(0)
    k_param, k_img, k_mask = jax.random.split(key, 3)

    params = init_params(k_param)
    image = jax.random.normal(k_img, (B, IN_CH, IMG, IMG), jnp.float32)
    mask = jax.random.bernoulli(k_mask, 0.25, (B, HP, HP))

    out = jax.jit(forward)(params, image, mask)
    out = jax.block_until_ready(out)
    assert out.shape == (B, C_OUT, HP, HP)
    assert bool(jnp.all(jnp.isfinite(out)))
    print("KERNEL_OK")
</pallas_src>

<mosaic_0001>
module attributes {stable_mosaic.version = 11 : i64} {
  func.func @vit_encoder_kernel(%arg0: i32, %arg1: i32, %arg2: memref<1x64x192xf32, #tpu.memory_space<vmem>>, %arg3: memref<1x64x1xf32, #tpu.memory_space<vmem>>, %arg4: memref<192x128xbf16, #tpu.memory_space<vmem>>, %arg5: memref<1x128xf32, #tpu.memory_space<vmem>>, %arg6: memref<1x128xf32, #tpu.memory_space<vmem>>, %arg7: memref<64x128xf32, #tpu.memory_space<vmem>>, %arg8: memref<1x1x128xf32, #tpu.memory_space<vmem>>, %arg9: memref<1x1x128xf32, #tpu.memory_space<vmem>>, %arg10: memref<1x128x384xbf16, #tpu.memory_space<vmem>>, %arg11: memref<1x1x384xf32, #tpu.memory_space<vmem>>, %arg12: memref<1x128x128xbf16, #tpu.memory_space<vmem>>, %arg13: memref<1x1x128xf32, #tpu.memory_space<vmem>>, %arg14: memref<1x1x128xf32, #tpu.memory_space<vmem>>, %arg15: memref<1x1x128xf32, #tpu.memory_space<vmem>>, %arg16: memref<1x128x512xbf16, #tpu.memory_space<vmem>>, %arg17: memref<1x1x512xf32, #tpu.memory_space<vmem>>, %arg18: memref<1x512x128xbf16, #tpu.memory_space<vmem>>, %arg19: memref<1x1x128xf32, #tpu.memory_space<vmem>>, %arg20: memref<1x64x128xf32, #tpu.memory_space<vmem>>, %arg21: memref<64x384xbf16, #tpu.memory_space<vmem>>, %arg22: memref<64x128xbf16, #tpu.memory_space<vmem>>, %arg23: memref<64x512xbf16, #tpu.memory_space<vmem>>) attributes {dimension_semantics = [#tpu.dimension_semantics<parallel>, #tpu.dimension_semantics<arbitrary>], iteration_bounds = array<i64: 2, 2>, scalar_prefetch = 0 : i64, scratch_operands = 3 : i64, tpu.core_type = #tpu.core_type<tc>, window_params = [{transform_indices = @transform_0, window_bounds = array<i64: 1, 64, 192>}, {transform_indices = @transform_1, window_bounds = array<i64: 1, 64, 1>}, {pipeline_mode = #tpu.pipeline_mode<synchronous>, transform_indices = @transform_2, window_bounds = array<i64: 192, 128>}, {pipeline_mode = #tpu.pipeline_mode<synchronous>, transform_indices = @transform_3, window_bounds = array<i64: 1, 128>}, {pipeline_mode = #tpu.pipeline_mode<synchronous>, transform_indices = @transform_4, window_bounds = array<i64: 1, 128>}, {pipeline_mode = #tpu.pipeline_mode<synchronous>, transform_indices = @transform_5, window_bounds = array<i64: 64, 128>}, {transform_indices = @transform_6, window_bounds = array<i64: 1, 1, 128>}, {transform_indices = @transform_7, window_bounds = array<i64: 1, 1, 128>}, {transform_indices = @transform_8, window_bounds = array<i64: 1, 128, 384>}, {transform_indices = @transform_9, window_bounds = array<i64: 1, 1, 384>}, {transform_indices = @transform_10, window_bounds = array<i64: 1, 128, 128>}, {transform_indices = @transform_11, window_bounds = array<i64: 1, 1, 128>}, {transform_indices = @transform_12, window_bounds = array<i64: 1, 1, 128>}, {transform_indices = @transform_13, window_bounds = array<i64: 1, 1, 128>}, {transform_indices = @transform_14, window_bounds = array<i64: 1, 128, 512>}, {transform_indices = @transform_15, window_bounds = array<i64: 1, 1, 512>}, {transform_indices = @transform_16, window_bounds = array<i64: 1, 512, 128>}, {transform_indices = @transform_17, window_bounds = array<i64: 1, 1, 128>}, {transform_indices = @transform_18, window_bounds = array<i64: 1, 64, 128>}]} {
    %c0_i32 = arith.constant 0 : i32
    %0 = arith.cmpi eq, %arg1, %c0_i32 : i32
    %1 = arith.extui %0 : i1 to i32
    %c0_i32_0 = arith.constant 0 : i32
    %2 = arith.cmpi ne, %1, %c0_i32_0 : i32
    scf.if %2 {
      %c0_101 = arith.constant 0 : index
      %c0_102 = arith.constant 0 : index
      %c0_103 = arith.constant 0 : index
      %171 = vector.load %arg2[%c0_101, %c0_102, %c0_103] : memref<1x64x192xf32, #tpu.memory_space<vmem>>, vector<1x64x192xf32>
      %172 = vector.shape_cast %171 : vector<1x64x192xf32> to vector<64x192xf32>
      %173 = arith.truncf %172 : vector<64x192xf32> to vector<64x192xbf16>
      %c0_104 = arith.constant 0 : index
      %c0_105 = arith.constant 0 : index
      %174 = vector.load %arg4[%c0_104, %c0_105] : memref<192x128xbf16, #tpu.memory_space<vmem>>, vector<192x128xbf16>
      %cst_106 = arith.constant dense<0.000000e+00> : vector<64x128xf32>
      %175 = tpu.matmul %173, %174, %cst_106 {dimension_numbers = #tpu.dot_dimension_numbers<[1], [0], [0], [1], [0, 0, 1, 1], [], []>} : vector<64x192xbf16>, vector<192x128xbf16>, vector<64x128xf32> -> vector<64x128xf32>
      %c0_107 = arith.constant 0 : index
      %c0_108 = arith.constant 0 : index
      %176 = vector.load %arg5[%c0_107, %c0_108] : memref<1x128xf32, #tpu.memory_space<vmem>>, vector<1x128xf32>
      %177 = vector.broadcast %176 : vector<1x128xf32> to vector<64x128xf32>
      %178 = arith.addf %175, %177 : vector<64x128xf32>
      %c0_109 = arith.constant 0 : index
      %c0_110 = arith.constant 0 : index
      %c0_111 = arith.constant 0 : index
      %179 = vector.load %arg3[%c0_109, %c0_110, %c0_111] : memref<1x64x1xf32, #tpu.memory_space<vmem>>, vector<1x64x1xf32>
      %180 = vector.shape_cast %179 : vector<1x64x1xf32> to vector<64x1xf32>
      %cst_112 = arith.constant 5.000000e-01 : f32
      %181 = vector.broadcast %cst_112 : f32 to vector<64x1xf32>
      %182 = arith.cmpf ogt, %180, %181 : vector<64x1xf32>
      %c0_113 = arith.constant 0 : index
      %c0_114 = arith.constant 0 : index
      %183 = vector.load %arg6[%c0_113, %c0_114] : memref<1x128xf32, #tpu.memory_space<vmem>>, vector<1x128xf32>
      %184 = vector.shape_cast %182 : vector<64x1xi1> to vector<64x1xi1>
      %185 = vector.broadcast %184 : vector<64x1xi1> to vector<64x128xi1>
      %186 = vector.shape_cast %183 : vector<1x128xf32> to vector<1x128xf32>
      %187 = vector.broadcast %186 : vector<1x128xf32> to vector<64x128xf32>
      %188 = arith.select %185, %187, %178 : vector<64x128xi1>, vector<64x128xf32>
      %c0_115 = arith.constant 0 : index
      %c0_116 = arith.constant 0 : index
      %189 = vector.load %arg7[%c0_115, %c0_116] : memref<64x128xf32, #tpu.memory_space<vmem>>, vector<64x128xf32>
      %190 = arith.addf %188, %189 : vector<64x128xf32>
      %c0_117 = arith.constant 0 : index
      %c0_118 = arith.constant 0 : index
      %c0_119 = arith.constant 0 : index
      %191 = vector.load %arg20[%c0_117, %c0_118, %c0_119] : memref<1x64x128xf32, #tpu.memory_space<vmem>>, vector<1x64x128xf32>
      %192 = vector.shape_cast %191 : vector<1x64x128xf32> to vector<64x128xf32>
      %193 = vector.shape_cast %190 : vector<64x128xf32> to vector<1x64x128xf32>
      tpu.vector_store %arg20[%c0_117, %c0_118, %c0_119], %193 {strides = array<i32>} : memref<1x64x128xf32, #tpu.memory_space<vmem>>, vector<1x64x128xf32>,
    } else {
    }
    %c0 = arith.constant 0 : index
    %c0_1 = arith.constant 0 : index
    %c0_2 = arith.constant 0 : index
    %3 = vector.load %arg20[%c0, %c0_1, %c0_2] : memref<1x64x128xf32, #tpu.memory_space<vmem>>, vector<1x64x128xf32>
    %4 = vector.shape_cast %3 : vector<1x64x128xf32> to vector<64x128xf32>
    %c0_3 = arith.constant 0 : index
    %c0_4 = arith.constant 0 : index
    %c0_5 = arith.constant 0 : index
    %5 = vector.load %arg8[%c0_3, %c0_4, %c0_5] : memref<1x1x128xf32, #tpu.memory_space<vmem>>, vector<1x1x128xf32>
    %6 = vector.shape_cast %5 : vector<1x1x128xf32> to vector<1x128xf32>
    %c0_6 = arith.constant 0 : index
    %c0_7 = arith.constant 0 : index
    %c0_8 = arith.constant 0 : index
    %7 = vector.load %arg9[%c0_6, %c0_7, %c0_8] : memref<1x1x128xf32, #tpu.memory_space<vmem>>, vector<1x1x128xf32>
    %8 = vector.shape_cast %7 : vector<1x1x128xf32> to vector<1x128xf32>
    %cst = arith.constant dense<0.000000e+00> : vector<64xf32>
    %9 = vector.multi_reduction <add>, %4, %cst [1] : vector<64x128xf32> to vector<64xf32>
    %10 = vector.shape_cast %9 : vector<64xf32> to vector<64x1xf32>
    %cst_9 = arith.constant 1.280000e+02 : f32
    %11 = vector.broadcast %cst_9 : f32 to vector<64x1xf32>
    %12 = arith.divf %10, %11 : vector<64x1xf32>
    %13 = vector.broadcast %12 : vector<64x1xf32> to vector<64x128xf32>
    %14 = arith.subf %4, %13 : vector<64x128xf32>
    %15 = arith.mulf %14, %14 : vector<64x128xf32>
    %cst_10 = arith.constant dense<0.000000e+00> : vector<64xf32>
    %16 = vector.multi_reduction <add>, %15, %cst_10 [1] : vector<64x128xf32> to vector<64xf32>
    %17 = vector.shape_cast %16 : vector<64xf32> to vector<64x1xf32>
    %cst_11 = arith.constant 1.280000e+02 : f32
    %18 = vector.broadcast %cst_11 : f32 to vector<64x1xf32>
    %19 = arith.divf %17, %18 : vector<64x1xf32>
    %20 = vector.broadcast %12 : vector<64x1xf32> to vector<64x128xf32>
    %21 = arith.subf %4, %20 : vector<64x128xf32>
    %cst_12 = arith.constant 9.99999997E-7 : f32
    %22 = vector.broadcast %cst_12 : f32 to vector<64x1xf32>
    %23 = arith.addf %19, %22 : vector<64x1xf32>
    %24 = math.rsqrt %23 : vector<64x1xf32>
    %25 = vector.broadcast %24 : vector<64x1xf32> to vector<64x128xf32>
    %26 = arith.mulf %21, %25 : vector<64x128xf32>
    %27 = vector.broadcast %6 : vector<1x128xf32> to vector<64x128xf32>
    %28 = arith.mulf %26, %27 : vector<64x128xf32>
    %29 = vector.broadcast %8 : vector<1x128xf32> to vector<64x128xf32>
    %30 = arith.addf %28, %29 : vector<64x128xf32>
    %31 = arith.truncf %30 : vector<64x128xf32> to vector<64x128xbf16>
    %c0_13 = arith.constant 0 : index
    %c0_14 = arith.constant 0 : index
    %c0_15 = arith.constant 0 : index
    %32 = vector.load %arg10[%c0_13, %c0_14, %c0_15] : memref<1x128x384xbf16, #tpu.memory_space<vmem>>, vector<1x128x384xbf16>
    %33 = vector.shape_cast %32 : vector<1x128x384xbf16> to vector<128x384xbf16>
    %cst_16 = arith.constant dense<0.000000e+00> : vector<64x384xf32>
    %34 = tpu.matmul %31, %33, %cst_16 {dimension_numbers = #tpu.dot_dimension_numbers<[1], [0], [0], [1], [0, 0, 1, 1], [], []>} : vector<64x128xbf16>, vector<128x384xbf16>, vector<64x384xf32> -> vector<64x384xf32>
    %c0_17 = arith.constant 0 : index
    %c0_18 = arith.constant 0 : index
    %c0_19 = arith.constant 0 : index
    %35 = vector.load %arg11[%c0_17, %c0_18, %c0_19] : memref<1x1x384xf32, #tpu.memory_space<vmem>>, vector<1x1x384xf32>
    %36 = vector.shape_cast %35 : vector<1x1x384xf32> to vector<1x384xf32>
    %37 = vector.broadcast %36 : vector<1x384xf32> to vector<64x384xf32>
    %38 = arith.addf %34, %37 : vector<64x384xf32>
    %39 = arith.truncf %38 : vector<64x384xf32> to vector<64x384xbf16>
    %c0_20 = arith.constant 0 : index
    %c0_21 = arith.constant 0 : index
    %40 = vector.load %arg21[%c0_20, %c0_21] : memref<64x384xbf16, #tpu.memory_space<vmem>>, vector<64x384xbf16>
    tpu.vector_store %arg21[%c0_20, %c0_21], %39 {strides = array<i32>} : memref<64x384xbf16, #tpu.memory_space<vmem>>, vector<64x384xbf16>,
    %c0_22 = arith.constant 0 : index
    %c0_23 = arith.constant 0 : index
    %41 = vector.load %arg21[%c0_22, %c0_23] : memref<64x384xbf16, #tpu.memory_space<vmem>>, vector<64x64xbf16>
    %c0_24 = arith.constant 0 : index
    %c128 = arith.constant 128 : index
    %42 = vector.load %arg21[%c0_24, %c128] : memref<64x384xbf16, #tpu.memory_space<vmem>>, vector<64x64xbf16>
    %c0_25 = arith.constant 0 : index
    %c256 = arith.constant 256 : index
    %43 = vector.load %arg21[%c0_25, %c256] : memref<64x384xbf16, #tpu.memory_space<vmem>>, vector<64x64xbf16>
    %cst_26 = arith.constant dense<0.000000e+00> : vector<64x64xf32>
    %44 = tpu.matmul %41, %42, %cst_26 {dimension_numbers = #tpu.dot_dimension_numbers<[1], [1], [0], [0], [0, 0, 1, 0], [], []>} : vector<64x64xbf16>, vector<64x64xbf16>, vector<64x64xf32> -> vector<64x64xf32>
    %cst_27 = arith.constant 1.250000e-01 : f32
    %45 = vector.broadcast %cst_27 : f32 to vector<64x64xf32>
    %46 = arith.mulf %44, %45 : vector<64x64xf32>
    %cst_28 = arith.constant dense<0xFF800000> : vector<64xf32>
    %47 = vector.multi_reduction <maximumf>, %46, %cst_28 [1] : vector<64x64xf32> to vector<64xf32>
    %48 = vector.shape_cast %47 : vector<64xf32> to vector<64x1xf32>
    %49 = vector.broadcast %48 : vector<64x1xf32> to vector<64x64xf32>
    %50 = arith.subf %46, %49 : vector<64x64xf32>
    %51 = math.exp %50 : vector<64x64xf32>
    %cst_29 = arith.constant dense<0.000000e+00> : vector<64xf32>
    %52 = vector.multi_reduction <add>, %51, %cst_29 [1] : vector<64x64xf32> to vector<64xf32>
    %53 = vector.shape_cast %52 : vector<64xf32> to vector<64x1xf32>
    %54 = vector.broadcast %53 : vector<64x1xf32> to vector<64x64xf32>
    %55 = arith.divf %51, %54 : vector<64x64xf32>
    %56 = arith.truncf %55 : vector<64x64xf32> to vector<64x64xbf16>
    %cst_30 = arith.constant dense<0.000000e+00> : vector<64x64xf32>
    %57 = tpu.matmul %56, %43, %cst_30 {dimension_numbers = #tpu.dot_dimension_numbers<[1], [0], [0], [1], [0, 0, 1, 1], [], []>} : vector<64x64xbf16>, vector<64x64xbf16>, vector<64x64xf32> -> vector<64x64xf32>
    %58 = arith.truncf %57 : vector<64x64xf32> to vector<64x64xbf16>
    %c0_31 = arith.constant 0 : index
    %c0_32 = arith.constant 0 : index
    %59 = vector.load %arg22[%c0_31, %c0_32] : memref<64x128xbf16, #tpu.memory_space<vmem>>, vector<64x64xbf16>
    tpu.vector_store %arg22[%c0_31, %c0_32], %58 {strides = array<i32>} : memref<64x128xbf16, #tpu.memory_space<vmem>>, vector<64x64xbf16>,
    %c0_33 = arith.constant 0 : index
    %c64 = arith.constant 64 : index
    %60 = vector.load %arg21[%c0_33, %c64] : memref<64x384xbf16, #tpu.memory_space<vmem>>, vector<64x64xbf16>
    %c0_34 = arith.constant 0 : index
    %c192 = arith.constant 192 : index
    %61 = vector.load %arg21[%c0_34, %c192] : memref<64x384xbf16, #tpu.memory_space<vmem>>, vector<64x64xbf16>
    %c0_35 = arith.constant 0 : index
    %c320 = arith.constant 320 : index
    %62 = vector.load %arg21[%c0_35, %c320] : memref<64x384xbf16, #tpu.memory_space<vmem>>, vector<64x64xbf16>
    %cst_36 = arith.constant dense<0.000000e+00> : vector<64x64xf32>
    %63 = tpu.matmul %60, %61, %cst_36 {dimension_numbers = #tpu.dot_dimension_numbers<[1], [1], [0], [0], [0, 0, 1, 0], [], []>} : vector<64x64xbf16>, vector<64x64xbf16>, vector<64x64xf32> -> vector<64x64xf32>
    %cst_37 = arith.constant 1.250000e-01 : f32
    %64 = vector.broadcast %cst_37 : f32 to vector<64x64xf32>
    %65 = arith.mulf %63, %64 : vector<64x64xf32>
    %cst_38 = arith.constant dense<0xFF800000> : vector<64xf32>
    %66 = vector.multi_reduction <maximumf>, %65, %cst_38 [1] : vector<64x64xf32> to vector<64xf32>
    %67 = vector.shape_cast %66 : vector<64xf32> to vector<64x1xf32>
    %68 = vector.broadcast %67 : vector<64x1xf32> to vector<64x64xf32>
    %69 = arith.subf %65, %68 : vector<64x64xf32>
    %70 = math.exp %69 : vector<64x64xf32>
    %cst_39 = arith.constant dense<0.000000e+00> : vector<64xf32>
    %71 = vector.multi_reduction <add>, %70, %cst_39 [1] : vector<64x64xf32> to vector<64xf32>
    %72 = vector.shape_cast %71 : vector<64xf32> to vector<64x1xf32>
    %73 = vector.broadcast %72 : vector<64x1xf32> to vector<64x64xf32>
    %74 = arith.divf %70, %73 : vector<64x64xf32>
    %75 = arith.truncf %74 : vector<64x64xf32> to vector<64x64xbf16>
    %cst_40 = arith.constant dense<0.000000e+00> : vector<64x64xf32>
    %76 = tpu.matmul %75, %62, %cst_40 {dimension_numbers = #tpu.dot_dimension_numbers<[1], [0], [0], [1], [0, 0, 1, 1], [], []>} : vector<64x64xbf16>, vector<64x64xbf16>, vector<64x64xf32> -> vector<64x64xf32>
    %77 = arith.truncf %76 : vector<64x64xf32> to vector<64x64xbf16>
    %c0_41 = arith.constant 0 : index
    %c64_42 = arith.constant 64 : index
    %78 = vector.load %arg22[%c0_41, %c64_42] : memref<64x128xbf16, #tpu.memory_space<vmem>>, vector<64x64xbf16>
    tpu.vector_store %arg22[%c0_41, %c64_42], %77 {strides = array<i32>} : memref<64x128xbf16, #tpu.memory_space<vmem>>, vector<64x64xbf16>,
    %c0_43 = arith.constant 0 : index
    %c0_44 = arith.constant 0 : index
    %79 = vector.load %arg22[%c0_43, %c0_44] : memref<64x128xbf16, #tpu.memory_space<vmem>>, vector<64x128xbf16>
    %c0_45 = arith.constant 0 : index
    %c0_46 = arith.constant 0 : index
    %c0_47 = arith.constant 0 : index
    %80 = vector.load %arg12[%c0_45, %c0_46, %c0_47] : memref<1x128x128xbf16, #tpu.memory_space<vmem>>, vector<1x128x128xbf16>
    %81 = vector.shape_cast %80 : vector<1x128x128xbf16> to vector<128x128xbf16>
    %cst_48 = arith.constant dense<0.000000e+00> : vector<64x128xf32>
    %82 = tpu.matmul %79, %81, %cst_48 {dimension_numbers = #tpu.dot_dimension_numbers<[1], [0], [0], [1], [0, 0, 1, 1], [], []>} : vector<64x128xbf16>, vector<128x128xbf16>, vector<64x128xf32> -> vector<64x128xf32>
    %c0_49 = arith.constant 0 : index
    %c0_50 = arith.constant 0 : index
    %c0_51 = arith.constant 0 : index
    %83 = vector.load %arg13[%c0_49, %c0_50, %c0_51] : memref<1x1x128xf32, #tpu.memory_space<vmem>>, vector<1x1x128xf32>
    %84 = vector.shape_cast %83 : vector<1x1x128xf32> to vector<1x128xf32>
    %85 = vector.broadcast %84 : vector<1x128xf32> to vector<64x128xf32>
    %86 = arith.addf %82, %85 : vector<64x128xf32>
    %87 = arith.addf %4, %86 : vector<64x128xf32>
    %c0_52 = arith.constant 0 : index
    %c0_53 = arith.constant 0 : index
    %c0_54 = arith.constant 0 : index
    %88 = vector.load %arg14[%c0_52, %c0_53, %c0_54] : memref<1x1x128xf32, #tpu.memory_space<vmem>>, vector<1x1x128xf32>
    %89 = vector.shape_cast %88 : vector<1x1x128xf32> to vector<1x128xf32>
    %c0_55 = arith.constant 0 : index
    %c0_56 = arith.constant 0 : index
    %c0_57 = arith.constant 0 : index
    %90 = vector.load %arg15[%c0_55, %c0_56, %c0_57] : memref<1x1x128xf32, #tpu.memory_space<vmem>>, vector<1x1x128xf32>
    %91 = vector.shape_cast %90 : vector<1x1x128xf32> to vector<1x128xf32>
    %cst_58 = arith.constant dense<0.000000e+00> : vector<64xf32>
    %92 = vector.multi_reduction <add>, %87, %cst_58 [1] : vector<64x128xf32> to vector<64xf32>
    %93 = vector.shape_cast %92 : vector<64xf32> to vector<64x1xf32>
    %cst_59 = arith.constant 1.280000e+02 : f32
    %94 = vector.broadcast %cst_59 : f32 to vector<64x1xf32>
    %95 = arith.divf %93, %94 : vector<64x1xf32>
    %96 = vector.broadcast %95 : vector<64x1xf32> to vector<64x128xf32>
    %97 = arith.subf %87, %96 : vector<64x128xf32>
    %98 = arith.mulf %97, %97 : vector<64x128xf32>
    %cst_60 = arith.constant dense<0.000000e+00> : vector<64xf32>
    %99 = vector.multi_reduction <add>, %98, %cst_60 [1] : vector<64x128xf32> to vector<64xf32>
    %100 = vector.shape_cast %99 : vector<64xf32> to vector<64x1xf32>
    %cst_61 = arith.constant 1.280000e+02 : f32
    %101 = vector.broadcast %cst_61 : f32 to vector<64x1xf32>
    %102 = arith.divf %100, %101 : vector<64x1xf32>
    %103 = vector.broadcast %95 : vector<64x1xf32> to vector<64x128xf32>
    %104 = arith.subf %87, %103 : vector<64x128xf32>
    %cst_62 = arith.constant 9.99999997E-7 : f32
    %105 = vector.broadcast %cst_62 : f32 to vector<64x1xf32>
    %106 = arith.addf %102, %105 : vector<64x1xf32>
    %107 = math.rsqrt %106 : vector<64x1xf32>
    %108 = vector.broadcast %107 : vector<64x1xf32> to vector<64x128xf32>
    %109 = arith.mulf %104, %108 : vector<64x128xf32>
    %110 = vector.broadcast %89 : vector<1x128xf32> to vector<64x128xf32>
    %111 = arith.mulf %109, %110 : vector<64x128xf32>
    %112 = vector.broadcast %91 : vector<1x128xf32> to vector<64x128xf32>
    %113 = arith.addf %111, %112 : vector<64x128xf32>
    %114 = arith.truncf %113 : vector<64x128xf32> to vector<64x128xbf16>
    %c0_63 = arith.constant 0 : index
    %c0_64 = arith.constant 0 : index
    %c0_65 = arith.constant 0 : index
    %115 = vector.load %arg16[%c0_63, %c0_64, %c0_65] : memref<1x128x512xbf16, #tpu.memory_space<vmem>>, vector<1x128x256xbf16>
    %116 = vector.shape_cast %115 : vector<1x128x256xbf16> to vector<128x256xbf16>
    %cst_66 = arith.constant dense<0.000000e+00> : vector<64x256xf32>
    %117 = tpu.matmul %114, %116, %cst_66 {dimension_numbers = #tpu.dot_dimension_numbers<[1], [0], [0], [1], [0, 0, 1, 1], [], []>} : vector<64x128xbf16>, vector<128x256xbf16>, vector<64x256xf32> -> vector<64x256xf32>
    %c0_67 = arith.constant 0 : index
    %c0_68 = arith.constant 0 : index
    %c0_69 = arith.constant 0 : index
    %118 = vector.load %arg17[%c0_67, %c0_68, %c0_69] : memref<1x1x512xf32, #tpu.memory_space<vmem>>, vector<1x1x256xf32>
    %119 = vector.shape_cast %118 : vector<1x1x256xf32> to vector<1x256xf32>
    %120 = vector.broadcast %119 : vector<1x256xf32> to vector<64x256xf32>
    %121 = arith.addf %117, %120 : vector<64x256xf32>
    %122 = arith.mulf %121, %121 : vector<64x256xf32>
    %123 = arith.mulf %121, %122 : vector<64x256xf32>
    %cst_70 = arith.constant 4.471500e-02 : f32
    %124 = vector.broadcast %cst_70 : f32 to vector<64x256xf32>
    %125 = arith.mulf %124, %123 : vector<64x256xf32>
    %126 = arith.addf %121, %125 : vector<64x256xf32>
    %cst_71 = arith.constant 0.797884583 : f32
    %127 = vector.broadcast %cst_71 : f32 to vector<64x256xf32>
    %128 = arith.mulf %127, %126 : vector<64x256xf32>
    %129 = math.tanh %128 : vector<64x256xf32>
    %cst_72 = arith.constant 1.000000e+00 : f32
    %130 = vector.broadcast %cst_72 : f32 to vector<64x256xf32>
    %131 = arith.addf %130, %129 : vector<64x256xf32>
    %cst_73 = arith.constant 5.000000e-01 : f32
    %132 = vector.broadcast %cst_73 : f32 to vector<64x256xf32>
    %133 = arith.mulf %132, %131 : vector<64x256xf32>
    %134 = arith.mulf %121, %133 : vector<64x256xf32>
    %135 = arith.truncf %134 : vector<64x256xf32> to vector<64x256xbf16>
    %c0_74 = arith.constant 0 : index
    %c0_75 = arith.constant 0 : index
    %136 = vector.load %arg23[%c0_74, %c0_75] : memref<64x512xbf16, #tpu.memory_space<vmem>>, vector<64x256xbf16>
    tpu.vector_store %arg23[%c0_74, %c0_75], %135 {strides = array<i32>} : memref<64x512xbf16, #tpu.memory_space<vmem>>, vector<64x256xbf16>,
    %c0_76 = arith.constant 0 : index
    %c0_77 = arith.constant 0 : index
    %c256_78 = arith.constant 256 : index
    %137 = vector.load %arg16[%c0_76, %c0_77, %c256_78] : memref<1x128x512xbf16, #tpu.memory_space<vmem>>, vector<1x128x256xbf16>
    %138 = vector.shape_cast %137 : vector<1x128x256xbf16> to vector<128x256xbf16>
    %cst_79 = arith.constant dense<0.000000e+00> : vector<64x256xf32>
    %139 = tpu.matmul %114, %138, %cst_79 {dimension_numbers = #tpu.dot_dimension_numbers<[1], [0], [0], [1], [0, 0, 1, 1], [], []>} : vector<64x128xbf16>, vector<128x256xbf16>, vector<64x256xf32> -> vector<64x256xf32>
    %c0_80 = arith.constant 0 : index
    %c0_81 = arith.constant 0 : index
    %c256_82 = arith.constant 256 : index
    %140 = vector.load %arg17[%c0_80, %c0_81, %c256_82] : memref<1x1x512xf32, #tpu.memory_space<vmem>>, vector<1x1x256xf32>
    %141 = vector.shape_cast %140 : vector<1x1x256xf32> to vector<1x256xf32>
    %142 = vector.broadcast %141 : vector<1x256xf32> to vector<64x256xf32>
    %143 = arith.addf %139, %142 : vector<64x256xf32>
    %144 = arith.mulf %143, %143 : vector<64x256xf32>
    %145 = arith.mulf %143, %144 : vector<64x256xf32>
    %cst_83 = arith.constant 4.471500e-02 : f32
    %146 = vector.broadcast %cst_83 : f32 to vector<64x256xf32>
    %147 = arith.mulf %146, %145 : vector<64x256xf32>
    %148 = arith.addf %143, %147 : vector<64x256xf32>
    %cst_84 = arith.constant 0.797884583 : f32
    %149 = vector.broadcast %cst_84 : f32 to vector<64x256xf32>
    %150 = arith.mulf %149, %148 : vector<64x256xf32>
    %151 = math.tanh %150 : vector<64x256xf32>
    %cst_85 = arith.constant 1.000000e+00 : f32
    %152 = vector.broadcast %cst_85 : f32 to vector<64x256xf32>
    %153 = arith.addf %152, %151 : vector<64x256xf32>
    %cst_86 = arith.constant 5.000000e-01 : f32
    %154 = vector.broadcast %cst_86 : f32 to vector<64x256xf32>
    %155 = arith.mulf %154, %153 : vector<64x256xf32>
    %156 = arith.mulf %143, %155 : vector<64x256xf32>
    %157 = arith.truncf %156 : vector<64x256xf32> to vector<64x256xbf16>
    %c0_87 = arith.constant 0 : index
    %c256_88 = arith.constant 256 : index
    %158 = vector.load %arg23[%c0_87, %c256_88] : memref<64x512xbf16, #tpu.memory_space<vmem>>, vector<64x256xbf16>
    tpu.vector_store %arg23[%c0_87, %c256_88], %157 {strides = array<i32>} : memref<64x512xbf16, #tpu.memory_space<vmem>>, vector<64x256xbf16>,
    %c0_89 = arith.constant 0 : index
    %c0_90 = arith.constant 0 : index
    %159 = vector.load %arg23[%c0_89, %c0_90] : memref<64x512xbf16, #tpu.memory_space<vmem>>, vector<64x512xbf16>
    %c0_91 = arith.constant 0 : index
    %c0_92 = arith.constant 0 : index
    %c0_93 = arith.constant 0 : index
    %160 = vector.load %arg18[%c0_91, %c0_92, %c0_93] : memref<1x512x128xbf16, #tpu.memory_space<vmem>>, vector<1x512x128xbf16>
    %161 = vector.shape_cast %160 : vector<1x512x128xbf16> to vector<512x128xbf16>
    %cst_94 = arith.constant dense<0.000000e+00> : vector<64x128xf32>
    %162 = tpu.matmul %159, %161, %cst_94 {dimension_numbers = #tpu.dot_dimension_numbers<[1], [0], [0], [1], [0, 0, 1, 1], [], []>} : vector<64x512xbf16>, vector<512x128xbf16>, vector<64x128xf32> -> vector<64x128xf32>
    %c0_95 = arith.constant 0 : index
    %c0_96 = arith.constant 0 : index
    %c0_97 = arith.constant 0 : index
    %163 = vector.load %arg19[%c0_95, %c0_96, %c0_97] : memref<1x1x128xf32, #tpu.memory_space<vmem>>, vector<1x1x128xf32>
    %164 = vector.shape_cast %163 : vector<1x1x128xf32> to vector<1x128xf32>
    %165 = vector.broadcast %164 : vector<1x128xf32> to vector<64x128xf32>
    %166 = arith.addf %162, %165 : vector<64x128xf32>
    %167 = arith.addf %87, %166 : vector<64x128xf32>
    %c0_98 = arith.constant 0 : index
    %c0_99 = arith.constant 0 : index
    %c0_100 = arith.constant 0 : index
    %168 = vector.load %arg20[%c0_98, %c0_99, %c0_100] : memref<1x64x128xf32, #tpu.memory_space<vmem>>, vector<1x64x128xf32>
    %169 = vector.shape_cast %168 : vector<1x64x128xf32> to vector<64x128xf32>
    %170 = vector.shape_cast %167 : vector<64x128xf32> to vector<1x64x128xf32>
    tpu.vector_store %arg20[%c0_98, %c0_99, %c0_100], %170 {strides = array<i32>} : memref<1x64x128xf32, #tpu.memory_space<vmem>>, vector<1x64x128xf32>,
    return
  }
  func.func @transform_0(%arg0: i32, %arg1: i32) -> (i32, i32, i32) {
    %c0_i32 = arith.constant 0 : i32
    %c0_i32_0 = arith.constant 0 : i32
    %c0_i32_1 = arith.constant 0 : i32
    return %arg0, %c0_i32, %c0_i32_0 : i32, i32, i32
  }
  func.func @transform_1(%arg0: i32, %arg1: i32) -> (i32, i32, i32) {
    %c0_i32 = arith.constant 0 : i32
    %c0_i32_0 = arith.constant 0 : i32
    %c0_i32_1 = arith.constant 0 : i32
    return %arg0, %c0_i32, %c0_i32_0 : i32, i32, i32
  }
  func.func @transform_2(%arg0: i32, %arg1: i32) -> (i32, i32) {
    %c0_i32 = arith.constant 0 : i32
    %c0_i32_0 = arith.constant 0 : i32
    %c0_i32_1 = arith.constant 0 : i32
    return %c0_i32, %c0_i32_0 : i32, i32
  }
  func.func @transform_3(%arg0: i32, %arg1: i32) -> (i32, i32) {
    %c0_i32 = arith.constant 0 : i32
    %c0_i32_0 = arith.constant 0 : i32
    %c0_i32_1 = arith.constant 0 : i32
    return %c0_i32, %c0_i32_0 : i32, i32
  }
  func.func @transform_4(%arg0: i32, %arg1: i32) -> (i32, i32) {
    %c0_i32 = arith.constant 0 : i32
    %c0_i32_0 = arith.constant 0 : i32
    %c0_i32_1 = arith.constant 0 : i32
    return %c0_i32, %c0_i32_0 : i32, i32
  }
  func.func @transform_5(%arg0: i32, %arg1: i32) -> (i32, i32) {
    %c0_i32 = arith.constant 0 : i32
    %c0_i32_0 = arith.constant 0 : i32
    %c0_i32_1 = arith.constant 0 : i32
    return %c0_i32, %c0_i32_0 : i32, i32
  }
  func.func @transform_6(%arg0: i32, %arg1: i32) -> (i32, i32, i32) {
    %c0_i32 = arith.constant 0 : i32
    %c0_i32_0 = arith.constant 0 : i32
    %c0_i32_1 = arith.constant 0 : i32
    return %arg1, %c0_i32, %c0_i32_0 : i32, i32, i32
  }
  func.func @transform_7(%arg0: i32, %arg1: i32) -> (i32, i32, i32) {
    %c0_i32 = arith.constant 0 : i32
    %c0_i32_0 = arith.constant 0 : i32
    %c0_i32_1 = arith.constant 0 : i32
    return %arg1, %c0_i32, %c0_i32_0 : i32, i32, i32
  }
  func.func @transform_8(%arg0: i32, %arg1: i32) -> (i32, i32, i32) {
    %c0_i32 = arith.constant 0 : i32
    %c0_i32_0 = arith.constant 0 : i32
    %c0_i32_1 = arith.constant 0 : i32
    return %arg1, %c0_i32, %c0_i32_0 : i32, i32, i32
  }
  func.func @transform_9(%arg0: i32, %arg1: i32) -> (i32, i32, i32) {
    %c0_i32 = arith.constant 0 : i32
    %c0_i32_0 = arith.constant 0 : i32
    %c0_i32_1 = arith.constant 0 : i32
    return %arg1, %c0_i32, %c0_i32_0 : i32, i32, i32
  }
  func.func @transform_10(%arg0: i32, %arg1: i32) -> (i32, i32, i32) {
    %c0_i32 = arith.constant 0 : i32
    %c0_i32_0 = arith.constant 0 : i32
    %c0_i32_1 = arith.constant 0 : i32
    return %arg1, %c0_i32, %c0_i32_0 : i32, i32, i32
  }
  func.func @transform_11(%arg0: i32, %arg1: i32) -> (i32, i32, i32) {
    %c0_i32 = arith.constant 0 : i32
    %c0_i32_0 = arith.constant 0 : i32
    %c0_i32_1 = arith.constant 0 : i32
    return %arg1, %c0_i32, %c0_i32_0 : i32, i32, i32
  }
  func.func @transform_12(%arg0: i32, %arg1: i32) -> (i32, i32, i32) {
    %c0_i32 = arith.constant 0 : i32
    %c0_i32_0 = arith.constant 0 : i32
    %c0_i32_1 = arith.constant 0 : i32
    return %arg1, %c0_i32, %c0_i32_0 : i32, i32, i32
  }
  func.func @transform_13(%arg0: i32, %arg1: i32) -> (i32, i32, i32) {
    %c0_i32 = arith.constant 0 : i32
    %c0_i32_0 = arith.constant 0 : i32
    %c0_i32_1 = arith.constant 0 : i32
    return %arg1, %c0_i32, %c0_i32_0 : i32, i32, i32
  }
  func.func @transform_14(%arg0: i32, %arg1: i32) -> (i32, i32, i32) {
    %c0_i32 = arith.constant 0 : i32
    %c0_i32_0 = arith.constant 0 : i32
    %c0_i32_1 = arith.constant 0 : i32
    return %arg1, %c0_i32, %c0_i32_0 : i32, i32, i32
  }
  func.func @transform_15(%arg0: i32, %arg1: i32) -> (i32, i32, i32) {
    %c0_i32 = arith.constant 0 : i32
    %c0_i32_0 = arith.constant 0 : i32
    %c0_i32_1 = arith.constant 0 : i32
    return %arg1, %c0_i32, %c0_i32_0 : i32, i32, i32
  }
  func.func @transform_16(%arg0: i32, %arg1: i32) -> (i32, i32, i32) {
    %c0_i32 = arith.constant 0 : i32
    %c0_i32_0 = arith.constant 0 : i32
    %c0_i32_1 = arith.constant 0 : i32
    return %arg1, %c0_i32, %c0_i32_0 : i32, i32, i32
  }
  func.func @transform_17(%arg0: i32, %arg1: i32) -> (i32, i32, i32) {
    %c0_i32 = arith.constant 0 : i32
    %c0_i32_0 = arith.constant 0 : i32
    %c0_i32_1 = arith.constant 0 : i32
    return %arg1, %c0_i32, %c0_i32_0 : i32, i32, i32
  }
  func.func @transform_18(%arg0: i32, %arg1: i32) -> (i32, i32, i32) {
    %c0_i32 = arith.constant 0 : i32
    %c0_i32_0 = arith.constant 0 : i32
    %c0_i32_1 = arith.constant 0 : i32
    return %arg0, %c0_i32, %c0_i32_0 : i32, i32, i32
  }
}

module attributes {stable_mosaic.version = 11 : i64} {
  func.func @neck_proj_kernel(%arg0: i32, %arg1: memref<1x64x128xf32, #tpu.memory_space<vmem>>, %arg2: memref<128x128xbf16, #tpu.memory_space<vmem>>, %arg3: memref<1x128xf32, #tpu.memory_space<vmem>>, %arg4: memref<1x128xf32, #tpu.memory_space<vmem>>, %arg5: memref<9x128x128xbf16, #tpu.memory_space<vmem>>, %arg6: memref<1x128xf32, #tpu.memory_space<vmem>>, %arg7: memref<1x128xf32, #tpu.memory_space<vmem>>, %arg8: memref<128x128xbf16, #tpu.memory_space<vmem>>, %arg9: memref<1x128xf32, #tpu.memory_space<vmem>>, %arg10: memref<1x8x8x128xf32, #tpu.memory_space<vmem>>, %arg11: memref<10x10x128xbf16, #tpu.memory_space<vmem>>) attributes {dimension_semantics = [#tpu.dimension_semantics<parallel>], iteration_bounds = array<i64: 2>, scalar_prefetch = 0 : i64, scratch_operands = 1 : i64, tpu.core_type = #tpu.core_type<tc>, window_params = [{transform_indices = @transform_0, window_bounds = array<i64: 1, 64, 128>}, {pipeline_mode = #tpu.pipeline_mode<synchronous>, transform_indices = @transform_1, window_bounds = array<i64: 128, 128>}, {pipeline_mode = #tpu.pipeline_mode<synchronous>, transform_indices = @transform_2, window_bounds = array<i64: 1, 128>}, {pipeline_mode = #tpu.pipeline_mode<synchronous>, transform_indices = @transform_3, window_bounds = array<i64: 1, 128>}, {pipeline_mode = #tpu.pipeline_mode<synchronous>, transform_indices = @transform_4, window_bounds = array<i64: 9, 128, 128>}, {pipeline_mode = #tpu.pipeline_mode<synchronous>, transform_indices = @transform_5, window_bounds = array<i64: 1, 128>}, {pipeline_mode = #tpu.pipeline_mode<synchronous>, transform_indices = @transform_6, window_bounds = array<i64: 1, 128>}, {pipeline_mode = #tpu.pipeline_mode<synchronous>, transform_indices = @transform_7, window_bounds = array<i64: 128, 128>}, {pipeline_mode = #tpu.pipeline_mode<synchronous>, transform_indices = @transform_8, window_bounds = array<i64: 1, 128>}, {transform_indices = @transform_9, window_bounds = array<i64: 1, 8, 8, 128>}]} {
    %c0 = arith.constant 0 : index
    %c0_0 = arith.constant 0 : index
    %c0_1 = arith.constant 0 : index
    %0 = vector.load %arg1[%c0, %c0_0, %c0_1] : memref<1x64x128xf32, #tpu.memory_space<vmem>>, vector<1x64x128xf32>
    %1 = vector.shape_cast %0 : vector<1x64x128xf32> to vector<64x128xf32>
    %2 = arith.truncf %1 : vector<64x128xf32> to vector<64x128xbf16>
    %c0_2 = arith.constant 0 : index
    %c0_3 = arith.constant 0 : index
    %3 = vector.load %arg2[%c0_2, %c0_3] : memref<128x128xbf16, #tpu.memory_space<vmem>>, vector<128x128xbf16>
    %cst = arith.constant dense<0.000000e+00> : vector<64x128xf32>
    %4 = tpu.matmul %2, %3, %cst {dimension_numbers = #tpu.dot_dimension_numbers<[1], [0], [0], [1], [0, 0, 1, 1], [], []>} : vector<64x128xbf16>, vector<128x128xbf16>, vector<64x128xf32> -> vector<64x128xf32>
    %c0_4 = arith.constant 0 : index
    %c0_5 = arith.constant 0 : index
    %5 = vector.load %arg3[%c0_4, %c0_5] : memref<1x128xf32, #tpu.memory_space<vmem>>, vector<1x128xf32>
    %c0_6 = arith.constant 0 : index
    %c0_7 = arith.constant 0 : index
    %6 = vector.load %arg4[%c0_6, %c0_7] : memref<1x128xf32, #tpu.memory_space<vmem>>, vector<1x128xf32>
    %cst_8 = arith.constant dense<0.000000e+00> : vector<64xf32>
    %7 = vector.multi_reduction <add>, %4, %cst_8 [1] : vector<64x128xf32> to vector<64xf32>
    %8 = vector.shape_cast %7 : vector<64xf32> to vector<64x1xf32>
    %cst_9 = arith.constant 1.280000e+02 : f32
    %9 = vector.broadcast %cst_9 : f32 to vector<64x1xf32>
    %10 = arith.divf %8, %9 : vector<64x1xf32>
    %11 = vector.broadcast %10 : vector<64x1xf32> to vector<64x128xf32>
    %12 = arith.subf %4, %11 : vector<64x128xf32>
    %13 = arith.mulf %12, %12 : vector<64x128xf32>
    %cst_10 = arith.constant dense<0.000000e+00> : vector<64xf32>
    %14 = vector.multi_reduction <add>, %13, %cst_10 [1] : vector<64x128xf32> to vector<64xf32>
    %15 = vector.shape_cast %14 : vector<64xf32> to vector<64x1xf32>
    %cst_11 = arith.constant 1.280000e+02 : f32
    %16 = vector.broadcast %cst_11 : f32 to vector<64x1xf32>
    %17 = arith.divf %15, %16 : vector<64x1xf32>
    %18 = vector.broadcast %10 : vector<64x1xf32> to vector<64x128xf32>
    %19 = arith.subf %4, %18 : vector<64x128xf32>
    %cst_12 = arith.constant 9.99999997E-7 : f32
    %20 = vector.broadcast %cst_12 : f32 to vector<64x1xf32>
    %21 = arith.addf %17, %20 : vector<64x1xf32>
    %22 = math.rsqrt %21 : vector<64x1xf32>
    %23 = vector.broadcast %22 : vector<64x1xf32> to vector<64x128xf32>
    %24 = arith.mulf %19, %23 : vector<64x128xf32>
    %25 = vector.broadcast %5 : vector<1x128xf32> to vector<64x128xf32>
    %26 = arith.mulf %24, %25 : vector<64x128xf32>
    %27 = vector.broadcast %6 : vector<1x128xf32> to vector<64x128xf32>
    %28 = arith.addf %26, %27 : vector<64x128xf32>
    %cst_13 = arith.constant 0.000000e+00 : bf16
    %29 = vector.broadcast %cst_13 : bf16 to vector<1x10x128xbf16>
    %cst_14 = arith.constant 0.000000e+00 : bf16
    %30 = vector.broadcast %cst_14 : bf16 to vector<8x1x128xbf16>
    %c0_15 = arith.constant 0 : index
    %c0_16 = arith.constant 0 : index
    %c0_17 = arith.constant 0 : index
    %31 = vector.load %arg11[%c0_15, %c0_16, %c0_17] : memref<10x10x128xbf16, #tpu.memory_space<vmem>>, vector<1x10x128xbf16>
    tpu.vector_store %arg11[%c0_15, %c0_16, %c0_17], %29 {strides = array<i32>} : memref<10x10x128xbf16, #tpu.memory_space<vmem>>, vector<1x10x128xbf16>,
    %c9 = arith.constant 9 : index
    %c0_18 = arith.constant 0 : index
    %c0_19 = arith.constant 0 : index
    %32 = vector.load %arg11[%c9, %c0_18, %c0_19] : memref<10x10x128xbf16, #tpu.memory_space<vmem>>, vector<1x10x128xbf16>
    tpu.vector_store %arg11[%c9, %c0_18, %c0_19], %29 {strides = array<i32>} : memref<10x10x128xbf16, #tpu.memory_space<vmem>>, vector<1x10x128xbf16>,
    %c1 = arith.constant 1 : index
    %c0_20 = arith.constant 0 : index
    %c0_21 = arith.constant 0 : index
    %33 = vector.load %arg11[%c1, %c0_20, %c0_21] : memref<10x10x128xbf16, #tpu.memory_space<vmem>>, vector<8x1x128xbf16>
    tpu.vector_store %arg11[%c1, %c0_20, %c0_21], %30 {strides = array<i32>} : memref<10x10x128xbf16, #tpu.memory_space<vmem>>, vector<8x1x128xbf16>,
    %c1_22 = arith.constant 1 : index
    %c9_23 = arith.constant 9 : index
    %c0_24 = arith.constant 0 : index
    %34 = vector.load %arg11[%c1_22, %c9_23, %c0_24] : memref<10x10x128xbf16, #tpu.memory_space<vmem>>, vector<8x1x128xbf16>
    tpu.vector_store %arg11[%c1_22, %c9_23, %c0_24], %30 {strides = array<i32>} : memref<10x10x128xbf16, #tpu.memory_space<vmem>>, vector<8x1x128xbf16>,
    %35 = vector.shape_cast %28 : vector<64x128xf32> to vector<8x8x128xf32>
    %36 = arith.truncf %35 : vector<8x8x128xf32> to vector<8x8x128xbf16>
    %c1_25 = arith.constant 1 : index
    %c1_26 = arith.constant 1 : index
    %c0_27 = arith.constant 0 : index
    %37 = vector.load %arg11[%c1_25, %c1_26, %c0_27] : memref<10x10x128xbf16, #tpu.memory_space<vmem>>, vector<8x8x128xbf16>
    tpu.vector_store %arg11[%c1_25, %c1_26, %c0_27], %36 {strides = array<i32>} : memref<10x10x128xbf16, #tpu.memory_space<vmem>>, vector<8x8x128xbf16>,
    %cst_28 = arith.constant 0.000000e+00 : f32
    %38 = vector.broadcast %cst_28 : f32 to vector<64x128xf32>
    %c0_29 = arith.constant 0 : index
    %c0_30 = arith.constant 0 : index
    %c0_31 = arith.constant 0 : index
    %39 = vector.load %arg11[%c0_29, %c0_30, %c0_31] : memref<10x10x128xbf16, #tpu.memory_space<vmem>>, vector<8x8x128xbf16>
    %40 = vector.shape_cast %39 : vector<8x8x128xbf16> to vector<64x128xbf16>
    %c0_32 = arith.constant 0 : index
    %c0_33 = arith.constant 0 : index
    %c0_34 = arith.constant 0 : index
    %41 = vector.load %arg5[%c0_32, %c0_33, %c0_34] : memref<9x128x128xbf16, #tpu.memory_space<vmem>>, vector<1x128x128xbf16>
    %42 = vector.shape_cast %41 : vector<1x128x128xbf16> to vector<128x128xbf16>
    %cst_35 = arith.constant dense<0.000000e+00> : vector<64x128xf32>
    %43 = tpu.matmul %40, %42, %cst_35 {dimension_numbers = #tpu.dot_dimension_numbers<[1], [0], [0], [1], [0, 0, 1, 1], [], []>} : vector<64x128xbf16>, vector<128x128xbf16>, vector<64x128xf32> -> vector<64x128xf32>
    %44 = arith.addf %38, %43 : vector<64x128xf32>
    %c0_36 = arith.constant 0 : index
    %c1_37 = arith.constant 1 : index
    %c0_38 = arith.constant 0 : index
    %45 = vector.load %arg11[%c0_36, %c1_37, %c0_38] : memref<10x10x128xbf16, #tpu.memory_space<vmem>>, vector<8x8x128xbf16>
    %46 = vector.shape_cast %45 : vector<8x8x128xbf16> to vector<64x128xbf16>
    %c1_39 = arith.constant 1 : index
    %c0_40 = arith.constant 0 : index
    %c0_41 = arith.constant 0 : index
    %47 = vector.load %arg5[%c1_39, %c0_40, %c0_41] : memref<9x128x128xbf16, #tpu.memory_space<vmem>>, vector<1x128x128xbf16>
    %48 = vector.shape_cast %47 : vector<1x128x128xbf16> to vector<128x128xbf16>
    %cst_42 = arith.constant dense<0.000000e+00> : vector<64x128xf32>
    %49 = tpu.matmul %46, %48, %cst_42 {dimension_numbers = #tpu.dot_dimension_numbers<[1], [0], [0], [1], [0, 0, 1, 1], [], []>} : vector<64x128xbf16>, vector<128x128xbf16>, vector<64x128xf32> -> vector<64x128xf32>
    %50 = arith.addf %44, %49 : vector<64x128xf32>
    %c0_43 = arith.constant 0 : index
    %c2 = arith.constant 2 : index
    %c0_44 = arith.constant 0 : index
    %51 = vector.load %arg11[%c0_43, %c2, %c0_44] : memref<10x10x128xbf16, #tpu.memory_space<vmem>>, vector<8x8x128xbf16>
    %52 = vector.shape_cast %51 : vector<8x8x128xbf16> to vector<64x128xbf16>
    %c2_45 = arith.constant 2 : index
    %c0_46 = arith.constant 0 : index
    %c0_47 = arith.constant 0 : index
    %53 = vector.load %arg5[%c2_45, %c0_46, %c0_47] : memref<9x128x128xbf16, #tpu.memory_space<vmem>>, vector<1x128x128xbf16>
    %54 = vector.shape_cast %53 : vector<1x128x128xbf16> to vector<128x128xbf16>
    %cst_48 = arith.constant dense<0.000000e+00> : vector<64x128xf32>
    %55 = tpu.matmul %52, %54, %cst_48 {dimension_numbers = #tpu.dot_dimension_numbers<[1], [0], [0], [1], [0, 0, 1, 1], [], []>} : vector<64x128xbf16>, vector<128x128xbf16>, vector<64x128xf32> -> vector<64x128xf32>
    %56 = arith.addf %50, %55 : vector<64x128xf32>
    %c1_49 = arith.constant 1 : index
    %c0_50 = arith.constant 0 : index
    %c0_51 = arith.constant 0 : index
    %57 = vector.load %arg11[%c1_49, %c0_50, %c0_51] : memref<10x10x128xbf16, #tpu.memory_space<vmem>>, vector<8x8x128xbf16>
    %58 = vector.shape_cast %57 : vector<8x8x128xbf16> to vector<64x128xbf16>
    %c3 = arith.constant 3 : index
    %c0_52 = arith.constant 0 : index
    %c0_53 = arith.constant 0 : index
    %59 = vector.load %arg5[%c3, %c0_52, %c0_53] : memref<9x128x128xbf16, #tpu.memory_space<vmem>>, vector<1x128x128xbf16>
    %60 = vector.shape_cast %59 : vector<1x128x128xbf16> to vector<128x128xbf16>
    %cst_54 = arith.constant dense<0.000000e+00> : vector<64x128xf32>
    %61 = tpu.matmul %58, %60, %cst_54 {dimension_numbers = #tpu.dot_dimension_numbers<[1], [0], [0], [1], [0, 0, 1, 1], [], []>} : vector<64x128xbf16>, vector<128x128xbf16>, vector<64x128xf32> -> vector<64x128xf32>
    %62 = arith.addf %56, %61 : vector<64x128xf32>
    %c1_55 = arith.constant 1 : index
    %c1_56 = arith.constant 1 : index
    %c0_57 = arith.constant 0 : index
    %63 = vector.load %arg11[%c1_55, %c1_56, %c0_57] : memref<10x10x128xbf16, #tpu.memory_space<vmem>>, vector<8x8x128xbf16>
    %64 = vector.shape_cast %63 : vector<8x8x128xbf16> to vector<64x128xbf16>
    %c4 = arith.constant 4 : index
    %c0_58 = arith.constant 0 : index
    %c0_59 = arith.constant 0 : index
    %65 = vector.load %arg5[%c4, %c0_58, %c0_59] : memref<9x128x128xbf16, #tpu.memory_space<vmem>>, vector<1x128x128xbf16>
    %66 = vector.shape_cast %65 : vector<1x128x128xbf16> to vector<128x128xbf16>
    %cst_60 = arith.constant dense<0.000000e+00> : vector<64x128xf32>
    %67 = tpu.matmul %64, %66, %cst_60 {dimension_numbers = #tpu.dot_dimension_numbers<[1], [0], [0], [1], [0, 0, 1, 1], [], []>} : vector<64x128xbf16>, vector<128x128xbf16>, vector<64x128xf32> -> vector<64x128xf32>
    %68 = arith.addf %62, %67 : vector<64x128xf32>
    %c1_61 = arith.constant 1 : index
    %c2_62 = arith.constant 2 : index
    %c0_63 = arith.constant 0 : index
    %69 = vector.load %arg11[%c1_61, %c2_62, %c0_63] : memref<10x10x128xbf16, #tpu.memory_space<vmem>>, vector<8x8x128xbf16>
    %70 = vector.shape_cast %69 : vector<8x8x128xbf16> to vector<64x128xbf16>
    %c5 = arith.constant 5 : index
    %c0_64 = arith.constant 0 : index
    %c0_65 = arith.constant 0 : index
    %71 = vector.load %arg5[%c5, %c0_64, %c0_65] : memref<9x128x128xbf16, #tpu.memory_space<vmem>>, vector<1x128x128xbf16>
    %72 = vector.shape_cast %71 : vector<1x128x128xbf16> to vector<128x128xbf16>
    %cst_66 = arith.constant dense<0.000000e+00> : vector<64x128xf32>
    %73 = tpu.matmul %70, %72, %cst_66 {dimension_numbers = #tpu.dot_dimension_numbers<[1], [0], [0], [1], [0, 0, 1, 1], [], []>} : vector<64x128xbf16>, vector<128x128xbf16>, vector<64x128xf32> -> vector<64x128xf32>
    %74 = arith.addf %68, %73 : vector<64x128xf32>
    %c2_67 = arith.constant 2 : index
    %c0_68 = arith.constant 0 : index
    %c0_69 = arith.constant 0 : index
    %75 = vector.load %arg11[%c2_67, %c0_68, %c0_69] : memref<10x10x128xbf16, #tpu.memory_space<vmem>>, vector<8x8x128xbf16>
    %76 = vector.shape_cast %75 : vector<8x8x128xbf16> to vector<64x128xbf16>
    %c6 = arith.constant 6 : index
    %c0_70 = arith.constant 0 : index
    %c0_71 = arith.constant 0 : index
    %77 = vector.load %arg5[%c6, %c0_70, %c0_71] : memref<9x128x128xbf16, #tpu.memory_space<vmem>>, vector<1x128x128xbf16>
    %78 = vector.shape_cast %77 : vector<1x128x128xbf16> to vector<128x128xbf16>
    %cst_72 = arith.constant dense<0.000000e+00> : vector<64x128xf32>
    %79 = tpu.matmul %76, %78, %cst_72 {dimension_numbers = #tpu.dot_dimension_numbers<[1], [0], [0], [1], [0, 0, 1, 1], [], []>} : vector<64x128xbf16>, vector<128x128xbf16>, vector<64x128xf32> -> vector<64x128xf32>
    %80 = arith.addf %74, %79 : vector<64x128xf32>
    %c2_73 = arith.constant 2 : index
    %c1_74 = arith.constant 1 : index
    %c0_75 = arith.constant 0 : index
    %81 = vector.load %arg11[%c2_73, %c1_74, %c0_75] : memref<10x10x128xbf16, #tpu.memory_space<vmem>>, vector<8x8x128xbf16>
    %82 = vector.shape_cast %81 : vector<8x8x128xbf16> to vector<64x128xbf16>
    %c7 = arith.constant 7 : index
    %c0_76 = arith.constant 0 : index
    %c0_77 = arith.constant 0 : index
    %83 = vector.load %arg5[%c7, %c0_76, %c0_77] : memref<9x128x128xbf16, #tpu.memory_space<vmem>>, vector<1x128x128xbf16>
    %84 = vector.shape_cast %83 : vector<1x128x128xbf16> to vector<128x128xbf16>
    %cst_78 = arith.constant dense<0.000000e+00> : vector<64x128xf32>
    %85 = tpu.matmul %82, %84, %cst_78 {dimension_numbers = #tpu.dot_dimension_numbers<[1], [0], [0], [1], [0, 0, 1, 1], [], []>} : vector<64x128xbf16>, vector<128x128xbf16>, vector<64x128xf32> -> vector<64x128xf32>
    %86 = arith.addf %80, %85 : vector<64x128xf32>
    %c2_79 = arith.constant 2 : index
    %c2_80 = arith.constant 2 : index
    %c0_81 = arith.constant 0 : index
    %87 = vector.load %arg11[%c2_79, %c2_80, %c0_81] : memref<10x10x128xbf16, #tpu.memory_space<vmem>>, vector<8x8x128xbf16>
    %88 = vector.shape_cast %87 : vector<8x8x128xbf16> to vector<64x128xbf16>
    %c8 = arith.constant 8 : index
    %c0_82 = arith.constant 0 : index
    %c0_83 = arith.constant 0 : index
    %89 = vector.load %arg5[%c8, %c0_82, %c0_83] : memref<9x128x128xbf16, #tpu.memory_space<vmem>>, vector<1x128x128xbf16>
    %90 = vector.shape_cast %89 : vector<1x128x128xbf16> to vector<128x128xbf16>
    %cst_84 = arith.constant dense<0.000000e+00> : vector<64x128xf32>
    %91 = tpu.matmul %88, %90, %cst_84 {dimension_numbers = #tpu.dot_dimension_numbers<[1], [0], [0], [1], [0, 0, 1, 1], [], []>} : vector<64x128xbf16>, vector<128x128xbf16>, vector<64x128xf32> -> vector<64x128xf32>
    %92 = arith.addf %86, %91 : vector<64x128xf32>
    %c0_85 = arith.constant 0 : index
    %c0_86 = arith.constant 0 : index
    %93 = vector.load %arg6[%c0_85, %c0_86] : memref<1x128xf32, #tpu.memory_space<vmem>>, vector<1x128xf32>
    %c0_87 = arith.constant 0 : index
    %c0_88 = arith.constant 0 : index
    %94 = vector.load %arg7[%c0_87, %c0_88] : memref<1x128xf32, #tpu.memory_space<vmem>>, vector<1x128xf32>
    %cst_89 = arith.constant dense<0.000000e+00> : vector<64xf32>
    %95 = vector.multi_reduction <add>, %92, %cst_89 [1] : vector<64x128xf32> to vector<64xf32>
    %96 = vector.shape_cast %95 : vector<64xf32> to vector<64x1xf32>
    %cst_90 = arith.constant 1.280000e+02 : f32
    %97 = vector.broadcast %cst_90 : f32 to vector<64x1xf32>
    %98 = arith.divf %96, %97 : vector<64x1xf32>
    %99 = vector.broadcast %98 : vector<64x1xf32> to vector<64x128xf32>
    %100 = arith.subf %92, %99 : vector<64x128xf32>
    %101 = arith.mulf %100, %100 : vector<64x128xf32>
    %cst_91 = arith.constant dense<0.000000e+00> : vector<64xf32>
    %102 = vector.multi_reduction <add>, %101, %cst_91 [1] : vector<64x128xf32> to vector<64xf32>
    %103 = vector.shape_cast %102 : vector<64xf32> to vector<64x1xf32>
    %cst_92 = arith.constant 1.280000e+02 : f32
    %104 = vector.broadcast %cst_92 : f32 to vector<64x1xf32>
    %105 = arith.divf %103, %104 : vector<64x1xf32>
    %106 = vector.broadcast %98 : vector<64x1xf32> to vector<64x128xf32>
    %107 = arith.subf %92, %106 : vector<64x128xf32>
    %cst_93 = arith.constant 9.99999997E-7 : f32
    %108 = vector.broadcast %cst_93 : f32 to vector<64x1xf32>
    %109 = arith.addf %105, %108 : vector<64x1xf32>
    %110 = math.rsqrt %109 : vector<64x1xf32>
    %111 = vector.broadcast %110 : vector<64x1xf32> to vector<64x128xf32>
    %112 = arith.mulf %107, %111 : vector<64x128xf32>
    %113 = vector.broadcast %93 : vector<1x128xf32> to vector<64x128xf32>
    %114 = arith.mulf %112, %113 : vector<64x128xf32>
    %115 = vector.broadcast %94 : vector<1x128xf32> to vector<64x128xf32>
    %116 = arith.addf %114, %115 : vector<64x128xf32>
    %117 = arith.truncf %116 : vector<64x128xf32> to vector<64x128xbf16>
    %c0_94 = arith.constant 0 : index
    %c0_95 = arith.constant 0 : index
    %118 = vector.load %arg8[%c0_94, %c0_95] : memref<128x128xbf16, #tpu.memory_space<vmem>>, vector<128x128xbf16>
    %cst_96 = arith.constant dense<0.000000e+00> : vector<64x128xf32>
    %119 = tpu.matmul %117, %118, %cst_96 {dimension_numbers = #tpu.dot_dimension_numbers<[1], [0], [0], [1], [0, 0, 1, 1], [], []>} : vector<64x128xbf16>, vector<128x128xbf16>, vector<64x128xf32> -> vector<64x128xf32>
    %c0_97 = arith.constant 0 : index
    %c0_98 = arith.constant 0 : index
    %120 = vector.load %arg9[%c0_97, %c0_98] : memref<1x128xf32, #tpu.memory_space<vmem>>, vector<1x128xf32>
    %121 = vector.broadcast %120 : vector<1x128xf32> to vector<64x128xf32>
    %122 = arith.addf %119, %121 : vector<64x128xf32>
    %123 = vector.shape_cast %122 : vector<64x128xf32> to vector<8x8x128xf32>
    %c0_99 = arith.constant 0 : index
    %c0_100 = arith.constant 0 : index
    %c0_101 = arith.constant 0 : index
    %c0_102 = arith.constant 0 : index
    %124 = vector.load %arg10[%c0_99, %c0_100, %c0_101, %c0_102] : memref<1x8x8x128xf32, #tpu.memory_space<vmem>>, vector<1x8x8x128xf32>
    %125 = vector.shape_cast %124 : vector<1x8x8x128xf32> to vector<8x8x128xf32>
    %126 = vector.shape_cast %123 : vector<8x8x128xf32> to vector<1x8x8x128xf32>
    tpu.vector_store %arg10[%c0_99, %c0_100, %c0_101, %c0_102], %126 {strides = array<i32>} : memref<1x8x8x128xf32, #tpu.memory_space<vmem>>, vector<1x8x8x128xf32>,
    return
  }
  func.func @transform_0(%arg0: i32) -> (i32, i32, i32) {
    %c0_i32 = arith.constant 0 : i32
    %c0_i32_0 = arith.constant 0 : i32
    %c0_i32_1 = arith.constant 0 : i32
    return %arg0, %c0_i32, %c0_i32_0 : i32, i32, i32
  }
  func.func @transform_1(%arg0: i32) -> (i32, i32) {
    %c0_i32 = arith.constant 0 : i32
    %c0_i32_0 = arith.constant 0 : i32
    %c0_i32_1 = arith.constant 0 : i32
    return %c0_i32, %c0_i32_0 : i32, i32
  }
  func.func @transform_2(%arg0: i32) -> (i32, i32) {
    %c0_i32 = arith.constant 0 : i32
    %c0_i32_0 = arith.constant 0 : i32
    %c0_i32_1 = arith.constant 0 : i32
    return %c0_i32, %c0_i32_0 : i32, i32
  }
  func.func @transform_3(%arg0: i32) -> (i32, i32) {
    %c0_i32 = arith.constant 0 : i32
    %c0_i32_0 = arith.constant 0 : i32
    %c0_i32_1 = arith.constant 0 : i32
    return %c0_i32, %c0_i32_0 : i32, i32
  }
  func.func @transform_4(%arg0: i32) -> (i32, i32, i32) {
    %c0_i32 = arith.constant 0 : i32
    %c0_i32_0 = arith.constant 0 : i32
    %c0_i32_1 = arith.constant 0 : i32
    %c0_i32_2 = arith.constant 0 : i32
    return %c0_i32, %c0_i32_0, %c0_i32_1 : i32, i32, i32
  }
  func.func @transform_5(%arg0: i32) -> (i32, i32) {
    %c0_i32 = arith.constant 0 : i32
    %c0_i32_0 = arith.constant 0 : i32
    %c0_i32_1 = arith.constant 0 : i32
    return %c0_i32, %c0_i32_0 : i32, i32
  }
  func.func @transform_6(%arg0: i32) -> (i32, i32) {
    %c0_i32 = arith.constant 0 : i32
    %c0_i32_0 = arith.constant 0 : i32
    %c0_i32_1 = arith.constant 0 : i32
    return %c0_i32, %c0_i32_0 : i32, i32
  }
  func.func @transform_7(%arg0: i32) -> (i32, i32) {
    %c0_i32 = arith.constant 0 : i32
    %c0_i32_0 = arith.constant 0 : i32
    %c0_i32_1 = arith.constant 0 : i32
    return %c0_i32, %c0_i32_0 : i32, i32
  }
  func.func @transform_8(%arg0: i32) -> (i32, i32) {
    %c0_i32 = arith.constant 0 : i32
    %c0_i32_0 = arith.constant 0 : i32
    %c0_i32_1 = arith.constant 0 : i32
    return %c0_i32, %c0_i32_0 : i32, i32
  }
  func.func @transform_9(%arg0: i32) -> (i32, i32, i32, i32) {
    %c0_i32 = arith.constant 0 : i32
    %c0_i32_0 = arith.constant 0 : i32
    %c0_i32_1 = arith.constant 0 : i32
    %c0_i32_2 = arith.constant 0 : i32
    return %arg0, %c0_i32, %c0_i32_0, %c0_i32_1 : i32, i32, i32, i32
  }
}

</mosaic_0001>

<llo_original>
// kernel: forward.3
$region0: #{forward.3}
  #allocation0 [shape = 'u32[]', space=smem, size = 0x4, offset = 0x4, fixed_abs, tag = 'smem constant byte address 0x4 - core index']
  #allocation1 [shape = 'u32[72,128]{1,0:T(1,128)}', space=vmem, size = 0x9000, scoped, tag = 'internal scratch']
  #allocation2 [shape = 'bf16[10,10,128]{2,1,0:T(8,128)(2,1)}', space=vmem, size = 0xa000, scoped, tag = 'scratch operand']
  %s0 = inlined_call_operand.vmem [shape: f32[2,64,128], index: 0, kind: input, shape index: {}]
  %s1 = inlined_call_operand.vmem [shape: bf16[128,128], index: 1, kind: input, shape index: {}]
  %s2 = inlined_call_operand.vmem [shape: f32[1,128], index: 2, kind: input, shape index: {}]
  %s3 = inlined_call_operand.vmem [shape: f32[1,128], index: 3, kind: input, shape index: {}]
  %s4 = inlined_call_operand.vmem [shape: bf16[9,128,128], index: 4, kind: input, shape index: {}]
  %s5 = inlined_call_operand.vmem [shape: f32[1,128], index: 5, kind: input, shape index: {}]
  %s6 = inlined_call_operand.vmem [shape: f32[1,128], index: 6, kind: input, shape index: {}]
  %s7 = inlined_call_operand.vmem [shape: bf16[128,128], index: 7, kind: input, shape index: {}]
  %s8 = inlined_call_operand.vmem [shape: f32[1,128], index: 8, kind: input, shape index: {}]
  %s9 = inlined_call_operand.hbm [shape: f32[2,8,8,128], index: 9, kind: output, shape index: {}]
  %s10 = sld [smem:[#allocation0]]
  $region69: #{forward.3} parent=0
    _
  %s12 = ssub.s32 1, %s10
  %s13 = scalar_select 0, %s12, %s10
  $region1: #{forward.3} parent=0
    #allocation3 [shape = 'u8[65536]{0}', space=vmem, size = 0x10000, scoped, tag = 'output window, operand 0']
    #allocation4 [shape = 's32[2]{0}', space=sflag, size = 0x8, scoped, tag = 'scoped memory for forward.3']
    %14 = vsyncpa [#allocation4], 0
    %s15 = scalar_lea.sflag [#allocation4], 1
    %16 = vsyncpa %s15, 0
    loop: start=0, step=1, limit=4
    $region2: #{forward.3} parent=1 // loop_pre_header
      _
    $region3: #{forward.3} parent=1 // loop_header
      %s18 = sphi 0, %s22
      %p19 = scmp.ge.s32.totalorder %s18, 4
      %s28 = sphi 0, %s30
      %s31 = sphi 0, %s28
      %s32 = sphi 0, %s31
      %s48 = sphi 0, %s32
      %s52 = sphi 0, %s52
      %s54 = sphi 0, %s52
      %s55 = sphi 0, %s54
      %s69 = sphi 0, %s55
      %s73 = sphi 0, %s73
      %s75 = sphi 0, %s73
      %s76 = sphi 0, %s75
      %s90 = sphi 0, %s76
      %s94 = sphi 0, %s94
      %s96 = sphi 0, %s94
      %s97 = sphi 0, %s96
      %s111 = sphi 0, %s97
      %s115 = sphi 0, %s115
      %s117 = sphi 0, %s115
      %s118 = sphi 0, %s117
      %s132 = sphi 0, %s118
      %s136 = sphi 0, %s136
      %s138 = sphi 0, %s136
      %s139 = sphi 0, %s138
      %s153 = sphi 0, %s139
      %s157 = sphi 0, %s157
      %s159 = sphi 0, %s157
      %s160 = sphi 0, %s159
      %s174 = sphi 0, %s160
      %s178 = sphi 0, %s178
      %s180 = sphi 0, %s178
      %s181 = sphi 0, %s180
      %s195 = sphi 0, %s181
      %s199 = sphi 0, %s199
      %s201 = sphi 0, %s199
      %s202 = sphi 0, %s201
      %s216 = sphi 0, %s202
      %s222 = sphi 0, %s224
      %s225 = sphi 0, %s222
      %s226 = sphi 0, %s225
      %s242 = sphi 0, %s226
    $region4: #{forward.3} parent=1 // loop_header_branch
      %21 = sbr.rel (%p19) target = $region8
    $region5: #{forward.3} parent=1 // loop_body
      %s23 = ssub.s32 %s18, 1
      %s24 = ssub.s32 %s18, 2
      %s25 = sadd.s32 %s18, 1
      %s26 = ssub.s32 %s18, %s25
      %p27 = scmp.eq.s32.totalorder %s26, 0
      %s29 = sadd.s32 %s28, 1
      %s30 = scalar_select %p27, %s28, %s29
      %p33 = pneg %p27
      %p34 = scmp.eq.s32.totalorder %s18, 1
      %p35 = por %p33, %p34
      %p36 = scmp.ne.s32.totalorder %s28, %s31
      %p37 = scmp.eq.s32.totalorder %s18, 0
      %p38 = por %p36, %p37
      %p39 = scmp.ne.s32.totalorder %s28, %s31
      %p40 = scmp.eq.s32.totalorder %s23, 1
      %p41 = por %p39, %p40
      %p42 = scmp.ne.s32.totalorder %s31, %s32
      %p43 = scmp.eq.s32.totalorder %s23, 0
      %p44 = por %p42, %p43
      %p45 = scmp.ne.s32.totalorder %s31, %s32
      %p46 = scmp.eq.s32.totalorder %s24, 1
      %p47 = por %p45, %p46
      %p49 = scmp.ne.s32.totalorder %s32, %s48
      %p50 = scmp.eq.s32.totalorder %s24, 0
      %p51 = por %p49, %p50
      %s53 = sadd.s32 %s52, 1
      %p56 = scmp.eq.s32.totalorder %s18, 1
      %p57 = scmp.ne.s32.totalorder %s52, %s54
      %p58 = scmp.eq.s32.totalorder %s18, 0
      %p59 = por %p57, %p58
      %p60 = scmp.ne.s32.totalorder %s52, %s54
      %p61 = scmp.eq.s32.totalorder %s23, 1
      %p62 = por %p60, %p61
      %p63 = scmp.ne.s32.totalorder %s54, %s55
      %p64 = scmp.eq.s32.totalorder %s23, 0
      %p65 = por %p63, %p64
      %p66 = scmp.ne.s32.totalorder %s54, %s55
      %p67 = scmp.eq.s32.totalorder %s24, 1
      %p68 = por %p66, %p67
      %p70 = scmp.ne.s32.totalorder %s55, %s69
      %p71 = scmp.eq.s32.totalorder %s24, 0
      %p72 = por %p70, %p71
      %s74 = sadd.s32 %s73, 1
      %p77 = scmp.eq.s32.totalorder %s18, 1
      %p78 = scmp.ne.s32.totalorder %s73, %s75
      %p79 = scmp.eq.s32.totalorder %s18, 0
      %p80 = por %p78, %p79
      %p81 = scmp.ne.s32.totalorder %s73, %s75
      %p82 = scmp.eq.s32.totalorder %s23, 1
      %p83 = por %p81, %p82
      %p84 = scmp.ne.s32.totalorder %s75, %s76
      %p85 = scmp.eq.s32.totalorder %s23, 0
      %p86 = por %p84, %p85
      %p87 = scmp.ne.s32.totalorder %s75, %s76
      %p88 = scmp.eq.s32.totalorder %s24, 1
      %p89 = por %p87, %p88
      %p91 = scmp.ne.s32.totalorder %s76, %s90
      %p92 = scmp.eq.s32.totalorder %s24, 0
      %p93 = por %p91, %p92
      %s95 = sadd.s32 %s94, 1
      %p98 = scmp.eq.s32.totalorder %s18, 1
      %p99 = scmp.ne.s32.totalorder %s94, %s96
      %p100 = scmp.eq.s32.totalorder %s18, 0
      %p101 = por %p99, %p100
      %p102 = scmp.ne.s32.totalorder %s94, %s96
      %p103 = scmp.eq.s32.totalorder %s23, 1
      %p104 = por %p102, %p103
      %p105 = scmp.ne.s32.totalorder %s96, %s97
      %p106 = scmp.eq.s32.totalorder %s23, 0
      %p107 = por %p105, %p106
      %p108 = scmp.ne.s32.totalorder %s96, %s97
      %p109 = scmp.eq.s32.totalorder %s24, 1
      %p110 = por %p108, %p109
      %p112 = scmp.ne.s32.totalorder %s97, %s111
      %p113 = scmp.eq.s32.totalorder %s24, 0
      %p114 = por %p112, %p113
      %s116 = sadd.s32 %s115, 1
      %p119 = scmp.eq.s32.totalorder %s18, 1
      %p120 = scmp.ne.s32.totalorder %s115, %s117
      %p121 = scmp.eq.s32.totalorder %s18, 0
      %p122 = por %p120, %p121
      %p123 = scmp.ne.s32.totalorder %s115, %s117
      %p124 = scmp.eq.s32.totalorder %s23, 1
      %p125 = por %p123, %p124
      %p126 = scmp.ne.s32.totalorder %s117, %s118
      %p127 = scmp.eq.s32.totalorder %s23, 0
      %p128 = por %p126, %p127
      %p129 = scmp.ne.s32.totalorder %s117, %s118
      %p130 = scmp.eq.s32.totalorder %s24, 1
      %p131 = por %p129, %p130
      %p133 = scmp.ne.s32.totalorder %s118, %s132
      %p134 = scmp.eq.s32.totalorder %s24, 0
      %p135 = por %p133, %p134
      %s137 = sadd.s32 %s136, 1
      %p140 = scmp.eq.s32.totalorder %s18, 1
      %p141 = scmp.ne.s32.totalorder %s136, %s138
      %p142 = scmp.eq.s32.totalorder %s18, 0
      %p143 = por %p141, %p142
      %p144 = scmp.ne.s32.totalorder %s136, %s138
      %p145 = scmp.eq.s32.totalorder %s23, 1
      %p146 = por %p144, %p145
      %p147 = scmp.ne.s32.totalorder %s138, %s139
      %p148 = scmp.eq.s32.totalorder %s23, 0
      %p149 = por %p147, %p148
      %p150 = scmp.ne.s32.totalorder %s138, %s139
      %p151 = scmp.eq.s32.totalorder %s24, 1
      %p152 = por %p150, %p151
      %p154 = scmp.ne.s32.totalorder %s139, %s153
      %p155 = scmp.eq.s32.totalorder %s24, 0
      %p156 = por %p154, %p155
      %s158 = sadd.s32 %s157, 1
      %p161 = scmp.eq.s32.totalorder %s18, 1
      %p162 = scmp.ne.s32.totalorder %s157, %s159
      %p163 = scmp.eq.s32.totalorder %s18, 0
      %p164 = por %p162, %p163
      %p165 = scmp.ne.s32.totalorder %s157, %s159
      %p166 = scmp.eq.s32.totalorder %s23, 1
      %p167 = por %p165, %p166
      %p168 = scmp.ne.s32.totalorder %s159, %s160
      %p169 = scmp.eq.s32.totalorder %s23, 0
      %p170 = por %p168, %p169
      %p171 = scmp.ne.s32.totalorder %s159, %s160
      %p172 = scmp.eq.s32.totalorder %s24, 1
      %p173 = por %p171, %p172
      %p175 = scmp.ne.s32.totalorder %s160, %s174
      %p176 = scmp.eq.s32.totalorder %s24, 0
      %p177 = por %p175, %p176
      %s179 = sadd.s32 %s178, 1
      %p182 = scmp.eq.s32.totalorder %s18, 1
      %p183 = scmp.ne.s32.totalorder %s178, %s180
      %p184 = scmp.eq.s32.totalorder %s18, 0
      %p185 = por %p183, %p184
      %p186 = scmp.ne.s32.totalorder %s178, %s180
      %p187 = scmp.eq.s32.totalorder %s23, 1
      %p188 = por %p186, %p187
      %p189 = scmp.ne.s32.totalorder %s180, %s181
      %p190 = scmp.eq.s32.totalorder %s23, 0
      %p191 = por %p189, %p190
      %p192 = scmp.ne.s32.totalorder %s180, %s181
      %p193 = scmp.eq.s32.totalorder %s24, 1
      %p194 = por %p192, %p193
      %p196 = scmp.ne.s32.totalorder %s181, %s195
      %p197 = scmp.eq.s32.totalorder %s24, 0
      %p198 = por %p196, %p197
      %s200 = sadd.s32 %s199, 1
      %p203 = scmp.eq.s32.totalorder %s18, 1
      %p204 = scmp.ne.s32.totalorder %s199, %s201
      %p205 = scmp.eq.s32.totalorder %s18, 0
      %p206 = por %p204, %p205
      %p207 = scmp.ne.s32.totalorder %s199, %s201
      %p208 = scmp.eq.s32.totalorder %s23, 1
      %p209 = por %p207, %p208
      %p210 = scmp.ne.s32.totalorder %s201, %s202
      %p211 = scmp.eq.s32.totalorder %s23, 0
      %p212 = por %p210, %p211
      %p213 = scmp.ne.s32.totalorder %s201, %s202
      %p214 = scmp.eq.s32.totalorder %s24, 1
      %p215 = por %p213, %p214
      %p217 = scmp.ne.s32.totalorder %s202, %s216
      %p218 = scmp.eq.s32.totalorder %s24, 0
      %p219 = por %p217, %p218
      %s220 = ssub.s32 %s18, %s25
      %p221 = scmp.eq.s32.totalorder %s220, 0
      %s223 = sadd.s32 %s222, 1
      %s224 = scalar_select %p221, %s222, %s223
      %p227 = pneg %p221
      %p228 = scmp.eq.s32.totalorder %s18, 1
      %p229 = por %p227, %p228
      %p230 = scmp.ne.s32.totalorder %s222, %s225
      %p231 = scmp.eq.s32.totalorder %s18, 0
      %p232 = por %p230, %p231
      %p233 = scmp.ne.s32.totalorder %s222, %s225
      %p234 = scmp.eq.s32.totalorder %s23, 1
      %p235 = por %p233, %p234
      %p236 = scmp.ne.s32.totalorder %s225, %s226
      %p237 = scmp.eq.s32.totalorder %s23, 0
      %p238 = por %p236, %p237
      %p239 = scmp.ne.s32.totalorder %s225, %s226
      %p240 = scmp.eq.s32.totalorder %s24, 1
      %p241 = por %p239, %p240
      %p243 = scmp.ne.s32.totalorder %s226, %s242
      %p244 = scmp.eq.s32.totalorder %s24, 0
      %p245 = por %p243, %p244
      %p246 = scmp.le.s32.totalorder 1, %s18
      %p247 = scmp.lt.s32.totalorder %s18, 3
      %p248 = pnand %p246, %p247
      %p249 = pneg %p248
      // Predicated region
      $region9: #{forward.3} parent=5 // pred_check
        _
      $region10: #{forward.3} parent=5 // pred_check_branch
        %251 = sbr.rel (%p248) target = $region12
      $region11: #{forward.3} parent=5 // pred_region
        %s252 = ssub.s32 %s18, 1
        // Predicated region
        $region13: #{forward.3} parent=11 // pred_check
          %p253 = pneg %p65
        $region14: #{forward.3} parent=11 // pred_check_branch
          %255 = sbr.rel (%p253) target = $region16
        $region15: #{forward.3} parent=11 // pred_region
          _
        $region16: #{forward.3} parent=11 // pred_fallthru
          _
        // Predicated region
        $region17: #{forward.3} parent=11 // pred_check
          %p256 = pneg %p86
        $region18: #{forward.3} parent=11 // pred_check_branch
          %258 = sbr.rel (%p256) target = $region20
        $region19: #{forward.3} parent=11 // pred_region
          _
        $region20: #{forward.3} parent=11 // pred_fallthru
          _
        // Predicated region
        $region21: #{forward.3} parent=11 // pred_check
          %p259 = pneg %p107
        $region22: #{forward.3} parent=11 // pred_check_branch
          %261 = sbr.rel (%p259) target = $region24
        $region23: #{forward.3} parent=11 // pred_region
          _
        $region24: #{forward.3} parent=11 // pred_fallthru
          _
        // Predicated region
        $region25: #{forward.3} parent=11 // pred_check
          %p262 = pneg %p128
        $region26: #{forward.3} parent=11 // pred_check_branch
          %264 = sbr.rel (%p262) target = $region28
        $region27: #{forward.3} parent=11 // pred_region
          _
        $region28: #{forward.3} parent=11 // pred_fallthru
          _
        // Predicated region
        $region29: #{forward.3} parent=11 // pred_check
          %p265 = pneg %p149
        $region30: #{forward.3} parent=11 // pred_check_branch
          %267 = sbr.rel (%p265) target = $region32
        $region31: #{forward.3} parent=11 // pred_region
          _
        $region32: #{forward.3} parent=11 // pred_fallthru
          _
        // Predicated region
        $region33: #{forward.3} parent=11 // pred_check
          %p268 = pneg %p170
        $region34: #{forward.3} parent=11 // pred_check_branch
          %270 = sbr.rel (%p268) target = $region36
        $region35: #{forward.3} parent=11 // pred_region
          _
        $region36: #{forward.3} parent=11 // pred_fallthru
          _
        // Predicated region
        $region37: #{forward.3} parent=11 // pred_check
          %p271 = pneg %p191
        $region38: #{forward.3} parent=11 // pred_check_branch
          %273 = sbr.rel (%p271) target = $region40
        $region39: #{forward.3} parent=11 // pred_region
          _
        $region40: #{forward.3} parent=11 // pred_fallthru
          _
        // Predicated region
        $region41: #{forward.3} parent=11 // pred_check
          %p274 = pneg %p212
        $region42: #{forward.3} parent=11 // pred_check_branch
          %276 = sbr.rel (%p274) target = $region44
        $region43: #{forward.3} parent=11 // pred_region
          _
        $region44: #{forward.3} parent=11 // pred_fallthru
          _
      $region12: #{forward.3} parent=5 // pred_fallthru
        _
      %p277 = scmp.lt.s32.totalorder %s18, 2
      // Predicated region
      $region45: #{forward.3} parent=5 // pred_check
        %p278 = pneg %p277
      $region46: #{forward.3} parent=5 // pred_check_branch
        %280 = sbr.rel (%p278) target = $region48
      $region47: #{forward.3} parent=5 // pred_region
        // Predicated region
        $region49: #{forward.3} parent=47 // pred_check
          %p281 = pneg %p38
        $region50: #{forward.3} parent=47 // pred_check_branch
          %283 = sbr.rel (%p281) target = $region52
        $region51: #{forward.3} parent=47 // pred_region
          %p284 = scmp.lt.s32.totalorder %s18, 1
          %s285 = scalar_select %p284, %s18, 1
          %s286 = smul.addr %s285, 8
          %s287 = smul.addr %s286, 8
          %s288 = scalar_lea.vmem %s0, %s287
        $region52: #{forward.3} parent=47 // pred_fallthru
          _
      $region48: #{forward.3} parent=5 // pred_fallthru
        _
      %p289 = scmp.le.s32.totalorder 1, %s18
      %p290 = scmp.lt.s32.totalorder %s18, 3
      %p291 = pnand %p289, %p290
      %p292 = pneg %p291
      // Predicated region
      $region53: #{forward.3} parent=5 // pred_check
        _
      $region54: #{forward.3} parent=5 // pred_check_branch
        %294 = sbr.rel (%p291) target = $region56
      $region55: #{forward.3} parent=5 // pred_region
        %s295 = ssub.s32 %s18, 1
        %p296 = scmp.lt.s32.totalorder %s23, 1
        %s297 = scalar_select %p296, %s23, 1
        %s298 = smul.addr %s297, 8
        %s299 = smul.addr %s298, 8
        %s300 = scalar_lea.vmem %s0, %s299
        %p301 = pneg %p44
        %p302 = pneg %p41
        %p303 = pneg %p65
        %p304 = pneg %p62
        %p305 = pneg %p86
        %p306 = pneg %p83
        %p307 = pneg %p107
        %p308 = pneg %p104
        %p309 = pneg %p128
        %p310 = pneg %p125
        %p311 = pneg %p149
        %p312 = pneg %p146
        %p313 = pneg %p170
        %p314 = pneg %p167
        %p315 = pneg %p191
        %p316 = pneg %p188
        %p317 = pneg %p212
        %p318 = pneg %p209
        %p319 = pneg %p238
        %p320 = pneg %p235
        %s321 = sand.u32 %s225, 1
        %s322 = scalar_lea.sflag [#allocation4], %s321
        %s323 = sand.u32 %s225, 1
        %s324 = smul.addr %s323, 64
        %s325 = scalar_lea.vmem [#allocation3], %s324
        %p326 = scmp.lt.s32.totalorder %s23, 1
        %s327 = scalar_select %p326, %s23, 1
        %s328 = smul.addr %s327, 8
        %s329 = smul.addr %s328, 8
        %s330 = scalar_lea.vmem %s0, %s329
        %v332 = vld [vmem:[%s330] sm:$0xff]
        %v333 = vld [vmem:[%s330 + $0x8] sm:$0xff]
        %v334 = vld [vmem:[%s330 + $0x10] sm:$0xff]
        %v335 = vld [vmem:[%s330 + $0x18] sm:$0xff]
        %v336 = vld [vmem:[%s330 + $0x20] sm:$0xff]
        %v337 = vld [vmem:[%s330 + $0x28] sm:$0xff]
        %v338 = vld [vmem:[%s330 + $0x30] sm:$0xff]
        %v339 = vld [vmem:[%s330 + $0x38] sm:$0xff]
        %v340 = vpack.c.bf16 %v333, %v332
        %v341 = vpack.c.bf16 %v335, %v334
        %v342 = vpack.c.bf16 %v337, %v336
        %v343 = vpack.c.bf16 %v339, %v338
        %v344 = vld [vmem:[%s1] sm:$0xf]
        %v345 = vld [vmem:[%s1 + $0x4] sm:$0xf]
        %v346 = vld [vmem:[%s1 + $0x8] sm:$0xf]
        %v347 = vld [vmem:[%s1 + $0xc] sm:$0xf]
        %v348 = vld [vmem:[%s1 + $0x10] sm:$0xf]
        %v349 = vld [vmem:[%s1 + $0x14] sm:$0xf]
        %v350 = vld [vmem:[%s1 + $0x18] sm:$0xf]
        %v351 = vld [vmem:[%s1 + $0x1c] sm:$0xf]
        %v352 = vld [vmem:[%s1 + $0x20] sm:$0xf]
        %v353 = vld [vmem:[%s1 + $0x24] sm:$0xf]
        %v354 = vld [vmem:[%s1 + $0x28] sm:$0xf]
        %v355 = vld [vmem:[%s1 + $0x2c] sm:$0xf]
        %v356 = vld [vmem:[%s1 + $0x30] sm:$0xf]
        %v357 = vld [vmem:[%s1 + $0x34] sm:$0xf]
        %v358 = vld [vmem:[%s1 + $0x38] sm:$0xf]
        %v359 = vld [vmem:[%s1 + $0x3c] sm:$0xf]
        %v376 = vunpack.c.l.b16 %v344
        %v377 = vunpack.c.l.b16 %v345
        %v378 = vunpack.c.l.b16 %v346
        %v379 = vunpack.c.l.b16 %v347
        %v380 = vunpack.c.l.b16 %v348
        %v381 = vunpack.c.l.b16 %v349
        %v382 = vunpack.c.l.b16 %v350
        %v383 = vunpack.c.l.b16 %v351
        %v384 = vunpack.c.l.b16 %v352
        %v385 = vunpack.c.l.b16 %v353
        %v386 = vunpack.c.l.b16 %v354
        %v387 = vunpack.c.l.b16 %v355
        %v388 = vunpack.c.l.b16 %v356
        %v389 = vunpack.c.l.b16 %v357
        %v390 = vunpack.c.l.b16 %v358
        %v391 = vunpack.c.l.b16 %v359
        %v392 = vpack.c.b16 %v377, %v376
        %v393 = vpack.c.b16 %v379, %v378
        %v394 = vpack.c.b16 %v381, %v380
        %v395 = vpack.c.b16 %v383, %v382
        %v396 = vpack.c.b16 %v385, %v384
        %v397 = vpack.c.b16 %v387, %v386
        %v398 = vpack.c.b16 %v389, %v388
        %v399 = vpack.c.b16 %v391, %v390
        %408 = vmatpush.bf16.msra.mxu0 %v399
        %409 = vmatpush.bf16.msra.mxu0 %v398
        %410 = vmatpush.bf16.msra.mxu0 %v397
        %411 = vmatpush.bf16.msra.mxu0 %v396
        %412 = vmatpush.bf16.msra.mxu0 %v395
        %413 = vmatpush.bf16.msra.mxu0 %v394
        %414 = vmatpush.bf16.msra.mxu0 %v393
        %415 = vmatpush.bf16.msra.mxu0 %v392
        %416 = vmatmul.bf16.gmra.mxu0 %v340
        %v417 = vpop.f32.mrf.mxu0
        %v418 = vadd.f32 0.0, %v417
        %v419 = vpop.f32.mrf.mxu0
        %v420 = vadd.f32 0.0, %v419
        %421 = vmatmul.bf16.gmra.mxu0 %v341
        %v422 = vpop.f32.mrf.mxu0
        %v423 = vadd.f32 0.0, %v422
        %v424 = vpop.f32.mrf.mxu0
        %v425 = vadd.f32 0.0, %v424
        %426 = vmatmul.bf16.gmra.mxu0 %v342
        %v427 = vpop.f32.mrf.mxu0
        %v428 = vadd.f32 0.0, %v427
        %v429 = vpop.f32.mrf.mxu0
        %v430 = vadd.f32 0.0, %v429
        %431 = vmatmul.bf16.gmra.mxu0 %v343
        %v432 = vpop.f32.mrf.mxu0
        %v433 = vadd.f32 0.0, %v432
        %v434 = vpop.f32.mrf.mxu0
        %v435 = vadd.f32 0.0, %v434
        %436 = vdwg.mxu0
        %v437 = vld [vmem:[%s2] sm:$0x1]
        %v438 = vld [vmem:[%s3] sm:$0x1]
        %439 = vadd.xlane.f32.xlu0 %v418
        %v440 = vpop.xlane.xlu0 %439
        %441 = vadd.xlane.f32.xlu0 %v420
        %v442 = vpop.xlane.xlu0 %441
        %443 = vadd.xlane.f32.xlu0 %v423
        %v444 = vpop.xlane.xlu0 %443
        %445 = vadd.xlane.f32.xlu0 %v425
        %v446 = vpop.xlane.xlu0 %445
        %447 = vadd.xlane.f32.xlu0 %v428
        %v448 = vpop.xlane.xlu0 %447
        %449 = vadd.xlane.f32.xlu0 %v430
        %v450 = vpop.xlane.xlu0 %449
        %451 = vadd.xlane.f32.xlu0 %v433
        %v452 = vpop.xlane.xlu0 %451
        %453 = vadd.xlane.f32.xlu0 %v435
        %v454 = vpop.xlane.xlu0 %453
        %v455 = vrcp.pop 128.0
        %v456 = vmul.f32 128.0, %v455
        %v457 = vsub.f32 1.0, %v456
        %v458 = vmul.f32 %v455, %v457
        %v459 = vadd.f32 %v455, %v458
        %vm460 = vweird.f32 %v455
        %v461 = vsel %vm460, %v455, %v459
        %v462 = vmul.f32 %v440, %v461
        %v463 = vmul.f32 %v442, %v461
        %v464 = vmul.f32 %v444, %v461
        %v465 = vmul.f32 %v446, %v461
        %v466 = vmul.f32 %v448, %v461
        %v467 = vmul.f32 %v450, %v461
        %v468 = vmul.f32 %v452, %v461
        %v469 = vmul.f32 %v454, %v461
        %v470 = vsub.f32 %v418, %v462
        %v471 = vsub.f32 %v420, %v463
        %v472 = vsub.f32 %v423, %v464
        %v473 = vsub.f32 %v425, %v465
        %v474 = vsub.f32 %v428, %v466
        %v475 = vsub.f32 %v430, %v467
        %v476 = vsub.f32 %v433, %v468
        %v477 = vsub.f32 %v435, %v469
        %v478 = vmul.f32 %v470, %v470
        %v479 = vmul.f32 %v471, %v471
        %v480 = vmul.f32 %v472, %v472
        %v481 = vmul.f32 %v473, %v473
        %v482 = vmul.f32 %v474, %v474
        %v483 = vmul.f32 %v475, %v475
        %v484 = vmul.f32 %v476, %v476
        %v485 = vmul.f32 %v477, %v477
        %486 = vadd.xlane.f32.xlu0 %v478
        %v487 = vpop.xlane.xlu0 %486
        %488 = vadd.xlane.f32.xlu0 %v479
        %v489 = vpop.xlane.xlu0 %488
        %490 = vadd.xlane.f32.xlu0 %v480
        %v491 = vpop.xlane.xlu0 %490
        %492 = vadd.xlane.f32.xlu0 %v481
        %v493 = vpop.xlane.xlu0 %492
        %494 = vadd.xlane.f32.xlu0 %v482
        %v495 = vpop.xlane.xlu0 %494
        %496 = vadd.xlane.f32.xlu0 %v483
        %v497 = vpop.xlane.xlu0 %496
        %498 = vadd.xlane.f32.xlu0 %v484
        %v499 = vpop.xlane.xlu0 %498
        %500 = vadd.xlane.f32.xlu0 %v485
        %v501 = vpop.xlane.xlu0 %500
        %v502 = vmul.f32 %v487, %v461
        %v503 = vmul.f32 %v489, %v461
        %v504 = vmul.f32 %v491, %v461
        %v505 = vmul.f32 %v493, %v461
        %v506 = vmul.f32 %v495, %v461
        %v507 = vmul.f32 %v497, %v461
        %v508 = vmul.f32 %v499, %v461
        %v509 = vmul.f32 %v501, %v461
        %v510 = vadd.f32 %v502, 1e-06
        %v511 = vadd.f32 %v503, 1e-06
        %v512 = vadd.f32 %v504, 1e-06
        %v513 = vadd.f32 %v505, 1e-06
        %v514 = vadd.f32 %v506, 1e-06
        %v515 = vadd.f32 %v507, 1e-06
        %v516 = vadd.f32 %v508, 1e-06
        %v517 = vadd.f32 %v509, 1e-06
        %v518 = vrsqrt.pop %v510
        %v519 = vmul.f32 %v518, %v510
        %v520 = vmul.f32 %v519, %v518
        %v521 = vmul.f32 0.5, %v520
        %v522 = vsub.f32 1.5, %v521
        %v523 = vmul.f32 %v518, %v522
        %vm524 = vweird.f32 %v510
        %vm525 = vweird.f32 %v518
        %vm526 = vmor %vm524, %vm525
        %v527 = vsel %vm526, %v518, %v523
        %v528 = vrsqrt.pop %v511
        %v529 = vmul.f32 %v528, %v511
        %v530 = vmul.f32 %v529, %v528
        %v531 = vmul.f32 0.5, %v530
        %v532 = vsub.f32 1.5, %v531
        %v533 = vmul.f32 %v528, %v532
        %vm534 = vweird.f32 %v511
        %vm535 = vweird.f32 %v528
        %vm536 = vmor %vm534, %vm535
        %v537 = vsel %vm536, %v528, %v533
        %v538 = vrsqrt.pop %v512
        %v539 = vmul.f32 %v538, %v512
        %v540 = vmul.f32 %v539, %v538
        %v541 = vmul.f32 0.5, %v540
        %v542 = vsub.f32 1.5, %v541
        %v543 = vmul.f32 %v538, %v542
        %vm544 = vweird.f32 %v512
        %vm545 = vweird.f32 %v538
        %vm546 = vmor %vm544, %vm545
        %v547 = vsel %vm546, %v538, %v543
        %v548 = vrsqrt.pop %v513
        %v549 = vmul.f32 %v548, %v513
        %v550 = vmul.f32 %v549, %v548
        %v551 = vmul.f32 0.5, %v550
        %v552 = vsub.f32 1.5, %v551
        %v553 = vmul.f32 %v548, %v552
        %vm554 = vweird.f32 %v513
        %vm555 = vweird.f32 %v548
        %vm556 = vmor %vm554, %vm555
        %v557 = vsel %vm556, %v548, %v553
        %v558 = vrsqrt.pop %v514
        %v559 = vmul.f32 %v558, %v514
        %v560 = vmul.f32 %v559, %v558
        %v561 = vmul.f32 0.5, %v560
        %v562 = vsub.f32 1.5, %v561
        %v563 = vmul.f32 %v558, %v562
        %vm564 = vweird.f32 %v514
        %vm565 = vweird.f32 %v558
        %vm566 = vmor %vm564, %vm565
        %v567 = vsel %vm566, %v558, %v563
        %v568 = vrsqrt.pop %v515
        %v569 = vmul.f32 %v568, %v515
        %v570 = vmul.f32 %v569, %v568
        %v571 = vmul.f32 0.5, %v570
        %v572 = vsub.f32 1.5, %v571
        %v573 = vmul.f32 %v568, %v572
        %vm574 = vweird.f32 %v515
        %vm575 = vweird.f32 %v568
        %vm576 = vmor %vm574, %vm575
        %v577 = vsel %vm576, %v568, %v573
        %v578 = vrsqrt.pop %v516
        %v579 = vmul.f32 %v578, %v516
        %v580 = vmul.f32 %v579, %v578
        %v581 = vmul.f32 0.5, %v580
        %v582 = vsub.f32 1.5, %v581
        %v583 = vmul.f32 %v578, %v582
        %vm584 = vweird.f32 %v516
        %vm585 = vweird.f32 %v578
        %vm586 = vmor %vm584, %vm585
        %v587 = vsel %vm586, %v578, %v583
        %v588 = vrsqrt.pop %v517
        %v589 = vmul.f32 %v588, %v517
        %v590 = vmul.f32 %v589, %v588
        %v591 = vmul.f32 0.5, %v590
        %v592 = vsub.f32 1.5, %v591
        %v593 = vmul.f32 %v588, %v592
        %vm594 = vweird.f32 %v517
        %vm595 = vweird.f32 %v588
        %vm596 = vmor %vm594, %vm595
        %v597 = vsel %vm596, %v588, %v593
        %v598 = vmul.f32 %v470, %v527
        %v599 = vmul.f32 %v471, %v537
        %v600 = vmul.f32 %v472, %v547
        %v601 = vmul.f32 %v473, %v557
        %v602 = vmul.f32 %v474, %v567
        %v603 = vmul.f32 %v475, %v577
        %v604 = vmul.f32 %v476, %v587
        %v605 = vmul.f32 %v477, %v597
        %v607 = vperm.slane %v437, 0
        %v609 = vmul.f32 %v598, %v607
        %v610 = vmul.f32 %v599, %v607
        %v611 = vmul.f32 %v600, %v607
        %v612 = vmul.f32 %v601, %v607
        %v613 = vmul.f32 %v602, %v607
        %v614 = vmul.f32 %v603, %v607
        %v615 = vmul.f32 %v604, %v607
        %v616 = vmul.f32 %v605, %v607
        %v618 = vperm.slane %v438, 0
        %v620 = vadd.f32 %v609, %v618
        %v621 = vadd.f32 %v610, %v618
        %v622 = vadd.f32 %v611, %v618
        %v623 = vadd.f32 %v612, %v618
        %v624 = vadd.f32 %v613, %v618
        %v625 = vadd.f32 %v614, %v618
        %v626 = vadd.f32 %v615, %v618
        %v627 = vadd.f32 %v616, %v618
        %628 = vst [vmem:[#allocation2] sm:$0xf] 0
        %629 = vst [vmem:[#allocation2 + $0x4] sm:$0x1] 0
        %s630 = scalar_lea.vmem [#allocation2], 72
        %631 = vst [vmem:[%s630] sm:$0xf] 0
        %632 = vst [vmem:[%s630 + $0x4] sm:$0x1] 0
        %s633 = scalar_lea.vmem [#allocation2], 8
        %vm634 = vcmask 1040384
        %vm635 = vsmask.f32 256
        %vm636 = vmand %vm634, %vm635
        %v637 = vld [vmem:[%s633] sm:$0x1]
        %v638 = vsel %vm636, 0, %v637
        %639 = vst [vmem:[%s633] sm:$0x1] %v638
        %v640 = vld [vmem:[%s633 + $0x8] sm:$0x1]
        %v641 = vsel %vm636, 0, %v640
        %642 = vst [vmem:[%s633 + $0x8] sm:$0x1] %v641
        %v643 = vld [vmem:[%s633 + $0x10] sm:$0x1]
        %v644 = vsel %vm636, 0, %v643
        %645 = vst [vmem:[%s633 + $0x10] sm:$0x1] %v644
        %v646 = vld [vmem:[%s633 + $0x18] sm:$0x1]
        %v647 = vsel %vm636, 0, %v646
        %648 = vst [vmem:[%s633 + $0x18] sm:$0x1] %v647
        %v649 = vld [vmem:[%s633 + $0x20] sm:$0x1]
        %v650 = vsel %vm636, 0, %v649
        %651 = vst [vmem:[%s633 + $0x20] sm:$0x1] %v650
        %v652 = vld [vmem:[%s633 + $0x28] sm:$0x1]
        %v653 = vsel %vm636, 0, %v652
        %654 = vst [vmem:[%s633 + $0x28] sm:$0x1] %v653
        %v655 = vld [vmem:[%s633 + $0x30] sm:$0x1]
        %v656 = vsel %vm636, 0, %v655
        %657 = vst [vmem:[%s633 + $0x30] sm:$0x1] %v656
        %v658 = vld [vmem:[%s633 + $0x38] sm:$0x1]
        %v659 = vsel %vm636, 0, %v658
        %660 = vst [vmem:[%s633 + $0x38] sm:$0x1] %v659
        %vm661 = vsmask.f32 7938
        %vm662 = vmand %vm634, %vm661
        %v663 = vld [vmem:[%s633 + $0x4] sm:$0x1]
        %v664 = vsel %vm662, 0, %v663
        %665 = vst [vmem:[%s633 + $0x4] sm:$0x1] %v664
        %v666 = vld [vmem:[%s633 + $0xc] sm:$0x1]
        %v667 = vsel %vm662, 0, %v666
        %668 = vst [vmem:[%s633 + $0xc] sm:$0x1] %v667
        %v669 = vld [vmem:[%s633 + $0x14] sm:$0x1]
        %v670 = vsel %vm662, 0, %v669
        %671 = vst [vmem:[%s633 + $0x14] sm:$0x1] %v670
        %v672 = vld [vmem:[%s633 + $0x1c] sm:$0x1]
        %v673 = vsel %vm662, 0, %v672
        %674 = vst [vmem:[%s633 + $0x1c] sm:$0x1] %v673
        %v675 = vld [vmem:[%s633 + $0x24] sm:$0x1]
        %v676 = vsel %vm662, 0, %v675
        %677 = vst [vmem:[%s633 + $0x24] sm:$0x1] %v676
        %v678 = vld [vmem:[%s633 + $0x2c] sm:$0x1]
        %v679 = vsel %vm662, 0, %v678
        %680 = vst [vmem:[%s633 + $0x2c] sm:$0x1] %v679
        %v681 = vld [vmem:[%s633 + $0x34] sm:$0x1]
        %v682 = vsel %vm662, 0, %v681
        %683 = vst [vmem:[%s633 + $0x34] sm:$0x1] %v682
        %v684 = vld [vmem:[%s633 + $0x3c] sm:$0x1]
        %v685 = vsel %vm662, 0, %v684
        %686 = vst [vmem:[%s633 + $0x3c] sm:$0x1] %v685
        %v687 = vpack.c.bf16 %v620, %v620
        %v688 = vpack.c.bf16 %v621, %v621
        %v689 = vpack.c.bf16 %v622, %v622
        %v690 = vpack.c.bf16 %v623, %v623
        %v691 = vpack.c.bf16 %v624, %v624
        %v692 = vpack.c.bf16 %v625, %v625
        %v693 = vpack.c.bf16 %v626, %v626
        %v694 = vpack.c.bf16 %v627, %v627
        %v696 = vshrl.u32 %v687, 16
        %v698 = vrot.slane %v696, 7
        %v699 = vshll.u32 %v687, 16
        %v701 = vor.u32 %v698, %v699
        %v702 = vrot.slane %v698, 4
        %v704 = vshrl.u32 %v688, 16
        %v706 = vrot.slane %v704, 7
        %v707 = vshll.u32 %v688, 16
        %v709 = vor.u32 %v706, %v707
        %v710 = vrot.slane %v706, 4
        %v712 = vshrl.u32 %v689, 16
        %v714 = vrot.slane %v712, 7
        %v715 = vshll.u32 %v689, 16
        %v717 = vor.u32 %v714, %v715
        %v718 = vrot.slane %v714, 4
        %v720 = vshrl.u32 %v690, 16
        %v722 = vrot.slane %v720, 7
        %v723 = vshll.u32 %v690, 16
        %v725 = vor.u32 %v722, %v723
        %v726 = vrot.slane %v722, 4
        %v728 = vshrl.u32 %v691, 16
        %v730 = vrot.slane %v728, 7
        %v731 = vshll.u32 %v691, 16
        %v733 = vor.u32 %v730, %v731
        %v734 = vrot.slane %v730, 4
        %v736 = vshrl.u32 %v692, 16
        %v738 = vrot.slane %v736, 7
        %v739 = vshll.u32 %v692, 16
        %v741 = vor.u32 %v738, %v739
        %v742 = vrot.slane %v738, 4
        %v744 = vshrl.u32 %v693, 16
        %v746 = vrot.slane %v744, 7
        %v747 = vshll.u32 %v693, 16
        %v749 = vor.u32 %v746, %v747
        %v750 = vrot.slane %v746, 4
        %v752 = vshrl.u32 %v694, 16
        %v754 = vrot.slane %v752, 7
        %v755 = vshll.u32 %v694, 16
        %v757 = vor.u32 %v754, %v755
        %v758 = vrot.slane %v754, 4
        %vm775 = vcmask 1043456
        %vm776 = vmand %vm775, %vm661
        %v777 = vld [vmem:[%s633] sm:$0xf]
        %v778 = vsel %vm776, %v701, %v777
        %779 = vst [vmem:[%s633] sm:$0xf] %v778
        %v780 = vld [vmem:[%s633 + $0x4] sm:$0x1]
        %v781 = vsel %vm636, %v702, %v780
        %782 = vst [vmem:[%s633 + $0x4] sm:$0x1] %v781
        %v783 = vld [vmem:[%s633 + $0x8] sm:$0xf]
        %v784 = vsel %vm776, %v709, %v783
        %785 = vst [vmem:[%s633 + $0x8] sm:$0xf] %v784
        %v786 = vld [vmem:[%s633 + $0xc] sm:$0x1]
        %v787 = vsel %vm636, %v710, %v786
        %788 = vst [vmem:[%s633 + $0xc] sm:$0x1] %v787
        %v789 = vld [vmem:[%s633 + $0x10] sm:$0xf]
        %v790 = vsel %vm776, %v717, %v789
        %791 = vst [vmem:[%s633 + $0x10] sm:$0xf] %v790
        %v792 = vld [vmem:[%s633 + $0x14] sm:$0x1]
        %v793 = vsel %vm636, %v718, %v792
        %794 = vst [vmem:[%s633 + $0x14] sm:$0x1] %v793
        %v795 = vld [vmem:[%s633 + $0x18] sm:$0xf]
        %v796 = vsel %vm776, %v725, %v795
        %797 = vst [vmem:[%s633 + $0x18] sm:$0xf] %v796
        %v798 = vld [vmem:[%s633 + $0x1c] sm:$0x1]
        %v799 = vsel %vm636, %v726, %v798
        %800 = vst [vmem:[%s633 + $0x1c] sm:$0x1] %v799
        %v801 = vld [vmem:[%s633 + $0x20] sm:$0xf]
        %v802 = vsel %vm776, %v733, %v801
        %803 = vst [vmem:[%s633 + $0x20] sm:$0xf] %v802
        %v804 = vld [vmem:[%s633 + $0x24] sm:$0x1]
        %v805 = vsel %vm636, %v734, %v804
        %806 = vst [vmem:[%s633 + $0x24] sm:$0x1] %v805
        %v807 = vld [vmem:[%s633 + $0x28] sm:$0xf]
        %v808 = vsel %vm776, %v741, %v807
        %809 = vst [vmem:[%s633 + $0x28] sm:$0xf] %v808
        %v810 = vld [vmem:[%s633 + $0x2c] sm:$0x1]
        %v811 = vsel %vm636, %v742, %v810
        %812 = vst [vmem:[%s633 + $0x2c] sm:$0x1] %v811
        %v813 = vld [vmem:[%s633 + $0x30] sm:$0xf]
        %v814 = vsel %vm776, %v749, %v813
        %815 = vst [vmem:[%s633 + $0x30] sm:$0xf] %v814
        %v816 = vld [vmem:[%s633 + $0x34] sm:$0x1]
        %v817 = vsel %vm636, %v750, %v816
        %818 = vst [vmem:[%s633 + $0x34] sm:$0x1] %v817
        %v819 = vld [vmem:[%s633 + $0x38] sm:$0xf]
        %v820 = vsel %vm776, %v757, %v819
        %821 = vst [vmem:[%s633 + $0x38] sm:$0xf] %v820
        %v822 = vld [vmem:[%s633 + $0x3c] sm:$0x1]
        %v823 = vsel %vm636, %v758, %v822
        %824 = vst [vmem:[%s633 + $0x3c] sm:$0x1] %v823
        %v825 = vld [vmem:[#allocation2] sm:$0xf]
        %v826 = vld [vmem:[#allocation2 + $0x8] sm:$0xf]
        %v827 = vld [vmem:[#allocation2 + $0x10] sm:$0xf]
        %v828 = vld [vmem:[#allocation2 + $0x18] sm:$0xf]
        %v829 = vld [vmem:[#allocation2 + $0x20] sm:$0xf]
        %v830 = vld [vmem:[#allocation2 + $0x28] sm:$0xf]
        %v831 = vld [vmem:[#allocation2 + $0x30] sm:$0xf]
        %v832 = vld [vmem:[#allocation2 + $0x38] sm:$0xf]
        %v833 = vld [vmem:[%s4] sm:$0xf]
        %v834 = vld [vmem:[%s4 + $0x4] sm:$0xf]
        %v835 = vld [vmem:[%s4 + $0x8] sm:$0xf]
        %v836 = vld [vmem:[%s4 + $0xc] sm:$0xf]
        %v837 = vld [vmem:[%s4 + $0x10] sm:$0xf]
        %v838 = vld [vmem:[%s4 + $0x14] sm:$0xf]
        %v839 = vld [vmem:[%s4 + $0x18] sm:$0xf]
        %v840 = vld [vmem:[%s4 + $0x1c] sm:$0xf]
        %v841 = vld [vmem:[%s4 + $0x20] sm:$0xf]
        %v842 = vld [vmem:[%s4 + $0x24] sm:$0xf]
        %v843 = vld [vmem:[%s4 + $0x28] sm:$0xf]
        %v844 = vld [vmem:[%s4 + $0x2c] sm:$0xf]
        %v845 = vld [vmem:[%s4 + $0x30] sm:$0xf]
        %v846 = vld [vmem:[%s4 + $0x34] sm:$0xf]
        %v847 = vld [vmem:[%s4 + $0x38] sm:$0xf]
        %v848 = vld [vmem:[%s4 + $0x3c] sm:$0xf]
        %v849 = vld [vmem:[#allocation2 + $0x4] sm:$0x1]
        %v850 = vld [vmem:[#allocation2 + $0xc] sm:$0x1]
        %v851 = vld [vmem:[#allocation2 + $0x14] sm:$0x1]
        %v852 = vld [vmem:[#allocation2 + $0x1c] sm:$0x1]
        %v853 = vld [vmem:[#allocation2 + $0x24] sm:$0x1]
        %v854 = vld [vmem:[#allocation2 + $0x2c] sm:$0x1]
        %v855 = vld [vmem:[#allocation2 + $0x34] sm:$0x1]
        %v856 = vld [vmem:[#allocation2 + $0x3c] sm:$0x1]
        %vm857 = vsmask.f32 3328
        %vm858 = vsmask.f32 7440
        %vm859 = vmor %vm857, %vm858
        %v861 = vshrl.u32 %v825, 16
        %v863 = vrot.slane %v861, 4
        %v864 = vshll.u32 %v825, 16
        %v866 = vrot.slane %v864, 5
        %v867 = vor.u32 %v863, %v866
        %v868 = vrot.slane %v867, 4
        %v870 = vshll.u32 %v849, 16
        %v872 = vrot.slane %v870, 5
        %v873 = vsel %vm859, %v868, %v872
        %v875 = vshrl.u32 %v826, 16
        %v877 = vrot.slane %v875, 4
        %v878 = vshll.u32 %v826, 16
        %v880 = vrot.slane %v878, 5
        %v881 = vor.u32 %v877, %v880
        %v882 = vrot.slane %v881, 4
        %v884 = vshll.u32 %v850, 16
        %v886 = vrot.slane %v884, 5
        %v887 = vsel %vm859, %v882, %v886
        %v889 = vshrl.u32 %v827, 16
        %v891 = vrot.slane %v889, 4
        %v892 = vshll.u32 %v827, 16
        %v894 = vrot.slane %v892, 5
        %v895 = vor.u32 %v891, %v894
        %v896 = vrot.slane %v895, 4
        %v898 = vshll.u32 %v851, 16
        %v900 = vrot.slane %v898, 5
        %v901 = vsel %vm859, %v896, %v900
        %v903 = vshrl.u32 %v828, 16
        %v905 = vrot.slane %v903, 4
        %v906 = vshll.u32 %v828, 16
        %v908 = vrot.slane %v906, 5
        %v909 = vor.u32 %v905, %v908
        %v910 = vrot.slane %v909, 4
        %v912 = vshll.u32 %v852, 16
        %v914 = vrot.slane %v912, 5
        %v915 = vsel %vm859, %v910, %v914
        %v917 = vshrl.u32 %v829, 16
        %v919 = vrot.slane %v917, 4
        %v920 = vshll.u32 %v829, 16
        %v922 = vrot.slane %v920, 5
        %v923 = vor.u32 %v919, %v922
        %v924 = vrot.slane %v923, 4
        %v926 = vshll.u32 %v853, 16
        %v928 = vrot.slane %v926, 5
        %v929 = vsel %vm859, %v924, %v928
        %v931 = vshrl.u32 %v830, 16
        %v933 = vrot.slane %v931, 4
        %v934 = vshll.u32 %v830, 16
        %v936 = vrot.slane %v934, 5
        %v937 = vor.u32 %v933, %v936
        %v938 = vrot.slane %v937, 4
        %v940 = vshll.u32 %v854, 16
        %v942 = vrot.slane %v940, 5
        %v943 = vsel %vm859, %v938, %v942
        %v945 = vshrl.u32 %v831, 16
        %v947 = vrot.slane %v945, 4
        %v948 = vshll.u32 %v831, 16
        %v950 = vrot.slane %v948, 5
        %v951 = vor.u32 %v947, %v950
        %v952 = vrot.slane %v951, 4
        %v954 = vshll.u32 %v855, 16
        %v956 = vrot.slane %v954, 5
        %v957 = vsel %vm859, %v952, %v956
        %v959 = vshrl.u32 %v832, 16
        %v961 = vrot.slane %v959, 4
        %v962 = vshll.u32 %v832, 16
        %v964 = vrot.slane %v962, 5
        %v965 = vor.u32 %v961, %v964
        %v966 = vrot.slane %v965, 4
        %v968 = vshll.u32 %v856, 16
        %v970 = vrot.slane %v968, 5
        %v971 = vsel %vm859, %v966, %v970
        %s972 = scalar_lea.vmem %s4, 64
        %v973 = vld [vmem:[%s972] sm:$0xf]
        %v974 = vld [vmem:[%s972 + $0x4] sm:$0xf]
        %v975 = vld [vmem:[%s972 + $0x8] sm:$0xf]
        %v976 = vld [vmem:[%s972 + $0xc] sm:$0xf]
        %v977 = vld [vmem:[%s972 + $0x10] sm:$0xf]
        %v978 = vld [vmem:[%s972 + $0x14] sm:$0xf]
        %v979 = vld [vmem:[%s972 + $0x18] sm:$0xf]
        %v980 = vld [vmem:[%s972 + $0x1c] sm:$0xf]
        %v981 = vld [vmem:[%s972 + $0x20] sm:$0xf]
        %v982 = vld [vmem:[%s972 + $0x24] sm:$0xf]
        %v983 = vld [vmem:[%s972 + $0x28] sm:$0xf]
        %v984 = vld [vmem:[%s972 + $0x2c] sm:$0xf]
        %v985 = vld [vmem:[%s972 + $0x30] sm:$0xf]
        %v986 = vld [vmem:[%s972 + $0x34] sm:$0xf]
        %v987 = vld [vmem:[%s972 + $0x38] sm:$0xf]
        %v988 = vld [vmem:[%s972 + $0x3c] sm:$0xf]
        %v989 = vunpack.c.l.b16 %v873
        %v990 = vunpack.c.l.b16 %v887
        %v991 = vunpack.c.l.b16 %v901
        %v992 = vunpack.c.l.b16 %v915
        %v993 = vunpack.c.l.b16 %v929
        %v994 = vunpack.c.l.b16 %v943
        %v995 = vunpack.c.l.b16 %v957
        %v996 = vunpack.c.l.b16 %v971
        %v997 = vpack.c.b16 %v990, %v989
        %v998 = vpack.c.b16 %v992, %v991
        %v999 = vpack.c.b16 %v994, %v993
        %v1000 = vpack.c.b16 %v996, %v995
        %v1021 = vunpack.c.l.b16 %v973
        %v1022 = vunpack.c.l.b16 %v974
        %v1023 = vunpack.c.l.b16 %v975
        %v1024 = vunpack.c.l.b16 %v976
        %v1025 = vunpack.c.l.b16 %v977
        %v1026 = vunpack.c.l.b16 %v978
        %v1027 = vunpack.c.l.b16 %v979
        %v1028 = vunpack.c.l.b16 %v980
        %v1029 = vunpack.c.l.b16 %v981
        %v1030 = vunpack.c.l.b16 %v982
        %v1031 = vunpack.c.l.b16 %v983
        %v1032 = vunpack.c.l.b16 %v984
        %v1033 = vunpack.c.l.b16 %v985
        %v1034 = vunpack.c.l.b16 %v986
        %v1035 = vunpack.c.l.b16 %v987
        %v1036 = vunpack.c.l.b16 %v988
        %v1037 = vpack.c.b16 %v1022, %v1021
        %v1038 = vpack.c.b16 %v1024, %v1023
        %v1039 = vpack.c.b16 %v1026, %v1025
        %v1040 = vpack.c.b16 %v1028, %v1027
        %v1041 = vpack.c.b16 %v1030, %v1029
        %v1042 = vpack.c.b16 %v1032, %v1031
        %v1043 = vpack.c.b16 %v1034, %v1033
        %v1044 = vpack.c.b16 %v1036, %v1035
        %1053 = vmatpush.bf16.msra.mxu0 %v1044
        %1054 = vmatpush.bf16.msra.mxu0 %v1043
        %1055 = vmatpush.bf16.msra.mxu0 %v1042
        %1056 = vmatpush.bf16.msra.mxu0 %v1041
        %1057 = vmatpush.bf16.msra.mxu0 %v1040
        %1058 = vmatpush.bf16.msra.mxu0 %v1039
        %1059 = vmatpush.bf16.msra.mxu0 %v1038
        %1060 = vmatpush.bf16.msra.mxu0 %v1037
        %1061 = vmatmul.bf16.gmra.mxu0 %v997
        %v1062 = vpop.f32.mrf.mxu0
        %v1063 = vadd.f32 0.0, %v1062
        %v1064 = vpop.f32.mrf.mxu0
        %v1065 = vadd.f32 0.0, %v1064
        %1066 = vmatmul.bf16.gmra.mxu0 %v998
        %v1067 = vpop.f32.mrf.mxu0
        %v1068 = vadd.f32 0.0, %v1067
        %v1069 = vpop.f32.mrf.mxu0
        %v1070 = vadd.f32 0.0, %v1069
        %1071 = vmatmul.bf16.gmra.mxu0 %v999
        %v1072 = vpop.f32.mrf.mxu0
        %v1073 = vadd.f32 0.0, %v1072
        %v1074 = vpop.f32.mrf.mxu0
        %v1075 = vadd.f32 0.0, %v1074
        %1076 = vmatmul.bf16.gmra.mxu0 %v1000
        %v1077 = vpop.f32.mrf.mxu0
        %v1078 = vadd.f32 0.0, %v1077
        %v1079 = vpop.f32.mrf.mxu0
        %v1080 = vadd.f32 0.0, %v1079
        %1081 = vdwg.mxu0
        %v1090 = vunpack.c.l.b16 %v825
        %v1091 = vunpack.c.l.b16 %v826
        %v1092 = vunpack.c.l.b16 %v827
        %v1093 = vunpack.c.l.b16 %v828
        %v1094 = vunpack.c.l.b16 %v829
        %v1095 = vunpack.c.l.b16 %v830
        %v1096 = vunpack.c.l.b16 %v831
        %v1097 = vunpack.c.l.b16 %v832
        %v1098 = vpack.c.b16 %v1091, %v1090
        %v1099 = vpack.c.b16 %v1093, %v1092
        %v1100 = vpack.c.b16 %v1095, %v1094
        %v1101 = vpack.c.b16 %v1097, %v1096
        %v1122 = vunpack.c.l.b16 %v833
        %v1123 = vunpack.c.l.b16 %v834
        %v1124 = vunpack.c.l.b16 %v835
        %v1125 = vunpack.c.l.b16 %v836
        %v1126 = vunpack.c.l.b16 %v837
        %v1127 = vunpack.c.l.b16 %v838
        %v1128 = vunpack.c.l.b16 %v839
        %v1129 = vunpack.c.l.b16 %v840
        %v1130 = vunpack.c.l.b16 %v841
        %v1131 = vunpack.c.l.b16 %v842
        %v1132 = vunpack.c.l.b16 %v843
        %v1133 = vunpack.c.l.b16 %v844
        %v1134 = vunpack.c.l.b16 %v845
        %v1135 = vunpack.c.l.b16 %v846
        %v1136 = vunpack.c.l.b16 %v847
        %v1137 = vunpack.c.l.b16 %v848
        %v1138 = vpack.c.b16 %v1123, %v1122
        %v1139 = vpack.c.b16 %v1125, %v1124
        %v1140 = vpack.c.b16 %v1127, %v1126
        %v1141 = vpack.c.b16 %v1129, %v1128
        %v1142 = vpack.c.b16 %v1131, %v1130
        %v1143 = vpack.c.b16 %v1133, %v1132
        %v1144 = vpack.c.b16 %v1135, %v1134
        %v1145 = vpack.c.b16 %v1137, %v1136
        %1154 = vmatpush.bf16.msra.mxu0 %v1145
        %1155 = vmatpush.bf16.msra.mxu0 %v1144
        %1156 = vmatpush.bf16.msra.mxu0 %v1143
        %1157 = vmatpush.bf16.msra.mxu0 %v1142
        %1158 = vmatpush.bf16.msra.mxu0 %v1141
        %1159 = vmatpush.bf16.msra.mxu0 %v1140
        %1160 = vmatpush.bf16.msra.mxu0 %v1139
        %1161 = vmatpush.bf16.msra.mxu0 %v1138
        %1162 = vmatmul.bf16.gmra.mxu0 %v1098
        %v1163 = vpop.f32.mrf.mxu0
        %v1164 = vadd.f32 %v1063, %v1163
        %v1165 = vpop.f32.mrf.mxu0
        %v1166 = vadd.f32 %v1065, %v1165
        %1167 = vmatmul.bf16.gmra.mxu0 %v1099
        %v1168 = vpop.f32.mrf.mxu0
        %v1169 = vadd.f32 %v1068, %v1168
        %v1170 = vpop.f32.mrf.mxu0
        %v1171 = vadd.f32 %v1070, %v1170
        %1172 = vmatmul.bf16.gmra.mxu0 %v1100
        %v1173 = vpop.f32.mrf.mxu0
        %v1174 = vadd.f32 %v1073, %v1173
        %v1175 = vpop.f32.mrf.mxu0
        %v1176 = vadd.f32 %v1075, %v1175
        %1177 = vmatmul.bf16.gmra.mxu0 %v1101
        %v1178 = vpop.f32.mrf.mxu0
        %v1179 = vadd.f32 %v1078, %v1178
        %v1180 = vpop.f32.mrf.mxu0
        %v1181 = vadd.f32 %v1080, %v1180
        %1182 = vdwg.mxu0
        %v1183 = vld [vmem:[#allocation2] sm:$0xe]
        %v1184 = vld [vmem:[#allocation2 + $0x8] sm:$0xe]
        %v1185 = vld [vmem:[#allocation2 + $0x10] sm:$0xe]
        %v1186 = vld [vmem:[#allocation2 + $0x18] sm:$0xe]
        %v1187 = vld [vmem:[#allocation2 + $0x20] sm:$0xe]
        %v1188 = vld [vmem:[#allocation2 + $0x28] sm:$0xe]
        %v1189 = vld [vmem:[#allocation2 + $0x30] sm:$0xe]
        %v1190 = vld [vmem:[#allocation2 + $0x38] sm:$0xe]
        %vm1207 = vcmask 1042432
        %vm1208 = vcmask 1046532
        %vm1209 = vmor %vm1207, %vm1208
        %v1210 = vrot.slane %v1183, 5
        %v1211 = vrot.slane %v1210, 4
        %v1212 = vrot.slane %v849, 5
        %v1213 = vsel %vm1209, %v1211, %v1212
        %v1214 = vrot.slane %v1184, 5
        %v1215 = vrot.slane %v1214, 4
        %v1216 = vrot.slane %v850, 5
        %v1217 = vsel %vm1209, %v1215, %v1216
        %v1218 = vrot.slane %v1185, 5
        %v1219 = vrot.slane %v1218, 4
        %v1220 = vrot.slane %v851, 5
        %v1221 = vsel %vm1209, %v1219, %v1220
        %v1222 = vrot.slane %v1186, 5
        %v1223 = vrot.slane %v1222, 4
        %v1224 = vrot.slane %v852, 5
        %v1225 = vsel %vm1209, %v1223, %v1224
        %v1226 = vrot.slane %v1187, 5
        %v1227 = vrot.slane %v1226, 4
        %v1228 = vrot.slane %v853, 5
        %v1229 = vsel %vm1209, %v1227, %v1228
        %v1230 = vrot.slane %v1188, 5
        %v1231 = vrot.slane %v1230, 4
        %v1232 = vrot.slane %v854, 5
        %v1233 = vsel %vm1209, %v1231, %v1232
        %v1234 = vrot.slane %v1189, 5
        %v1235 = vrot.slane %v1234, 4
        %v1236 = vrot.slane %v855, 5
        %v1237 = vsel %vm1209, %v1235, %v1236
        %v1238 = vrot.slane %v1190, 5
        %v1239 = vrot.slane %v1238, 4
        %v1240 = vrot.slane %v856, 5
        %v1241 = vsel %vm1209, %v1239, %v1240
        %s1242 = scalar_lea.vmem %s4, 128
        %v1243 = vld [vmem:[%s1242] sm:$0xf]
        %v1244 = vld [vmem:[%s1242 + $0x4] sm:$0xf]
        %v1245 = vld [vmem:[%s1242 + $0x8] sm:$0xf]
        %v1246 = vld [vmem:[%s1242 + $0xc] sm:$0xf]
        %v1247 = vld [vmem:[%s1242 + $0x10] sm:$0xf]
        %v1248 = vld [vmem:[%s1242 + $0x14] sm:$0xf]
        %v1249 = vld [vmem:[%s1242 + $0x18] sm:$0xf]
        %v1250 = vld [vmem:[%s1242 + $0x1c] sm:$0xf]
        %v1251 = vld [vmem:[%s1242 + $0x20] sm:$0xf]
        %v1252 = vld [vmem:[%s1242 + $0x24] sm:$0xf]
        %v1253 = vld [vmem:[%s1242 + $0x28] sm:$0xf]
        %v1254 = vld [vmem:[%s1242 + $0x2c] sm:$0xf]
        %v1255 = vld [vmem:[%s1242 + $0x30] sm:$0xf]
        %v1256 = vld [vmem:[%s1242 + $0x34] sm:$0xf]
        %v1257 = vld [vmem:[%s1242 + $0x38] sm:$0xf]
        %v1258 = vld [vmem:[%s1242 + $0x3c] sm:$0xf]
        %v1259 = vunpack.c.l.b16 %v1213
        %v1260 = vunpack.c.l.b16 %v1217
        %v1261 = vunpack.c.l.b16 %v1221
        %v1262 = vunpack.c.l.b16 %v1225
        %v1263 = vunpack.c.l.b16 %v1229
        %v1264 = vunpack.c.l.b16 %v1233
        %v1265 = vunpack.c.l.b16 %v1237
        %v1266 = vunpack.c.l.b16 %v1241
        %v1267 = vpack.c.b16 %v1260, %v1259
        %v1268 = vpack.c.b16 %v1262, %v1261
        %v1269 = vpack.c.b16 %v1264, %v1263
        %v1270 = vpack.c.b16 %v1266, %v1265
        %v1291 = vunpack.c.l.b16 %v1243
        %v1292 = vunpack.c.l.b16 %v1244
        %v1293 = vunpack.c.l.b16 %v1245
        %v1294 = vunpack.c.l.b16 %v1246
        %v1295 = vunpack.c.l.b16 %v1247
        %v1296 = vunpack.c.l.b16 %v1248
        %v1297 = vunpack.c.l.b16 %v1249
        %v1298 = vunpack.c.l.b16 %v1250
        %v1299 = vunpack.c.l.b16 %v1251
        %v1300 = vunpack.c.l.b16 %v1252
        %v1301 = vunpack.c.l.b16 %v1253
        %v1302 = vunpack.c.l.b16 %v1254
        %v1303 = vunpack.c.l.b16 %v1255
        %v1304 = vunpack.c.l.b16 %v1256
        %v1305 = vunpack.c.l.b16 %v1257
        %v1306 = vunpack.c.l.b16 %v1258
        %v1307 = vpack.c.b16 %v1292, %v1291
        %v1308 = vpack.c.b16 %v1294, %v1293
        %v1309 = vpack.c.b16 %v1296, %v1295
        %v1310 = vpack.c.b16 %v1298, %v1297
        %v1311 = vpack.c.b16 %v1300, %v1299
        %v1312 = vpack.c.b16 %v1302, %v1301
        %v1313 = vpack.c.b16 %v1304, %v1303
        %v1314 = vpack.c.b16 %v1306, %v1305
        %1323 = vmatpush.bf16.msra.mxu0 %v1314
        %1324 = vmatpush.bf16.msra.mxu0 %v1313
        %1325 = vmatpush.bf16.msra.mxu0 %v1312
        %1326 = vmatpush.bf16.msra.mxu0 %v1311
        %1327 = vmatpush.bf16.msra.mxu0 %v1310
        %1328 = vmatpush.bf16.msra.mxu0 %v1309
        %1329 = vmatpush.bf16.msra.mxu0 %v1308
        %1330 = vmatpush.bf16.msra.mxu0 %v1307
        %1331 = vmatmul.bf16.gmra.mxu0 %v1267
        %v1332 = vpop.f32.mrf.mxu0
        %v1333 = vadd.f32 0.0, %v1332
        %v1334 = vpop.f32.mrf.mxu0
        %v1335 = vadd.f32 0.0, %v1334
        %1336 = vmatmul.bf16.gmra.mxu0 %v1268
        %v1337 = vpop.f32.mrf.mxu0
        %v1338 = vadd.f32 0.0, %v1337
        %v1339 = vpop.f32.mrf.mxu0
        %v1340 = vadd.f32 0.0, %v1339
        %1341 = vmatmul.bf16.gmra.mxu0 %v1269
        %v1342 = vpop.f32.mrf.mxu0
        %v1343 = vadd.f32 0.0, %v1342
        %v1344 = vpop.f32.mrf.mxu0
        %v1345 = vadd.f32 0.0, %v1344
        %1346 = vmatmul.bf16.gmra.mxu0 %v1270
        %v1347 = vpop.f32.mrf.mxu0
        %v1348 = vadd.f32 0.0, %v1347
        %v1349 = vpop.f32.mrf.mxu0
        %v1350 = vadd.f32 0.0, %v1349
        %1351 = vdwg.mxu0
        %v1352 = vadd.f32 %v1164, %v1333
        %v1353 = vadd.f32 %v1166, %v1335
        %v1354 = vadd.f32 %v1169, %v1338
        %v1355 = vadd.f32 %v1171, %v1340
        %v1356 = vadd.f32 %v1174, %v1343
        %v1357 = vadd.f32 %v1176, %v1345
        %v1358 = vadd.f32 %v1179, %v1348
        %v1359 = vadd.f32 %v1181, %v1350
        %v1360 = vld [vmem:[%s633] sm:$0xf]
        %v1361 = vld [vmem:[%s633 + $0x8] sm:$0xf]
        %v1362 = vld [vmem:[%s633 + $0x10] sm:$0xf]
        %v1363 = vld [vmem:[%s633 + $0x18] sm:$0xf]
        %v1364 = vld [vmem:[%s633 + $0x20] sm:$0xf]
        %v1365 = vld [vmem:[%s633 + $0x28] sm:$0xf]
        %v1366 = vld [vmem:[%s633 + $0x30] sm:$0xf]
        %v1367 = vld [vmem:[%s633 + $0x38] sm:$0xf]
        %s1368 = scalar_lea.vmem %s4, 192
        %v1369 = vld [vmem:[%s1368] sm:$0xf]
        %v1370 = vld [vmem:[%s1368 + $0x4] sm:$0xf]
        %v1371 = vld [vmem:[%s1368 + $0x8] sm:$0xf]
        %v1372 = vld [vmem:[%s1368 + $0xc] sm:$0xf]
        %v1373 = vld [vmem:[%s1368 + $0x10] sm:$0xf]
        %v1374 = vld [vmem:[%s1368 + $0x14] sm:$0xf]
        %v1375 = vld [vmem:[%s1368 + $0x18] sm:$0xf]
        %v1376 = vld [vmem:[%s1368 + $0x1c] sm:$0xf]
        %v1377 = vld [vmem:[%s1368 + $0x20] sm:$0xf]
        %v1378 = vld [vmem:[%s1368 + $0x24] sm:$0xf]
        %v1379 = vld [vmem:[%s1368 + $0x28] sm:$0xf]
        %v1380 = vld [vmem:[%s1368 + $0x2c] sm:$0xf]
        %v1381 = vld [vmem:[%s1368 + $0x30] sm:$0xf]
        %v1382 = vld [vmem:[%s1368 + $0x34] sm:$0xf]
        %v1383 = vld [vmem:[%s1368 + $0x38] sm:$0xf]
        %v1384 = vld [vmem:[%s1368 + $0x3c] sm:$0xf]
        %v1393 = vunpack.c.l.b16 %v1360
        %v1394 = vunpack.c.l.b16 %v1361
        %v1395 = vunpack.c.l.b16 %v1362
        %v1396 = vunpack.c.l.b16 %v1363
        %v1397 = vunpack.c.l.b16 %v1364
        %v1398 = vunpack.c.l.b16 %v1365
        %v1399 = vunpack.c.l.b16 %v1366
        %v1400 = vunpack.c.l.b16 %v1367
        %v1401 = vpack.c.b16 %v1394, %v1393
        %v1402 = vpack.c.b16 %v1396, %v1395
        %v1403 = vpack.c.b16 %v1398, %v1397
        %v1404 = vpack.c.b16 %v1400, %v1399
        %v1425 = vunpack.c.l.b16 %v1369
        %v1426 = vunpack.c.l.b16 %v1370
        %v1427 = vunpack.c.l.b16 %v1371
        %v1428 = vunpack.c.l.b16 %v1372
        %v1429 = vunpack.c.l.b16 %v1373
        %v1430 = vunpack.c.l.b16 %v1374
        %v1431 = vunpack.c.l.b16 %v1375
        %v1432 = vunpack.c.l.b16 %v1376
        %v1433 = vunpack.c.l.b16 %v1377
        %v1434 = vunpack.c.l.b16 %v1378
        %v1435 = vunpack.c.l.b16 %v1379
        %v1436 = vunpack.c.l.b16 %v1380
        %v1437 = vunpack.c.l.b16 %v1381
        %v1438 = vunpack.c.l.b16 %v1382
        %v1439 = vunpack.c.l.b16 %v1383
        %v1440 = vunpack.c.l.b16 %v1384
        %v1441 = vpack.c.b16 %v1426, %v1425
        %v1442 = vpack.c.b16 %v1428, %v1427
        %v1443 = vpack.c.b16 %v1430, %v1429
        %v1444 = vpack.c.b16 %v1432, %v1431
        %v1445 = vpack.c.b16 %v1434, %v1433
        %v1446 = vpack.c.b16 %v1436, %v1435
        %v1447 = vpack.c.b16 %v1438, %v1437
        %v1448 = vpack.c.b16 %v1440, %v1439
        %1457 = vmatpush.bf16.msra.mxu0 %v1448
        %1458 = vmatpush.bf16.msra.mxu0 %v1447
        %1459 = vmatpush.bf16.msra.mxu0 %v1446
        %1460 = vmatpush.bf16.msra.mxu0 %v1445
        %1461 = vmatpush.bf16.msra.mxu0 %v1444
        %1462 = vmatpush.bf16.msra.mxu0 %v1443
        %1463 = vmatpush.bf16.msra.mxu0 %v1442
        %1464 = vmatpush.bf16.msra.mxu0 %v1441
        %1465 = vmatmul.bf16.gmra.mxu0 %v1401
        %v1466 = vpop.f32.mrf.mxu0
        %v1467 = vadd.f32 0.0, %v1466
        %v1468 = vpop.f32.mrf.mxu0
        %v1469 = vadd.f32 0.0, %v1468
        %1470 = vmatmul.bf16.gmra.mxu0 %v1402
        %v1471 = vpop.f32.mrf.mxu0
        %v1472 = vadd.f32 0.0, %v1471
        %v1473 = vpop.f32.mrf.mxu0
        %v1474 = vadd.f32 0.0, %v1473
        %1475 = vmatmul.bf16.gmra.mxu0 %v1403
        %v1476 = vpop.f32.mrf.mxu0
        %v1477 = vadd.f32 0.0, %v1476
        %v1478 = vpop.f32.mrf.mxu0
        %v1479 = vadd.f32 0.0, %v1478
        %1480 = vmatmul.bf16.gmra.mxu0 %v1404
        %v1481 = vpop.f32.mrf.mxu0
        %v1482 = vadd.f32 0.0, %v1481
        %v1483 = vpop.f32.mrf.mxu0
        %v1484 = vadd.f32 0.0, %v1483
        %1485 = vdwg.mxu0
        %v1486 = vadd.f32 %v1352, %v1467
        %v1487 = vadd.f32 %v1353, %v1469
        %v1488 = vadd.f32 %v1354, %v1472
        %v1489 = vadd.f32 %v1355, %v1474
        %v1490 = vadd.f32 %v1356, %v1477
        %v1491 = vadd.f32 %v1357, %v1479
        %v1492 = vadd.f32 %v1358, %v1482
        %v1493 = vadd.f32 %v1359, %v1484
        %v1494 = vld [vmem:[%s633] sm:$0xf]
        %v1495 = vld [vmem:[%s633 + $0x4] sm:$0x1]
        %v1496 = vld [vmem:[%s633 + $0x8] sm:$0xf]
        %v1497 = vld [vmem:[%s633 + $0xc] sm:$0x1]
        %v1498 = vld [vmem:[%s633 + $0x10] sm:$0xf]
        %v1499 = vld [vmem:[%s633 + $0x14] sm:$0x1]
        %v1500 = vld [vmem:[%s633 + $0x18] sm:$0xf]
        %v1501 = vld [vmem:[%s633 + $0x1c] sm:$0x1]
        %v1502 = vld [vmem:[%s633 + $0x20] sm:$0xf]
        %v1503 = vld [vmem:[%s633 + $0x24] sm:$0x1]
        %v1504 = vld [vmem:[%s633 + $0x28] sm:$0xf]
        %v1505 = vld [vmem:[%s633 + $0x2c] sm:$0x1]
        %v1506 = vld [vmem:[%s633 + $0x30] sm:$0xf]
        %v1507 = vld [vmem:[%s633 + $0x34] sm:$0x1]
        %v1508 = vld [vmem:[%s633 + $0x38] sm:$0xf]
        %v1509 = vld [vmem:[%s633 + $0x3c] sm:$0x1]
        %v1511 = vshrl.u32 %v1494, 16
        %v1513 = vrot.slane %v1511, 4
        %v1514 = vshll.u32 %v1494, 16
        %v1516 = vrot.slane %v1514, 5
        %v1517 = vor.u32 %v1513, %v1516
        %v1518 = vrot.slane %v1517, 4
        %v1520 = vshll.u32 %v1495, 16
        %v1522 = vrot.slane %v1520, 5
        %v1523 = vsel %vm859, %v1518, %v1522
        %v1525 = vshrl.u32 %v1496, 16
        %v1527 = vrot.slane %v1525, 4
        %v1528 = vshll.u32 %v1496, 16
        %v1530 = vrot.slane %v1528, 5
        %v1531 = vor.u32 %v1527, %v1530
        %v1532 = vrot.slane %v1531, 4
        %v1534 = vshll.u32 %v1497, 16
        %v1536 = vrot.slane %v1534, 5
        %v1537 = vsel %vm859, %v1532, %v1536
        %v1539 = vshrl.u32 %v1498, 16
        %v1541 = vrot.slane %v1539, 4
        %v1542 = vshll.u32 %v1498, 16
        %v1544 = vrot.slane %v1542, 5
        %v1545 = vor.u32 %v1541, %v1544
        %v1546 = vrot.slane %v1545, 4
        %v1548 = vshll.u32 %v1499, 16
        %v1550 = vrot.slane %v1548, 5
        %v1551 = vsel %vm859, %v1546, %v1550
        %v1553 = vshrl.u32 %v1500, 16
        %v1555 = vrot.slane %v1553, 4
        %v1556 = vshll.u32 %v1500, 16
        %v1558 = vrot.slane %v1556, 5
        %v1559 = vor.u32 %v1555, %v1558
        %v1560 = vrot.slane %v1559, 4
        %v1562 = vshll.u32 %v1501, 16
        %v1564 = vrot.slane %v1562, 5
        %v1565 = vsel %vm859, %v1560, %v1564
        %v1567 = vshrl.u32 %v1502, 16
        %v1569 = vrot.slane %v1567, 4
        %v1570 = vshll.u32 %v1502, 16
        %v1572 = vrot.slane %v1570, 5
        %v1573 = vor.u32 %v1569, %v1572
        %v1574 = vrot.slane %v1573, 4
        %v1576 = vshll.u32 %v1503, 16
        %v1578 = vrot.slane %v1576, 5
        %v1579 = vsel %vm859, %v1574, %v1578
        %v1581 = vshrl.u32 %v1504, 16
        %v1583 = vrot.slane %v1581, 4
        %v1584 = vshll.u32 %v1504, 16
        %v1586 = vrot.slane %v1584, 5
        %v1587 = vor.u32 %v1583, %v1586
        %v1588 = vrot.slane %v1587, 4
        %v1590 = vshll.u32 %v1505, 16
        %v1592 = vrot.slane %v1590, 5
        %v1593 = vsel %vm859, %v1588, %v1592
        %v1595 = vshrl.u32 %v1506, 16
        %v1597 = vrot.slane %v1595, 4
        %v1598 = vshll.u32 %v1506, 16
        %v1600 = vrot.slane %v1598, 5
        %v1601 = vor.u32 %v1597, %v1600
        %v1602 = vrot.slane %v1601, 4
        %v1604 = vshll.u32 %v1507, 16
        %v1606 = vrot.slane %v1604, 5
        %v1607 = vsel %vm859, %v1602, %v1606
        %v1609 = vshrl.u32 %v1508, 16
        %v1611 = vrot.slane %v1609, 4
        %v1612 = vshll.u32 %v1508, 16
        %v1614 = vrot.slane %v1612, 5
        %v1615 = vor.u32 %v1611, %v1614
        %v1616 = vrot.slane %v1615, 4
        %v1618 = vshll.u32 %v1509, 16
        %v1620 = vrot.slane %v1618, 5
        %v1621 = vsel %vm859, %v1616, %v1620
        %s1622 = scalar_lea.vmem %s4, 256
        %v1623 = vld [vmem:[%s1622] sm:$0xf]
        %v1624 = vld [vmem:[%s1622 + $0x4] sm:$0xf]
        %v1625 = vld [vmem:[%s1622 + $0x8] sm:$0xf]
        %v1626 = vld [vmem:[%s1622 + $0xc] sm:$0xf]
        %v1627 = vld [vmem:[%s1622 + $0x10] sm:$0xf]
        %v1628 = vld [vmem:[%s1622 + $0x14] sm:$0xf]
        %v1629 = vld [vmem:[%s1622 + $0x18] sm:$0xf]
        %v1630 = vld [vmem:[%s1622 + $0x1c] sm:$0xf]
        %v1631 = vld [vmem:[%s1622 + $0x20] sm:$0xf]
        %v1632 = vld [vmem:[%s1622 + $0x24] sm:$0xf]
        %v1633 = vld [vmem:[%s1622 + $0x28] sm:$0xf]
        %v1634 = vld [vmem:[%s1622 + $0x2c] sm:$0xf]
        %v1635 = vld [vmem:[%s1622 + $0x30] sm:$0xf]
        %v1636 = vld [vmem:[%s1622 + $0x34] sm:$0xf]
        %v1637 = vld [vmem:[%s1622 + $0x38] sm:$0xf]
        %v1638 = vld [vmem:[%s1622 + $0x3c] sm:$0xf]
        %v1639 = vunpack.c.l.b16 %v1523
        %v1640 = vunpack.c.l.b16 %v1537
        %v1641 = vunpack.c.l.b16 %v1551
        %v1642 = vunpack.c.l.b16 %v1565
        %v1643 = vunpack.c.l.b16 %v1579
        %v1644 = vunpack.c.l.b16 %v1593
        %v1645 = vunpack.c.l.b16 %v1607
        %v1646 = vunpack.c.l.b16 %v1621
        %v1647 = vpack.c.b16 %v1640, %v1639
        %v1648 = vpack.c.b16 %v1642, %v1641
        %v1649 = vpack.c.b16 %v1644, %v1643
        %v1650 = vpack.c.b16 %v1646, %v1645
        %v1671 = vunpack.c.l.b16 %v1623
        %v1672 = vunpack.c.l.b16 %v1624
        %v1673 = vunpack.c.l.b16 %v1625
        %v1674 = vunpack.c.l.b16 %v1626
        %v1675 = vunpack.c.l.b16 %v1627
        %v1676 = vunpack.c.l.b16 %v1628
        %v1677 = vunpack.c.l.b16 %v1629
        %v1678 = vunpack.c.l.b16 %v1630
        %v1679 = vunpack.c.l.b16 %v1631
        %v1680 = vunpack.c.l.b16 %v1632
        %v1681 = vunpack.c.l.b16 %v1633
        %v1682 = vunpack.c.l.b16 %v1634
        %v1683 = vunpack.c.l.b16 %v1635
        %v1684 = vunpack.c.l.b16 %v1636
        %v1685 = vunpack.c.l.b16 %v1637
        %v1686 = vunpack.c.l.b16 %v1638
        %v1687 = vpack.c.b16 %v1672, %v1671
        %v1688 = vpack.c.b16 %v1674, %v1673
        %v1689 = vpack.c.b16 %v1676, %v1675
        %v1690 = vpack.c.b16 %v1678, %v1677
        %v1691 = vpack.c.b16 %v1680, %v1679
        %v1692 = vpack.c.b16 %v1682, %v1681
        %v1693 = vpack.c.b16 %v1684, %v1683
        %v1694 = vpack.c.b16 %v1686, %v1685
        %1703 = vmatpush.bf16.msra.mxu0 %v1694
        %1704 = vmatpush.bf16.msra.mxu0 %v1693
        %1705 = vmatpush.bf16.msra.mxu0 %v1692
        %1706 = vmatpush.bf16.msra.mxu0 %v1691
        %1707 = vmatpush.bf16.msra.mxu0 %v1690
        %1708 = vmatpush.bf16.msra.mxu0 %v1689
        %1709 = vmatpush.bf16.msra.mxu0 %v1688
        %1710 = vmatpush.bf16.msra.mxu0 %v1687
        %1711 = vmatmul.bf16.gmra.mxu0 %v1647
        %v1712 = vpop.f32.mrf.mxu0
        %v1713 = vadd.f32 0.0, %v1712
        %v1714 = vpop.f32.mrf.mxu0
        %v1715 = vadd.f32 0.0, %v1714
        %1716 = vmatmul.bf16.gmra.mxu0 %v1648
        %v1717 = vpop.f32.mrf.mxu0
        %v1718 = vadd.f32 0.0, %v1717
        %v1719 = vpop.f32.mrf.mxu0
        %v1720 = vadd.f32 0.0, %v1719
        %1721 = vmatmul.bf16.gmra.mxu0 %v1649
        %v1722 = vpop.f32.mrf.mxu0
        %v1723 = vadd.f32 0.0, %v1722
        %v1724 = vpop.f32.mrf.mxu0
        %v1725 = vadd.f32 0.0, %v1724
        %1726 = vmatmul.bf16.gmra.mxu0 %v1650
        %v1727 = vpop.f32.mrf.mxu0
        %v1728 = vadd.f32 0.0, %v1727
        %v1729 = vpop.f32.mrf.mxu0
        %v1730 = vadd.f32 0.0, %v1729
        %1731 = vdwg.mxu0
        %v1732 = vadd.f32 %v1486, %v1713
        %v1733 = vadd.f32 %v1487, %v1715
        %v1734 = vadd.f32 %v1488, %v1718
        %v1735 = vadd.f32 %v1489, %v1720
        %v1736 = vadd.f32 %v1490, %v1723
        %v1737 = vadd.f32 %v1491, %v1725
        %v1738 = vadd.f32 %v1492, %v1728
        %v1739 = vadd.f32 %v1493, %v1730
        %v1740 = vld [vmem:[%s633] sm:$0xe]
        %v1741 = vld [vmem:[%s633 + $0x8] sm:$0xe]
        %v1742 = vld [vmem:[%s633 + $0x10] sm:$0xe]
        %v1743 = vld [vmem:[%s633 + $0x18] sm:$0xe]
        %v1744 = vld [vmem:[%s633 + $0x20] sm:$0xe]
        %v1745 = vld [vmem:[%s633 + $0x28] sm:$0xe]
        %v1746 = vld [vmem:[%s633 + $0x30] sm:$0xe]
        %v1747 = vld [vmem:[%s633 + $0x38] sm:$0xe]
        %v1764 = vrot.slane %v1740, 5
        %v1765 = vrot.slane %v1764, 4
        %v1766 = vrot.slane %v1495, 5
        %v1767 = vsel %vm1209, %v1765, %v1766
        %v1768 = vrot.slane %v1741, 5
        %v1769 = vrot.slane %v1768, 4
        %v1770 = vrot.slane %v1497, 5
        %v1771 = vsel %vm1209, %v1769, %v1770
        %v1772 = vrot.slane %v1742, 5
        %v1773 = vrot.slane %v1772, 4
        %v1774 = vrot.slane %v1499, 5
        %v1775 = vsel %vm1209, %v1773, %v1774
        %v1776 = vrot.slane %v1743, 5
        %v1777 = vrot.slane %v1776, 4
        %v1778 = vrot.slane %v1501, 5
        %v1779 = vsel %vm1209, %v1777, %v1778
        %v1780 = vrot.slane %v1744, 5
        %v1781 = vrot.slane %v1780, 4
        %v1782 = vrot.slane %v1503, 5
        %v1783 = vsel %vm1209, %v1781, %v1782
        %v1784 = vrot.slane %v1745, 5
        %v1785 = vrot.slane %v1784, 4
        %v1786 = vrot.slane %v1505, 5
        %v1787 = vsel %vm1209, %v1785, %v1786
        %v1788 = vrot.slane %v1746, 5
        %v1789 = vrot.slane %v1788, 4
        %v1790 = vrot.slane %v1507, 5
        %v1791 = vsel %vm1209, %v1789, %v1790
        %v1792 = vrot.slane %v1747, 5
        %v1793 = vrot.slane %v1792, 4
        %v1794 = vrot.slane %v1509, 5
        %v1795 = vsel %vm1209, %v1793, %v1794
        %s1796 = scalar_lea.vmem %s4, 320
        %v1797 = vld [vmem:[%s1796] sm:$0xf]
        %v1798 = vld [vmem:[%s1796 + $0x4] sm:$0xf]
        %v1799 = vld [vmem:[%s1796 + $0x8] sm:$0xf]
        %v1800 = vld [vmem:[%s1796 + $0xc] sm:$0xf]
        %v1801 = vld [vmem:[%s1796 + $0x10] sm:$0xf]
        %v1802 = vld [vmem:[%s1796 + $0x14] sm:$0xf]
        %v1803 = vld [vmem:[%s1796 + $0x18] sm:$0xf]
        %v1804 = vld [vmem:[%s1796 + $0x1c] sm:$0xf]
        %v1805 = vld [vmem:[%s1796 + $0x20] sm:$0xf]
        %v1806 = vld [vmem:[%s1796 + $0x24] sm:$0xf]
        %v1807 = vld [vmem:[%s1796 + $0x28] sm:$0xf]
        %v1808 = vld [vmem:[%s1796 + $0x2c] sm:$0xf]
        %v1809 = vld [vmem:[%s1796 + $0x30] sm:$0xf]
        %v1810 = vld [vmem:[%s1796 + $0x34] sm:$0xf]
        %v1811 = vld [vmem:[%s1796 + $0x38] sm:$0xf]
        %v1812 = vld [vmem:[%s1796 + $0x3c] sm:$0xf]
        %v1813 = vunpack.c.l.b16 %v1767
        %v1814 = vunpack.c.l.b16 %v1771
        %v1815 = vunpack.c.l.b16 %v1775
        %v1816 = vunpack.c.l.b16 %v1779
        %v1817 = vunpack.c.l.b16 %v1783
        %v1818 = vunpack.c.l.b16 %v1787
        %v1819 = vunpack.c.l.b16 %v1791
        %v1820 = vunpack.c.l.b16 %v1795
        %v1821 = vpack.c.b16 %v1814, %v1813
        %v1822 = vpack.c.b16 %v1816, %v1815
        %v1823 = vpack.c.b16 %v1818, %v1817
        %v1824 = vpack.c.b16 %v1820, %v1819
        %v1845 = vunpack.c.l.b16 %v1797
        %v1846 = vunpack.c.l.b16 %v1798
        %v1847 = vunpack.c.l.b16 %v1799
        %v1848 = vunpack.c.l.b16 %v1800
        %v1849 = vunpack.c.l.b16 %v1801
        %v1850 = vunpack.c.l.b16 %v1802
        %v1851 = vunpack.c.l.b16 %v1803
        %v1852 = vunpack.c.l.b16 %v1804
        %v1853 = vunpack.c.l.b16 %v1805
        %v1854 = vunpack.c.l.b16 %v1806
        %v1855 = vunpack.c.l.b16 %v1807
        %v1856 = vunpack.c.l.b16 %v1808
        %v1857 = vunpack.c.l.b16 %v1809
        %v1858 = vunpack.c.l.b16 %v1810
        %v1859 = vunpack.c.l.b16 %v1811
        %v1860 = vunpack.c.l.b16 %v1812
        %v1861 = vpack.c.b16 %v1846, %v1845
        %v1862 = vpack.c.b16 %v1848, %v1847
        %v1863 = vpack.c.b16 %v1850, %v1849
        %v1864 = vpack.c.b16 %v1852, %v1851
        %v1865 = vpack.c.b16 %v1854, %v1853
        %v1866 = vpack.c.b16 %v1856, %v1855
        %v1867 = vpack.c.b16 %v1858, %v1857
        %v1868 = vpack.c.b16 %v1860, %v1859
        %1877 = vmatpush.bf16.msra.mxu0 %v1868
        %1878 = vmatpush.bf16.msra.mxu0 %v1867
        %1879 = vmatpush.bf16.msra.mxu0 %v1866
        %1880 = vmatpush.bf16.msra.mxu0 %v1865
        %1881 = vmatpush.bf16.msra.mxu0 %v1864
        %1882 = vmatpush.bf16.msra.mxu0 %v1863
        %1883 = vmatpush.bf16.msra.mxu0 %v1862
        %1884 = vmatpush.bf16.msra.mxu0 %v1861
        %1885 = vmatmul.bf16.gmra.mxu0 %v1821
        %v1886 = vpop.f32.mrf.mxu0
        %v1887 = vadd.f32 0.0, %v1886
        %v1888 = vpop.f32.mrf.mxu0
        %v1889 = vadd.f32 0.0, %v1888
        %1890 = vmatmul.bf16.gmra.mxu0 %v1822
        %v1891 = vpop.f32.mrf.mxu0
        %v1892 = vadd.f32 0.0, %v1891
        %v1893 = vpop.f32.mrf.mxu0
        %v1894 = vadd.f32 0.0, %v1893
        %1895 = vmatmul.bf16.gmra.mxu0 %v1823
        %v1896 = vpop.f32.mrf.mxu0
        %v1897 = vadd.f32 0.0, %v1896
        %v1898 = vpop.f32.mrf.mxu0
        %v1899 = vadd.f32 0.0, %v1898
        %1900 = vmatmul.bf16.gmra.mxu0 %v1824
        %v1901 = vpop.f32.mrf.mxu0
        %v1902 = vadd.f32 0.0, %v1901
        %v1903 = vpop.f32.mrf.mxu0
        %v1904 = vadd.f32 0.0, %v1903
        %1905 = vdwg.mxu0
        %v1906 = vadd.f32 %v1732, %v1887
        %v1907 = vadd.f32 %v1733, %v1889
        %v1908 = vadd.f32 %v1734, %v1892
        %v1909 = vadd.f32 %v1735, %v1894
        %v1910 = vadd.f32 %v1736, %v1897
        %v1911 = vadd.f32 %v1737, %v1899
        %v1912 = vadd.f32 %v1738, %v1902
        %v1913 = vadd.f32 %v1739, %v1904
        %s1914 = scalar_lea.vmem [#allocation2], 16
        %v1915 = vld [vmem:[%s1914] sm:$0xf]
        %v1916 = vld [vmem:[%s1914 + $0x8] sm:$0xf]
        %v1917 = vld [vmem:[%s1914 + $0x10] sm:$0xf]
        %v1918 = vld [vmem:[%s1914 + $0x18] sm:$0xf]
        %v1919 = vld [vmem:[%s1914 + $0x20] sm:$0xf]
        %v1920 = vld [vmem:[%s1914 + $0x28] sm:$0xf]
        %v1921 = vld [vmem:[%s1914 + $0x30] sm:$0xf]
        %v1922 = vld [vmem:[%s1914 + $0x38] sm:$0xf]
        %s1923 = scalar_lea.vmem %s4, 384
        %v1924 = vld [vmem:[%s1923] sm:$0xf]
        %v1925 = vld [vmem:[%s1923 + $0x4] sm:$0xf]
        %v1926 = vld [vmem:[%s1923 + $0x8] sm:$0xf]
        %v1927 = vld [vmem:[%s1923 + $0xc] sm:$0xf]
        %v1928 = vld [vmem:[%s1923 + $0x10] sm:$0xf]
        %v1929 = vld [vmem:[%s1923 + $0x14] sm:$0xf]
        %v1930 = vld [vmem:[%s1923 + $0x18] sm:$0xf]
        %v1931 = vld [vmem:[%s1923 + $0x1c] sm:$0xf]
        %v1932 = vld [vmem:[%s1923 + $0x20] sm:$0xf]
        %v1933 = vld [vmem:[%s1923 + $0x24] sm:$0xf]
        %v1934 = vld [vmem:[%s1923 + $0x28] sm:$0xf]
        %v1935 = vld [vmem:[%s1923 + $0x2c] sm:$0xf]
        %v1936 = vld [vmem:[%s1923 + $0x30] sm:$0xf]
        %v1937 = vld [vmem:[%s1923 + $0x34] sm:$0xf]
        %v1938 = vld [vmem:[%s1923 + $0x38] sm:$0xf]
        %v1939 = vld [vmem:[%s1923 + $0x3c] sm:$0xf]
        %v1948 = vunpack.c.l.b16 %v1915
        %v1949 = vunpack.c.l.b16 %v1916
        %v1950 = vunpack.c.l.b16 %v1917
        %v1951 = vunpack.c.l.b16 %v1918
        %v1952 = vunpack.c.l.b16 %v1919
        %v1953 = vunpack.c.l.b16 %v1920
        %v1954 = vunpack.c.l.b16 %v1921
        %v1955 = vunpack.c.l.b16 %v1922
        %v1956 = vpack.c.b16 %v1949, %v1948
        %v1957 = vpack.c.b16 %v1951, %v1950
        %v1958 = vpack.c.b16 %v1953, %v1952
        %v1959 = vpack.c.b16 %v1955, %v1954
        %v1980 = vunpack.c.l.b16 %v1924
        %v1981 = vunpack.c.l.b16 %v1925
        %v1982 = vunpack.c.l.b16 %v1926
        %v1983 = vunpack.c.l.b16 %v1927
        %v1984 = vunpack.c.l.b16 %v1928
        %v1985 = vunpack.c.l.b16 %v1929
        %v1986 = vunpack.c.l.b16 %v1930
        %v1987 = vunpack.c.l.b16 %v1931
        %v1988 = vunpack.c.l.b16 %v1932
        %v1989 = vunpack.c.l.b16 %v1933
        %v1990 = vunpack.c.l.b16 %v1934
        %v1991 = vunpack.c.l.b16 %v1935
        %v1992 = vunpack.c.l.b16 %v1936
        %v1993 = vunpack.c.l.b16 %v1937
        %v1994 = vunpack.c.l.b16 %v1938
        %v1995 = vunpack.c.l.b16 %v1939
        %v1996 = vpack.c.b16 %v1981, %v1980
        %v1997 = vpack.c.b16 %v1983, %v1982
        %v1998 = vpack.c.b16 %v1985, %v1984
        %v1999 = vpack.c.b16 %v1987, %v1986
        %v2000 = vpack.c.b16 %v1989, %v1988
        %v2001 = vpack.c.b16 %v1991, %v1990
        %v2002 = vpack.c.b16 %v1993, %v1992
        %v2003 = vpack.c.b16 %v1995, %v1994
        %2012 = vmatpush.bf16.msra.mxu0 %v2003
        %2013 = vmatpush.bf16.msra.mxu0 %v2002
        %2014 = vmatpush.bf16.msra.mxu0 %v2001
        %2015 = vmatpush.bf16.msra.mxu0 %v2000
        %2016 = vmatpush.bf16.msra.mxu0 %v1999
        %2017 = vmatpush.bf16.msra.mxu0 %v1998
        %2018 = vmatpush.bf16.msra.mxu0 %v1997
        %2019 = vmatpush.bf16.msra.mxu0 %v1996
        %2020 = vmatmul.bf16.gmra.mxu0 %v1956
        %v2021 = vpop.f32.mrf.mxu0
        %v2022 = vadd.f32 0.0, %v2021
        %v2023 = vpop.f32.mrf.mxu0
        %v2024 = vadd.f32 0.0, %v2023
        %2025 = vmatmul.bf16.gmra.mxu0 %v1957
        %v2026 = vpop.f32.mrf.mxu0
        %v2027 = vadd.f32 0.0, %v2026
        %v2028 = vpop.f32.mrf.mxu0
        %v2029 = vadd.f32 0.0, %v2028
        %2030 = vmatmul.bf16.gmra.mxu0 %v1958
        %v2031 = vpop.f32.mrf.mxu0
        %v2032 = vadd.f32 0.0, %v2031
        %v2033 = vpop.f32.mrf.mxu0
        %v2034 = vadd.f32 0.0, %v2033
        %2035 = vmatmul.bf16.gmra.mxu0 %v1959
        %v2036 = vpop.f32.mrf.mxu0
        %v2037 = vadd.f32 0.0, %v2036
        %v2038 = vpop.f32.mrf.mxu0
        %v2039 = vadd.f32 0.0, %v2038
        %2040 = vdwg.mxu0
        %v2041 = vadd.f32 %v1906, %v2022
        %v2042 = vadd.f32 %v1907, %v2024
        %v2043 = vadd.f32 %v1908, %v2027
        %v2044 = vadd.f32 %v1909, %v2029
        %v2045 = vadd.f32 %v1910, %v2032
        %v2046 = vadd.f32 %v1911, %v2034
        %v2047 = vadd.f32 %v1912, %v2037
        %v2048 = vadd.f32 %v1913, %v2039
        %v2049 = vld [vmem:[%s1914] sm:$0xf]
        %v2050 = vld [vmem:[%s1914 + $0x4] sm:$0x1]
        %v2051 = vld [vmem:[%s1914 + $0x8] sm:$0xf]
        %v2052 = vld [vmem:[%s1914 + $0xc] sm:$0x1]
        %v2053 = vld [vmem:[%s1914 + $0x10] sm:$0xf]
        %v2054 = vld [vmem:[%s1914 + $0x14] sm:$0x1]
        %v2055 = vld [vmem:[%s1914 + $0x18] sm:$0xf]
        %v2056 = vld [vmem:[%s1914 + $0x1c] sm:$0x1]
        %v2057 = vld [vmem:[%s1914 + $0x20] sm:$0xf]
        %v2058 = vld [vmem:[%s1914 + $0x24] sm:$0x1]
        %v2059 = vld [vmem:[%s1914 + $0x28] sm:$0xf]
        %v2060 = vld [vmem:[%s1914 + $0x2c] sm:$0x1]
        %v2061 = vld [vmem:[%s1914 + $0x30] sm:$0xf]
        %v2062 = vld [vmem:[%s1914 + $0x34] sm:$0x1]
        %v2063 = vld [vmem:[%s1914 + $0x38] sm:$0xf]
        %v2064 = vld [vmem:[%s1914 + $0x3c] sm:$0x1]
        %v2066 = vshrl.u32 %v2049, 16
        %v2068 = vrot.slane %v2066, 4
        %v2069 = vshll.u32 %v2049, 16
        %v2071 = vrot.slane %v2069, 5
        %v2072 = vor.u32 %v2068, %v2071
        %v2073 = vrot.slane %v2072, 4
        %v2075 = vshll.u32 %v2050, 16
        %v2077 = vrot.slane %v2075, 5
        %v2078 = vsel %vm859, %v2073, %v2077
        %v2080 = vshrl.u32 %v2051, 16
        %v2082 = vrot.slane %v2080, 4
        %v2083 = vshll.u32 %v2051, 16
        %v2085 = vrot.slane %v2083, 5
        %v2086 = vor.u32 %v2082, %v2085
        %v2087 = vrot.slane %v2086, 4
        %v2089 = vshll.u32 %v2052, 16
        %v2091 = vrot.slane %v2089, 5
        %v2092 = vsel %vm859, %v2087, %v2091
        %v2094 = vshrl.u32 %v2053, 16
        %v2096 = vrot.slane %v2094, 4
        %v2097 = vshll.u32 %v2053, 16
        %v2099 = vrot.slane %v2097, 5
        %v2100 = vor.u32 %v2096, %v2099
        %v2101 = vrot.slane %v2100, 4
        %v2103 = vshll.u32 %v2054, 16
        %v2105 = vrot.slane %v2103, 5
        %v2106 = vsel %vm859, %v2101, %v2105
        %v2108 = vshrl.u32 %v2055, 16
        %v2110 = vrot.slane %v2108, 4
        %v2111 = vshll.u32 %v2055, 16
        %v2113 = vrot.slane %v2111, 5
        %v2114 = vor.u32 %v2110, %v2113
        %v2115 = vrot.slane %v2114, 4
        %v2117 = vshll.u32 %v2056, 16
        %v2119 = vrot.slane %v2117, 5
        %v2120 = vsel %vm859, %v2115, %v2119
        %v2122 = vshrl.u32 %v2057, 16
        %v2124 = vrot.slane %v2122, 4
        %v2125 = vshll.u32 %v2057, 16
        %v2127 = vrot.slane %v2125, 5
        %v2128 = vor.u32 %v2124, %v2127
        %v2129 = vrot.slane %v2128, 4
        %v2131 = vshll.u32 %v2058, 16
        %v2133 = vrot.slane %v2131, 5
        %v2134 = vsel %vm859, %v2129, %v2133
        %v2136 = vshrl.u32 %v2059, 16
        %v2138 = vrot.slane %v2136, 4
        %v2139 = vshll.u32 %v2059, 16
        %v2141 = vrot.slane %v2139, 5
        %v2142 = vor.u32 %v2138, %v2141
        %v2143 = vrot.slane %v2142, 4
        %v2145 = vshll.u32 %v2060, 16
        %v2147 = vrot.slane %v2145, 5
        %v2148 = vsel %vm859, %v2143, %v2147
        %v2150 = vshrl.u32 %v2061, 16
        %v2152 = vrot.slane %v2150, 4
        %v2153 = vshll.u32 %v2061, 16
        %v2155 = vrot.slane %v2153, 5
        %v2156 = vor.u32 %v2152, %v2155
        %v2157 = vrot.slane %v2156, 4
        %v2159 = vshll.u32 %v2062, 16
        %v2161 = vrot.slane %v2159, 5
        %v2162 = vsel %vm859, %v2157, %v2161
        %v2164 = vshrl.u32 %v2063, 16
        %v2166 = vrot.slane %v2164, 4
        %v2167 = vshll.u32 %v2063, 16
        %v2169 = vrot.slane %v2167, 5
        %v2170 = vor.u32 %v2166, %v2169
        %v2171 = vrot.slane %v2170, 4
        %v2173 = vshll.u32 %v2064, 16
        %v2175 = vrot.slane %v2173, 5
        %v2176 = vsel %vm859, %v2171, %v2175
        %s2177 = scalar_lea.vmem %s4, 448
        %v2178 = vld [vmem:[%s2177] sm:$0xf]
        %v2179 = vld [vmem:[%s2177 + $0x4] sm:$0xf]
        %v2180 = vld [vmem:[%s2177 + $0x8] sm:$0xf]
        %v2181 = vld [vmem:[%s2177 + $0xc] sm:$0xf]
        %v2182 = vld [vmem:[%s2177 + $0x10] sm:$0xf]
        %v2183 = vld [vmem:[%s2177 + $0x14] sm:$0xf]
        %v2184 = vld [vmem:[%s2177 + $0x18] sm:$0xf]
        %v2185 = vld [vmem:[%s2177 + $0x1c] sm:$0xf]
        %v2186 = vld [vmem:[%s2177 + $0x20] sm:$0xf]
        %v2187 = vld [vmem:[%s2177 + $0x24] sm:$0xf]
        %v2188 = vld [vmem:[%s2177 + $0x28] sm:$0xf]
        %v2189 = vld [vmem:[%s2177 + $0x2c] sm:$0xf]
        %v2190 = vld [vmem:[%s2177 + $0x30] sm:$0xf]
        %v2191 = vld [vmem:[%s2177 + $0x34] sm:$0xf]
        %v2192 = vld [vmem:[%s2177 + $0x38] sm:$0xf]
        %v2193 = vld [vmem:[%s2177 + $0x3c] sm:$0xf]
        %v2194 = vunpack.c.l.b16 %v2078
        %v2195 = vunpack.c.l.b16 %v2092
        %v2196 = vunpack.c.l.b16 %v2106
        %v2197 = vunpack.c.l.b16 %v2120
        %v2198 = vunpack.c.l.b16 %v2134
        %v2199 = vunpack.c.l.b16 %v2148
        %v2200 = vunpack.c.l.b16 %v2162
        %v2201 = vunpack.c.l.b16 %v2176
        %v2202 = vpack.c.b16 %v2195, %v2194
        %v2203 = vpack.c.b16 %v2197, %v2196
        %v2204 = vpack.c.b16 %v2199, %v2198
        %v2205 = vpack.c.b16 %v2201, %v2200
        %v2226 = vunpack.c.l.b16 %v2178
        %v2227 = vunpack.c.l.b16 %v2179
        %v2228 = vunpack.c.l.b16 %v2180
        %v2229 = vunpack.c.l.b16 %v2181
        %v2230 = vunpack.c.l.b16 %v2182
        %v2231 = vunpack.c.l.b16 %v2183
        %v2232 = vunpack.c.l.b16 %v2184
        %v2233 = vunpack.c.l.b16 %v2185
        %v2234 = vunpack.c.l.b16 %v2186
        %v2235 = vunpack.c.l.b16 %v2187
        %v2236 = vunpack.c.l.b16 %v2188
        %v2237 = vunpack.c.l.b16 %v2189
        %v2238 = vunpack.c.l.b16 %v2190
        %v2239 = vunpack.c.l.b16 %v2191
        %v2240 = vunpack.c.l.b16 %v2192
        %v2241 = vunpack.c.l.b16 %v2193
        %v2242 = vpack.c.b16 %v2227, %v2226
        %v2243 = vpack.c.b16 %v2229, %v2228
        %v2244 = vpack.c.b16 %v2231, %v2230
        %v2245 = vpack.c.b16 %v2233, %v2232
        %v2246 = vpack.c.b16 %v2235, %v2234
        %v2247 = vpack.c.b16 %v2237, %v2236
        %v2248 = vpack.c.b16 %v2239, %v2238
        %v2249 = vpack.c.b16 %v2241, %v2240
        %2258 = vmatpush.bf16.msra.mxu0 %v2249
        %2259 = vmatpush.bf16.msra.mxu0 %v2248
        %2260 = vmatpush.bf16.msra.mxu0 %v2247
        %2261 = vmatpush.bf16.msra.mxu0 %v2246
        %2262 = vmatpush.bf16.msra.mxu0 %v2245
        %2263 = vmatpush.bf16.msra.mxu0 %v2244
        %2264 = vmatpush.bf16.msra.mxu0 %v2243
        %2265 = vmatpush.bf16.msra.mxu0 %v2242
        %2266 = vmatmul.bf16.gmra.mxu0 %v2202
        %v2267 = vpop.f32.mrf.mxu0
        %v2268 = vadd.f32 0.0, %v2267
        %v2269 = vpop.f32.mrf.mxu0
        %v2270 = vadd.f32 0.0, %v2269
        %2271 = vmatmul.bf16.gmra.mxu0 %v2203
        %v2272 = vpop.f32.mrf.mxu0
        %v2273 = vadd.f32 0.0, %v2272
        %v2274 = vpop.f32.mrf.mxu0
        %v2275 = vadd.f32 0.0, %v2274
        %2276 = vmatmul.bf16.gmra.mxu0 %v2204
        %v2277 = vpop.f32.mrf.mxu0
        %v2278 = vadd.f32 0.0, %v2277
        %v2279 = vpop.f32.mrf.mxu0
        %v2280 = vadd.f32 0.0, %v2279
        %2281 = vmatmul.bf16.gmra.mxu0 %v2205
        %v2282 = vpop.f32.mrf.mxu0
        %v2283 = vadd.f32 0.0, %v2282
        %v2284 = vpop.f32.mrf.mxu0
        %v2285 = vadd.f32 0.0, %v2284
        %2286 = vdwg.mxu0
        %v2287 = vadd.f32 %v2041, %v2268
        %v2288 = vadd.f32 %v2042, %v2270
        %v2289 = vadd.f32 %v2043, %v2273
        %v2290 = vadd.f32 %v2044, %v2275
        %v2291 = vadd.f32 %v2045, %v2278
        %v2292 = vadd.f32 %v2046, %v2280
        %v2293 = vadd.f32 %v2047, %v2283
        %v2294 = vadd.f32 %v2048, %v2285
        %v2295 = vld [vmem:[%s1914] sm:$0xe]
        %v2296 = vld [vmem:[%s1914 + $0x8] sm:$0xe]
        %v2297 = vld [vmem:[%s1914 + $0x10] sm:$0xe]
        %v2298 = vld [vmem:[%s1914 + $0x18] sm:$0xe]
        %v2299 = vld [vmem:[%s1914 + $0x20] sm:$0xe]
        %v2300 = vld [vmem:[%s1914 + $0x28] sm:$0xe]
        %v2301 = vld [vmem:[%s1914 + $0x30] sm:$0xe]
        %v2302 = vld [vmem:[%s1914 + $0x38] sm:$0xe]
        %v2319 = vrot.slane %v2295, 5
        %v2320 = vrot.slane %v2319, 4
        %v2321 = vrot.slane %v2050, 5
        %v2322 = vsel %vm1209, %v2320, %v2321
        %v2323 = vrot.slane %v2296, 5
        %v2324 = vrot.slane %v2323, 4
        %v2325 = vrot.slane %v2052, 5
        %v2326 = vsel %vm1209, %v2324, %v2325
        %v2327 = vrot.slane %v2297, 5
        %v2328 = vrot.slane %v2327, 4
        %v2329 = vrot.slane %v2054, 5
        %v2330 = vsel %vm1209, %v2328, %v2329
        %v2331 = vrot.slane %v2298, 5
        %v2332 = vrot.slane %v2331, 4
        %v2333 = vrot.slane %v2056, 5
        %v2334 = vsel %vm1209, %v2332, %v2333
        %v2335 = vrot.slane %v2299, 5
        %v2336 = vrot.slane %v2335, 4
        %v2337 = vrot.slane %v2058, 5
        %v2338 = vsel %vm1209, %v2336, %v2337
        %v2339 = vrot.slane %v2300, 5
        %v2340 = vrot.slane %v2339, 4
        %v2341 = vrot.slane %v2060, 5
        %v2342 = vsel %vm1209, %v2340, %v2341
        %v2343 = vrot.slane %v2301, 5
        %v2344 = vrot.slane %v2343, 4
        %v2345 = vrot.slane %v2062, 5
        %v2346 = vsel %vm1209, %v2344, %v2345
        %v2347 = vrot.slane %v2302, 5
        %v2348 = vrot.slane %v2347, 4
        %v2349 = vrot.slane %v2064, 5
        %v2350 = vsel %vm1209, %v2348, %v2349
        %s2351 = scalar_lea.vmem %s4, 512
        %v2352 = vld [vmem:[%s2351] sm:$0xf]
        %v2353 = vld [vmem:[%s2351 + $0x4] sm:$0xf]
        %v2354 = vld [vmem:[%s2351 + $0x8] sm:$0xf]
        %v2355 = vld [vmem:[%s2351 + $0xc] sm:$0xf]
        %v2356 = vld [vmem:[%s2351 + $0x10] sm:$0xf]
        %v2357 = vld [vmem:[%s2351 + $0x14] sm:$0xf]
        %v2358 = vld [vmem:[%s2351 + $0x18] sm:$0xf]
        %v2359 = vld [vmem:[%s2351 + $0x1c] sm:$0xf]
        %v2360 = vld [vmem:[%s2351 + $0x20] sm:$0xf]
        %v2361 = vld [vmem:[%s2351 + $0x24] sm:$0xf]
        %v2362 = vld [vmem:[%s2351 + $0x28] sm:$0xf]
        %v2363 = vld [vmem:[%s2351 + $0x2c] sm:$0xf]
        %v2364 = vld [vmem:[%s2351 + $0x30] sm:$0xf]
        %v2365 = vld [vmem:[%s2351 + $0x34] sm:$0xf]
        %v2366 = vld [vmem:[%s2351 + $0x38] sm:$0xf]
        %v2367 = vld [vmem:[%s2351 + $0x3c] sm:$0xf]
        %v2368 = vunpack.c.l.b16 %v2322
        %v2369 = vunpack.c.l.b16 %v2326
        %v2370 = vunpack.c.l.b16 %v2330
        %v2371 = vunpack.c.l.b16 %v2334
        %v2372 = vunpack.c.l.b16 %v2338
        %v2373 = vunpack.c.l.b16 %v2342
        %v2374 = vunpack.c.l.b16 %v2346
        %v2375 = vunpack.c.l.b16 %v2350
        %v2376 = vpack.c.b16 %v2369, %v2368
        %v2377 = vpack.c.b16 %v2371, %v2370
        %v2378 = vpack.c.b16 %v2373, %v2372
        %v2379 = vpack.c.b16 %v2375, %v2374
        %v2400 = vunpack.c.l.b16 %v2352
        %v2401 = vunpack.c.l.b16 %v2353
        %v2402 = vunpack.c.l.b16 %v2354
        %v2403 = vunpack.c.l.b16 %v2355
        %v2404 = vunpack.c.l.b16 %v2356
        %v2405 = vunpack.c.l.b16 %v2357
        %v2406 = vunpack.c.l.b16 %v2358
        %v2407 = vunpack.c.l.b16 %v2359
        %v2408 = vunpack.c.l.b16 %v2360
        %v2409 = vunpack.c.l.b16 %v2361
        %v2410 = vunpack.c.l.b16 %v2362
        %v2411 = vunpack.c.l.b16 %v2363
        %v2412 = vunpack.c.l.b16 %v2364
        %v2413 = vunpack.c.l.b16 %v2365
        %v2414 = vunpack.c.l.b16 %v2366
        %v2415 = vunpack.c.l.b16 %v2367
        %v2416 = vpack.c.b16 %v2401, %v2400
        %v2417 = vpack.c.b16 %v2403, %v2402
        %v2418 = vpack.c.b16 %v2405, %v2404
        %v2419 = vpack.c.b16 %v2407, %v2406
        %v2420 = vpack.c.b16 %v2409, %v2408
        %v2421 = vpack.c.b16 %v2411, %v2410
        %v2422 = vpack.c.b16 %v2413, %v2412
        %v2423 = vpack.c.b16 %v2415, %v2414
        %2432 = vmatpush.bf16.msra.mxu0 %v2423
        %2433 = vmatpush.bf16.msra.mxu0 %v2422
        %2434 = vmatpush.bf16.msra.mxu0 %v2421
        %2435 = vmatpush.bf16.msra.mxu0 %v2420
        %2436 = vmatpush.bf16.msra.mxu0 %v2419
        %2437 = vmatpush.bf16.msra.mxu0 %v2418
        %2438 = vmatpush.bf16.msra.mxu0 %v2417
        %2439 = vmatpush.bf16.msra.mxu0 %v2416
        %2440 = vmatmul.bf16.gmra.mxu0 %v2376
        %v2441 = vpop.f32.mrf.mxu0
        %v2442 = vadd.f32 0.0, %v2441
        %v2443 = vpop.f32.mrf.mxu0
        %v2444 = vadd.f32 0.0, %v2443
        %2445 = vmatmul.bf16.gmra.mxu0 %v2377
        %v2446 = vpop.f32.mrf.mxu0
        %v2447 = vadd.f32 0.0, %v2446
        %v2448 = vpop.f32.mrf.mxu0
        %v2449 = vadd.f32 0.0, %v2448
        %2450 = vmatmul.bf16.gmra.mxu0 %v2378
        %v2451 = vpop.f32.mrf.mxu0
        %v2452 = vadd.f32 0.0, %v2451
        %v2453 = vpop.f32.mrf.mxu0
        %v2454 = vadd.f32 0.0, %v2453
        %2455 = vmatmul.bf16.gmra.mxu0 %v2379
        %v2456 = vpop.f32.mrf.mxu0
        %v2457 = vadd.f32 0.0, %v2456
        %v2458 = vpop.f32.mrf.mxu0
        %v2459 = vadd.f32 0.0, %v2458
        %2460 = vdwg.mxu0
        %v2461 = vadd.f32 %v2287, %v2442
        %v2462 = vadd.f32 %v2288, %v2444
        %v2463 = vadd.f32 %v2289, %v2447
        %v2464 = vadd.f32 %v2290, %v2449
        %v2465 = vadd.f32 %v2291, %v2452
        %v2466 = vadd.f32 %v2292, %v2454
        %v2467 = vadd.f32 %v2293, %v2457
        %v2468 = vadd.f32 %v2294, %v2459
        %v2469 = vld [vmem:[%s5] sm:$0x1]
        %v2470 = vld [vmem:[%s6] sm:$0x1]
        %2471 = vadd.xlane.f32.xlu0 %v2461
        %v2472 = vpop.xlane.xlu0 %2471
        %2473 = vadd.xlane.f32.xlu0 %v2462
        %v2474 = vpop.xlane.xlu0 %2473
        %2475 = vadd.xlane.f32.xlu0 %v2463
        %v2476 = vpop.xlane.xlu0 %2475
        %2477 = vadd.xlane.f32.xlu0 %v2464
        %v2478 = vpop.xlane.xlu0 %2477
        %2479 = vadd.xlane.f32.xlu0 %v2465
        %v2480 = vpop.xlane.xlu0 %2479
        %2481 = vadd.xlane.f32.xlu0 %v2466
        %v2482 = vpop.xlane.xlu0 %2481
        %2483 = vadd.xlane.f32.xlu0 %v2467
        %v2484 = vpop.xlane.xlu0 %2483
        %2485 = vadd.xlane.f32.xlu0 %v2468
        %v2486 = vpop.xlane.xlu0 %2485
        %v2487 = vmul.f32 %v2472, %v461
        %v2488 = vmul.f32 %v2474, %v461
        %v2489 = vmul.f32 %v2476, %v461
        %v2490 = vmul.f32 %v2478, %v461
        %v2491 = vmul.f32 %v2480, %v461
        %v2492 = vmul.f32 %v2482, %v461
        %v2493 = vmul.f32 %v2484, %v461
        %v2494 = vmul.f32 %v2486, %v461
        %v2495 = vsub.f32 %v2461, %v2487
        %v2496 = vsub.f32 %v2462, %v2488
        %v2497 = vsub.f32 %v2463, %v2489
        %v2498 = vsub.f32 %v2464, %v2490
        %v2499 = vsub.f32 %v2465, %v2491
        %v2500 = vsub.f32 %v2466, %v2492
        %v2501 = vsub.f32 %v2467, %v2493
        %v2502 = vsub.f32 %v2468, %v2494
        %v2503 = vmul.f32 %v2495, %v2495
        %v2504 = vmul.f32 %v2496, %v2496
        %v2505 = vmul.f32 %v2497, %v2497
        %v2506 = vmul.f32 %v2498, %v2498
        %v2507 = vmul.f32 %v2499, %v2499
        %v2508 = vmul.f32 %v2500, %v2500
        %v2509 = vmul.f32 %v2501, %v2501
        %v2510 = vmul.f32 %v2502, %v2502
        %2511 = vadd.xlane.f32.xlu0 %v2503
        %v2512 = vpop.xlane.xlu0 %2511
        %2513 = vadd.xlane.f32.xlu0 %v2504
        %v2514 = vpop.xlane.xlu0 %2513
        %2515 = vadd.xlane.f32.xlu0 %v2505
        %v2516 = vpop.xlane.xlu0 %2515
        %2517 = vadd.xlane.f32.xlu0 %v2506
        %v2518 = vpop.xlane.xlu0 %2517
        %2519 = vadd.xlane.f32.xlu0 %v2507
        %v2520 = vpop.xlane.xlu0 %2519
        %2521 = vadd.xlane.f32.xlu0 %v2508
        %v2522 = vpop.xlane.xlu0 %2521
        %2523 = vadd.xlane.f32.xlu0 %v2509
        %v2524 = vpop.xlane.xlu0 %2523
        %2525 = vadd.xlane.f32.xlu0 %v2510
        %v2526 = vpop.xlane.xlu0 %2525
        %v2527 = vmul.f32 %v2512, %v461
        %v2528 = vmul.f32 %v2514, %v461
        %v2529 = vmul.f32 %v2516, %v461
        %v2530 = vmul.f32 %v2518, %v461
        %v2531 = vmul.f32 %v2520, %v461
        %v2532 = vmul.f32 %v2522, %v461
        %v2533 = vmul.f32 %v2524, %v461
        %v2534 = vmul.f32 %v2526, %v461
        %v2535 = vadd.f32 %v2527, 1e-06
        %v2536 = vadd.f32 %v2528, 1e-06
        %v2537 = vadd.f32 %v2529, 1e-06
        %v2538 = vadd.f32 %v2530, 1e-06
        %v2539 = vadd.f32 %v2531, 1e-06
        %v2540 = vadd.f32 %v2532, 1e-06
        %v2541 = vadd.f32 %v2533, 1e-06
        %v2542 = vadd.f32 %v2534, 1e-06
        %v2543 = vrsqrt.pop %v2535
        %v2544 = vmul.f32 %v2543, %v2535
        %v2545 = vmul.f32 %v2544, %v2543
        %v2546 = vmul.f32 0.5, %v2545
        %v2547 = vsub.f32 1.5, %v2546
        %v2548 = vmul.f32 %v2543, %v2547
        %vm2549 = vweird.f32 %v2535
        %vm2550 = vweird.f32 %v2543
        %vm2551 = vmor %vm2549, %vm2550
        %v2552 = vsel %vm2551, %v2543, %v2548
        %v2553 = vrsqrt.pop %v2536
        %v2554 = vmul.f32 %v2553, %v2536
        %v2555 = vmul.f32 %v2554, %v2553
        %v2556 = vmul.f32 0.5, %v2555
        %v2557 = vsub.f32 1.5, %v2556
        %v2558 = vmul.f32 %v2553, %v2557
        %vm2559 = vweird.f32 %v2536
        %vm2560 = vweird.f32 %v2553
        %vm2561 = vmor %vm2559, %vm2560
        %v2562 = vsel %vm2561, %v2553, %v2558
        %v2563 = vrsqrt.pop %v2537
        %v2564 = vmul.f32 %v2563, %v2537
        %v2565 = vmul.f32 %v2564, %v2563
        %v2566 = vmul.f32 0.5, %v2565
        %v2567 = vsub.f32 1.5, %v2566
        %v2568 = vmul.f32 %v2563, %v2567
        %vm2569 = vweird.f32 %v2537
        %vm2570 = vweird.f32 %v2563
        %vm2571 = vmor %vm2569, %vm2570
        %v2572 = vsel %vm2571, %v2563, %v2568
        %v2573 = vrsqrt.pop %v2538
        %v2574 = vmul.f32 %v2573, %v2538
        %v2575 = vmul.f32 %v2574, %v2573
        %v2576 = vmul.f32 0.5, %v2575
        %v2577 = vsub.f32 1.5, %v2576
        %v2578 = vmul.f32 %v2573, %v2577
        %vm2579 = vweird.f32 %v2538
        %vm2580 = vweird.f32 %v2573
        %vm2581 = vmor %vm2579, %vm2580
        %v2582 = vsel %vm2581, %v2573, %v2578
        %v2583 = vrsqrt.pop %v2539
        %v2584 = vmul.f32 %v2583, %v2539
        %v2585 = vmul.f32 %v2584, %v2583
        %v2586 = vmul.f32 0.5, %v2585
        %v2587 = vsub.f32 1.5, %v2586
        %v2588 = vmul.f32 %v2583, %v2587
        %vm2589 = vweird.f32 %v2539
        %vm2590 = vweird.f32 %v2583
        %vm2591 = vmor %vm2589, %vm2590
        %v2592 = vsel %vm2591, %v2583, %v2588
        %v2593 = vrsqrt.pop %v2540
        %v2594 = vmul.f32 %v2593, %v2540
        %v2595 = vmul.f32 %v2594, %v2593
        %v2596 = vmul.f32 0.5, %v2595
        %v2597 = vsub.f32 1.5, %v2596
        %v2598 = vmul.f32 %v2593, %v2597
        %vm2599 = vweird.f32 %v2540
        %vm2600 = vweird.f32 %v2593
        %vm2601 = vmor %vm2599, %vm2600
        %v2602 = vsel %vm2601, %v2593, %v2598
        %v2603 = vrsqrt.pop %v2541
        %v2604 = vmul.f32 %v2603, %v2541
        %v2605 = vmul.f32 %v2604, %v2603
        %v2606 = vmul.f32 0.5, %v2605
        %v2607 = vsub.f32 1.5, %v2606
        %v2608 = vmul.f32 %v2603, %v2607
        %vm2609 = vweird.f32 %v2541
        %vm2610 = vweird.f32 %v2603
        %vm2611 = vmor %vm2609, %vm2610
        %v2612 = vsel %vm2611, %v2603, %v2608
        %v2613 = vrsqrt.pop %v2542
        %v2614 = vmul.f32 %v2613, %v2542
        %v2615 = vmul.f32 %v2614, %v2613
        %v2616 = vmul.f32 0.5, %v2615
        %v2617 = vsub.f32 1.5, %v2616
        %v2618 = vmul.f32 %v2613, %v2617
        %vm2619 = vweird.f32 %v2542
        %vm2620 = vweird.f32 %v2613
        %vm2621 = vmor %vm2619, %vm2620
        %v2622 = vsel %vm2621, %v2613, %v2618
        %v2623 = vmul.f32 %v2495, %v2552
        %v2624 = vmul.f32 %v2496, %v2562
        %v2625 = vmul.f32 %v2497, %v2572
        %v2626 = vmul.f32 %v2498, %v2582
        %v2627 = vmul.f32 %v2499, %v2592
        %v2628 = vmul.f32 %v2500, %v2602
        %v2629 = vmul.f32 %v2501, %v2612
        %v2630 = vmul.f32 %v2502, %v2622
        %v2632 = vperm.slane %v2469, 0
        %v2634 = vmul.f32 %v2623, %v2632
        %v2635 = vmul.f32 %v2624, %v2632
        %v2636 = vmul.f32 %v2625, %v2632
        %v2637 = vmul.f32 %v2626, %v2632
        %v2638 = vmul.f32 %v2627, %v2632
        %v2639 = vmul.f32 %v2628, %v2632
        %v2640 = vmul.f32 %v2629, %v2632
        %v2641 = vmul.f32 %v2630, %v2632
        %v2643 = vperm.slane %v2470, 0
        %v2645 = vadd.f32 %v2634, %v2643
        %v2646 = vadd.f32 %v2635, %v2643
        %v2647 = vadd.f32 %v2636, %v2643
        %v2648 = vadd.f32 %v2637, %v2643
        %v2649 = vadd.f32 %v2638, %v2643
        %v2650 = vadd.f32 %v2639, %v2643
        %v2651 = vadd.f32 %v2640, %v2643
        %v2652 = vadd.f32 %v2641, %v2643
        %v2653 = vpack.c.bf16 %v2646, %v2645
        %v2654 = vpack.c.bf16 %v2648, %v2647
        %v2655 = vpack.c.bf16 %v2650, %v2649
        %v2656 = vpack.c.bf16 %v2652, %v2651
        %v2657 = vld [vmem:[%s7] sm:$0xf]
        %v2658 = vld [vmem:[%s7 + $0x4] sm:$0xf]
        %v2659 = vld [vmem:[%s7 + $0x8] sm:$0xf]
        %v2660 = vld [vmem:[%s7 + $0xc] sm:$0xf]
        %v2661 = vld [vmem:[%s7 + $0x10] sm:$0xf]
        %v2662 = vld [vmem:[%s7 + $0x14] sm:$0xf]
        %v2663 = vld [vmem:[%s7 + $0x18] sm:$0xf]
        %v2664 = vld [vmem:[%s7 + $0x1c] sm:$0xf]
        %v2665 = vld [vmem:[%s7 + $0x20] sm:$0xf]
        %v2666 = vld [vmem:[%s7 + $0x24] sm:$0xf]
        %v2667 = vld [vmem:[%s7 + $0x28] sm:$0xf]
        %v2668 = vld [vmem:[%s7 + $0x2c] sm:$0xf]
        %v2669 = vld [vmem:[%s7 + $0x30] sm:$0xf]
        %v2670 = vld [vmem:[%s7 + $0x34] sm:$0xf]
        %v2671 = vld [vmem:[%s7 + $0x38] sm:$0xf]
        %v2672 = vld [vmem:[%s7 + $0x3c] sm:$0xf]
        %v2673 = vld [vmem:[%s8] sm:$0x1]
        %v2675 = vperm.slane %v2673, 0
        %v2693 = vunpack.c.l.b16 %v2657
        %v2694 = vunpack.c.l.b16 %v2658
        %v2695 = vunpack.c.l.b16 %v2659
        %v2696 = vunpack.c.l.b16 %v2660
        %v2697 = vunpack.c.l.b16 %v2661
        %v2698 = vunpack.c.l.b16 %v2662
        %v2699 = vunpack.c.l.b16 %v2663
        %v2700 = vunpack.c.l.b16 %v2664
        %v2701 = vunpack.c.l.b16 %v2665
        %v2702 = vunpack.c.l.b16 %v2666
        %v2703 = vunpack.c.l.b16 %v2667
        %v2704 = vunpack.c.l.b16 %v2668
        %v2705 = vunpack.c.l.b16 %v2669
        %v2706 = vunpack.c.l.b16 %v2670
        %v2707 = vunpack.c.l.b16 %v2671
        %v2708 = vunpack.c.l.b16 %v2672
        %v2709 = vpack.c.b16 %v2694, %v2693
        %v2710 = vpack.c.b16 %v2696, %v2695
        %v2711 = vpack.c.b16 %v2698, %v2697
        %v2712 = vpack.c.b16 %v2700, %v2699
        %v2713 = vpack.c.b16 %v2702, %v2701
        %v2714 = vpack.c.b16 %v2704, %v2703
        %v2715 = vpack.c.b16 %v2706, %v2705
        %v2716 = vpack.c.b16 %v2708, %v2707
        %2725 = vmatpush.bf16.msra.mxu0 %v2716
        %2726 = vmatpush.bf16.msra.mxu0 %v2715
        %2727 = vmatpush.bf16.msra.mxu0 %v2714
        %2728 = vmatpush.bf16.msra.mxu0 %v2713
        %2729 = vmatpush.bf16.msra.mxu0 %v2712
        %2730 = vmatpush.bf16.msra.mxu0 %v2711
        %2731 = vmatpush.bf16.msra.mxu0 %v2710
        %2732 = vmatpush.bf16.msra.mxu0 %v2709
        %2733 = vmatmul.bf16.gmra.mxu0 %v2653
        %v2734 = vpop.f32.mrf.mxu0
        %v2735 = vadd.f32 %v2675, %v2734
        %v2736 = vpop.f32.mrf.mxu0
        %v2737 = vadd.f32 %v2675, %v2736
        %2738 = vmatmul.bf16.gmra.mxu0 %v2654
        %v2739 = vpop.f32.mrf.mxu0
        %v2740 = vadd.f32 %v2675, %v2739
        %v2741 = vpop.f32.mrf.mxu0
        %v2742 = vadd.f32 %v2675, %v2741
        %2743 = vmatmul.bf16.gmra.mxu0 %v2655
        %v2744 = vpop.f32.mrf.mxu0
        %v2745 = vadd.f32 %v2675, %v2744
        %v2746 = vpop.f32.mrf.mxu0
        %v2747 = vadd.f32 %v2675, %v2746
        %2748 = vmatmul.bf16.gmra.mxu0 %v2656
        %v2749 = vpop.f32.mrf.mxu0
        %v2750 = vadd.f32 %v2675, %v2749
        %v2751 = vpop.f32.mrf.mxu0
        %v2752 = vadd.f32 %v2675, %v2751
        %2753 = vdwg.mxu0
        %2754 = vst [vmem:[%s325] sm:$0xff] %v2735
        %2755 = vst [vmem:[%s325 + $0x8] sm:$0xff] %v2737
        %2756 = vst [vmem:[%s325 + $0x10] sm:$0xff] %v2740
        %2757 = vst [vmem:[%s325 + $0x18] sm:$0xff] %v2742
        %2758 = vst [vmem:[%s325 + $0x20] sm:$0xff] %v2745
        %2759 = vst [vmem:[%s325 + $0x28] sm:$0xff] %v2747
        %2760 = vst [vmem:[%s325 + $0x30] sm:$0xff] %v2750
        %2761 = vst [vmem:[%s325 + $0x38] sm:$0xff] %v2752
        %s2762 = sand.u32 %s225, 1
        %s2763 = scalar_lea.sflag [#allocation4], %s2762
        %s2764 = sand.u32 %s225, 1
        %s2765 = smul.addr %s2764, 64
        %s2766 = scalar_lea.vmem [#allocation3], %s2765
        // Predicated region
        $region57: #{forward.3} parent=55 // pred_check
          %p2767 = pneg %p235
        $region58: #{forward.3} parent=55 // pred_check_branch
          %2769 = sbr.rel (%p2767) target = $region60
        $region59: #{forward.3} parent=55 // pred_region
          %2771 = vsyncadd %s2763, 0
          %s2772 = smul.addr %s23, 8
          %s2773 = smul.addr %s2772, 8
          %s2774 = scalar_lea.hbm %s9, %s2773
          %s2775 = sshll.u32 %s2766, 4
          %s2776 = int_to_ptr.vmem [resolvable:$true] %s2775
          %s2777 = sshll.u32 %s2774, 4
          %s2778 = int_to_ptr.hbm [resolvable:$true] %s2777
          %2783 = dma.vmem_to_hbm [thread:$0]  %s2776, 1024, %s2778, %s2763, 128, 128, 8
        $region60: #{forward.3} parent=55 // pred_fallthru
          _
      $region56: #{forward.3} parent=5 // pred_fallthru
        _
      %p2784 = scmp.le.s32.totalorder 2, %s18
      // Predicated region
      $region61: #{forward.3} parent=5 // pred_check
        %p2785 = pneg %p2784
      $region62: #{forward.3} parent=5 // pred_check_branch
        %2787 = sbr.rel (%p2785) target = $region64
      $region63: #{forward.3} parent=5 // pred_region
        %s2788 = ssub.s32 %s18, 2
        // Predicated region
        $region65: #{forward.3} parent=63 // pred_check
          %p2789 = pneg %p241
        $region66: #{forward.3} parent=63 // pred_check_branch
          %2791 = sbr.rel (%p2789) target = $region68
        $region67: #{forward.3} parent=63 // pred_region
          %s2792 = sand.u32 %s226, 1
          %s2793 = scalar_lea.sflag [#allocation4], %s2792
          %s2794 = sand.u32 %s226, 1
          %s2795 = smul.addr %s2794, 64
          %s2796 = scalar_lea.vmem [#allocation3], %s2795
          %2798 = dma.done %s2793, 1024
        $region68: #{forward.3} parent=63 // pred_fallthru
          _
      $region64: #{forward.3} parent=5 // pred_fallthru
        _
    $region6: #{forward.3} parent=1 // loop_footer
      %s22 = sadd.s32 1, %s18
    $region7: #{forward.3} parent=1 // loop_footer_branch
      %17 = sbr.rel target = $region3
    $region8: #{forward.3} parent=1 // loop_exit
      _
    %2799 = vsyncpa [#allocation4], 1
    %s2800 = scalar_lea.sflag [#allocation4], 1
    %2801 = vsyncpa %s2800, 1

// kernel: forward.2
$region0: #{forward.2}
  #allocation0 [shape = 'u32[]', space=smem, size = 0x4, offset = 0x4, fixed_abs, tag = 'smem constant byte address 0x4 - core index']
  #allocation1 [shape = 'u32[72,128]{1,0:T(1,128)}', space=vmem, size = 0x9000, scoped, tag = 'internal scratch']
  #allocation2 [shape = 'bf16[64,384]{1,0:T(8,128)(2,1)}', space=vmem, size = 0xc000, scoped, tag = 'scratch operand']
  #allocation3 [shape = 'bf16[64,128]{1,0:T(8,128)(2,1)}', space=vmem, size = 0x4000, scoped, tag = 'scratch operand']
  #allocation4 [shape = 'bf16[64,512]{1,0:T(8,128)(2,1)}', space=vmem, size = 0x10000, scoped, tag = 'scratch operand']
  %s0 = inlined_call_operand.vmem [shape: f32[2,64,192], index: 0, kind: input, shape index: {}]
  %s1 = inlined_call_operand.vmem [shape: f32[2,64,1], index: 1, kind: input, shape index: {}]
  %s2 = inlined_call_operand.vmem [shape: bf16[192,128], index: 2, kind: input, shape index: {}]
  %s3 = inlined_call_operand.vmem [shape: f32[1,128], index: 3, kind: input, shape index: {}]
  %s4 = inlined_call_operand.vmem [shape: f32[1,128], index: 4, kind: input, shape index: {}]
  %s5 = inlined_call_operand.vmem [shape: f32[64,128], index: 5, kind: input, shape index: {}]
  %s6 = inlined_call_operand.vmem [shape: f32[2,1,128], index: 6, kind: input, shape index: {}]
  %s7 = inlined_call_operand.vmem [shape: f32[2,1,128], index: 7, kind: input, shape index: {}]
  %s8 = inlined_call_operand.vmem [shape: bf16[2,128,384], index: 8, kind: input, shape index: {}]
  %s9 = inlined_call_operand.vmem [shape: f32[2,1,384], index: 9, kind: input, shape index: {}]
  %s10 = inlined_call_operand.vmem [shape: bf16[2,128,128], index: 10, kind: input, shape index: {}]
  %s11 = inlined_call_operand.vmem [shape: f32[2,1,128], index: 11, kind: input, shape index: {}]
  %s12 = inlined_call_operand.vmem [shape: f32[2,1,128], index: 12, kind: input, shape index: {}]
  %s13 = inlined_call_operand.vmem [shape: f32[2,1,128], index: 13, kind: input, shape index: {}]
  %s14 = inlined_call_operand.vmem [shape: bf16[2,128,512], index: 14, kind: input, shape index: {}]
  %s15 = inlined_call_operand.vmem [shape: f32[2,1,512], index: 15, kind: input, shape index: {}]
  %s16 = inlined_call_operand.vmem [shape: bf16[2,512,128], index: 16, kind: input, shape index: {}]
  %s17 = inlined_call_operand.vmem [shape: f32[2,1,128], index: 17, kind: input, shape index: {}]
  %s18 = inlined_call_operand.vmem [shape: f32[2,64,128], index: 18, kind: output, shape index: {}]
  %s19 = sld [smem:[#allocation0]]
  $region109: #{forward.2} parent=0
    _
  %s21 = ssub.s32 1, %s19
  %s22 = scalar_select 0, %s21, %s19
  loop: start=0, step=1, limit=6
  $region2: #{forward.2} parent=0 // loop_pre_header
    _
  $region3: #{forward.2} parent=0 // loop_header
    %s24 = sphi 0, %s28
    %p25 = scmp.ge.s32.totalorder %s24, 6
    %s31 = sphi 0, %s43
    %s32 = sphi 0, %s39
    %s33 = sphi 0, %s31
    %s34 = sphi 0, %s32
    %s35 = sphi 0, %s33
    %s36 = sphi 0, %s34
    %s46 = sphi 0, %s48
    %s49 = sphi 0, %s46
    %s50 = sphi 0, %s49
    %s66 = sphi 0, %s50
    %s72 = sphi 0, %s74
    %s75 = sphi 0, %s72
    %s76 = sphi 0, %s75
    %s92 = sphi 0, %s76
    %s96 = sphi 0, %s96
    %s98 = sphi 0, %s96
    %s99 = sphi 0, %s98
    %s113 = sphi 0, %s99
    %s117 = sphi 0, %s117
    %s119 = sphi 0, %s117
    %s120 = sphi 0, %s119
    %s134 = sphi 0, %s120
    %s138 = sphi 0, %s138
    %s140 = sphi 0, %s138
    %s141 = sphi 0, %s140
    %s155 = sphi 0, %s141
    %s159 = sphi 0, %s159
    %s161 = sphi 0, %s159
    %s162 = sphi 0, %s161
    %s176 = sphi 0, %s162
    %s182 = sphi 0, %s184
    %s185 = sphi 0, %s182
    %s186 = sphi 0, %s185
    %s202 = sphi 0, %s186
    %s208 = sphi 0, %s210
    %s211 = sphi 0, %s208
    %s212 = sphi 0, %s211
    %s228 = sphi 0, %s212
    %s234 = sphi 0, %s236
    %s237 = sphi 0, %s234
    %s238 = sphi 0, %s237
    %s254 = sphi 0, %s238
    %s260 = sphi 0, %s262
    %s263 = sphi 0, %s260
    %s264 = sphi 0, %s263
    %s280 = sphi 0, %s264
    %s286 = sphi 0, %s288
    %s289 = sphi 0, %s286
    %s290 = sphi 0, %s289
    %s306 = sphi 0, %s290
    %s312 = sphi 0, %s314
    %s315 = sphi 0, %s312
    %s316 = sphi 0, %s315
    %s332 = sphi 0, %s316
    %s338 = sphi 0, %s340
    %s341 = sphi 0, %s338
    %s342 = sphi 0, %s341
    %s358 = sphi 0, %s342
    %s364 = sphi 0, %s366
    %s367 = sphi 0, %s364
    %s368 = sphi 0, %s367
    %s384 = sphi 0, %s368
    %s390 = sphi 0, %s392
    %s393 = sphi 0, %s390
    %s394 = sphi 0, %s393
    %s410 = sphi 0, %s394
    %s416 = sphi 0, %s418
    %s419 = sphi 0, %s416
    %s420 = sphi 0, %s419
    %s436 = sphi 0, %s420
    %s442 = sphi 0, %s444
    %s445 = sphi 0, %s442
    %s446 = sphi 0, %s445
    %s462 = sphi 0, %s446
    %s468 = sphi 0, %s470
    %s471 = sphi 0, %s468
    %s472 = sphi 0, %s471
    %s488 = sphi 0, %s472
    %s494 = sphi 0, %s496
    %s497 = sphi 0, %s494
    %s498 = sphi 0, %s497
    %s514 = sphi 0, %s498
  $region4: #{forward.2} parent=0 // loop_header_branch
    %27 = sbr.rel (%p25) target = $region8
  $region5: #{forward.2} parent=0 // loop_body
    %s29 = ssub.s32 %s24, 1
    %s30 = ssub.s32 %s24, 2
    %s37 = sadd.s32 1, %s32
    %p38 = scmp.ge.s32.totalorder %s37, 2
    %s39 = scalar_select %p38, 0, %s37
    %s40 = sadd.s32 1, %s31
    %s41 = scalar_select %p38, %s40, %s31
    %p42 = scmp.ge.s32.totalorder %s41, 2
    %s43 = scalar_select %p42, 0, %s41
    %s44 = ssub.s32 %s31, %s43
    %p45 = scmp.eq.s32.totalorder %s44, 0
    %s47 = sadd.s32 %s46, 1
    %s48 = scalar_select %p45, %s46, %s47
    %p51 = pneg %p45
    %p52 = scmp.eq.s32.totalorder %s24, 3
    %p53 = por %p51, %p52
    %p54 = scmp.ne.s32.totalorder %s46, %s49
    %p55 = scmp.eq.s32.totalorder %s24, 0
    %p56 = por %p54, %p55
    %p57 = scmp.ne.s32.totalorder %s46, %s49
    %p58 = scmp.eq.s32.totalorder %s29, 3
    %p59 = por %p57, %p58
    %p60 = scmp.ne.s32.totalorder %s49, %s50
    %p61 = scmp.eq.s32.totalorder %s29, 0
    %p62 = por %p60, %p61
    %p63 = scmp.ne.s32.totalorder %s49, %s50
    %p64 = scmp.eq.s32.totalorder %s30, 3
    %p65 = por %p63, %p64
    %p67 = scmp.ne.s32.totalorder %s50, %s66
    %p68 = scmp.eq.s32.totalorder %s30, 0
    %p69 = por %p67, %p68
    %s70 = ssub.s32 %s31, %s43
    %p71 = scmp.eq.s32.totalorder %s70, 0
    %s73 = sadd.s32 %s72, 1
    %s74 = scalar_select %p71, %s72, %s73
    %p77 = pneg %p71
    %p78 = scmp.eq.s32.totalorder %s24, 3
    %p79 = por %p77, %p78
    %p80 = scmp.ne.s32.totalorder %s72, %s75
    %p81 = scmp.eq.s32.totalorder %s24, 0
    %p82 = por %p80, %p81
    %p83 = scmp.ne.s32.totalorder %s72, %s75
    %p84 = scmp.eq.s32.totalorder %s29, 3
    %p85 = por %p83, %p84
    %p86 = scmp.ne.s32.totalorder %s75, %s76
    %p87 = scmp.eq.s32.totalorder %s29, 0
    %p88 = por %p86, %p87
    %p89 = scmp.ne.s32.totalorder %s75, %s76
    %p90 = scmp.eq.s32.totalorder %s30, 3
    %p91 = por %p89, %p90
    %p93 = scmp.ne.s32.totalorder %s76, %s92
    %p94 = scmp.eq.s32.totalorder %s30, 0
    %p95 = por %p93, %p94
    %s97 = sadd.s32 %s96, 1
    %p100 = scmp.eq.s32.totalorder %s24, 3
    %p101 = scmp.ne.s32.totalorder %s96, %s98
    %p102 = scmp.eq.s32.totalorder %s24, 0
    %p103 = por %p101, %p102
    %p104 = scmp.ne.s32.totalorder %s96, %s98
    %p105 = scmp.eq.s32.totalorder %s29, 3
    %p106 = por %p104, %p105
    %p107 = scmp.ne.s32.totalorder %s98, %s99
    %p108 = scmp.eq.s32.totalorder %s29, 0
    %p109 = por %p107, %p108
    %p110 = scmp.ne.s32.totalorder %s98, %s99
    %p111 = scmp.eq.s32.totalorder %s30, 3
    %p112 = por %p110, %p111
    %p114 = scmp.ne.s32.totalorder %s99, %s113
    %p115 = scmp.eq.s32.totalorder %s30, 0
    %p116 = por %p114, %p115
    %s118 = sadd.s32 %s117, 1
    %p121 = scmp.eq.s32.totalorder %s24, 3
    %p122 = scmp.ne.s32.totalorder %s117, %s119
    %p123 = scmp.eq.s32.totalorder %s24, 0
    %p124 = por %p122, %p123
    %p125 = scmp.ne.s32.totalorder %s117, %s119
    %p126 = scmp.eq.s32.totalorder %s29, 3
    %p127 = por %p125, %p126
    %p128 = scmp.ne.s32.totalorder %s119, %s120
    %p129 = scmp.eq.s32.totalorder %s29, 0
    %p130 = por %p128, %p129
    %p131 = scmp.ne.s32.totalorder %s119, %s120
    %p132 = scmp.eq.s32.totalorder %s30, 3
    %p133 = por %p131, %p132
    %p135 = scmp.ne.s32.totalorder %s120, %s134
    %p136 = scmp.eq.s32.totalorder %s30, 0
    %p137 = por %p135, %p136
    %s139 = sadd.s32 %s138, 1
    %p142 = scmp.eq.s32.totalorder %s24, 3
    %p143 = scmp.ne.s32.totalorder %s138, %s140
    %p144 = scmp.eq.s32.totalorder %s24, 0
    %p145 = por %p143, %p144
    %p146 = scmp.ne.s32.totalorder %s138, %s140
    %p147 = scmp.eq.s32.totalorder %s29, 3
    %p148 = por %p146, %p147
    %p149 = scmp.ne.s32.totalorder %s140, %s141
    %p150 = scmp.eq.s32.totalorder %s29, 0
    %p151 = por %p149, %p150
    %p152 = scmp.ne.s32.totalorder %s140, %s141
    %p153 = scmp.eq.s32.totalorder %s30, 3
    %p154 = por %p152, %p153
    %p156 = scmp.ne.s32.totalorder %s141, %s155
    %p157 = scmp.eq.s32.totalorder %s30, 0
    %p158 = por %p156, %p157
    %s160 = sadd.s32 %s159, 1
    %p163 = scmp.eq.s32.totalorder %s24, 3
    %p164 = scmp.ne.s32.totalorder %s159, %s161
    %p165 = scmp.eq.s32.totalorder %s24, 0
    %p166 = por %p164, %p165
    %p167 = scmp.ne.s32.totalorder %s159, %s161
    %p168 = scmp.eq.s32.totalorder %s29, 3
    %p169 = por %p167, %p168
    %p170 = scmp.ne.s32.totalorder %s161, %s162
    %p171 = scmp.eq.s32.totalorder %s29, 0
    %p172 = por %p170, %p171
    %p173 = scmp.ne.s32.totalorder %s161, %s162
    %p174 = scmp.eq.s32.totalorder %s30, 3
    %p175 = por %p173, %p174
    %p177 = scmp.ne.s32.totalorder %s162, %s176
    %p178 = scmp.eq.s32.totalorder %s30, 0
    %p179 = por %p177, %p178
    %s180 = ssub.s32 %s32, %s39
    %p181 = scmp.eq.s32.totalorder %s180, 0
    %s183 = sadd.s32 %s182, 1
    %s184 = scalar_select %p181, %s182, %s183
    %p187 = pneg %p181
    %p188 = scmp.eq.s32.totalorder %s24, 3
    %p189 = por %p187, %p188
    %p190 = scmp.ne.s32.totalorder %s182, %s185
    %p191 = scmp.eq.s32.totalorder %s24, 0
    %p192 = por %p190, %p191
    %p193 = scmp.ne.s32.totalorder %s182, %s185
    %p194 = scmp.eq.s32.totalorder %s29, 3
    %p195 = por %p193, %p194
    %p196 = scmp.ne.s32.totalorder %s185, %s186
    %p197 = scmp.eq.s32.totalorder %s29, 0
    %p198 = por %p196, %p197
    %p199 = scmp.ne.s32.totalorder %s185, %s186
    %p200 = scmp.eq.s32.totalorder %s30, 3
    %p201 = por %p199, %p200
    %p203 = scmp.ne.s32.totalorder %s186, %s202
    %p204 = scmp.eq.s32.totalorder %s30, 0
    %p205 = por %p203, %p204
    %s206 = ssub.s32 %s32, %s39
    %p207 = scmp.eq.s32.totalorder %s206, 0
    %s209 = sadd.s32 %s208, 1
    %s210 = scalar_select %p207, %s208, %s209
    %p213 = pneg %p207
    %p214 = scmp.eq.s32.totalorder %s24, 3
    %p215 = por %p213, %p214
    %p216 = scmp.ne.s32.totalorder %s208, %s211
    %p217 = scmp.eq.s32.totalorder %s24, 0
    %p218 = por %p216, %p217
    %p219 = scmp.ne.s32.totalorder %s208, %s211
    %p220 = scmp.eq.s32.totalorder %s29, 3
    %p221 = por %p219, %p220
    %p222 = scmp.ne.s32.totalorder %s211, %s212
    %p223 = scmp.eq.s32.totalorder %s29, 0
    %p224 = por %p222, %p223
    %p225 = scmp.ne.s32.totalorder %s211, %s212
    %p226 = scmp.eq.s32.totalorder %s30, 3
    %p227 = por %p225, %p226
    %p229 = scmp.ne.s32.totalorder %s212, %s228
    %p230 = scmp.eq.s32.totalorder %s30, 0
    %p231 = por %p229, %p230
    %s232 = ssub.s32 %s32, %s39
    %p233 = scmp.eq.s32.totalorder %s232, 0
    %s235 = sadd.s32 %s234, 1
    %s236 = scalar_select %p233, %s234, %s235
    %p239 = pneg %p233
    %p240 = scmp.eq.s32.totalorder %s24, 3
    %p241 = por %p239, %p240
    %p242 = scmp.ne.s32.totalorder %s234, %s237
    %p243 = scmp.eq.s32.totalorder %s24, 0
    %p244 = por %p242, %p243
    %p245 = scmp.ne.s32.totalorder %s234, %s237
    %p246 = scmp.eq.s32.totalorder %s29, 3
    %p247 = por %p245, %p246
    %p248 = scmp.ne.s32.totalorder %s237, %s238
    %p249 = scmp.eq.s32.totalorder %s29, 0
    %p250 = por %p248, %p249
    %p251 = scmp.ne.s32.totalorder %s237, %s238
    %p252 = scmp.eq.s32.totalorder %s30, 3
    %p253 = por %p251, %p252
    %p255 = scmp.ne.s32.totalorder %s238, %s254
    %p256 = scmp.eq.s32.totalorder %s30, 0
    %p257 = por %p255, %p256
    %s258 = ssub.s32 %s32, %s39
    %p259 = scmp.eq.s32.totalorder %s258, 0
    %s261 = sadd.s32 %s260, 1
    %s262 = scalar_select %p259, %s260, %s261
    %p265 = pneg %p259
    %p266 = scmp.eq.s32.totalorder %s24, 3
    %p267 = por %p265, %p266
    %p268 = scmp.ne.s32.totalorder %s260, %s263
    %p269 = scmp.eq.s32.totalorder %s24, 0
    %p270 = por %p268, %p269
    %p271 = scmp.ne.s32.totalorder %s260, %s263
    %p272 = scmp.eq.s32.totalorder %s29, 3
    %p273 = por %p271, %p272
    %p274 = scmp.ne.s32.totalorder %s263, %s264
    %p275 = scmp.eq.s32.totalorder %s29, 0
    %p276 = por %p274, %p275
    %p277 = scmp.ne.s32.totalorder %s263, %s264
    %p278 = scmp.eq.s32.totalorder %s30, 3
    %p279 = por %p277, %p278
    %p281 = scmp.ne.s32.totalorder %s264, %s280
    %p282 = scmp.eq.s32.totalorder %s30, 0
    %p283 = por %p281, %p282
    %s284 = ssub.s32 %s32, %s39
    %p285 = scmp.eq.s32.totalorder %s284, 0
    %s287 = sadd.s32 %s286, 1
    %s288 = scalar_select %p285, %s286, %s287
    %p291 = pneg %p285
    %p292 = scmp.eq.s32.totalorder %s24, 3
    %p293 = por %p291, %p292
    %p294 = scmp.ne.s32.totalorder %s286, %s289
    %p295 = scmp.eq.s32.totalorder %s24, 0
    %p296 = por %p294, %p295
    %p297 = scmp.ne.s32.totalorder %s286, %s289
    %p298 = scmp.eq.s32.totalorder %s29, 3
    %p299 = por %p297, %p298
    %p300 = scmp.ne.s32.totalorder %s289, %s290
    %p301 = scmp.eq.s32.totalorder %s29, 0
    %p302 = por %p300, %p301
    %p303 = scmp.ne.s32.totalorder %s289, %s290
    %p304 = scmp.eq.s32.totalorder %s30, 3
    %p305 = por %p303, %p304
    %p307 = scmp.ne.s32.totalorder %s290, %s306
    %p308 = scmp.eq.s32.totalorder %s30, 0
    %p309 = por %p307, %p308
    %s310 = ssub.s32 %s32, %s39
    %p311 = scmp.eq.s32.totalorder %s310, 0
    %s313 = sadd.s32 %s312, 1
    %s314 = scalar_select %p311, %s312, %s313
    %p317 = pneg %p311
    %p318 = scmp.eq.s32.totalorder %s24, 3
    %p319 = por %p317, %p318
    %p320 = scmp.ne.s32.totalorder %s312, %s315
    %p321 = scmp.eq.s32.totalorder %s24, 0
    %p322 = por %p320, %p321
    %p323 = scmp.ne.s32.totalorder %s312, %s315
    %p324 = scmp.eq.s32.totalorder %s29, 3
    %p325 = por %p323, %p324
    %p326 = scmp.ne.s32.totalorder %s315, %s316
    %p327 = scmp.eq.s32.totalorder %s29, 0
    %p328 = por %p326, %p327
    %p329 = scmp.ne.s32.totalorder %s315, %s316
    %p330 = scmp.eq.s32.totalorder %s30, 3
    %p331 = por %p329, %p330
    %p333 = scmp.ne.s32.totalorder %s316, %s332
    %p334 = scmp.eq.s32.totalorder %s30, 0
    %p335 = por %p333, %p334
    %s336 = ssub.s32 %s32, %s39
    %p337 = scmp.eq.s32.totalorder %s336, 0
    %s339 = sadd.s32 %s338, 1
    %s340 = scalar_select %p337, %s338, %s339
    %p343 = pneg %p337
    %p344 = scmp.eq.s32.totalorder %s24, 3
    %p345 = por %p343, %p344
    %p346 = scmp.ne.s32.totalorder %s338, %s341
    %p347 = scmp.eq.s32.totalorder %s24, 0
    %p348 = por %p346, %p347
    %p349 = scmp.ne.s32.totalorder %s338, %s341
    %p350 = scmp.eq.s32.totalorder %s29, 3
    %p351 = por %p349, %p350
    %p352 = scmp.ne.s32.totalorder %s341, %s342
    %p353 = scmp.eq.s32.totalorder %s29, 0
    %p354 = por %p352, %p353
    %p355 = scmp.ne.s32.totalorder %s341, %s342
    %p356 = scmp.eq.s32.totalorder %s30, 3
    %p357 = por %p355, %p356
    %p359 = scmp.ne.s32.totalorder %s342, %s358
    %p360 = scmp.eq.s32.totalorder %s30, 0
    %p361 = por %p359, %p360
    %s362 = ssub.s32 %s32, %s39
    %p363 = scmp.eq.s32.totalorder %s362, 0
    %s365 = sadd.s32 %s364, 1
    %s366 = scalar_select %p363, %s364, %s365
    %p369 = pneg %p363
    %p370 = scmp.eq.s32.totalorder %s24, 3
    %p371 = por %p369, %p370
    %p372 = scmp.ne.s32.totalorder %s364, %s367
    %p373 = scmp.eq.s32.totalorder %s24, 0
    %p374 = por %p372, %p373
    %p375 = scmp.ne.s32.totalorder %s364, %s367
    %p376 = scmp.eq.s32.totalorder %s29, 3
    %p377 = por %p375, %p376
    %p378 = scmp.ne.s32.totalorder %s367, %s368
    %p379 = scmp.eq.s32.totalorder %s29, 0
    %p380 = por %p378, %p379
    %p381 = scmp.ne.s32.totalorder %s367, %s368
    %p382 = scmp.eq.s32.totalorder %s30, 3
    %p383 = por %p381, %p382
    %p385 = scmp.ne.s32.totalorder %s368, %s384
    %p386 = scmp.eq.s32.totalorder %s30, 0
    %p387 = por %p385, %p386
    %s388 = ssub.s32 %s32, %s39
    %p389 = scmp.eq.s32.totalorder %s388, 0
    %s391 = sadd.s32 %s390, 1
    %s392 = scalar_select %p389, %s390, %s391
    %p395 = pneg %p389
    %p396 = scmp.eq.s32.totalorder %s24, 3
    %p397 = por %p395, %p396
    %p398 = scmp.ne.s32.totalorder %s390, %s393
    %p399 = scmp.eq.s32.totalorder %s24, 0
    %p400 = por %p398, %p399
    %p401 = scmp.ne.s32.totalorder %s390, %s393
    %p402 = scmp.eq.s32.totalorder %s29, 3
    %p403 = por %p401, %p402
    %p404 = scmp.ne.s32.totalorder %s393, %s394
    %p405 = scmp.eq.s32.totalorder %s29, 0
    %p406 = por %p404, %p405
    %p407 = scmp.ne.s32.totalorder %s393, %s394
    %p408 = scmp.eq.s32.totalorder %s30, 3
    %p409 = por %p407, %p408
    %p411 = scmp.ne.s32.totalorder %s394, %s410
    %p412 = scmp.eq.s32.totalorder %s30, 0
    %p413 = por %p411, %p412
    %s414 = ssub.s32 %s32, %s39
    %p415 = scmp.eq.s32.totalorder %s414, 0
    %s417 = sadd.s32 %s416, 1
    %s418 = scalar_select %p415, %s416, %s417
    %p421 = pneg %p415
    %p422 = scmp.eq.s32.totalorder %s24, 3
    %p423 = por %p421, %p422
    %p424 = scmp.ne.s32.totalorder %s416, %s419
    %p425 = scmp.eq.s32.totalorder %s24, 0
    %p426 = por %p424, %p425
    %p427 = scmp.ne.s32.totalorder %s416, %s419
    %p428 = scmp.eq.s32.totalorder %s29, 3
    %p429 = por %p427, %p428
    %p430 = scmp.ne.s32.totalorder %s419, %s420
    %p431 = scmp.eq.s32.totalorder %s29, 0
    %p432 = por %p430, %p431
    %p433 = scmp.ne.s32.totalorder %s419, %s420
    %p434 = scmp.eq.s32.totalorder %s30, 3
    %p435 = por %p433, %p434
    %p437 = scmp.ne.s32.totalorder %s420, %s436
    %p438 = scmp.eq.s32.totalorder %s30, 0
    %p439 = por %p437, %p438
    %s440 = ssub.s32 %s32, %s39
    %p441 = scmp.eq.s32.totalorder %s440, 0
    %s443 = sadd.s32 %s442, 1
    %s444 = scalar_select %p441, %s442, %s443
    %p447 = pneg %p441
    %p448 = scmp.eq.s32.totalorder %s24, 3
    %p449 = por %p447, %p448
    %p450 = scmp.ne.s32.totalorder %s442, %s445
    %p451 = scmp.eq.s32.totalorder %s24, 0
    %p452 = por %p450, %p451
    %p453 = scmp.ne.s32.totalorder %s442, %s445
    %p454 = scmp.eq.s32.totalorder %s29, 3
    %p455 = por %p453, %p454
    %p456 = scmp.ne.s32.totalorder %s445, %s446
    %p457 = scmp.eq.s32.totalorder %s29, 0
    %p458 = por %p456, %p457
    %p459 = scmp.ne.s32.totalorder %s445, %s446
    %p460 = scmp.eq.s32.totalorder %s30, 3
    %p461 = por %p459, %p460
    %p463 = scmp.ne.s32.totalorder %s446, %s462
    %p464 = scmp.eq.s32.totalorder %s30, 0
    %p465 = por %p463, %p464
    %s466 = ssub.s32 %s32, %s39
    %p467 = scmp.eq.s32.totalorder %s466, 0
    %s469 = sadd.s32 %s468, 1
    %s470 = scalar_select %p467, %s468, %s469
    %p473 = pneg %p467
    %p474 = scmp.eq.s32.totalorder %s24, 3
    %p475 = por %p473, %p474
    %p476 = scmp.ne.s32.totalorder %s468, %s471
    %p477 = scmp.eq.s32.totalorder %s24, 0
    %p478 = por %p476, %p477
    %p479 = scmp.ne.s32.totalorder %s468, %s471
    %p480 = scmp.eq.s32.totalorder %s29, 3
    %p481 = por %p479, %p480
    %p482 = scmp.ne.s32.totalorder %s471, %s472
    %p483 = scmp.eq.s32.totalorder %s29, 0
    %p484 = por %p482, %p483
    %p485 = scmp.ne.s32.totalorder %s471, %s472
    %p486 = scmp.eq.s32.totalorder %s30, 3
    %p487 = por %p485, %p486
    %p489 = scmp.ne.s32.totalorder %s472, %s488
    %p490 = scmp.eq.s32.totalorder %s30, 0
    %p491 = por %p489, %p490
    %s492 = ssub.s32 %s31, %s43
    %p493 = scmp.eq.s32.totalorder %s492, 0
    %s495 = sadd.s32 %s494, 1
    %s496 = scalar_select %p493, %s494, %s495
    %p499 = pneg %p493
    %p500 = scmp.eq.s32.totalorder %s24, 3
    %p501 = por %p499, %p500
    %p502 = scmp.ne.s32.totalorder %s494, %s497
    %p503 = scmp.eq.s32.totalorder %s24, 0
    %p504 = por %p502, %p503
    %p505 = scmp.ne.s32.totalorder %s494, %s497
    %p506 = scmp.eq.s32.totalorder %s29, 3
    %p507 = por %p505, %p506
    %p508 = scmp.ne.s32.totalorder %s497, %s498
    %p509 = scmp.eq.s32.totalorder %s29, 0
    %p510 = por %p508, %p509
    %p511 = scmp.ne.s32.totalorder %s497, %s498
    %p512 = scmp.eq.s32.totalorder %s30, 3
    %p513 = por %p511, %p512
    %p515 = scmp.ne.s32.totalorder %s498, %s514
    %p516 = scmp.eq.s32.totalorder %s30, 0
    %p517 = por %p515, %p516
    %p518 = scmp.le.s32.totalorder 1, %s24
    %p519 = scmp.lt.s32.totalorder %s24, 5
    %p520 = pnand %p518, %p519
    %p521 = pneg %p520
    // Predicated region
    $region9: #{forward.2} parent=5 // pred_check
      _
    $region10: #{forward.2} parent=5 // pred_check_branch
      %523 = sbr.rel (%p520) target = $region12
    $region11: #{forward.2} parent=5 // pred_region
      %s524 = ssub.s32 %s24, 1
      // Predicated region
      $region13: #{forward.2} parent=11 // pred_check
        %p525 = pneg %p109
      $region14: #{forward.2} parent=11 // pred_check_branch
        %527 = sbr.rel (%p525) target = $region16
      $region15: #{forward.2} parent=11 // pred_region
        _
      $region16: #{forward.2} parent=11 // pred_fallthru
        _
      // Predicated region
      $region17: #{forward.2} parent=11 // pred_check
        %p528 = pneg %p130
      $region18: #{forward.2} parent=11 // pred_check_branch
        %530 = sbr.rel (%p528) target = $region20
      $region19: #{forward.2} parent=11 // pred_region
        _
      $region20: #{forward.2} parent=11 // pred_fallthru
        _
      // Predicated region
      $region21: #{forward.2} parent=11 // pred_check
        %p531 = pneg %p151
      $region22: #{forward.2} parent=11 // pred_check_branch
        %533 = sbr.rel (%p531) target = $region24
      $region23: #{forward.2} parent=11 // pred_region
        _
      $region24: #{forward.2} parent=11 // pred_fallthru
        _
      // Predicated region
      $region25: #{forward.2} parent=11 // pred_check
        %p534 = pneg %p172
      $region26: #{forward.2} parent=11 // pred_check_branch
        %536 = sbr.rel (%p534) target = $region28
      $region27: #{forward.2} parent=11 // pred_region
        _
      $region28: #{forward.2} parent=11 // pred_fallthru
        _
    $region12: #{forward.2} parent=5 // pred_fallthru
      _
    %p537 = scmp.lt.s32.totalorder %s24, 4
    // Predicated region
    $region29: #{forward.2} parent=5 // pred_check
      %p538 = pneg %p537
    $region30: #{forward.2} parent=5 // pred_check_branch
      %540 = sbr.rel (%p538) target = $region32
    $region31: #{forward.2} parent=5 // pred_region
      // Predicated region
      $region33: #{forward.2} parent=31 // pred_check
        %p541 = pneg %p56
      $region34: #{forward.2} parent=31 // pred_check_branch
        %543 = sbr.rel (%p541) target = $region36
      $region35: #{forward.2} parent=31 // pred_region
        %p544 = scmp.lt.s32.totalorder %s31, 1
        %s545 = scalar_select %p544, %s31, 1
        %s546 = smul.addr %s545, 16
        %s547 = smul.addr %s546, 8
        %s548 = scalar_lea.vmem %s0, %s547
      $region36: #{forward.2} parent=31 // pred_fallthru
        _
      // Predicated region
      $region37: #{forward.2} parent=31 // pred_check
        %p549 = pneg %p82
      $region38: #{forward.2} parent=31 // pred_check_branch
        %551 = sbr.rel (%p549) target = $region40
      $region39: #{forward.2} parent=31 // pred_region
        %p552 = scmp.lt.s32.totalorder %s31, 1
        %s553 = scalar_select %p552, %s31, 1
        %s554 = smul.addr %s553, 8
        %s555 = smul.addr %s554, 8
        %s556 = scalar_lea.vmem %s1, %s555
      $region40: #{forward.2} parent=31 // pred_fallthru
        _
      // Predicated region
      $region41: #{forward.2} parent=31 // pred_check
        %p557 = pneg %p192
      $region42: #{forward.2} parent=31 // pred_check_branch
        %559 = sbr.rel (%p557) target = $region44
      $region43: #{forward.2} parent=31 // pred_region
        %p560 = scmp.lt.s32.totalorder %s32, 1
        %s561 = scalar_select %p560, %s32, 1
        %s562 = scalar_lea.vmem %s6, %s561
      $region44: #{forward.2} parent=31 // pred_fallthru
        _
      // Predicated region
      $region45: #{forward.2} parent=31 // pred_check
        %p563 = pneg %p218
      $region46: #{forward.2} parent=31 // pred_check_branch
        %565 = sbr.rel (%p563) target = $region48
      $region47: #{forward.2} parent=31 // pred_region
        %p566 = scmp.lt.s32.totalorder %s32, 1
        %s567 = scalar_select %p566, %s32, 1
        %s568 = scalar_lea.vmem %s7, %s567
      $region48: #{forward.2} parent=31 // pred_fallthru
        _
      // Predicated region
      $region49: #{forward.2} parent=31 // pred_check
        %p569 = pneg %p244
      $region50: #{forward.2} parent=31 // pred_check_branch
        %571 = sbr.rel (%p569) target = $region52
      $region51: #{forward.2} parent=31 // pred_region
        %p572 = scmp.lt.s32.totalorder %s32, 1
        %s573 = scalar_select %p572, %s32, 1
        %s574 = smul.addr %s573, 48
        %s575 = smul.addr %s574, 4
        %s576 = scalar_lea.vmem %s8, %s575
      $region52: #{forward.2} parent=31 // pred_fallthru
        _
      // Predicated region
      $region53: #{forward.2} parent=31 // pred_check
        %p577 = pneg %p270
      $region54: #{forward.2} parent=31 // pred_check_branch
        %579 = sbr.rel (%p577) target = $region56
      $region55: #{forward.2} parent=31 // pred_region
        %p580 = scmp.lt.s32.totalorder %s32, 1
        %s581 = scalar_select %p580, %s32, 1
        %s582 = smul.addr %s581, 3
        %s583 = scalar_lea.vmem %s9, %s582
      $region56: #{forward.2} parent=31 // pred_fallthru
        _
      // Predicated region
      $region57: #{forward.2} parent=31 // pred_check
        %p584 = pneg %p296
      $region58: #{forward.2} parent=31 // pred_check_branch
        %586 = sbr.rel (%p584) target = $region60
      $region59: #{forward.2} parent=31 // pred_region
        %p587 = scmp.lt.s32.totalorder %s32, 1
        %s588 = scalar_select %p587, %s32, 1
        %s589 = smul.addr %s588, 16
        %s590 = smul.addr %s589, 4
        %s591 = scalar_lea.vmem %s10, %s590
      $region60: #{forward.2} parent=31 // pred_fallthru
        _
      // Predicated region
      $region61: #{forward.2} parent=31 // pred_check
        %p592 = pneg %p322
      $region62: #{forward.2} parent=31 // pred_check_branch
        %594 = sbr.rel (%p592) target = $region64
      $region63: #{forward.2} parent=31 // pred_region
        %p595 = scmp.lt.s32.totalorder %s32, 1
        %s596 = scalar_select %p595, %s32, 1
        %s597 = scalar_lea.vmem %s11, %s596
      $region64: #{forward.2} parent=31 // pred_fallthru
        _
      // Predicated region
      $region65: #{forward.2} parent=31 // pred_check
        %p598 = pneg %p348
      $region66: #{forward.2} parent=31 // pred_check_branch
        %600 = sbr.rel (%p598) target = $region68
      $region67: #{forward.2} parent=31 // pred_region
        %p601 = scmp.lt.s32.totalorder %s32, 1
        %s602 = scalar_select %p601, %s32, 1
        %s603 = scalar_lea.vmem %s12, %s602
      $region68: #{forward.2} parent=31 // pred_fallthru
        _
      // Predicated region
      $region69: #{forward.2} parent=31 // pred_check
        %p604 = pneg %p374
      $region70: #{forward.2} parent=31 // pred_check_branch
        %606 = sbr.rel (%p604) target = $region72
      $region71: #{forward.2} parent=31 // pred_region
        %p607 = scmp.lt.s32.totalorder %s32, 1
        %s608 = scalar_select %p607, %s32, 1
        %s609 = scalar_lea.vmem %s13, %s608
      $region72: #{forward.2} parent=31 // pred_fallthru
        _
      // Predicated region
      $region73: #{forward.2} parent=31 // pred_check
        %p610 = pneg %p400
      $region74: #{forward.2} parent=31 // pred_check_branch
        %612 = sbr.rel (%p610) target = $region76
      $region75: #{forward.2} parent=31 // pred_region
        %p613 = scmp.lt.s32.totalorder %s32, 1
        %s614 = scalar_select %p613, %s32, 1
        %s615 = smul.addr %s614, 64
        %s616 = smul.addr %s615, 4
        %s617 = scalar_lea.vmem %s14, %s616
      $region76: #{forward.2} parent=31 // pred_fallthru
        _
      // Predicated region
      $region77: #{forward.2} parent=31 // pred_check
        %p618 = pneg %p426
      $region78: #{forward.2} parent=31 // pred_check_branch
        %620 = sbr.rel (%p618) target = $region80
      $region79: #{forward.2} parent=31 // pred_region
        %p621 = scmp.lt.s32.totalorder %s32, 1
        %s622 = scalar_select %p621, %s32, 1
        %s623 = smul.addr %s622, 4
        %s624 = scalar_lea.vmem %s15, %s623
      $region80: #{forward.2} parent=31 // pred_fallthru
        _
      // Predicated region
      $region81: #{forward.2} parent=31 // pred_check
        %p625 = pneg %p452
      $region82: #{forward.2} parent=31 // pred_check_branch
        %627 = sbr.rel (%p625) target = $region84
      $region83: #{forward.2} parent=31 // pred_region
        %p628 = scmp.lt.s32.totalorder %s32, 1
        %s629 = scalar_select %p628, %s32, 1
        %s630 = smul.addr %s629, 64
        %s631 = smul.addr %s630, 4
        %s632 = scalar_lea.vmem %s16, %s631
      $region84: #{forward.2} parent=31 // pred_fallthru
        _
      // Predicated region
      $region85: #{forward.2} parent=31 // pred_check
        %p633 = pneg %p478
      $region86: #{forward.2} parent=31 // pred_check_branch
        %635 = sbr.rel (%p633) target = $region88
      $region87: #{forward.2} parent=31 // pred_region
        %p636 = scmp.lt.s32.totalorder %s32, 1
        %s637 = scalar_select %p636, %s32, 1
        %s638 = scalar_lea.vmem %s17, %s637
      $region88: #{forward.2} parent=31 // pred_fallthru
        _
    $region32: #{forward.2} parent=5 // pred_fallthru
      _
    %p639 = scmp.le.s32.totalorder 1, %s24
    %p640 = scmp.lt.s32.totalorder %s24, 5
    %p641 = pnand %p639, %p640
    %p642 = pneg %p641
    // Predicated region
    $region89: #{forward.2} parent=5 // pred_check
      _
    $region90: #{forward.2} parent=5 // pred_check_branch
      %644 = sbr.rel (%p641) target = $region92
    $region91: #{forward.2} parent=5 // pred_region
      %s645 = ssub.s32 %s24, 1
      %p646 = scmp.lt.s32.totalorder %s33, 1
      %s647 = scalar_select %p646, %s33, 1
      %s648 = smul.addr %s647, 16
      %s649 = smul.addr %s648, 8
      %s650 = scalar_lea.vmem %s0, %s649
      %p651 = pneg %p62
      %p652 = pneg %p59
      %p653 = scmp.lt.s32.totalorder %s33, 1
      %s654 = scalar_select %p653, %s33, 1
      %s655 = smul.addr %s654, 8
      %s656 = smul.addr %s655, 8
      %s657 = scalar_lea.vmem %s1, %s656
      %p658 = pneg %p88
      %p659 = pneg %p85
      %p660 = pneg %p109
      %p661 = pneg %p106
      %p662 = pneg %p130
      %p663 = pneg %p127
      %p664 = pneg %p151
      %p665 = pneg %p148
      %p666 = pneg %p172
      %p667 = pneg %p169
      %p668 = scmp.lt.s32.totalorder %s34, 1
      %s669 = scalar_select %p668, %s34, 1
      %s670 = scalar_lea.vmem %s6, %s669
      %p671 = pneg %p198
      %p672 = pneg %p195
      %p673 = scmp.lt.s32.totalorder %s34, 1
      %s674 = scalar_select %p673, %s34, 1
      %s675 = scalar_lea.vmem %s7, %s674
      %p676 = pneg %p224
      %p677 = pneg %p221
      %p678 = scmp.lt.s32.totalorder %s34, 1
      %s679 = scalar_select %p678, %s34, 1
      %s680 = smul.addr %s679, 48
      %s681 = smul.addr %s680, 4
      %s682 = scalar_lea.vmem %s8, %s681
      %p683 = pneg %p250
      %p684 = pneg %p247
      %p685 = scmp.lt.s32.totalorder %s34, 1
      %s686 = scalar_select %p685, %s34, 1
      %s687 = smul.addr %s686, 3
      %s688 = scalar_lea.vmem %s9, %s687
      %p689 = pneg %p276
      %p690 = pneg %p273
      %p691 = scmp.lt.s32.totalorder %s34, 1
      %s692 = scalar_select %p691, %s34, 1
      %s693 = smul.addr %s692, 16
      %s694 = smul.addr %s693, 4
      %s695 = scalar_lea.vmem %s10, %s694
      %p696 = pneg %p302
      %p697 = pneg %p299
      %p698 = scmp.lt.s32.totalorder %s34, 1
      %s699 = scalar_select %p698, %s34, 1
      %s700 = scalar_lea.vmem %s11, %s699
      %p701 = pneg %p328
      %p702 = pneg %p325
      %p703 = scmp.lt.s32.totalorder %s34, 1
      %s704 = scalar_select %p703, %s34, 1
      %s705 = scalar_lea.vmem %s12, %s704
      %p706 = pneg %p354
      %p707 = pneg %p351
      %p708 = scmp.lt.s32.totalorder %s34, 1
      %s709 = scalar_select %p708, %s34, 1
      %s710 = scalar_lea.vmem %s13, %s709
      %p711 = pneg %p380
      %p712 = pneg %p377
      %p713 = scmp.lt.s32.totalorder %s34, 1
      %s714 = scalar_select %p713, %s34, 1
      %s715 = smul.addr %s714, 64
      %s716 = smul.addr %s715, 4
      %s717 = scalar_lea.vmem %s14, %s716
      %p718 = pneg %p406
      %p719 = pneg %p403
      %p720 = scmp.lt.s32.totalorder %s34, 1
      %s721 = scalar_select %p720, %s34, 1
      %s722 = smul.addr %s721, 4
      %s723 = scalar_lea.vmem %s15, %s722
      %p724 = pneg %p432
      %p725 = pneg %p429
      %p726 = scmp.lt.s32.totalorder %s34, 1
      %s727 = scalar_select %p726, %s34, 1
      %s728 = smul.addr %s727, 64
      %s729 = smul.addr %s728, 4
      %s730 = scalar_lea.vmem %s16, %s729
      %p731 = pneg %p458
      %p732 = pneg %p455
      %p733 = scmp.lt.s32.totalorder %s34, 1
      %s734 = scalar_select %p733, %s34, 1
      %s735 = scalar_lea.vmem %s17, %s734
      %p736 = pneg %p484
      %p737 = pneg %p481
      %p738 = pneg %p510
      %p739 = pneg %p507
      %p740 = scmp.lt.s32.totalorder %s33, 1
      %s741 = scalar_select %p740, %s33, 1
      %s742 = smul.addr %s741, 8
      %s743 = smul.addr %s742, 8
      %s744 = scalar_lea.vmem %s18, %s743
      %p745 = scmp.lt.s32.totalorder %s33, 1
      %s746 = scalar_select %p745, %s33, 1
      %s747 = smul.addr %s746, 16
      %s748 = smul.addr %s747, 8
      %s749 = scalar_lea.vmem %s0, %s748
      %p750 = scmp.lt.s32.totalorder %s33, 1
      %s751 = scalar_select %p750, %s33, 1
      %s752 = smul.addr %s751, 8
      %s753 = smul.addr %s752, 8
      %s754 = scalar_lea.vmem %s1, %s753
      %p755 = scmp.lt.s32.totalorder %s34, 1
      %s756 = scalar_select %p755, %s34, 1
      %s757 = scalar_lea.vmem %s6, %s756
      %p758 = scmp.lt.s32.totalorder %s34, 1
      %s759 = scalar_select %p758, %s34, 1
      %s760 = scalar_lea.vmem %s7, %s759
      %p761 = scmp.lt.s32.totalorder %s34, 1
      %s762 = scalar_select %p761, %s34, 1
      %s763 = smul.addr %s762, 48
      %s764 = smul.addr %s763, 4
      %s765 = scalar_lea.vmem %s8, %s764
      %p766 = scmp.lt.s32.totalorder %s34, 1
      %s767 = scalar_select %p766, %s34, 1
      %s768 = smul.addr %s767, 3
      %s769 = scalar_lea.vmem %s9, %s768
      %p770 = scmp.lt.s32.totalorder %s34, 1
      %s771 = scalar_select %p770, %s34, 1
      %s772 = smul.addr %s771, 16
      %s773 = smul.addr %s772, 4
      %s774 = scalar_lea.vmem %s10, %s773
      %p775 = scmp.lt.s32.totalorder %s34, 1
      %s776 = scalar_select %p775, %s34, 1
      %s777 = scalar_lea.vmem %s11, %s776
      %p778 = scmp.lt.s32.totalorder %s34, 1
      %s779 = scalar_select %p778, %s34, 1
      %s780 = scalar_lea.vmem %s12, %s779
      %p781 = scmp.lt.s32.totalorder %s34, 1
      %s782 = scalar_select %p781, %s34, 1
      %s783 = scalar_lea.vmem %s13, %s782
      %p784 = scmp.lt.s32.totalorder %s34, 1
      %s785 = scalar_select %p784, %s34, 1
      %s786 = smul.addr %s785, 64
      %s787 = smul.addr %s786, 4
      %s788 = scalar_lea.vmem %s14, %s787
      %p789 = scmp.lt.s32.totalorder %s34, 1
      %s790 = scalar_select %p789, %s34, 1
      %s791 = smul.addr %s790, 4
      %s792 = scalar_lea.vmem %s15, %s791
      %p793 = scmp.lt.s32.totalorder %s34, 1
      %s794 = scalar_select %p793, %s34, 1
      %s795 = smul.addr %s794, 64
      %s796 = smul.addr %s795, 4
      %s797 = scalar_lea.vmem %s16, %s796
      %p798 = scmp.lt.s32.totalorder %s34, 1
      %s799 = scalar_select %p798, %s34, 1
      %s800 = scalar_lea.vmem %s17, %s799
      %p801 = scmp.lt.s32.totalorder %s33, 1
      %s802 = scalar_select %p801, %s33, 1
      %s803 = smul.addr %s802, 8
      %s804 = smul.addr %s803, 8
      %s805 = scalar_lea.vmem %s18, %s804
      %p807 = scmp.eq.s32.totalorder %s34, 0
      // Predicated region
      $region93: #{forward.2} parent=91 // pred_check
        %p808 = pneg %p807
      $region94: #{forward.2} parent=91 // pred_check_branch
        %810 = sbr.rel (%p808) target = $region96
      $region95: #{forward.2} parent=91 // pred_region
        %v811 = vld [vmem:[%s749] sm:$0xff]
        %v812 = vld [vmem:[%s749 + $0x8] sm:$0xff]
        %v813 = vld [vmem:[%s749 + $0x10] sm:$0xff]
        %v814 = vld [vmem:[%s749 + $0x18] sm:$0xff]
        %v815 = vld [vmem:[%s749 + $0x20] sm:$0xff]
        %v816 = vld [vmem:[%s749 + $0x28] sm:$0xff]
        %v817 = vld [vmem:[%s749 + $0x30] sm:$0xff]
        %v818 = vld [vmem:[%s749 + $0x38] sm:$0xff]
        %v819 = vld [vmem:[%s749 + $0x40] sm:$0xff]
        %v820 = vld [vmem:[%s749 + $0x48] sm:$0xff]
        %v821 = vld [vmem:[%s749 + $0x50] sm:$0xff]
        %v822 = vld [vmem:[%s749 + $0x58] sm:$0xff]
        %v823 = vld [vmem:[%s749 + $0x60] sm:$0xff]
        %v824 = vld [vmem:[%s749 + $0x68] sm:$0xff]
        %v825 = vld [vmem:[%s749 + $0x70] sm:$0xff]
        %v826 = vld [vmem:[%s749 + $0x78] sm:$0xff]
        %v827 = vpack.c.bf16 %v813, %v811
        %v828 = vpack.c.bf16 %v814, %v812
        %v829 = vpack.c.bf16 %v817, %v815
        %v830 = vpack.c.bf16 %v818, %v816
        %v831 = vpack.c.bf16 %v821, %v819
        %v832 = vpack.c.bf16 %v822, %v820
        %v833 = vpack.c.bf16 %v825, %v823
        %v834 = vpack.c.bf16 %v826, %v824
        %v835 = vld [vmem:[%s2] sm:$0xf]
        %v836 = vld [vmem:[%s2 + $0x4] sm:$0xf]
        %v837 = vld [vmem:[%s2 + $0x8] sm:$0xf]
        %v838 = vld [vmem:[%s2 + $0xc] sm:$0xf]
        %v839 = vld [vmem:[%s2 + $0x10] sm:$0xf]
        %v840 = vld [vmem:[%s2 + $0x14] sm:$0xf]
        %v841 = vld [vmem:[%s2 + $0x18] sm:$0xf]
        %v842 = vld [vmem:[%s2 + $0x1c] sm:$0xf]
        %v843 = vld [vmem:[%s2 + $0x20] sm:$0xf]
        %v844 = vld [vmem:[%s2 + $0x24] sm:$0xf]
        %v845 = vld [vmem:[%s2 + $0x28] sm:$0xf]
        %v846 = vld [vmem:[%s2 + $0x2c] sm:$0xf]
        %v847 = vld [vmem:[%s2 + $0x30] sm:$0xf]
        %v848 = vld [vmem:[%s2 + $0x34] sm:$0xf]
        %v849 = vld [vmem:[%s2 + $0x38] sm:$0xf]
        %v850 = vld [vmem:[%s2 + $0x3c] sm:$0xf]
        %v851 = vld [vmem:[%s2 + $0x40] sm:$0xf]
        %v852 = vld [vmem:[%s2 + $0x44] sm:$0xf]
        %v853 = vld [vmem:[%s2 + $0x48] sm:$0xf]
        %v854 = vld [vmem:[%s2 + $0x4c] sm:$0xf]
        %v855 = vld [vmem:[%s2 + $0x50] sm:$0xf]
        %v856 = vld [vmem:[%s2 + $0x54] sm:$0xf]
        %v857 = vld [vmem:[%s2 + $0x58] sm:$0xf]
        %v858 = vld [vmem:[%s2 + $0x5c] sm:$0xf]
        %v859 = vld [vmem:[%s3] sm:$0x1]
        %v861 = vperm.slane %v859, 0
        %v887 = vunpack.c.l.b16 %v835
        %v888 = vunpack.c.l.b16 %v836
        %v889 = vunpack.c.l.b16 %v837
        %v890 = vunpack.c.l.b16 %v838
        %v891 = vunpack.c.l.b16 %v839
        %v892 = vunpack.c.l.b16 %v840
        %v893 = vunpack.c.l.b16 %v841
        %v894 = vunpack.c.l.b16 %v842
        %v895 = vunpack.c.l.b16 %v843
        %v896 = vunpack.c.l.b16 %v844
        %v897 = vunpack.c.l.b16 %v845
        %v898 = vunpack.c.l.b16 %v846
        %v899 = vunpack.c.l.b16 %v847
        %v900 = vunpack.c.l.b16 %v848
        %v901 = vunpack.c.l.b16 %v849
        %v902 = vunpack.c.l.b16 %v850
        %v903 = vunpack.c.l.b16 %v851
        %v904 = vunpack.c.l.b16 %v852
        %v905 = vunpack.c.l.b16 %v853
        %v906 = vunpack.c.l.b16 %v854
        %v907 = vunpack.c.l.b16 %v855
        %v908 = vunpack.c.l.b16 %v856
        %v909 = vunpack.c.l.b16 %v857
        %v910 = vunpack.c.l.b16 %v858
        %v911 = vpack.c.b16 %v888, %v887
        %v912 = vpack.c.b16 %v890, %v889
        %v913 = vpack.c.b16 %v892, %v891
        %v914 = vpack.c.b16 %v894, %v893
        %v915 = vpack.c.b16 %v896, %v895
        %v916 = vpack.c.b16 %v898, %v897
        %v917 = vpack.c.b16 %v900, %v899
        %v918 = vpack.c.b16 %v902, %v901
        %v919 = vpack.c.b16 %v904, %v903
        %v920 = vpack.c.b16 %v906, %v905
        %v921 = vpack.c.b16 %v908, %v907
        %v922 = vpack.c.b16 %v910, %v909
        %vm935 = vcmask 523264
        %v937 = vsel %vm935, %v828, 0
        %v940 = vsel %vm935, %v830, 0
        %v943 = vsel %vm935, %v832, 0
        %v946 = vsel %vm935, %v834, 0
        %948 = vmatpush.bf16.msra.mxu0 %v918
        %949 = vmatpush.bf16.msra.mxu0 %v917
        %950 = vmatpush.bf16.msra.mxu0 %v916
        %951 = vmatpush.bf16.msra.mxu0 %v915
        %952 = vmatpush.bf16.msra.mxu0 %v914
        %953 = vmatpush.bf16.msra.mxu0 %v913
        %954 = vmatpush.bf16.msra.mxu0 %v912
        %955 = vmatpush.bf16.msra.mxu0 %v911
        %956 = vmatmul.bf16.gmra.mxu0 %v827
        %v957 = vpop.f32.mrf.mxu0
        %v958 = vadd.f32 %v861, %v957
        %v959 = vpop.f32.mrf.mxu0
        %v960 = vadd.f32 %v861, %v959
        %961 = vmatmul.bf16.gmra.mxu0 %v829
        %v962 = vpop.f32.mrf.mxu0
        %v963 = vadd.f32 %v861, %v962
        %v964 = vpop.f32.mrf.mxu0
        %v965 = vadd.f32 %v861, %v964
        %966 = vmatmul.bf16.gmra.mxu0 %v831
        %v967 = vpop.f32.mrf.mxu0
        %v968 = vadd.f32 %v861, %v967
        %v969 = vpop.f32.mrf.mxu0
        %v970 = vadd.f32 %v861, %v969
        %971 = vmatmul.bf16.gmra.mxu0 %v833
        %v972 = vpop.f32.mrf.mxu0
        %v973 = vadd.f32 %v861, %v972
        %v974 = vpop.f32.mrf.mxu0
        %v975 = vadd.f32 %v861, %v974
        %976 = vdwg.mxu0
        %977 = vmatpush.bf16.msra.mxu0 0
        %978 = vmatpush.bf16.msra.mxu0 0
        %979 = vmatpush.bf16.msra.mxu0 0
        %980 = vmatpush.bf16.msra.mxu0 0
        %981 = vmatpush.bf16.msra.mxu0 %v922
        %982 = vmatpush.bf16.msra.mxu0 %v921
        %983 = vmatpush.bf16.msra.mxu0 %v920
        %984 = vmatpush.bf16.msra.mxu0 %v919
        %985 = vmatmul.bf16.gmra.mxu0 %v937
        %v986 = vpop.f32.mrf.mxu0
        %v987 = vadd.f32 %v958, %v986
        %v988 = vpop.f32.mrf.mxu0
        %v989 = vadd.f32 %v960, %v988
        %990 = vmatmul.bf16.gmra.mxu0 %v940
        %v991 = vpop.f32.mrf.mxu0
        %v992 = vadd.f32 %v963, %v991
        %v993 = vpop.f32.mrf.mxu0
        %v994 = vadd.f32 %v965, %v993
        %995 = vmatmul.bf16.gmra.mxu0 %v943
        %v996 = vpop.f32.mrf.mxu0
        %v997 = vadd.f32 %v968, %v996
        %v998 = vpop.f32.mrf.mxu0
        %v999 = vadd.f32 %v970, %v998
        %1000 = vmatmul.bf16.gmra.mxu0 %v946
        %v1001 = vpop.f32.mrf.mxu0
        %v1002 = vadd.f32 %v973, %v1001
        %v1003 = vpop.f32.mrf.mxu0
        %v1004 = vadd.f32 %v975, %v1003
        %1005 = vdwg.mxu0
        %v1006 = vld [vmem:[%s754] sm:$0xff]
        %v1007 = vld [vmem:[%s754 + $0x8] sm:$0xff]
        %v1008 = vld [vmem:[%s754 + $0x10] sm:$0xff]
        %v1009 = vld [vmem:[%s754 + $0x18] sm:$0xff]
        %v1010 = vld [vmem:[%s754 + $0x20] sm:$0xff]
        %v1011 = vld [vmem:[%s754 + $0x28] sm:$0xff]
        %v1012 = vld [vmem:[%s754 + $0x30] sm:$0xff]
        %v1013 = vld [vmem:[%s754 + $0x38] sm:$0xff]
        %vm1014 = vcmp.gt.f32.partialorder %v1006, 0.5
        %vm1015 = vcmp.gt.f32.partialorder %v1007, 0.5
        %vm1016 = vcmp.gt.f32.partialorder %v1008, 0.5
        %vm1017 = vcmp.gt.f32.partialorder %v1009, 0.5
        %vm1018 = vcmp.gt.f32.partialorder %v1010, 0.5
        %vm1019 = vcmp.gt.f32.partialorder %v1011, 0.5
        %vm1020 = vcmp.gt.f32.partialorder %v1012, 0.5
        %vm1021 = vcmp.gt.f32.partialorder %v1013, 0.5
        %v1022 = vld [vmem:[%s4] sm:$0x1]
        %v1023 = vsel %vm1014, 1, 0
        %v1024 = vsel %vm1015, 1, 0
        %v1025 = vsel %vm1016, 1, 0
        %v1026 = vsel %vm1017, 1, 0
        %v1027 = vsel %vm1018, 1, 0
        %v1028 = vsel %vm1019, 1, 0
        %v1029 = vsel %vm1020, 1, 0
        %v1030 = vsel %vm1021, 1, 0
        %1031 = vset.pattern.permute.xlu0 0
        %1032 = vperm.xlu0 %1031, %v1023
        %v1033 = vpop.permute.xlu0 %1032
        %1034 = vset.pattern.permute.xlu0 0
        %1035 = vperm.xlu0 %1034, %v1024
        %v1036 = vpop.permute.xlu0 %1035
        %1037 = vset.pattern.permute.xlu0 0
        %1038 = vperm.xlu0 %1037, %v1025
        %v1039 = vpop.permute.xlu0 %1038
        %1040 = vset.pattern.permute.xlu0 0
        %1041 = vperm.xlu0 %1040, %v1026
        %v1042 = vpop.permute.xlu0 %1041
        %1043 = vset.pattern.permute.xlu0 0
        %1044 = vperm.xlu0 %1043, %v1027
        %v1045 = vpop.permute.xlu0 %1044
        %1046 = vset.pattern.permute.xlu0 0
        %1047 = vperm.xlu0 %1046, %v1028
        %v1048 = vpop.permute.xlu0 %1047
        %1049 = vset.pattern.permute.xlu0 0
        %1050 = vperm.xlu0 %1049, %v1029
        %v1051 = vpop.permute.xlu0 %1050
        %1052 = vset.pattern.permute.xlu0 0
        %1053 = vperm.xlu0 %1052, %v1030
        %v1054 = vpop.permute.xlu0 %1053
        %vm1055 = vcmp.eq.s32.totalorder %v1033, 1
        %vm1056 = vcmp.eq.s32.totalorder %v1036, 1
        %vm1057 = vcmp.eq.s32.totalorder %v1039, 1
        %vm1058 = vcmp.eq.s32.totalorder %v1042, 1
        %vm1059 = vcmp.eq.s32.totalorder %v1045, 1
        %vm1060 = vcmp.eq.s32.totalorder %v1048, 1
        %vm1061 = vcmp.eq.s32.totalorder %v1051, 1
        %vm1062 = vcmp.eq.s32.totalorder %v1054, 1
        %v1064 = vperm.slane %v1022, 0
        %v1066 = vsel %vm1055, %v1064, %v987
        %v1067 = vsel %vm1056, %v1064, %v989
        %v1068 = vsel %vm1057, %v1064, %v992
        %v1069 = vsel %vm1058, %v1064, %v994
        %v1070 = vsel %vm1059, %v1064, %v997
        %v1071 = vsel %vm1060, %v1064, %v999
        %v1072 = vsel %vm1061, %v1064, %v1002
        %v1073 = vsel %vm1062, %v1064, %v1004
        %v1074 = vld [vmem:[%s5] sm:$0xff]
        %v1075 = vld [vmem:[%s5 + $0x8] sm:$0xff]
        %v1076 = vld [vmem:[%s5 + $0x10] sm:$0xff]
        %v1077 = vld [vmem:[%s5 + $0x18] sm:$0xff]
        %v1078 = vld [vmem:[%s5 + $0x20] sm:$0xff]
        %v1079 = vld [vmem:[%s5 + $0x28] sm:$0xff]
        %v1080 = vld [vmem:[%s5 + $0x30] sm:$0xff]
        %v1081 = vld [vmem:[%s5 + $0x38] sm:$0xff]
        %v1082 = vadd.f32 %v1066, %v1074
        %v1083 = vadd.f32 %v1067, %v1075
        %v1084 = vadd.f32 %v1068, %v1076
        %v1085 = vadd.f32 %v1069, %v1077
        %v1086 = vadd.f32 %v1070, %v1078
        %v1087 = vadd.f32 %v1071, %v1079
        %v1088 = vadd.f32 %v1072, %v1080
        %v1089 = vadd.f32 %v1073, %v1081
        %1090 = vst [vmem:[%s805] sm:$0xff] %v1082
        %1091 = vst [vmem:[%s805 + $0x8] sm:$0xff] %v1083
        %1092 = vst [vmem:[%s805 + $0x10] sm:$0xff] %v1084
        %1093 = vst [vmem:[%s805 + $0x18] sm:$0xff] %v1085
        %1094 = vst [vmem:[%s805 + $0x20] sm:$0xff] %v1086
        %1095 = vst [vmem:[%s805 + $0x28] sm:$0xff] %v1087
        %1096 = vst [vmem:[%s805 + $0x30] sm:$0xff] %v1088
        %1097 = vst [vmem:[%s805 + $0x38] sm:$0xff] %v1089
      $region96: #{forward.2} parent=91 // pred_fallthru
        _
      %v1098 = vld [vmem:[%s805] sm:$0xff]
      %v1099 = vld [vmem:[%s805 + $0x8] sm:$0xff]
      %v1100 = vld [vmem:[%s805 + $0x10] sm:$0xff]
      %v1101 = vld [vmem:[%s805 + $0x18] sm:$0xff]
      %v1102 = vld [vmem:[%s805 + $0x20] sm:$0xff]
      %v1103 = vld [vmem:[%s805 + $0x28] sm:$0xff]
      %v1104 = vld [vmem:[%s805 + $0x30] sm:$0xff]
      %v1105 = vld [vmem:[%s805 + $0x38] sm:$0xff]
      %v1106 = vld [vmem:[%s757] sm:$0x1]
      %v1107 = vld [vmem:[%s760] sm:$0x1]
      %1108 = vadd.xlane.f32.xlu0 %v1098
      %v1109 = vpop.xlane.xlu0 %1108
      %1110 = vadd.xlane.f32.xlu0 %v1099
      %v1111 = vpop.xlane.xlu0 %1110
      %1112 = vadd.xlane.f32.xlu0 %v1100
      %v1113 = vpop.xlane.xlu0 %1112
      %1114 = vadd.xlane.f32.xlu0 %v1101
      %v1115 = vpop.xlane.xlu0 %1114
      %1116 = vadd.xlane.f32.xlu0 %v1102
      %v1117 = vpop.xlane.xlu0 %1116
      %1118 = vadd.xlane.f32.xlu0 %v1103
      %v1119 = vpop.xlane.xlu0 %1118
      %1120 = vadd.xlane.f32.xlu0 %v1104
      %v1121 = vpop.xlane.xlu0 %1120
      %1122 = vadd.xlane.f32.xlu0 %v1105
      %v1123 = vpop.xlane.xlu0 %1122
      %v1124 = vrcp.pop 128.0
      %v1125 = vmul.f32 128.0, %v1124
      %v1126 = vsub.f32 1.0, %v1125
      %v1127 = vmul.f32 %v1124, %v1126
      %v1128 = vadd.f32 %v1124, %v1127
      %vm1129 = vweird.f32 %v1124
      %v1130 = vsel %vm1129, %v1124, %v1128
      %v1131 = vmul.f32 %v1109, %v1130
      %v1132 = vmul.f32 %v1111, %v1130
      %v1133 = vmul.f32 %v1113, %v1130
      %v1134 = vmul.f32 %v1115, %v1130
      %v1135 = vmul.f32 %v1117, %v1130
      %v1136 = vmul.f32 %v1119, %v1130
      %v1137 = vmul.f32 %v1121, %v1130
      %v1138 = vmul.f32 %v1123, %v1130
      %v1139 = vsub.f32 %v1098, %v1131
      %v1140 = vsub.f32 %v1099, %v1132
      %v1141 = vsub.f32 %v1100, %v1133
      %v1142 = vsub.f32 %v1101, %v1134
      %v1143 = vsub.f32 %v1102, %v1135
      %v1144 = vsub.f32 %v1103, %v1136
      %v1145 = vsub.f32 %v1104, %v1137
      %v1146 = vsub.f32 %v1105, %v1138
      %v1147 = vmul.f32 %v1139, %v1139
      %v1148 = vmul.f32 %v1140, %v1140
      %v1149 = vmul.f32 %v1141, %v1141
      %v1150 = vmul.f32 %v1142, %v1142
      %v1151 = vmul.f32 %v1143, %v1143
      %v1152 = vmul.f32 %v1144, %v1144
      %v1153 = vmul.f32 %v1145, %v1145
      %v1154 = vmul.f32 %v1146, %v1146
      %1155 = vadd.xlane.f32.xlu0 %v1147
      %v1156 = vpop.xlane.xlu0 %1155
      %1157 = vadd.xlane.f32.xlu0 %v1148
      %v1158 = vpop.xlane.xlu0 %1157
      %1159 = vadd.xlane.f32.xlu0 %v1149
      %v1160 = vpop.xlane.xlu0 %1159
      %1161 = vadd.xlane.f32.xlu0 %v1150
      %v1162 = vpop.xlane.xlu0 %1161
      %1163 = vadd.xlane.f32.xlu0 %v1151
      %v1164 = vpop.xlane.xlu0 %1163
      %1165 = vadd.xlane.f32.xlu0 %v1152
      %v1166 = vpop.xlane.xlu0 %1165
      %1167 = vadd.xlane.f32.xlu0 %v1153
      %v1168 = vpop.xlane.xlu0 %1167
      %1169 = vadd.xlane.f32.xlu0 %v1154
      %v1170 = vpop.xlane.xlu0 %1169
      %v1171 = vmul.f32 %v1156, %v1130
      %v1172 = vmul.f32 %v1158, %v1130
      %v1173 = vmul.f32 %v1160, %v1130
      %v1174 = vmul.f32 %v1162, %v1130
      %v1175 = vmul.f32 %v1164, %v1130
      %v1176 = vmul.f32 %v1166, %v1130
      %v1177 = vmul.f32 %v1168, %v1130
      %v1178 = vmul.f32 %v1170, %v1130
      %v1179 = vadd.f32 %v1171, 1e-06
      %v1180 = vadd.f32 %v1172, 1e-06
      %v1181 = vadd.f32 %v1173, 1e-06
      %v1182 = vadd.f32 %v1174, 1e-06
      %v1183 = vadd.f32 %v1175, 1e-06
      %v1184 = vadd.f32 %v1176, 1e-06
      %v1185 = vadd.f32 %v1177, 1e-06
      %v1186 = vadd.f32 %v1178, 1e-06
      %v1187 = vrsqrt.pop %v1179
      %v1188 = vmul.f32 %v1187, %v1179
      %v1189 = vmul.f32 %v1188, %v1187
      %v1190 = vmul.f32 0.5, %v1189
      %v1191 = vsub.f32 1.5, %v1190
      %v1192 = vmul.f32 %v1187, %v1191
      %vm1193 = vweird.f32 %v1179
      %vm1194 = vweird.f32 %v1187
      %vm1195 = vmor %vm1193, %vm1194
      %v1196 = vsel %vm1195, %v1187, %v1192
      %v1197 = vrsqrt.pop %v1180
      %v1198 = vmul.f32 %v1197, %v1180
      %v1199 = vmul.f32 %v1198, %v1197
      %v1200 = vmul.f32 0.5, %v1199
      %v1201 = vsub.f32 1.5, %v1200
      %v1202 = vmul.f32 %v1197, %v1201
      %vm1203 = vweird.f32 %v1180
      %vm1204 = vweird.f32 %v1197
      %vm1205 = vmor %vm1203, %vm1204
      %v1206 = vsel %vm1205, %v1197, %v1202
      %v1207 = vrsqrt.pop %v1181
      %v1208 = vmul.f32 %v1207, %v1181
      %v1209 = vmul.f32 %v1208, %v1207
      %v1210 = vmul.f32 0.5, %v1209
      %v1211 = vsub.f32 1.5, %v1210
      %v1212 = vmul.f32 %v1207, %v1211
      %vm1213 = vweird.f32 %v1181
      %vm1214 = vweird.f32 %v1207
      %vm1215 = vmor %vm1213, %vm1214
      %v1216 = vsel %vm1215, %v1207, %v1212
      %v1217 = vrsqrt.pop %v1182
      %v1218 = vmul.f32 %v1217, %v1182
      %v1219 = vmul.f32 %v1218, %v1217
      %v1220 = vmul.f32 0.5, %v1219
      %v1221 = vsub.f32 1.5, %v1220
      %v1222 = vmul.f32 %v1217, %v1221
      %vm1223 = vweird.f32 %v1182
      %vm1224 = vweird.f32 %v1217
      %vm1225 = vmor %vm1223, %vm1224
      %v1226 = vsel %vm1225, %v1217, %v1222
      %v1227 = vrsqrt.pop %v1183
      %v1228 = vmul.f32 %v1227, %v1183
      %v1229 = vmul.f32 %v1228, %v1227
      %v1230 = vmul.f32 0.5, %v1229
      %v1231 = vsub.f32 1.5, %v1230
      %v1232 = vmul.f32 %v1227, %v1231
      %vm1233 = vweird.f32 %v1183
      %vm1234 = vweird.f32 %v1227
      %vm1235 = vmor %vm1233, %vm1234
      %v1236 = vsel %vm1235, %v1227, %v1232
      %v1237 = vrsqrt.pop %v1184
      %v1238 = vmul.f32 %v1237, %v1184
      %v1239 = vmul.f32 %v1238, %v1237
      %v1240 = vmul.f32 0.5, %v1239
      %v1241 = vsub.f32 1.5, %v1240
      %v1242 = vmul.f32 %v1237, %v1241
      %vm1243 = vweird.f32 %v1184
      %vm1244 = vweird.f32 %v1237
      %vm1245 = vmor %vm1243, %vm1244
      %v1246 = vsel %vm1245, %v1237, %v1242
      %v1247 = vrsqrt.pop %v1185
      %v1248 = vmul.f32 %v1247, %v1185
      %v1249 = vmul.f32 %v1248, %v1247
      %v1250 = vmul.f32 0.5, %v1249
      %v1251 = vsub.f32 1.5, %v1250
      %v1252 = vmul.f32 %v1247, %v1251
      %vm1253 = vweird.f32 %v1185
      %vm1254 = vweird.f32 %v1247
      %vm1255 = vmor %vm1253, %vm1254
      %v1256 = vsel %vm1255, %v1247, %v1252
      %v1257 = vrsqrt.pop %v1186
      %v1258 = vmul.f32 %v1257, %v1186
      %v1259 = vmul.f32 %v1258, %v1257
      %v1260 = vmul.f32 0.5, %v1259
      %v1261 = vsub.f32 1.5, %v1260
      %v1262 = vmul.f32 %v1257, %v1261
      %vm1263 = vweird.f32 %v1186
      %vm1264 = vweird.f32 %v1257
      %vm1265 = vmor %vm1263, %vm1264
      %v1266 = vsel %vm1265, %v1257, %v1262
      %v1267 = vmul.f32 %v1139, %v1196
      %v1268 = vmul.f32 %v1140, %v1206
      %v1269 = vmul.f32 %v1141, %v1216
      %v1270 = vmul.f32 %v1142, %v1226
      %v1271 = vmul.f32 %v1143, %v1236
      %v1272 = vmul.f32 %v1144, %v1246
      %v1273 = vmul.f32 %v1145, %v1256
      %v1274 = vmul.f32 %v1146, %v1266
      %v1276 = vperm.slane %v1106, 0
      %v1278 = vmul.f32 %v1267, %v1276
      %v1279 = vmul.f32 %v1268, %v1276
      %v1280 = vmul.f32 %v1269, %v1276
      %v1281 = vmul.f32 %v1270, %v1276
      %v1282 = vmul.f32 %v1271, %v1276
      %v1283 = vmul.f32 %v1272, %v1276
      %v1284 = vmul.f32 %v1273, %v1276
      %v1285 = vmul.f32 %v1274, %v1276
      %v1287 = vperm.slane %v1107, 0
      %v1289 = vadd.f32 %v1278, %v1287
      %v1290 = vadd.f32 %v1279, %v1287
      %v1291 = vadd.f32 %v1280, %v1287
      %v1292 = vadd.f32 %v1281, %v1287
      %v1293 = vadd.f32 %v1282, %v1287
      %v1294 = vadd.f32 %v1283, %v1287
      %v1295 = vadd.f32 %v1284, %v1287
      %v1296 = vadd.f32 %v1285, %v1287
      %v1297 = vpack.c.bf16 %v1290, %v1289
      %v1298 = vpack.c.bf16 %v1292, %v1291
      %v1299 = vpack.c.bf16 %v1294, %v1293
      %v1300 = vpack.c.bf16 %v1296, %v1295
      %v1301 = vld [vmem:[%s765] sm:$0xff]
      %v1302 = vld [vmem:[%s765 + $0x8] sm:$0xf]
      %v1303 = vld [vmem:[%s765 + $0xc] sm:$0xff]
      %v1304 = vld [vmem:[%s765 + $0x14] sm:$0xf]
      %v1305 = vld [vmem:[%s765 + $0x18] sm:$0xff]
      %v1306 = vld [vmem:[%s765 + $0x20] sm:$0xf]
      %v1307 = vld [vmem:[%s765 + $0x24] sm:$0xff]
      %v1308 = vld [vmem:[%s765 + $0x2c] sm:$0xf]
      %v1309 = vld [vmem:[%s765 + $0x30] sm:$0xff]
      %v1310 = vld [vmem:[%s765 + $0x38] sm:$0xf]
      %v1311 = vld [vmem:[%s765 + $0x3c] sm:$0xff]
      %v1312 = vld [vmem:[%s765 + $0x44] sm:$0xf]
      %v1313 = vld [vmem:[%s765 + $0x48] sm:$0xff]
      %v1314 = vld [vmem:[%s765 + $0x50] sm:$0xf]
      %v1315 = vld [vmem:[%s765 + $0x54] sm:$0xff]
      %v1316 = vld [vmem:[%s765 + $0x5c] sm:$0xf]
      %v1317 = vld [vmem:[%s765 + $0x60] sm:$0xff]
      %v1318 = vld [vmem:[%s765 + $0x68] sm:$0xf]
      %v1319 = vld [vmem:[%s765 + $0x6c] sm:$0xff]
      %v1320 = vld [vmem:[%s765 + $0x74] sm:$0xf]
      %v1321 = vld [vmem:[%s765 + $0x78] sm:$0xff]
      %v1322 = vld [vmem:[%s765 + $0x80] sm:$0xf]
      %v1323 = vld [vmem:[%s765 + $0x84] sm:$0xff]
      %v1324 = vld [vmem:[%s765 + $0x8c] sm:$0xf]
      %v1325 = vld [vmem:[%s765 + $0x90] sm:$0xff]
      %v1326 = vld [vmem:[%s765 + $0x98] sm:$0xf]
      %v1327 = vld [vmem:[%s765 + $0x9c] sm:$0xff]
      %v1328 = vld [vmem:[%s765 + $0xa4] sm:$0xf]
      %v1329 = vld [vmem:[%s765 + $0xa8] sm:$0xff]
      %v1330 = vld [vmem:[%s765 + $0xb0] sm:$0xf]
      %v1331 = vld [vmem:[%s765 + $0xb4] sm:$0xff]
      %v1332 = vld [vmem:[%s765 + $0xbc] sm:$0xf]
      %v1333 = vld [vmem:[%s769] sm:$0x7]
      %v1335 = vperm.slane %v1333, 0
      %v1336 = vperm.slane %v1333, 1
      %v1337 = vperm.slane %v1333, 2
      %v1373 = vunpack.c.l.b16 %v1301
      %v1374 = vunpack.c.h.b16 %v1301
      %v1375 = vunpack.c.l.b16 %v1302
      %v1376 = vunpack.c.l.b16 %v1303
      %v1377 = vunpack.c.h.b16 %v1303
      %v1378 = vunpack.c.l.b16 %v1304
      %v1379 = vunpack.c.l.b16 %v1305
      %v1380 = vunpack.c.h.b16 %v1305
      %v1381 = vunpack.c.l.b16 %v1306
      %v1382 = vunpack.c.l.b16 %v1307
      %v1383 = vunpack.c.h.b16 %v1307
      %v1384 = vunpack.c.l.b16 %v1308
      %v1385 = vunpack.c.l.b16 %v1309
      %v1386 = vunpack.c.h.b16 %v1309
      %v1387 = vunpack.c.l.b16 %v1310
      %v1388 = vunpack.c.l.b16 %v1311
      %v1389 = vunpack.c.h.b16 %v1311
      %v1390 = vunpack.c.l.b16 %v1312
      %v1391 = vunpack.c.l.b16 %v1313
      %v1392 = vunpack.c.h.b16 %v1313
      %v1393 = vunpack.c.l.b16 %v1314
      %v1394 = vunpack.c.l.b16 %v1315
      %v1395 = vunpack.c.h.b16 %v1315
      %v1396 = vunpack.c.l.b16 %v1316
      %v1397 = vunpack.c.l.b16 %v1317
      %v1398 = vunpack.c.h.b16 %v1317
      %v1399 = vunpack.c.l.b16 %v1318
      %v1400 = vunpack.c.l.b16 %v1319
      %v1401 = vunpack.c.h.b16 %v1319
      %v1402 = vunpack.c.l.b16 %v1320
      %v1403 = vunpack.c.l.b16 %v1321
      %v1404 = vunpack.c.h.b16 %v1321
      %v1405 = vunpack.c.l.b16 %v1322
      %v1406 = vunpack.c.l.b16 %v1323
      %v1407 = vunpack.c.h.b16 %v1323
      %v1408 = vunpack.c.l.b16 %v1324
      %v1409 = vunpack.c.l.b16 %v1325
      %v1410 = vunpack.c.h.b16 %v1325
      %v1411 = vunpack.c.l.b16 %v1326
      %v1412 = vunpack.c.l.b16 %v1327
      %v1413 = vunpack.c.h.b16 %v1327
      %v1414 = vunpack.c.l.b16 %v1328
      %v1415 = vunpack.c.l.b16 %v1329
      %v1416 = vunpack.c.h.b16 %v1329
      %v1417 = vunpack.c.l.b16 %v1330
      %v1418 = vunpack.c.l.b16 %v1331
      %v1419 = vunpack.c.h.b16 %v1331
      %v1420 = vunpack.c.l.b16 %v1332
      %v1421 = vpack.c.b16 %v1376, %v1373
      %v1422 = vpack.c.b16 %v1377, %v1374
      %v1423 = vpack.c.b16 %v1378, %v1375
      %v1424 = vpack.c.b16 %v1382, %v1379
      %v1425 = vpack.c.b16 %v1383, %v1380
      %v1426 = vpack.c.b16 %v1384, %v1381
      %v1427 = vpack.c.b16 %v1388, %v1385
      %v1428 = vpack.c.b16 %v1389, %v1386
      %v1429 = vpack.c.b16 %v1390, %v1387
      %v1430 = vpack.c.b16 %v1394, %v1391
      %v1431 = vpack.c.b16 %v1395, %v1392
      %v1432 = vpack.c.b16 %v1396, %v1393
      %v1433 = vpack.c.b16 %v1400, %v1397
      %v1434 = vpack.c.b16 %v1401, %v1398
      %v1435 = vpack.c.b16 %v1402, %v1399
      %v1436 = vpack.c.b16 %v1406, %v1403
      %v1437 = vpack.c.b16 %v1407, %v1404
      %v1438 = vpack.c.b16 %v1408, %v1405
      %v1439 = vpack.c.b16 %v1412, %v1409
      %v1440 = vpack.c.b16 %v1413, %v1410
      %v1441 = vpack.c.b16 %v1414, %v1411
      %v1442 = vpack.c.b16 %v1418, %v1415
      %v1443 = vpack.c.b16 %v1419, %v1416
      %v1444 = vpack.c.b16 %v1420, %v1417
      %1469 = vmatpush.bf16.msra.mxu0 %v1442
      %1470 = vmatpush.bf16.msra.mxu0 %v1439
      %1471 = vmatpush.bf16.msra.mxu0 %v1436
      %1472 = vmatpush.bf16.msra.mxu0 %v1433
      %1473 = vmatpush.bf16.msra.mxu0 %v1430
      %1474 = vmatpush.bf16.msra.mxu0 %v1427
      %1475 = vmatpush.bf16.msra.mxu0 %v1424
      %1476 = vmatpush.bf16.msra.mxu0 %v1421
      %1477 = vmatmul.bf16.gmra.mxu0 %v1297
      %v1478 = vpop.f32.mrf.mxu0
      %v1479 = vadd.f32 %v1335, %v1478
      %v1480 = vpop.f32.mrf.mxu0
      %v1481 = vadd.f32 %v1335, %v1480
      %1482 = vmatmul.bf16.gmra.mxu0 %v1298
      %v1483 = vpop.f32.mrf.mxu0
      %v1484 = vadd.f32 %v1335, %v1483
      %v1485 = vpop.f32.mrf.mxu0
      %v1486 = vadd.f32 %v1335, %v1485
      %1487 = vmatmul.bf16.gmra.mxu0 %v1299
      %v1488 = vpop.f32.mrf.mxu0
      %v1489 = vadd.f32 %v1335, %v1488
      %v1490 = vpop.f32.mrf.mxu0
      %v1491 = vadd.f32 %v1335, %v1490
      %1492 = vmatmul.bf16.gmra.mxu0 %v1300
      %v1493 = vpop.f32.mrf.mxu0
      %v1494 = vadd.f32 %v1335, %v1493
      %v1495 = vpop.f32.mrf.mxu0
      %v1496 = vadd.f32 %v1335, %v1495
      %1497 = vdwg.mxu0
      %1498 = vmatpush.bf16.msra.mxu0 %v1443
      %1499 = vmatpush.bf16.msra.mxu0 %v1440
      %1500 = vmatpush.bf16.msra.mxu0 %v1437
      %1501 = vmatpush.bf16.msra.mxu0 %v1434
      %1502 = vmatpush.bf16.msra.mxu0 %v1431
      %1503 = vmatpush.bf16.msra.mxu0 %v1428
      %1504 = vmatpush.bf16.msra.mxu0 %v1425
      %1505 = vmatpush.bf16.msra.mxu0 %v1422
      %1506 = vmatmul.bf16.gmra.mxu0 %v1297
      %v1507 = vpop.f32.mrf.mxu0
      %v1508 = vadd.f32 %v1336, %v1507
      %v1509 = vpop.f32.mrf.mxu0
      %v1510 = vadd.f32 %v1336, %v1509
      %1511 = vmatmul.bf16.gmra.mxu0 %v1298
      %v1512 = vpop.f32.mrf.mxu0
      %v1513 = vadd.f32 %v1336, %v1512
      %v1514 = vpop.f32.mrf.mxu0
      %v1515 = vadd.f32 %v1336, %v1514
      %1516 = vmatmul.bf16.gmra.mxu0 %v1299
      %v1517 = vpop.f32.mrf.mxu0
      %v1518 = vadd.f32 %v1336, %v1517
      %v1519 = vpop.f32.mrf.mxu0
      %v1520 = vadd.f32 %v1336, %v1519
      %1521 = vmatmul.bf16.gmra.mxu0 %v1300
      %v1522 = vpop.f32.mrf.mxu0
      %v1523 = vadd.f32 %v1336, %v1522
      %v1524 = vpop.f32.mrf.mxu0
      %v1525 = vadd.f32 %v1336, %v1524
      %1526 = vdwg.mxu0
      %1527 = vmatpush.bf16.msra.mxu0 %v1444
      %1528 = vmatpush.bf16.msra.mxu0 %v1441
      %1529 = vmatpush.bf16.msra.mxu0 %v1438
      %1530 = vmatpush.bf16.msra.mxu0 %v1435
      %1531 = vmatpush.bf16.msra.mxu0 %v1432
      %1532 = vmatpush.bf16.msra.mxu0 %v1429
      %1533 = vmatpush.bf16.msra.mxu0 %v1426
      %1534 = vmatpush.bf16.msra.mxu0 %v1423
      %1535 = vmatmul.bf16.gmra.mxu0 %v1297
      %v1536 = vpop.f32.mrf.mxu0
      %v1537 = vadd.f32 %v1337, %v1536
      %v1538 = vpop.f32.mrf.mxu0
      %v1539 = vadd.f32 %v1337, %v1538
      %1540 = vmatmul.bf16.gmra.mxu0 %v1298
      %v1541 = vpop.f32.mrf.mxu0
      %v1542 = vadd.f32 %v1337, %v1541
      %v1543 = vpop.f32.mrf.mxu0
      %v1544 = vadd.f32 %v1337, %v1543
      %1545 = vmatmul.bf16.gmra.mxu0 %v1299
      %v1546 = vpop.f32.mrf.mxu0
      %v1547 = vadd.f32 %v1337, %v1546
      %v1548 = vpop.f32.mrf.mxu0
      %v1549 = vadd.f32 %v1337, %v1548
      %1550 = vmatmul.bf16.gmra.mxu0 %v1300
      %v1551 = vpop.f32.mrf.mxu0
      %v1552 = vadd.f32 %v1337, %v1551
      %v1553 = vpop.f32.mrf.mxu0
      %v1554 = vadd.f32 %v1337, %v1553
      %1555 = vdwg.mxu0
      %v1556 = vpack.c.bf16 %v1508, %v1479
      %v1557 = vpack.c.bf16 %v1537, %v1537
      %v1558 = vpack.c.bf16 %v1510, %v1481
      %v1559 = vpack.c.bf16 %v1539, %v1539
      %v1560 = vpack.c.bf16 %v1513, %v1484
      %v1561 = vpack.c.bf16 %v1542, %v1542
      %v1562 = vpack.c.bf16 %v1515, %v1486
      %v1563 = vpack.c.bf16 %v1544, %v1544
      %v1564 = vpack.c.bf16 %v1518, %v1489
      %v1565 = vpack.c.bf16 %v1547, %v1547
      %v1566 = vpack.c.bf16 %v1520, %v1491
      %v1567 = vpack.c.bf16 %v1549, %v1549
      %v1568 = vpack.c.bf16 %v1523, %v1494
      %v1569 = vpack.c.bf16 %v1552, %v1552
      %v1570 = vpack.c.bf16 %v1525, %v1496
      %v1571 = vpack.c.bf16 %v1554, %v1554
      %1572 = vst [vmem:[#allocation2] sm:$0xff] %v1556
      %1573 = vst [vmem:[#allocation2 + $0x8] sm:$0xf] %v1557
      %1574 = vst [vmem:[#allocation2 + $0xc] sm:$0xff] %v1558
      %1575 = vst [vmem:[#allocation2 + $0x14] sm:$0xf] %v1559
      %1576 = vst [vmem:[#allocation2 + $0x18] sm:$0xff] %v1560
      %1577 = vst [vmem:[#allocation2 + $0x20] sm:$0xf] %v1561
      %1578 = vst [vmem:[#allocation2 + $0x24] sm:$0xff] %v1562
      %1579 = vst [vmem:[#allocation2 + $0x2c] sm:$0xf] %v1563
      %1580 = vst [vmem:[#allocation2 + $0x30] sm:$0xff] %v1564
      %1581 = vst [vmem:[#allocation2 + $0x38] sm:$0xf] %v1565
      %1582 = vst [vmem:[#allocation2 + $0x3c] sm:$0xff] %v1566
      %1583 = vst [vmem:[#allocation2 + $0x44] sm:$0xf] %v1567
      %1584 = vst [vmem:[#allocation2 + $0x48] sm:$0xff] %v1568
      %1585 = vst [vmem:[#allocation2 + $0x50] sm:$0xf] %v1569
      %1586 = vst [vmem:[#allocation2 + $0x54] sm:$0xff] %v1570
      %1587 = vst [vmem:[#allocation2 + $0x5c] sm:$0xf] %v1571
      %v1588 = vld [vmem:[#allocation2] sm:$0xf]
      %v1589 = vld [vmem:[#allocation2 + $0xc] sm:$0xf]
      %v1590 = vld [vmem:[#allocation2 + $0x18] sm:$0xf]
      %v1591 = vld [vmem:[#allocation2 + $0x24] sm:$0xf]
      %v1592 = vld [vmem:[#allocation2 + $0x30] sm:$0xf]
      %v1593 = vld [vmem:[#allocation2 + $0x3c] sm:$0xf]
      %v1594 = vld [vmem:[#allocation2 + $0x48] sm:$0xf]
      %v1595 = vld [vmem:[#allocation2 + $0x54] sm:$0xf]
      %v1596 = vld [vmem:[#allocation2 + $0x4] sm:$0xf]
      %v1597 = vld [vmem:[#allocation2 + $0x10] sm:$0xf]
      %v1598 = vld [vmem:[#allocation2 + $0x1c] sm:$0xf]
      %v1599 = vld [vmem:[#allocation2 + $0x28] sm:$0xf]
      %v1600 = vld [vmem:[#allocation2 + $0x34] sm:$0xf]
      %v1601 = vld [vmem:[#allocation2 + $0x40] sm:$0xf]
      %v1602 = vld [vmem:[#allocation2 + $0x4c] sm:$0xf]
      %v1603 = vld [vmem:[#allocation2 + $0x58] sm:$0xf]
      %v1604 = vld [vmem:[#allocation2 + $0x8] sm:$0xf]
      %v1605 = vld [vmem:[#allocation2 + $0x14] sm:$0xf]
      %v1606 = vld [vmem:[#allocation2 + $0x20] sm:$0xf]
      %v1607 = vld [vmem:[#allocation2 + $0x2c] sm:$0xf]
      %v1608 = vld [vmem:[#allocation2 + $0x38] sm:$0xf]
      %v1609 = vld [vmem:[#allocation2 + $0x44] sm:$0xf]
      %v1610 = vld [vmem:[#allocation2 + $0x50] sm:$0xf]
      %v1611 = vld [vmem:[#allocation2 + $0x5c] sm:$0xf]
      %v1620 = vunpack.c.l.b16 %v1588
      %v1621 = vunpack.c.l.b16 %v1589
      %v1622 = vunpack.c.l.b16 %v1590
      %v1623 = vunpack.c.l.b16 %v1591
      %v1624 = vunpack.c.l.b16 %v1592
      %v1625 = vunpack.c.l.b16 %v1593
      %v1626 = vunpack.c.l.b16 %v1594
      %v1627 = vunpack.c.l.b16 %v1595
      %v1628 = vpack.c.b16 %v1621, %v1620
      %v1629 = vpack.c.b16 %v1623, %v1622
      %v1630 = vpack.c.b16 %v1625, %v1624
      %v1631 = vpack.c.b16 %v1627, %v1626
      %v1640 = vunpack.c.l.b16 %v1596
      %v1641 = vunpack.c.l.b16 %v1597
      %v1642 = vunpack.c.l.b16 %v1598
      %v1643 = vunpack.c.l.b16 %v1599
      %v1644 = vunpack.c.l.b16 %v1600
      %v1645 = vunpack.c.l.b16 %v1601
      %v1646 = vunpack.c.l.b16 %v1602
      %v1647 = vunpack.c.l.b16 %v1603
      %v1648 = vpack.c.b16 %v1641, %v1640
      %v1649 = vpack.c.b16 %v1643, %v1642
      %v1650 = vpack.c.b16 %v1645, %v1644
      %v1651 = vpack.c.b16 %v1647, %v1646
      %vm1652 = vcmask 523264
      %v1654 = vsel %vm1652, %v1628, 0
      %v1657 = vsel %vm1652, %v1629, 0
      %v1660 = vsel %vm1652, %v1630, 0
      %v1663 = vsel %vm1652, %v1631, 0
      %v1666 = vsel %vm1652, %v1648, 0
      %v1669 = vsel %vm1652, %v1649, 0
      %v1672 = vsel %vm1652, %v1650, 0
      %v1675 = vsel %vm1652, %v1651, 0
      %1677 = vmatpush.bf16.xpose.msra.mxu0 0
      %1678 = vmatpush.bf16.xpose.msra.mxu0 0
      %1679 = vmatpush.bf16.xpose.msra.mxu0 0
      %1680 = vmatpush.bf16.xpose.msra.mxu0 0
      %1681 = vmatpush.bf16.xpose.msra.mxu0 %v1675
      %1682 = vmatpush.bf16.xpose.msra.mxu0 %v1672
      %1683 = vmatpush.bf16.xpose.msra.mxu0 %v1669
      %1684 = vmatpush.bf16.xpose.msra.mxu0 %v1666
      %1685 = vmatmul.bf16.gmra.mxu0 %v1654
      %v1686 = vpop.f32.mrf.mxu0
      %v1687 = vadd.f32 0.0, %v1686
      %v1688 = vpop.f32.mrf.mxu0
      %v1689 = vadd.f32 0.0, %v1688
      %1690 = vmatmul.bf16.gmra.mxu0 %v1657
      %v1691 = vpop.f32.mrf.mxu0
      %v1692 = vadd.f32 0.0, %v1691
      %v1693 = vpop.f32.mrf.mxu0
      %v1694 = vadd.f32 0.0, %v1693
      %1695 = vmatmul.bf16.gmra.mxu0 %v1660
      %v1696 = vpop.f32.mrf.mxu0
      %v1697 = vadd.f32 0.0, %v1696
      %v1698 = vpop.f32.mrf.mxu0
      %v1699 = vadd.f32 0.0, %v1698
      %1700 = vmatmul.bf16.gmra.mxu0 %v1663
      %v1701 = vpop.f32.mrf.mxu0
      %v1702 = vadd.f32 0.0, %v1701
      %v1703 = vpop.f32.mrf.mxu0
      %v1704 = vadd.f32 0.0, %v1703
      %1705 = vdwg.mxu0
      %v1706 = vmul.f32 %v1687, 0.125
      %v1707 = vmul.f32 %v1689, 0.125
      %v1708 = vmul.f32 %v1692, 0.125
      %v1709 = vmul.f32 %v1694, 0.125
      %v1710 = vmul.f32 %v1697, 0.125
      %v1711 = vmul.f32 %v1699, 0.125
      %v1712 = vmul.f32 %v1702, 0.125
      %v1713 = vmul.f32 %v1704, 0.125
      %v1714 = vsel %vm1652, %v1706, -inf
      %1715 = vmax.xlane.f32.xlu0 %v1714
      %v1716 = vpop.xlane.xlu0 %1715
      %v1717 = vsel %vm1652, %v1707, -inf
      %1718 = vmax.xlane.f32.xlu0 %v1717
      %v1719 = vpop.xlane.xlu0 %1718
      %v1720 = vsel %vm1652, %v1708, -inf
      %1721 = vmax.xlane.f32.xlu0 %v1720
      %v1722 = vpop.xlane.xlu0 %1721
      %v1723 = vsel %vm1652, %v1709, -inf
      %1724 = vmax.xlane.f32.xlu0 %v1723
      %v1725 = vpop.xlane.xlu0 %1724
      %v1726 = vsel %vm1652, %v1710, -inf
      %1727 = vmax.xlane.f32.xlu0 %v1726
      %v1728 = vpop.xlane.xlu0 %1727
      %v1729 = vsel %vm1652, %v1711, -inf
      %1730 = vmax.xlane.f32.xlu0 %v1729
      %v1731 = vpop.xlane.xlu0 %1730
      %v1732 = vsel %vm1652, %v1712, -inf
      %1733 = vmax.xlane.f32.xlu0 %v1732
      %v1734 = vpop.xlane.xlu0 %1733
      %v1735 = vsel %vm1652, %v1713, -inf
      %1736 = vmax.xlane.f32.xlu0 %v1735
      %v1737 = vpop.xlane.xlu0 %1736
      %v1738 = vsub.f32 %v1706, %v1716
      %v1739 = vsub.f32 %v1707, %v1719
      %v1740 = vsub.f32 %v1708, %v1722
      %v1741 = vsub.f32 %v1709, %v1725
      %v1742 = vsub.f32 %v1710, %v1728
      %v1743 = vsub.f32 %v1711, %v1731
      %v1744 = vsub.f32 %v1712, %v1734
      %v1745 = vsub.f32 %v1713, %v1737
      %v1746 = vmul.f32 %v1738, 1.442695
      %v1747 = vpow.pop %v1746
      %v1748 = vmul.f32 %v1739, 1.442695
      %v1749 = vpow.pop %v1748
      %v1750 = vmul.f32 %v1740, 1.442695
      %v1751 = vpow.pop %v1750
      %v1752 = vmul.f32 %v1741, 1.442695
      %v1753 = vpow.pop %v1752
      %v1754 = vmul.f32 %v1742, 1.442695
      %v1755 = vpow.pop %v1754
      %v1756 = vmul.f32 %v1743, 1.442695
      %v1757 = vpow.pop %v1756
      %v1758 = vmul.f32 %v1744, 1.442695
      %v1759 = vpow.pop %v1758
      %v1760 = vmul.f32 %v1745, 1.442695
      %v1761 = vpow.pop %v1760
      %v1762 = vsel %vm1652, %v1747, 0.0
      %1763 = vadd.xlane.f32.xlu0 %v1762
      %v1764 = vpop.xlane.xlu0 %1763
      %v1765 = vsel %vm1652, %v1749, 0.0
      %1766 = vadd.xlane.f32.xlu0 %v1765
      %v1767 = vpop.xlane.xlu0 %1766
      %v1768 = vsel %vm1652, %v1751, 0.0
      %1769 = vadd.xlane.f32.xlu0 %v1768
      %v1770 = vpop.xlane.xlu0 %1769
      %v1771 = vsel %vm1652, %v1753, 0.0
      %1772 = vadd.xlane.f32.xlu0 %v1771
      %v1773 = vpop.xlane.xlu0 %1772
      %v1774 = vsel %vm1652, %v1755, 0.0
      %1775 = vadd.xlane.f32.xlu0 %v1774
      %v1776 = vpop.xlane.xlu0 %1775
      %v1777 = vsel %vm1652, %v1757, 0.0
      %1778 = vadd.xlane.f32.xlu0 %v1777
      %v1779 = vpop.xlane.xlu0 %1778
      %v1780 = vsel %vm1652, %v1759, 0.0
      %1781 = vadd.xlane.f32.xlu0 %v1780
      %v1782 = vpop.xlane.xlu0 %1781
      %v1783 = vsel %vm1652, %v1761, 0.0
      %1784 = vadd.xlane.f32.xlu0 %v1783
      %v1785 = vpop.xlane.xlu0 %1784
      %v1786 = vrcp.pop %v1764
      %v1787 = vmul.f32 %v1764, %v1786
      %v1788 = vsub.f32 1.0, %v1787
      %v1789 = vmul.f32 %v1786, %v1788
      %v1790 = vadd.f32 %v1786, %v1789
      %vm1791 = vweird.f32 %v1764
      %vm1792 = vweird.f32 %v1786
      %vm1793 = vmor %vm1791, %vm1792
      %v1794 = vsel %vm1793, %v1786, %v1790
      %v1795 = vand.u32 2147483647, %v1764
      %vm1796 = vcmp.eq.f32.partialorder %v1795, 8.507059e+37
      %v1797 = vand.u32 %v1764, 2147483648
      %v1798 = vor.u32 1.1754944e-38, %v1797
      %v1799 = vsel %vm1796, %v1798, %v1794
      %v1800 = vmul.f32 %v1747, %v1799
      %v1801 = vrcp.pop %v1767
      %v1802 = vmul.f32 %v1767, %v1801
      %v1803 = vsub.f32 1.0, %v1802
      %v1804 = vmul.f32 %v1801, %v1803
      %v1805 = vadd.f32 %v1801, %v1804
      %vm1806 = vweird.f32 %v1767
      %vm1807 = vweird.f32 %v1801
      %vm1808 = vmor %vm1806, %vm1807
      %v1809 = vsel %vm1808, %v1801, %v1805
      %v1810 = vand.u32 2147483647, %v1767
      %vm1811 = vcmp.eq.f32.partialorder %v1810, 8.507059e+37
      %v1812 = vand.u32 %v1767, 2147483648
      %v1813 = vor.u32 1.1754944e-38, %v1812
      %v1814 = vsel %vm1811, %v1813, %v1809
      %v1815 = vmul.f32 %v1749, %v1814
      %v1816 = vrcp.pop %v1770
      %v1817 = vmul.f32 %v1770, %v1816
      %v1818 = vsub.f32 1.0, %v1817
      %v1819 = vmul.f32 %v1816, %v1818
      %v1820 = vadd.f32 %v1816, %v1819
      %vm1821 = vweird.f32 %v1770
      %vm1822 = vweird.f32 %v1816
      %vm1823 = vmor %vm1821, %vm1822
      %v1824 = vsel %vm1823, %v1816, %v1820
      %v1825 = vand.u32 2147483647, %v1770
      %vm1826 = vcmp.eq.f32.partialorder %v1825, 8.507059e+37
      %v1827 = vand.u32 %v1770, 2147483648
      %v1828 = vor.u32 1.1754944e-38, %v1827
      %v1829 = vsel %vm1826, %v1828, %v1824
      %v1830 = vmul.f32 %v1751, %v1829
      %v1831 = vrcp.pop %v1773
      %v1832 = vmul.f32 %v1773, %v1831
      %v1833 = vsub.f32 1.0, %v1832
      %v1834 = vmul.f32 %v1831, %v1833
      %v1835 = vadd.f32 %v1831, %v1834
      %vm1836 = vweird.f32 %v1773
      %vm1837 = vweird.f32 %v1831
      %vm1838 = vmor %vm1836, %vm1837
      %v1839 = vsel %vm1838, %v1831, %v1835
      %v1840 = vand.u32 2147483647, %v1773
      %vm1841 = vcmp.eq.f32.partialorder %v1840, 8.507059e+37
      %v1842 = vand.u32 %v1773, 2147483648
      %v1843 = vor.u32 1.1754944e-38, %v1842
      %v1844 = vsel %vm1841, %v1843, %v1839
      %v1845 = vmul.f32 %v1753, %v1844
      %v1846 = vrcp.pop %v1776
      %v1847 = vmul.f32 %v1776, %v1846
      %v1848 = vsub.f32 1.0, %v1847
      %v1849 = vmul.f32 %v1846, %v1848
      %v1850 = vadd.f32 %v1846, %v1849
      %vm1851 = vweird.f32 %v1776
      %vm1852 = vweird.f32 %v1846
      %vm1853 = vmor %vm1851, %vm1852
      %v1854 = vsel %vm1853, %v1846, %v1850
      %v1855 = vand.u32 2147483647, %v1776
      %vm1856 = vcmp.eq.f32.partialorder %v1855, 8.507059e+37
      %v1857 = vand.u32 %v1776, 2147483648
      %v1858 = vor.u32 1.1754944e-38, %v1857
      %v1859 = vsel %vm1856, %v1858, %v1854
      %v1860 = vmul.f32 %v1755, %v1859
      %v1861 = vrcp.pop %v1779
      %v1862 = vmul.f32 %v1779, %v1861
      %v1863 = vsub.f32 1.0, %v1862
      %v1864 = vmul.f32 %v1861, %v1863
      %v1865 = vadd.f32 %v1861, %v1864
      %vm1866 = vweird.f32 %v1779
      %vm1867 = vweird.f32 %v1861
      %vm1868 = vmor %vm1866, %vm1867
      %v1869 = vsel %vm1868, %v1861, %v1865
      %v1870 = vand.u32 2147483647, %v1779
      %vm1871 = vcmp.eq.f32.partialorder %v1870, 8.507059e+37
      %v1872 = vand.u32 %v1779, 2147483648
      %v1873 = vor.u32 1.1754944e-38, %v1872
      %v1874 = vsel %vm1871, %v1873, %v1869
      %v1875 = vmul.f32 %v1757, %v1874
      %v1876 = vrcp.pop %v1782
      %v1877 = vmul.f32 %v1782, %v1876
      %v1878 = vsub.f32 1.0, %v1877
      %v1879 = vmul.f32 %v1876, %v1878
      %v1880 = vadd.f32 %v1876, %v1879
      %vm1881 = vweird.f32 %v1782
      %vm1882 = vweird.f32 %v1876
      %vm1883 = vmor %vm1881, %vm1882
      %v1884 = vsel %vm1883, %v1876, %v1880
      %v1885 = vand.u32 2147483647, %v1782
      %vm1886 = vcmp.eq.f32.partialorder %v1885, 8.507059e+37
      %v1887 = vand.u32 %v1782, 2147483648
      %v1888 = vor.u32 1.1754944e-38, %v1887
      %v1889 = vsel %vm1886, %v1888, %v1884
      %v1890 = vmul.f32 %v1759, %v1889
      %v1891 = vrcp.pop %v1785
      %v1892 = vmul.f32 %v1785, %v1891
      %v1893 = vsub.f32 1.0, %v1892
      %v1894 = vmul.f32 %v1891, %v1893
      %v1895 = vadd.f32 %v1891, %v1894
      %vm1896 = vweird.f32 %v1785
      %vm1897 = vweird.f32 %v1891
      %vm1898 = vmor %vm1896, %vm1897
      %v1899 = vsel %vm1898, %v1891, %v1895
      %v1900 = vand.u32 2147483647, %v1785
      %vm1901 = vcmp.eq.f32.partialorder %v1900, 8.507059e+37
      %v1902 = vand.u32 %v1785, 2147483648
      %v1903 = vor.u32 1.1754944e-38, %v1902
      %v1904 = vsel %vm1901, %v1903, %v1899
      %v1905 = vmul.f32 %v1761, %v1904
      %v1906 = vpack.c.bf16 %v1815, %v1800
      %v1907 = vpack.c.bf16 %v1845, %v1830
      %v1908 = vpack.c.bf16 %v1875, %v1860
      %v1909 = vpack.c.bf16 %v1905, %v1890
      %v1918 = vunpack.c.l.b16 %v1604
      %v1919 = vunpack.c.l.b16 %v1605
      %v1920 = vunpack.c.l.b16 %v1606
      %v1921 = vunpack.c.l.b16 %v1607
      %v1922 = vunpack.c.l.b16 %v1608
      %v1923 = vunpack.c.l.b16 %v1609
      %v1924 = vunpack.c.l.b16 %v1610
      %v1925 = vunpack.c.l.b16 %v1611
      %v1926 = vpack.c.b16 %v1919, %v1918
      %v1927 = vpack.c.b16 %v1921, %v1920
      %v1928 = vpack.c.b16 %v1923, %v1922
      %v1929 = vpack.c.b16 %v1925, %v1924
      %v1935 = vsel %vm1652, %v1906, 0
      %v1938 = vsel %vm1652, %v1907, 0
      %v1941 = vsel %vm1652, %v1908, 0
      %v1944 = vsel %vm1652, %v1909, 0
      %1946 = vmatpush.bf16.msra.mxu0 0
      %1947 = vmatpush.bf16.msra.mxu0 0
      %1948 = vmatpush.bf16.msra.mxu0 0
      %1949 = vmatpush.bf16.msra.mxu0 0
      %1950 = vmatpush.bf16.msra.mxu0 %v1929
      %1951 = vmatpush.bf16.msra.mxu0 %v1928
      %1952 = vmatpush.bf16.msra.mxu0 %v1927
      %1953 = vmatpush.bf16.msra.mxu0 %v1926
      %1954 = vmatmul.bf16.gmra.mxu0 %v1935
      %v1955 = vpop.f32.mrf.mxu0
      %v1956 = vadd.f32 0.0, %v1955
      %v1957 = vpop.f32.mrf.mxu0
      %v1958 = vadd.f32 0.0, %v1957
      %1959 = vmatmul.bf16.gmra.mxu0 %v1938
      %v1960 = vpop.f32.mrf.mxu0
      %v1961 = vadd.f32 0.0, %v1960
      %v1962 = vpop.f32.mrf.mxu0
      %v1963 = vadd.f32 0.0, %v1962
      %1964 = vmatmul.bf16.gmra.mxu0 %v1941
      %v1965 = vpop.f32.mrf.mxu0
      %v1966 = vadd.f32 0.0, %v1965
      %v1967 = vpop.f32.mrf.mxu0
      %v1968 = vadd.f32 0.0, %v1967
      %1969 = vmatmul.bf16.gmra.mxu0 %v1944
      %v1970 = vpop.f32.mrf.mxu0
      %v1971 = vadd.f32 0.0, %v1970
      %v1972 = vpop.f32.mrf.mxu0
      %v1973 = vadd.f32 0.0, %v1972
      %1974 = vdwg.mxu0
      %v1975 = vpack.c.bf16 %v1956, %v1956
      %v1976 = vpack.c.bf16 %v1958, %v1958
      %v1977 = vpack.c.bf16 %v1961, %v1961
      %v1978 = vpack.c.bf16 %v1963, %v1963
      %v1979 = vpack.c.bf16 %v1966, %v1966
      %v1980 = vpack.c.bf16 %v1968, %v1968
      %v1981 = vpack.c.bf16 %v1971, %v1971
      %v1982 = vpack.c.bf16 %v1973, %v1973
      %vm1983 = vcmask 519168
      %1984 = vst.msk [vmem:[#allocation3] sm:$0xf] %vm1983, %v1975
      %1985 = vst.msk [vmem:[#allocation3 + $0x4] sm:$0xf] %vm1983, %v1976
      %1986 = vst.msk [vmem:[#allocation3 + $0x8] sm:$0xf] %vm1983, %v1977
      %1987 = vst.msk [vmem:[#allocation3 + $0xc] sm:$0xf] %vm1983, %v1978
      %1988 = vst.msk [vmem:[#allocation3 + $0x10] sm:$0xf] %vm1983, %v1979
      %1989 = vst.msk [vmem:[#allocation3 + $0x14] sm:$0xf] %vm1983, %v1980
      %1990 = vst.msk [vmem:[#allocation3 + $0x18] sm:$0xf] %vm1983, %v1981
      %1991 = vst.msk [vmem:[#allocation3 + $0x1c] sm:$0xf] %vm1983, %v1982
      %v1992 = vld [vmem:[#allocation2] sm:$0xf]
      %v1993 = vld [vmem:[#allocation2 + $0xc] sm:$0xf]
      %v1994 = vld [vmem:[#allocation2 + $0x18] sm:$0xf]
      %v1995 = vld [vmem:[#allocation2 + $0x24] sm:$0xf]
      %v1996 = vld [vmem:[#allocation2 + $0x30] sm:$0xf]
      %v1997 = vld [vmem:[#allocation2 + $0x3c] sm:$0xf]
      %v1998 = vld [vmem:[#allocation2 + $0x48] sm:$0xf]
      %v1999 = vld [vmem:[#allocation2 + $0x54] sm:$0xf]
      %v2000 = vld [vmem:[#allocation2 + $0x4] sm:$0xf]
      %v2001 = vld [vmem:[#allocation2 + $0x10] sm:$0xf]
      %v2002 = vld [vmem:[#allocation2 + $0x1c] sm:$0xf]
      %v2003 = vld [vmem:[#allocation2 + $0x28] sm:$0xf]
      %v2004 = vld [vmem:[#allocation2 + $0x34] sm:$0xf]
      %v2005 = vld [vmem:[#allocation2 + $0x40] sm:$0xf]
      %v2006 = vld [vmem:[#allocation2 + $0x4c] sm:$0xf]
      %v2007 = vld [vmem:[#allocation2 + $0x58] sm:$0xf]
      %v2008 = vld [vmem:[#allocation2 + $0x8] sm:$0xf]
      %v2009 = vld [vmem:[#allocation2 + $0x14] sm:$0xf]
      %v2010 = vld [vmem:[#allocation2 + $0x20] sm:$0xf]
      %v2011 = vld [vmem:[#allocation2 + $0x2c] sm:$0xf]
      %v2012 = vld [vmem:[#allocation2 + $0x38] sm:$0xf]
      %v2013 = vld [vmem:[#allocation2 + $0x44] sm:$0xf]
      %v2014 = vld [vmem:[#allocation2 + $0x50] sm:$0xf]
      %v2015 = vld [vmem:[#allocation2 + $0x5c] sm:$0xf]
      %v2024 = vunpack.c.l.b16 %v1992
      %v2025 = vunpack.c.l.b16 %v1993
      %v2026 = vunpack.c.l.b16 %v1994
      %v2027 = vunpack.c.l.b16 %v1995
      %v2028 = vunpack.c.l.b16 %v1996
      %v2029 = vunpack.c.l.b16 %v1997
      %v2030 = vunpack.c.l.b16 %v1998
      %v2031 = vunpack.c.l.b16 %v1999
      %v2032 = vpack.c.b16 %v2025, %v2024
      %v2033 = vpack.c.b16 %v2027, %v2026
      %v2034 = vpack.c.b16 %v2029, %v2028
      %v2035 = vpack.c.b16 %v2031, %v2030
      %2036 = vrot.lane.b32.xlu0 %v2032, 64
      %v2037 = vpop.permute.xlu0 %2036
      %2038 = vrot.lane.b32.xlu0 %v2033, 64
      %v2039 = vpop.permute.xlu0 %2038
      %2040 = vrot.lane.b32.xlu0 %v2034, 64
      %v2041 = vpop.permute.xlu0 %2040
      %2042 = vrot.lane.b32.xlu0 %v2035, 64
      %v2043 = vpop.permute.xlu0 %2042
      %v2052 = vunpack.c.l.b16 %v2000
      %v2053 = vunpack.c.l.b16 %v2001
      %v2054 = vunpack.c.l.b16 %v2002
      %v2055 = vunpack.c.l.b16 %v2003
      %v2056 = vunpack.c.l.b16 %v2004
      %v2057 = vunpack.c.l.b16 %v2005
      %v2058 = vunpack.c.l.b16 %v2006
      %v2059 = vunpack.c.l.b16 %v2007
      %v2060 = vpack.c.b16 %v2053, %v2052
      %v2061 = vpack.c.b16 %v2055, %v2054
      %v2062 = vpack.c.b16 %v2057, %v2056
      %v2063 = vpack.c.b16 %v2059, %v2058
      %2064 = vrot.lane.b32.xlu0 %v2060, 64
      %v2065 = vpop.permute.xlu0 %2064
      %2066 = vrot.lane.b32.xlu0 %v2061, 64
      %v2067 = vpop.permute.xlu0 %2066
      %2068 = vrot.lane.b32.xlu0 %v2062, 64
      %v2069 = vpop.permute.xlu0 %2068
      %2070 = vrot.lane.b32.xlu0 %v2063, 64
      %v2071 = vpop.permute.xlu0 %2070
      %v2073 = vsel %vm1652, %v2037, 0
      %v2076 = vsel %vm1652, %v2039, 0
      %v2079 = vsel %vm1652, %v2041, 0
      %v2082 = vsel %vm1652, %v2043, 0
      %v2085 = vsel %vm1652, %v2065, 0
      %v2088 = vsel %vm1652, %v2067, 0
      %v2091 = vsel %vm1652, %v2069, 0
      %v2094 = vsel %vm1652, %v2071, 0
      %2096 = vmatpush.bf16.xpose.msra.mxu0 0
      %2097 = vmatpush.bf16.xpose.msra.mxu0 0
      %2098 = vmatpush.bf16.xpose.msra.mxu0 0
      %2099 = vmatpush.bf16.xpose.msra.mxu0 0
      %2100 = vmatpush.bf16.xpose.msra.mxu0 %v2094
      %2101 = vmatpush.bf16.xpose.msra.mxu0 %v2091
      %2102 = vmatpush.bf16.xpose.msra.mxu0 %v2088
      %2103 = vmatpush.bf16.xpose.msra.mxu0 %v2085
      %2104 = vmatmul.bf16.gmra.mxu0 %v2073
      %v2105 = vpop.f32.mrf.mxu0
      %v2106 = vadd.f32 0.0, %v2105
      %v2107 = vpop.f32.mrf.mxu0
      %v2108 = vadd.f32 0.0, %v2107
      %2109 = vmatmul.bf16.gmra.mxu0 %v2076
      %v2110 = vpop.f32.mrf.mxu0
      %v2111 = vadd.f32 0.0, %v2110
      %v2112 = vpop.f32.mrf.mxu0
      %v2113 = vadd.f32 0.0, %v2112
      %2114 = vmatmul.bf16.gmra.mxu0 %v2079
      %v2115 = vpop.f32.mrf.mxu0
      %v2116 = vadd.f32 0.0, %v2115
      %v2117 = vpop.f32.mrf.mxu0
      %v2118 = vadd.f32 0.0, %v2117
      %2119 = vmatmul.bf16.gmra.mxu0 %v2082
      %v2120 = vpop.f32.mrf.mxu0
      %v2121 = vadd.f32 0.0, %v2120
      %v2122 = vpop.f32.mrf.mxu0
      %v2123 = vadd.f32 0.0, %v2122
      %2124 = vdwg.mxu0
      %v2125 = vmul.f32 %v2106, 0.125
      %v2126 = vmul.f32 %v2108, 0.125
      %v2127 = vmul.f32 %v2111, 0.125
      %v2128 = vmul.f32 %v2113, 0.125
      %v2129 = vmul.f32 %v2116, 0.125
      %v2130 = vmul.f32 %v2118, 0.125
      %v2131 = vmul.f32 %v2121, 0.125
      %v2132 = vmul.f32 %v2123, 0.125
      %v2133 = vsel %vm1652, %v2125, -inf
      %2134 = vmax.xlane.f32.xlu0 %v2133
      %v2135 = vpop.xlane.xlu0 %2134
      %v2136 = vsel %vm1652, %v2126, -inf
      %2137 = vmax.xlane.f32.xlu0 %v2136
      %v2138 = vpop.xlane.xlu0 %2137
      %v2139 = vsel %vm1652, %v2127, -inf
      %2140 = vmax.xlane.f32.xlu0 %v2139
      %v2141 = vpop.xlane.xlu0 %2140
      %v2142 = vsel %vm1652, %v2128, -inf
      %2143 = vmax.xlane.f32.xlu0 %v2142
      %v2144 = vpop.xlane.xlu0 %2143
      %v2145 = vsel %vm1652, %v2129, -inf
      %2146 = vmax.xlane.f32.xlu0 %v2145
      %v2147 = vpop.xlane.xlu0 %2146
      %v2148 = vsel %vm1652, %v2130, -inf
      %2149 = vmax.xlane.f32.xlu0 %v2148
      %v2150 = vpop.xlane.xlu0 %2149
      %v2151 = vsel %vm1652, %v2131, -inf
      %2152 = vmax.xlane.f32.xlu0 %v2151
      %v2153 = vpop.xlane.xlu0 %2152
      %v2154 = vsel %vm1652, %v2132, -inf
      %2155 = vmax.xlane.f32.xlu0 %v2154
      %v2156 = vpop.xlane.xlu0 %2155
      %v2157 = vsub.f32 %v2125, %v2135
      %v2158 = vsub.f32 %v2126, %v2138
      %v2159 = vsub.f32 %v2127, %v2141
      %v2160 = vsub.f32 %v2128, %v2144
      %v2161 = vsub.f32 %v2129, %v2147
      %v2162 = vsub.f32 %v2130, %v2150
      %v2163 = vsub.f32 %v2131, %v2153
      %v2164 = vsub.f32 %v2132, %v2156
      %v2165 = vmul.f32 %v2157, 1.442695
      %v2166 = vpow.pop %v2165
      %v2167 = vmul.f32 %v2158, 1.442695
      %v2168 = vpow.pop %v2167
      %v2169 = vmul.f32 %v2159, 1.442695
      %v2170 = vpow.pop %v2169
      %v2171 = vmul.f32 %v2160, 1.442695
      %v2172 = vpow.pop %v2171
      %v2173 = vmul.f32 %v2161, 1.442695
      %v2174 = vpow.pop %v2173
      %v2175 = vmul.f32 %v2162, 1.442695
      %v2176 = vpow.pop %v2175
      %v2177 = vmul.f32 %v2163, 1.442695
      %v2178 = vpow.pop %v2177
      %v2179 = vmul.f32 %v2164, 1.442695
      %v2180 = vpow.pop %v2179
      %v2181 = vsel %vm1652, %v2166, 0.0
      %2182 = vadd.xlane.f32.xlu0 %v2181
      %v2183 = vpop.xlane.xlu0 %2182
      %v2184 = vsel %vm1652, %v2168, 0.0
      %2185 = vadd.xlane.f32.xlu0 %v2184
      %v2186 = vpop.xlane.xlu0 %2185
      %v2187 = vsel %vm1652, %v2170, 0.0
      %2188 = vadd.xlane.f32.xlu0 %v2187
      %v2189 = vpop.xlane.xlu0 %2188
      %v2190 = vsel %vm1652, %v2172, 0.0
      %2191 = vadd.xlane.f32.xlu0 %v2190
      %v2192 = vpop.xlane.xlu0 %2191
      %v2193 = vsel %vm1652, %v2174, 0.0
      %2194 = vadd.xlane.f32.xlu0 %v2193
      %v2195 = vpop.xlane.xlu0 %2194
      %v2196 = vsel %vm1652, %v2176, 0.0
      %2197 = vadd.xlane.f32.xlu0 %v2196
      %v2198 = vpop.xlane.xlu0 %2197
      %v2199 = vsel %vm1652, %v2178, 0.0
      %2200 = vadd.xlane.f32.xlu0 %v2199
      %v2201 = vpop.xlane.xlu0 %2200
      %v2202 = vsel %vm1652, %v2180, 0.0
      %2203 = vadd.xlane.f32.xlu0 %v2202
      %v2204 = vpop.xlane.xlu0 %2203
      %v2205 = vrcp.pop %v2183
      %v2206 = vmul.f32 %v2183, %v2205
      %v2207 = vsub.f32 1.0, %v2206
      %v2208 = vmul.f32 %v2205, %v2207
      %v2209 = vadd.f32 %v2205, %v2208
      %vm2210 = vweird.f32 %v2183
      %vm2211 = vweird.f32 %v2205
      %vm2212 = vmor %vm2210, %vm2211
      %v2213 = vsel %vm2212, %v2205, %v2209
      %v2214 = vand.u32 2147483647, %v2183
      %vm2215 = vcmp.eq.f32.partialorder %v2214, 8.507059e+37
      %v2216 = vand.u32 %v2183, 2147483648
      %v2217 = vor.u32 1.1754944e-38, %v2216
      %v2218 = vsel %vm2215, %v2217, %v2213
      %v2219 = vmul.f32 %v2166, %v2218
      %v2220 = vrcp.pop %v2186
      %v2221 = vmul.f32 %v2186, %v2220
      %v2222 = vsub.f32 1.0, %v2221
      %v2223 = vmul.f32 %v2220, %v2222
      %v2224 = vadd.f32 %v2220, %v2223
      %vm2225 = vweird.f32 %v2186
      %vm2226 = vweird.f32 %v2220
      %vm2227 = vmor %vm2225, %vm2226
      %v2228 = vsel %vm2227, %v2220, %v2224
      %v2229 = vand.u32 2147483647, %v2186
      %vm2230 = vcmp.eq.f32.partialorder %v2229, 8.507059e+37
      %v2231 = vand.u32 %v2186, 2147483648
      %v2232 = vor.u32 1.1754944e-38, %v2231
      %v2233 = vsel %vm2230, %v2232, %v2228
      %v2234 = vmul.f32 %v2168, %v2233
      %v2235 = vrcp.pop %v2189
      %v2236 = vmul.f32 %v2189, %v2235
      %v2237 = vsub.f32 1.0, %v2236
      %v2238 = vmul.f32 %v2235, %v2237
      %v2239 = vadd.f32 %v2235, %v2238
      %vm2240 = vweird.f32 %v2189
      %vm2241 = vweird.f32 %v2235
      %vm2242 = vmor %vm2240, %vm2241
      %v2243 = vsel %vm2242, %v2235, %v2239
      %v2244 = vand.u32 2147483647, %v2189
      %vm2245 = vcmp.eq.f32.partialorder %v2244, 8.507059e+37
      %v2246 = vand.u32 %v2189, 2147483648
      %v2247 = vor.u32 1.1754944e-38, %v2246
      %v2248 = vsel %vm2245, %v2247, %v2243
      %v2249 = vmul.f32 %v2170, %v2248
      %v2250 = vrcp.pop %v2192
      %v2251 = vmul.f32 %v2192, %v2250
      %v2252 = vsub.f32 1.0, %v2251
      %v2253 = vmul.f32 %v2250, %v2252
      %v2254 = vadd.f32 %v2250, %v2253
      %vm2255 = vweird.f32 %v2192
      %vm2256 = vweird.f32 %v2250
      %vm2257 = vmor %vm2255, %vm2256
      %v2258 = vsel %vm2257, %v2250, %v2254
      %v2259 = vand.u32 2147483647, %v2192
      %vm2260 = vcmp.eq.f32.partialorder %v2259, 8.507059e+37
      %v2261 = vand.u32 %v2192, 2147483648
      %v2262 = vor.u32 1.1754944e-38, %v2261
      %v2263 = vsel %vm2260, %v2262, %v2258
      %v2264 = vmul.f32 %v2172, %v2263
      %v2265 = vrcp.pop %v2195
      %v2266 = vmul.f32 %v2195, %v2265
      %v2267 = vsub.f32 1.0, %v2266
      %v2268 = vmul.f32 %v2265, %v2267
      %v2269 = vadd.f32 %v2265, %v2268
      %vm2270 = vweird.f32 %v2195
      %vm2271 = vweird.f32 %v2265
      %vm2272 = vmor %vm2270, %vm2271
      %v2273 = vsel %vm2272, %v2265, %v2269
      %v2274 = vand.u32 2147483647, %v2195
      %vm2275 = vcmp.eq.f32.partialorder %v2274, 8.507059e+37
      %v2276 = vand.u32 %v2195, 2147483648
      %v2277 = vor.u32 1.1754944e-38, %v2276
      %v2278 = vsel %vm2275, %v2277, %v2273
      %v2279 = vmul.f32 %v2174, %v2278
      %v2280 = vrcp.pop %v2198
      %v2281 = vmul.f32 %v2198, %v2280
      %v2282 = vsub.f32 1.0, %v2281
      %v2283 = vmul.f32 %v2280, %v2282
      %v2284 = vadd.f32 %v2280, %v2283
      %vm2285 = vweird.f32 %v2198
      %vm2286 = vweird.f32 %v2280
      %vm2287 = vmor %vm2285, %vm2286
      %v2288 = vsel %vm2287, %v2280, %v2284
      %v2289 = vand.u32 2147483647, %v2198
      %vm2290 = vcmp.eq.f32.partialorder %v2289, 8.507059e+37
      %v2291 = vand.u32 %v2198, 2147483648
      %v2292 = vor.u32 1.1754944e-38, %v2291
      %v2293 = vsel %vm2290, %v2292, %v2288
      %v2294 = vmul.f32 %v2176, %v2293
      %v2295 = vrcp.pop %v2201
      %v2296 = vmul.f32 %v2201, %v2295
      %v2297 = vsub.f32 1.0, %v2296
      %v2298 = vmul.f32 %v2295, %v2297
      %v2299 = vadd.f32 %v2295, %v2298
      %vm2300 = vweird.f32 %v2201
      %vm2301 = vweird.f32 %v2295
      %vm2302 = vmor %vm2300, %vm2301
      %v2303 = vsel %vm2302, %v2295, %v2299
      %v2304 = vand.u32 2147483647, %v2201
      %vm2305 = vcmp.eq.f32.partialorder %v2304, 8.507059e+37
      %v2306 = vand.u32 %v2201, 2147483648
      %v2307 = vor.u32 1.1754944e-38, %v2306
      %v2308 = vsel %vm2305, %v2307, %v2303
      %v2309 = vmul.f32 %v2178, %v2308
      %v2310 = vrcp.pop %v2204
      %v2311 = vmul.f32 %v2204, %v2310
      %v2312 = vsub.f32 1.0, %v2311
      %v2313 = vmul.f32 %v2310, %v2312
      %v2314 = vadd.f32 %v2310, %v2313
      %vm2315 = vweird.f32 %v2204
      %vm2316 = vweird.f32 %v2310
      %vm2317 = vmor %vm2315, %vm2316
      %v2318 = vsel %vm2317, %v2310, %v2314
      %v2319 = vand.u32 2147483647, %v2204
      %vm2320 = vcmp.eq.f32.partialorder %v2319, 8.507059e+37
      %v2321 = vand.u32 %v2204, 2147483648
      %v2322 = vor.u32 1.1754944e-38, %v2321
      %v2323 = vsel %vm2320, %v2322, %v2318
      %v2324 = vmul.f32 %v2180, %v2323
      %v2325 = vpack.c.bf16 %v2234, %v2219
      %v2326 = vpack.c.bf16 %v2264, %v2249
      %v2327 = vpack.c.bf16 %v2294, %v2279
      %v2328 = vpack.c.bf16 %v2324, %v2309
      %v2337 = vunpack.c.l.b16 %v2008
      %v2338 = vunpack.c.l.b16 %v2009
      %v2339 = vunpack.c.l.b16 %v2010
      %v2340 = vunpack.c.l.b16 %v2011
      %v2341 = vunpack.c.l.b16 %v2012
      %v2342 = vunpack.c.l.b16 %v2013
      %v2343 = vunpack.c.l.b16 %v2014
      %v2344 = vunpack.c.l.b16 %v2015
      %v2345 = vpack.c.b16 %v2338, %v2337
      %v2346 = vpack.c.b16 %v2340, %v2339
      %v2347 = vpack.c.b16 %v2342, %v2341
      %v2348 = vpack.c.b16 %v2344, %v2343
      %2349 = vrot.lane.b32.xlu0 %v2345, 64
      %v2350 = vpop.permute.xlu0 %2349
      %2351 = vrot.lane.b32.xlu0 %v2346, 64
      %v2352 = vpop.permute.xlu0 %2351
      %2353 = vrot.lane.b32.xlu0 %v2347, 64
      %v2354 = vpop.permute.xlu0 %2353
      %2355 = vrot.lane.b32.xlu0 %v2348, 64
      %v2356 = vpop.permute.xlu0 %2355
      %v2362 = vsel %vm1652, %v2325, 0
      %v2365 = vsel %vm1652, %v2326, 0
      %v2368 = vsel %vm1652, %v2327, 0
      %v2371 = vsel %vm1652, %v2328, 0
      %2373 = vmatpush.bf16.msra.mxu0 0
      %2374 = vmatpush.bf16.msra.mxu0 0
      %2375 = vmatpush.bf16.msra.mxu0 0
      %2376 = vmatpush.bf16.msra.mxu0 0
      %2377 = vmatpush.bf16.msra.mxu0 %v2356
      %2378 = vmatpush.bf16.msra.mxu0 %v2354
      %2379 = vmatpush.bf16.msra.mxu0 %v2352
      %2380 = vmatpush.bf16.msra.mxu0 %v2350
      %2381 = vmatmul.bf16.gmra.mxu0 %v2362
      %v2382 = vpop.f32.mrf.mxu0
      %v2383 = vadd.f32 0.0, %v2382
      %v2384 = vpop.f32.mrf.mxu0
      %v2385 = vadd.f32 0.0, %v2384
      %2386 = vmatmul.bf16.gmra.mxu0 %v2365
      %v2387 = vpop.f32.mrf.mxu0
      %v2388 = vadd.f32 0.0, %v2387
      %v2389 = vpop.f32.mrf.mxu0
      %v2390 = vadd.f32 0.0, %v2389
      %2391 = vmatmul.bf16.gmra.mxu0 %v2368
      %v2392 = vpop.f32.mrf.mxu0
      %v2393 = vadd.f32 0.0, %v2392
      %v2394 = vpop.f32.mrf.mxu0
      %v2395 = vadd.f32 0.0, %v2394
      %2396 = vmatmul.bf16.gmra.mxu0 %v2371
      %v2397 = vpop.f32.mrf.mxu0
      %v2398 = vadd.f32 0.0, %v2397
      %v2399 = vpop.f32.mrf.mxu0
      %v2400 = vadd.f32 0.0, %v2399
      %2401 = vdwg.mxu0
      %v2402 = vpack.c.bf16 %v2383, %v2383
      %v2403 = vpack.c.bf16 %v2385, %v2385
      %v2404 = vpack.c.bf16 %v2388, %v2388
      %v2405 = vpack.c.bf16 %v2390, %v2390
      %v2406 = vpack.c.bf16 %v2393, %v2393
      %v2407 = vpack.c.bf16 %v2395, %v2395
      %v2408 = vpack.c.bf16 %v2398, %v2398
      %v2409 = vpack.c.bf16 %v2400, %v2400
      %2418 = vrot.lane.b32.xlu0 %v2402, 64
      %v2419 = vpop.permute.xlu0 %2418
      %2420 = vrot.lane.b32.xlu0 %v2403, 64
      %v2421 = vpop.permute.xlu0 %2420
      %2422 = vrot.lane.b32.xlu0 %v2404, 64
      %v2423 = vpop.permute.xlu0 %2422
      %2424 = vrot.lane.b32.xlu0 %v2405, 64
      %v2425 = vpop.permute.xlu0 %2424
      %2426 = vrot.lane.b32.xlu0 %v2406, 64
      %v2427 = vpop.permute.xlu0 %2426
      %2428 = vrot.lane.b32.xlu0 %v2407, 64
      %v2429 = vpop.permute.xlu0 %2428
      %2430 = vrot.lane.b32.xlu0 %v2408, 64
      %v2431 = vpop.permute.xlu0 %2430
      %2432 = vrot.lane.b32.xlu0 %v2409, 64
      %v2433 = vpop.permute.xlu0 %2432
      %vm2442 = vcmask 1043968
      %2443 = vst.msk [vmem:[#allocation3] sm:$0xf] %vm2442, %v2419
      %2444 = vst.msk [vmem:[#allocation3 + $0x4] sm:$0xf] %vm2442, %v2421
      %2445 = vst.msk [vmem:[#allocation3 + $0x8] sm:$0xf] %vm2442, %v2423
      %2446 = vst.msk [vmem:[#allocation3 + $0xc] sm:$0xf] %vm2442, %v2425
      %2447 = vst.msk [vmem:[#allocation3 + $0x10] sm:$0xf] %vm2442, %v2427
      %2448 = vst.msk [vmem:[#allocation3 + $0x14] sm:$0xf] %vm2442, %v2429
      %2449 = vst.msk [vmem:[#allocation3 + $0x18] sm:$0xf] %vm2442, %v2431
      %2450 = vst.msk [vmem:[#allocation3 + $0x1c] sm:$0xf] %vm2442, %v2433
      %v2451 = vld [vmem:[#allocation3] sm:$0xf]
      %v2452 = vld [vmem:[#allocation3 + $0x4] sm:$0xf]
      %v2453 = vld [vmem:[#allocation3 + $0x8] sm:$0xf]
      %v2454 = vld [vmem:[#allocation3 + $0xc] sm:$0xf]
      %v2455 = vld [vmem:[#allocation3 + $0x10] sm:$0xf]
      %v2456 = vld [vmem:[#allocation3 + $0x14] sm:$0xf]
      %v2457 = vld [vmem:[#allocation3 + $0x18] sm:$0xf]
      %v2458 = vld [vmem:[#allocation3 + $0x1c] sm:$0xf]
      %v2459 = vld [vmem:[%s774] sm:$0xf]
      %v2460 = vld [vmem:[%s774 + $0x4] sm:$0xf]
      %v2461 = vld [vmem:[%s774 + $0x8] sm:$0xf]
      %v2462 = vld [vmem:[%s774 + $0xc] sm:$0xf]
      %v2463 = vld [vmem:[%s774 + $0x10] sm:$0xf]
      %v2464 = vld [vmem:[%s774 + $0x14] sm:$0xf]
      %v2465 = vld [vmem:[%s774 + $0x18] sm:$0xf]
      %v2466 = vld [vmem:[%s774 + $0x1c] sm:$0xf]
      %v2467 = vld [vmem:[%s774 + $0x20] sm:$0xf]
      %v2468 = vld [vmem:[%s774 + $0x24] sm:$0xf]
      %v2469 = vld [vmem:[%s774 + $0x28] sm:$0xf]
      %v2470 = vld [vmem:[%s774 + $0x2c] sm:$0xf]
      %v2471 = vld [vmem:[%s774 + $0x30] sm:$0xf]
      %v2472 = vld [vmem:[%s774 + $0x34] sm:$0xf]
      %v2473 = vld [vmem:[%s774 + $0x38] sm:$0xf]
      %v2474 = vld [vmem:[%s774 + $0x3c] sm:$0xf]
      %v2475 = vld [vmem:[%s777] sm:$0x1]
      %v2477 = vperm.slane %v2475, 0
      %v2487 = vunpack.c.l.b16 %v2451
      %v2488 = vunpack.c.l.b16 %v2452
      %v2489 = vunpack.c.l.b16 %v2453
      %v2490 = vunpack.c.l.b16 %v2454
      %v2491 = vunpack.c.l.b16 %v2455
      %v2492 = vunpack.c.l.b16 %v2456
      %v2493 = vunpack.c.l.b16 %v2457
      %v2494 = vunpack.c.l.b16 %v2458
      %v2495 = vpack.c.b16 %v2488, %v2487
      %v2496 = vpack.c.b16 %v2490, %v2489
      %v2497 = vpack.c.b16 %v2492, %v2491
      %v2498 = vpack.c.b16 %v2494, %v2493
      %v2519 = vunpack.c.l.b16 %v2459
      %v2520 = vunpack.c.l.b16 %v2460
      %v2521 = vunpack.c.l.b16 %v2461
      %v2522 = vunpack.c.l.b16 %v2462
      %v2523 = vunpack.c.l.b16 %v2463
      %v2524 = vunpack.c.l.b16 %v2464
      %v2525 = vunpack.c.l.b16 %v2465
      %v2526 = vunpack.c.l.b16 %v2466
      %v2527 = vunpack.c.l.b16 %v2467
      %v2528 = vunpack.c.l.b16 %v2468
      %v2529 = vunpack.c.l.b16 %v2469
      %v2530 = vunpack.c.l.b16 %v2470
      %v2531 = vunpack.c.l.b16 %v2471
      %v2532 = vunpack.c.l.b16 %v2472
      %v2533 = vunpack.c.l.b16 %v2473
      %v2534 = vunpack.c.l.b16 %v2474
      %v2535 = vpack.c.b16 %v2520, %v2519
      %v2536 = vpack.c.b16 %v2522, %v2521
      %v2537 = vpack.c.b16 %v2524, %v2523
      %v2538 = vpack.c.b16 %v2526, %v2525
      %v2539 = vpack.c.b16 %v2528, %v2527
      %v2540 = vpack.c.b16 %v2530, %v2529
      %v2541 = vpack.c.b16 %v2532, %v2531
      %v2542 = vpack.c.b16 %v2534, %v2533
      %2551 = vmatpush.bf16.msra.mxu0 %v2542
      %2552 = vmatpush.bf16.msra.mxu0 %v2541
      %2553 = vmatpush.bf16.msra.mxu0 %v2540
      %2554 = vmatpush.bf16.msra.mxu0 %v2539
      %2555 = vmatpush.bf16.msra.mxu0 %v2538
      %2556 = vmatpush.bf16.msra.mxu0 %v2537
      %2557 = vmatpush.bf16.msra.mxu0 %v2536
      %2558 = vmatpush.bf16.msra.mxu0 %v2535
      %2559 = vmatmul.bf16.gmra.mxu0 %v2495
      %v2560 = vpop.f32.mrf.mxu0
      %v2561 = vadd.f32 %v2477, %v2560
      %v2562 = vpop.f32.mrf.mxu0
      %v2563 = vadd.f32 %v2477, %v2562
      %2564 = vmatmul.bf16.gmra.mxu0 %v2496
      %v2565 = vpop.f32.mrf.mxu0
      %v2566 = vadd.f32 %v2477, %v2565
      %v2567 = vpop.f32.mrf.mxu0
      %v2568 = vadd.f32 %v2477, %v2567
      %2569 = vmatmul.bf16.gmra.mxu0 %v2497
      %v2570 = vpop.f32.mrf.mxu0
      %v2571 = vadd.f32 %v2477, %v2570
      %v2572 = vpop.f32.mrf.mxu0
      %v2573 = vadd.f32 %v2477, %v2572
      %2574 = vmatmul.bf16.gmra.mxu0 %v2498
      %v2575 = vpop.f32.mrf.mxu0
      %v2576 = vadd.f32 %v2477, %v2575
      %v2577 = vpop.f32.mrf.mxu0
      %v2578 = vadd.f32 %v2477, %v2577
      %2579 = vdwg.mxu0
      %v2580 = vadd.f32 %v1098, %v2561
      %v2581 = vadd.f32 %v1099, %v2563
      %v2582 = vadd.f32 %v1100, %v2566
      %v2583 = vadd.f32 %v1101, %v2568
      %v2584 = vadd.f32 %v1102, %v2571
      %v2585 = vadd.f32 %v1103, %v2573
      %v2586 = vadd.f32 %v1104, %v2576
      %v2587 = vadd.f32 %v1105, %v2578
      %v2588 = vld [vmem:[%s780] sm:$0x1]
      %v2589 = vld [vmem:[%s783] sm:$0x1]
      %2590 = vadd.xlane.f32.xlu0 %v2580
      %v2591 = vpop.xlane.xlu0 %2590
      %2592 = vadd.xlane.f32.xlu0 %v2581
      %v2593 = vpop.xlane.xlu0 %2592
      %2594 = vadd.xlane.f32.xlu0 %v2582
      %v2595 = vpop.xlane.xlu0 %2594
      %2596 = vadd.xlane.f32.xlu0 %v2583
      %v2597 = vpop.xlane.xlu0 %2596
      %2598 = vadd.xlane.f32.xlu0 %v2584
      %v2599 = vpop.xlane.xlu0 %2598
      %2600 = vadd.xlane.f32.xlu0 %v2585
      %v2601 = vpop.xlane.xlu0 %2600
      %2602 = vadd.xlane.f32.xlu0 %v2586
      %v2603 = vpop.xlane.xlu0 %2602
      %2604 = vadd.xlane.f32.xlu0 %v2587
      %v2605 = vpop.xlane.xlu0 %2604
      %v2606 = vmul.f32 %v2591, %v1130
      %v2607 = vmul.f32 %v2593, %v1130
      %v2608 = vmul.f32 %v2595, %v1130
      %v2609 = vmul.f32 %v2597, %v1130
      %v2610 = vmul.f32 %v2599, %v1130
      %v2611 = vmul.f32 %v2601, %v1130
      %v2612 = vmul.f32 %v2603, %v1130
      %v2613 = vmul.f32 %v2605, %v1130
      %v2614 = vsub.f32 %v2580, %v2606
      %v2615 = vsub.f32 %v2581, %v2607
      %v2616 = vsub.f32 %v2582, %v2608
      %v2617 = vsub.f32 %v2583, %v2609
      %v2618 = vsub.f32 %v2584, %v2610
      %v2619 = vsub.f32 %v2585, %v2611
      %v2620 = vsub.f32 %v2586, %v2612
      %v2621 = vsub.f32 %v2587, %v2613
      %v2622 = vmul.f32 %v2614, %v2614
      %v2623 = vmul.f32 %v2615, %v2615
      %v2624 = vmul.f32 %v2616, %v2616
      %v2625 = vmul.f32 %v2617, %v2617
      %v2626 = vmul.f32 %v2618, %v2618
      %v2627 = vmul.f32 %v2619, %v2619
      %v2628 = vmul.f32 %v2620, %v2620
      %v2629 = vmul.f32 %v2621, %v2621
      %2630 = vadd.xlane.f32.xlu0 %v2622
      %v2631 = vpop.xlane.xlu0 %2630
      %2632 = vadd.xlane.f32.xlu0 %v2623
      %v2633 = vpop.xlane.xlu0 %2632
      %2634 = vadd.xlane.f32.xlu0 %v2624
      %v2635 = vpop.xlane.xlu0 %2634
      %2636 = vadd.xlane.f32.xlu0 %v2625
      %v2637 = vpop.xlane.xlu0 %2636
      %2638 = vadd.xlane.f32.xlu0 %v2626
      %v2639 = vpop.xlane.xlu0 %2638
      %2640 = vadd.xlane.f32.xlu0 %v2627
      %v2641 = vpop.xlane.xlu0 %2640
      %2642 = vadd.xlane.f32.xlu0 %v2628
      %v2643 = vpop.xlane.xlu0 %2642
      %2644 = vadd.xlane.f32.xlu0 %v2629
      %v2645 = vpop.xlane.xlu0 %2644
      %v2646 = vmul.f32 %v2631, %v1130
      %v2647 = vmul.f32 %v2633, %v1130
      %v2648 = vmul.f32 %v2635, %v1130
      %v2649 = vmul.f32 %v2637, %v1130
      %v2650 = vmul.f32 %v2639, %v1130
      %v2651 = vmul.f32 %v2641, %v1130
      %v2652 = vmul.f32 %v2643, %v1130
      %v2653 = vmul.f32 %v2645, %v1130
      %v2654 = vadd.f32 %v2646, 1e-06
      %v2655 = vadd.f32 %v2647, 1e-06
      %v2656 = vadd.f32 %v2648, 1e-06
      %v2657 = vadd.f32 %v2649, 1e-06
      %v2658 = vadd.f32 %v2650, 1e-06
      %v2659 = vadd.f32 %v2651, 1e-06
      %v2660 = vadd.f32 %v2652, 1e-06
      %v2661 = vadd.f32 %v2653, 1e-06
      %v2662 = vrsqrt.pop %v2654
      %v2663 = vmul.f32 %v2662, %v2654
      %v2664 = vmul.f32 %v2663, %v2662
      %v2665 = vmul.f32 0.5, %v2664
      %v2666 = vsub.f32 1.5, %v2665
      %v2667 = vmul.f32 %v2662, %v2666
      %vm2668 = vweird.f32 %v2654
      %vm2669 = vweird.f32 %v2662
      %vm2670 = vmor %vm2668, %vm2669
      %v2671 = vsel %vm2670, %v2662, %v2667
      %v2672 = vrsqrt.pop %v2655
      %v2673 = vmul.f32 %v2672, %v2655
      %v2674 = vmul.f32 %v2673, %v2672
      %v2675 = vmul.f32 0.5, %v2674
      %v2676 = vsub.f32 1.5, %v2675
      %v2677 = vmul.f32 %v2672, %v2676
      %vm2678 = vweird.f32 %v2655
      %vm2679 = vweird.f32 %v2672
      %vm2680 = vmor %vm2678, %vm2679
      %v2681 = vsel %vm2680, %v2672, %v2677
      %v2682 = vrsqrt.pop %v2656
      %v2683 = vmul.f32 %v2682, %v2656
      %v2684 = vmul.f32 %v2683, %v2682
      %v2685 = vmul.f32 0.5, %v2684
      %v2686 = vsub.f32 1.5, %v2685
      %v2687 = vmul.f32 %v2682, %v2686
      %vm2688 = vweird.f32 %v2656
      %vm2689 = vweird.f32 %v2682
      %vm2690 = vmor %vm2688, %vm2689
      %v2691 = vsel %vm2690, %v2682, %v2687
      %v2692 = vrsqrt.pop %v2657
      %v2693 = vmul.f32 %v2692, %v2657
      %v2694 = vmul.f32 %v2693, %v2692
      %v2695 = vmul.f32 0.5, %v2694
      %v2696 = vsub.f32 1.5, %v2695
      %v2697 = vmul.f32 %v2692, %v2696
      %vm2698 = vweird.f32 %v2657
      %vm2699 = vweird.f32 %v2692
      %vm2700 = vmor %vm2698, %vm2699
      %v2701 = vsel %vm2700, %v2692, %v2697
      %v2702 = vrsqrt.pop %v2658
      %v2703 = vmul.f32 %v2702, %v2658
      %v2704 = vmul.f32 %v2703, %v2702
      %v2705 = vmul.f32 0.5, %v2704
      %v2706 = vsub.f32 1.5, %v2705
      %v2707 = vmul.f32 %v2702, %v2706
      %vm2708 = vweird.f32 %v2658
      %vm2709 = vweird.f32 %v2702
      %vm2710 = vmor %vm2708, %vm2709
      %v2711 = vsel %vm2710, %v2702, %v2707
      %v2712 = vrsqrt.pop %v2659
      %v2713 = vmul.f32 %v2712, %v2659
      %v2714 = vmul.f32 %v2713, %v2712
      %v2715 = vmul.f32 0.5, %v2714
      %v2716 = vsub.f32 1.5, %v2715
      %v2717 = vmul.f32 %v2712, %v2716
      %vm2718 = vweird.f32 %v2659
      %vm2719 = vweird.f32 %v2712
      %vm2720 = vmor %vm2718, %vm2719
      %v2721 = vsel %vm2720, %v2712, %v2717
      %v2722 = vrsqrt.pop %v2660
      %v2723 = vmul.f32 %v2722, %v2660
      %v2724 = vmul.f32 %v2723, %v2722
      %v2725 = vmul.f32 0.5, %v2724
      %v2726 = vsub.f32 1.5, %v2725
      %v2727 = vmul.f32 %v2722, %v2726
      %vm2728 = vweird.f32 %v2660
      %vm2729 = vweird.f32 %v2722
      %vm2730 = vmor %vm2728, %vm2729
      %v2731 = vsel %vm2730, %v2722, %v2727
      %v2732 = vrsqrt.pop %v2661
      %v2733 = vmul.f32 %v2732, %v2661
      %v2734 = vmul.f32 %v2733, %v2732
      %v2735 = vmul.f32 0.5, %v2734
      %v2736 = vsub.f32 1.5, %v2735
      %v2737 = vmul.f32 %v2732, %v2736
      %vm2738 = vweird.f32 %v2661
      %vm2739 = vweird.f32 %v2732
      %vm2740 = vmor %vm2738, %vm2739
      %v2741 = vsel %vm2740, %v2732, %v2737
      %v2742 = vmul.f32 %v2614, %v2671
      %v2743 = vmul.f32 %v2615, %v2681
      %v2744 = vmul.f32 %v2616, %v2691
      %v2745 = vmul.f32 %v2617, %v2701
      %v2746 = vmul.f32 %v2618, %v2711
      %v2747 = vmul.f32 %v2619, %v2721
      %v2748 = vmul.f32 %v2620, %v2731
      %v2749 = vmul.f32 %v2621, %v2741
      %v2751 = vperm.slane %v2588, 0
      %v2753 = vmul.f32 %v2742, %v2751
      %v2754 = vmul.f32 %v2743, %v2751
      %v2755 = vmul.f32 %v2744, %v2751
      %v2756 = vmul.f32 %v2745, %v2751
      %v2757 = vmul.f32 %v2746, %v2751
      %v2758 = vmul.f32 %v2747, %v2751
      %v2759 = vmul.f32 %v2748, %v2751
      %v2760 = vmul.f32 %v2749, %v2751
      %v2762 = vperm.slane %v2589, 0
      %v2764 = vadd.f32 %v2753, %v2762
      %v2765 = vadd.f32 %v2754, %v2762
      %v2766 = vadd.f32 %v2755, %v2762
      %v2767 = vadd.f32 %v2756, %v2762
      %v2768 = vadd.f32 %v2757, %v2762
      %v2769 = vadd.f32 %v2758, %v2762
      %v2770 = vadd.f32 %v2759, %v2762
      %v2771 = vadd.f32 %v2760, %v2762
      %v2772 = vpack.c.bf16 %v2765, %v2764
      %v2773 = vpack.c.bf16 %v2767, %v2766
      %v2774 = vpack.c.bf16 %v2769, %v2768
      %v2775 = vpack.c.bf16 %v2771, %v2770
      %v2776 = vld [vmem:[%s788] sm:$0xff]
      %v2777 = vld [vmem:[%s788 + $0x10] sm:$0xff]
      %v2778 = vld [vmem:[%s788 + $0x20] sm:$0xff]
      %v2779 = vld [vmem:[%s788 + $0x30] sm:$0xff]
      %v2780 = vld [vmem:[%s788 + $0x40] sm:$0xff]
      %v2781 = vld [vmem:[%s788 + $0x50] sm:$0xff]
      %v2782 = vld [vmem:[%s788 + $0x60] sm:$0xff]
      %v2783 = vld [vmem:[%s788 + $0x70] sm:$0xff]
      %v2784 = vld [vmem:[%s788 + $0x80] sm:$0xff]
      %v2785 = vld [vmem:[%s788 + $0x90] sm:$0xff]
      %v2786 = vld [vmem:[%s788 + $0xa0] sm:$0xff]
      %v2787 = vld [vmem:[%s788 + $0xb0] sm:$0xff]
      %v2788 = vld [vmem:[%s788 + $0xc0] sm:$0xff]
      %v2789 = vld [vmem:[%s788 + $0xd0] sm:$0xff]
      %v2790 = vld [vmem:[%s788 + $0xe0] sm:$0xff]
      %v2791 = vld [vmem:[%s788 + $0xf0] sm:$0xff]
      %v2792 = vld [vmem:[%s792] sm:$0x3]
      %v2794 = vperm.slane %v2792, 0
      %v2795 = vperm.slane %v2792, 1
      %v2814 = vunpack.c.l.b16 %v2776
      %v2815 = vunpack.c.h.b16 %v2776
      %v2816 = vunpack.c.l.b16 %v2777
      %v2817 = vunpack.c.h.b16 %v2777
      %v2818 = vunpack.c.l.b16 %v2778
      %v2819 = vunpack.c.h.b16 %v2778
      %v2820 = vunpack.c.l.b16 %v2779
      %v2821 = vunpack.c.h.b16 %v2779
      %v2822 = vunpack.c.l.b16 %v2780
      %v2823 = vunpack.c.h.b16 %v2780
      %v2824 = vunpack.c.l.b16 %v2781
      %v2825 = vunpack.c.h.b16 %v2781
      %v2826 = vunpack.c.l.b16 %v2782
      %v2827 = vunpack.c.h.b16 %v2782
      %v2828 = vunpack.c.l.b16 %v2783
      %v2829 = vunpack.c.h.b16 %v2783
      %v2830 = vunpack.c.l.b16 %v2784
      %v2831 = vunpack.c.h.b16 %v2784
      %v2832 = vunpack.c.l.b16 %v2785
      %v2833 = vunpack.c.h.b16 %v2785
      %v2834 = vunpack.c.l.b16 %v2786
      %v2835 = vunpack.c.h.b16 %v2786
      %v2836 = vunpack.c.l.b16 %v2787
      %v2837 = vunpack.c.h.b16 %v2787
      %v2838 = vunpack.c.l.b16 %v2788
      %v2839 = vunpack.c.h.b16 %v2788
      %v2840 = vunpack.c.l.b16 %v2789
      %v2841 = vunpack.c.h.b16 %v2789
      %v2842 = vunpack.c.l.b16 %v2790
      %v2843 = vunpack.c.h.b16 %v2790
      %v2844 = vunpack.c.l.b16 %v2791
      %v2845 = vunpack.c.h.b16 %v2791
      %v2846 = vpack.c.b16 %v2816, %v2814
      %v2847 = vpack.c.b16 %v2817, %v2815
      %v2848 = vpack.c.b16 %v2820, %v2818
      %v2849 = vpack.c.b16 %v2821, %v2819
      %v2850 = vpack.c.b16 %v2824, %v2822
      %v2851 = vpack.c.b16 %v2825, %v2823
      %v2852 = vpack.c.b16 %v2828, %v2826
      %v2853 = vpack.c.b16 %v2829, %v2827
      %v2854 = vpack.c.b16 %v2832, %v2830
      %v2855 = vpack.c.b16 %v2833, %v2831
      %v2856 = vpack.c.b16 %v2836, %v2834
      %v2857 = vpack.c.b16 %v2837, %v2835
      %v2858 = vpack.c.b16 %v2840, %v2838
      %v2859 = vpack.c.b16 %v2841, %v2839
      %v2860 = vpack.c.b16 %v2844, %v2842
      %v2861 = vpack.c.b16 %v2845, %v2843
      %2878 = vmatpush.bf16.msra.mxu0 %v2860
      %2879 = vmatpush.bf16.msra.mxu0 %v2858
      %2880 = vmatpush.bf16.msra.mxu0 %v2856
      %2881 = vmatpush.bf16.msra.mxu0 %v2854
      %2882 = vmatpush.bf16.msra.mxu0 %v2852
      %2883 = vmatpush.bf16.msra.mxu0 %v2850
      %2884 = vmatpush.bf16.msra.mxu0 %v2848
      %2885 = vmatpush.bf16.msra.mxu0 %v2846
      %2886 = vmatmul.bf16.gmra.mxu0 %v2772
      %v2887 = vpop.f32.mrf.mxu0
      %v2888 = vadd.f32 %v2794, %v2887
      %v2889 = vpop.f32.mrf.mxu0
      %v2890 = vadd.f32 %v2794, %v2889
      %2891 = vmatmul.bf16.gmra.mxu0 %v2773
      %v2892 = vpop.f32.mrf.mxu0
      %v2893 = vadd.f32 %v2794, %v2892
      %v2894 = vpop.f32.mrf.mxu0
      %v2895 = vadd.f32 %v2794, %v2894
      %2896 = vmatmul.bf16.gmra.mxu0 %v2774
      %v2897 = vpop.f32.mrf.mxu0
      %v2898 = vadd.f32 %v2794, %v2897
      %v2899 = vpop.f32.mrf.mxu0
      %v2900 = vadd.f32 %v2794, %v2899
      %2901 = vmatmul.bf16.gmra.mxu0 %v2775
      %v2902 = vpop.f32.mrf.mxu0
      %v2903 = vadd.f32 %v2794, %v2902
      %v2904 = vpop.f32.mrf.mxu0
      %v2905 = vadd.f32 %v2794, %v2904
      %2906 = vdwg.mxu0
      %2907 = vmatpush.bf16.msra.mxu0 %v2861
      %2908 = vmatpush.bf16.msra.mxu0 %v2859
      %2909 = vmatpush.bf16.msra.mxu0 %v2857
      %2910 = vmatpush.bf16.msra.mxu0 %v2855
      %2911 = vmatpush.bf16.msra.mxu0 %v2853
      %2912 = vmatpush.bf16.msra.mxu0 %v2851
      %2913 = vmatpush.bf16.msra.mxu0 %v2849
      %2914 = vmatpush.bf16.msra.mxu0 %v2847
      %2915 = vmatmul.bf16.gmra.mxu0 %v2772
      %v2916 = vpop.f32.mrf.mxu0
      %v2917 = vadd.f32 %v2795, %v2916
      %v2918 = vpop.f32.mrf.mxu0
      %v2919 = vadd.f32 %v2795, %v2918
      %2920 = vmatmul.bf16.gmra.mxu0 %v2773
      %v2921 = vpop.f32.mrf.mxu0
      %v2922 = vadd.f32 %v2795, %v2921
      %v2923 = vpop.f32.mrf.mxu0
      %v2924 = vadd.f32 %v2795, %v2923
      %2925 = vmatmul.bf16.gmra.mxu0 %v2774
      %v2926 = vpop.f32.mrf.mxu0
      %v2927 = vadd.f32 %v2795, %v2926
      %v2928 = vpop.f32.mrf.mxu0
      %v2929 = vadd.f32 %v2795, %v2928
      %2930 = vmatmul.bf16.gmra.mxu0 %v2775
      %v2931 = vpop.f32.mrf.mxu0
      %v2932 = vadd.f32 %v2795, %v2931
      %v2933 = vpop.f32.mrf.mxu0
      %v2934 = vadd.f32 %v2795, %v2933
      %2935 = vdwg.mxu0
      %v2936 = vmul.f32 %v2888, %v2888
      %v2937 = vmul.f32 %v2917, %v2917
      %v2938 = vmul.f32 %v2890, %v2890
      %v2939 = vmul.f32 %v2919, %v2919
      %v2940 = vmul.f32 %v2893, %v2893
      %v2941 = vmul.f32 %v2922, %v2922
      %v2942 = vmul.f32 %v2895, %v2895
      %v2943 = vmul.f32 %v2924, %v2924
      %v2944 = vmul.f32 %v2898, %v2898
      %v2945 = vmul.f32 %v2927, %v2927
      %v2946 = vmul.f32 %v2900, %v2900
      %v2947 = vmul.f32 %v2929, %v2929
      %v2948 = vmul.f32 %v2903, %v2903
      %v2949 = vmul.f32 %v2932, %v2932
      %v2950 = vmul.f32 %v2905, %v2905
      %v2951 = vmul.f32 %v2934, %v2934
      %v2952 = vmul.f32 %v2888, %v2936
      %v2953 = vmul.f32 %v2917, %v2937
      %v2954 = vmul.f32 %v2890, %v2938
      %v2955 = vmul.f32 %v2919, %v2939
      %v2956 = vmul.f32 %v2893, %v2940
      %v2957 = vmul.f32 %v2922, %v2941
      %v2958 = vmul.f32 %v2895, %v2942
      %v2959 = vmul.f32 %v2924, %v2943
      %v2960 = vmul.f32 %v2898, %v2944
      %v2961 = vmul.f32 %v2927, %v2945
      %v2962 = vmul.f32 %v2900, %v2946
      %v2963 = vmul.f32 %v2929, %v2947
      %v2964 = vmul.f32 %v2903, %v2948
      %v2965 = vmul.f32 %v2932, %v2949
      %v2966 = vmul.f32 %v2905, %v2950
      %v2967 = vmul.f32 %v2934, %v2951
      %v2968 = vmul.f32 %v2952, 0.044715
      %v2969 = vmul.f32 %v2953, 0.044715
      %v2970 = vmul.f32 %v2954, 0.044715
      %v2971 = vmul.f32 %v2955, 0.044715
      %v2972 = vmul.f32 %v2956, 0.044715
      %v2973 = vmul.f32 %v2957, 0.044715
      %v2974 = vmul.f32 %v2958, 0.044715
      %v2975 = vmul.f32 %v2959, 0.044715
      %v2976 = vmul.f32 %v2960, 0.044715
      %v2977 = vmul.f32 %v2961, 0.044715
      %v2978 = vmul.f32 %v2962, 0.044715
      %v2979 = vmul.f32 %v2963, 0.044715
      %v2980 = vmul.f32 %v2964, 0.044715
      %v2981 = vmul.f32 %v2965, 0.044715
      %v2982 = vmul.f32 %v2966, 0.044715
      %v2983 = vmul.f32 %v2967, 0.044715
      %v2984 = vadd.f32 %v2888, %v2968
      %v2985 = vadd.f32 %v2917, %v2969
      %v2986 = vadd.f32 %v2890, %v2970
      %v2987 = vadd.f32 %v2919, %v2971
      %v2988 = vadd.f32 %v2893, %v2972
      %v2989 = vadd.f32 %v2922, %v2973
      %v2990 = vadd.f32 %v2895, %v2974
      %v2991 = vadd.f32 %v2924, %v2975
      %v2992 = vadd.f32 %v2898, %v2976
      %v2993 = vadd.f32 %v2927, %v2977
      %v2994 = vadd.f32 %v2900, %v2978
      %v2995 = vadd.f32 %v2929, %v2979
      %v2996 = vadd.f32 %v2903, %v2980
      %v2997 = vadd.f32 %v2932, %v2981
      %v2998 = vadd.f32 %v2905, %v2982
      %v2999 = vadd.f32 %v2934, %v2983
      %v3000 = vmul.f32 %v2984, 0.7978846
      %v3001 = vmul.f32 %v2985, 0.7978846
      %v3002 = vmul.f32 %v2986, 0.7978846
      %v3003 = vmul.f32 %v2987, 0.7978846
      %v3004 = vmul.f32 %v2988, 0.7978846
      %v3005 = vmul.f32 %v2989, 0.7978846
      %v3006 = vmul.f32 %v2990, 0.7978846
      %v3007 = vmul.f32 %v2991, 0.7978846
      %v3008 = vmul.f32 %v2992, 0.7978846
      %v3009 = vmul.f32 %v2993, 0.7978846
      %v3010 = vmul.f32 %v2994, 0.7978846
      %v3011 = vmul.f32 %v2995, 0.7978846
      %v3012 = vmul.f32 %v2996, 0.7978846
      %v3013 = vmul.f32 %v2997, 0.7978846
      %v3014 = vmul.f32 %v2998, 0.7978846
      %v3015 = vmul.f32 %v2999, 0.7978846
      %v3016 = vtanh.pop %v3000
      %v3017 = vtanh.pop %v3001
      %v3018 = vtanh.pop %v3002
      %v3019 = vtanh.pop %v3003
      %v3020 = vtanh.pop %v3004
      %v3021 = vtanh.pop %v3005
      %v3022 = vtanh.pop %v3006
      %v3023 = vtanh.pop %v3007
      %v3024 = vtanh.pop %v3008
      %v3025 = vtanh.pop %v3009
      %v3026 = vtanh.pop %v3010
      %v3027 = vtanh.pop %v3011
      %v3028 = vtanh.pop %v3012
      %v3029 = vtanh.pop %v3013
      %v3030 = vtanh.pop %v3014
      %v3031 = vtanh.pop %v3015
      %v3032 = vadd.f32 %v3016, 1.0
      %v3033 = vadd.f32 %v3017, 1.0
      %v3034 = vadd.f32 %v3018, 1.0
      %v3035 = vadd.f32 %v3019, 1.0
      %v3036 = vadd.f32 %v3020, 1.0
      %v3037 = vadd.f32 %v3021, 1.0
      %v3038 = vadd.f32 %v3022, 1.0
      %v3039 = vadd.f32 %v3023, 1.0
      %v3040 = vadd.f32 %v3024, 1.0
      %v3041 = vadd.f32 %v3025, 1.0
      %v3042 = vadd.f32 %v3026, 1.0
      %v3043 = vadd.f32 %v3027, 1.0
      %v3044 = vadd.f32 %v3028, 1.0
      %v3045 = vadd.f32 %v3029, 1.0
      %v3046 = vadd.f32 %v3030, 1.0
      %v3047 = vadd.f32 %v3031, 1.0
      %v3048 = vmul.f32 %v3032, 0.5
      %v3049 = vmul.f32 %v3033, 0.5
      %v3050 = vmul.f32 %v3034, 0.5
      %v3051 = vmul.f32 %v3035, 0.5
      %v3052 = vmul.f32 %v3036, 0.5
      %v3053 = vmul.f32 %v3037, 0.5
      %v3054 = vmul.f32 %v3038, 0.5
      %v3055 = vmul.f32 %v3039, 0.5
      %v3056 = vmul.f32 %v3040, 0.5
      %v3057 = vmul.f32 %v3041, 0.5
      %v3058 = vmul.f32 %v3042, 0.5
      %v3059 = vmul.f32 %v3043, 0.5
      %v3060 = vmul.f32 %v3044, 0.5
      %v3061 = vmul.f32 %v3045, 0.5
      %v3062 = vmul.f32 %v3046, 0.5
      %v3063 = vmul.f32 %v3047, 0.5
      %v3064 = vmul.f32 %v2888, %v3048
      %v3065 = vmul.f32 %v2917, %v3049
      %v3066 = vmul.f32 %v2890, %v3050
      %v3067 = vmul.f32 %v2919, %v3051
      %v3068 = vmul.f32 %v2893, %v3052
      %v3069 = vmul.f32 %v2922, %v3053
      %v3070 = vmul.f32 %v2895, %v3054
      %v3071 = vmul.f32 %v2924, %v3055
      %v3072 = vmul.f32 %v2898, %v3056
      %v3073 = vmul.f32 %v2927, %v3057
      %v3074 = vmul.f32 %v2900, %v3058
      %v3075 = vmul.f32 %v2929, %v3059
      %v3076 = vmul.f32 %v2903, %v3060
      %v3077 = vmul.f32 %v2932, %v3061
      %v3078 = vmul.f32 %v2905, %v3062
      %v3079 = vmul.f32 %v2934, %v3063
      %v3080 = vpack.c.bf16 %v3065, %v3064
      %v3081 = vpack.c.bf16 %v3067, %v3066
      %v3082 = vpack.c.bf16 %v3069, %v3068
      %v3083 = vpack.c.bf16 %v3071, %v3070
      %v3084 = vpack.c.bf16 %v3073, %v3072
      %v3085 = vpack.c.bf16 %v3075, %v3074
      %v3086 = vpack.c.bf16 %v3077, %v3076
      %v3087 = vpack.c.bf16 %v3079, %v3078
      %3088 = vst [vmem:[#allocation4] sm:$0xff] %v3080
      %3089 = vst [vmem:[#allocation4 + $0x10] sm:$0xff] %v3081
      %3090 = vst [vmem:[#allocation4 + $0x20] sm:$0xff] %v3082
      %3091 = vst [vmem:[#allocation4 + $0x30] sm:$0xff] %v3083
      %3092 = vst [vmem:[#allocation4 + $0x40] sm:$0xff] %v3084
      %3093 = vst [vmem:[#allocation4 + $0x50] sm:$0xff] %v3085
      %3094 = vst [vmem:[#allocation4 + $0x60] sm:$0xff] %v3086
      %3095 = vst [vmem:[#allocation4 + $0x70] sm:$0xff] %v3087
      %v3096 = vld [vmem:[%s788 + $0x8] sm:$0xff]
      %v3097 = vld [vmem:[%s788 + $0x18] sm:$0xff]
      %v3098 = vld [vmem:[%s788 + $0x28] sm:$0xff]
      %v3099 = vld [vmem:[%s788 + $0x38] sm:$0xff]
      %v3100 = vld [vmem:[%s788 + $0x48] sm:$0xff]
      %v3101 = vld [vmem:[%s788 + $0x58] sm:$0xff]
      %v3102 = vld [vmem:[%s788 + $0x68] sm:$0xff]
      %v3103 = vld [vmem:[%s788 + $0x78] sm:$0xff]
      %v3104 = vld [vmem:[%s788 + $0x88] sm:$0xff]
      %v3105 = vld [vmem:[%s788 + $0x98] sm:$0xff]
      %v3106 = vld [vmem:[%s788 + $0xa8] sm:$0xff]
      %v3107 = vld [vmem:[%s788 + $0xb8] sm:$0xff]
      %v3108 = vld [vmem:[%s788 + $0xc8] sm:$0xff]
      %v3109 = vld [vmem:[%s788 + $0xd8] sm:$0xff]
      %v3110 = vld [vmem:[%s788 + $0xe8] sm:$0xff]
      %v3111 = vld [vmem:[%s788 + $0xf8] sm:$0xff]
      %v3112 = vld [vmem:[%s792 + $0x2] sm:$0x3]
      %v3114 = vperm.slane %v3112, 0
      %v3115 = vperm.slane %v3112, 1
      %v3134 = vunpack.c.l.b16 %v3096
      %v3135 = vunpack.c.h.b16 %v3096
      %v3136 = vunpack.c.l.b16 %v3097
      %v3137 = vunpack.c.h.b16 %v3097
      %v3138 = vunpack.c.l.b16 %v3098
      %v3139 = vunpack.c.h.b16 %v3098
      %v3140 = vunpack.c.l.b16 %v3099
      %v3141 = vunpack.c.h.b16 %v3099
      %v3142 = vunpack.c.l.b16 %v3100
      %v3143 = vunpack.c.h.b16 %v3100
      %v3144 = vunpack.c.l.b16 %v3101
      %v3145 = vunpack.c.h.b16 %v3101
      %v3146 = vunpack.c.l.b16 %v3102
      %v3147 = vunpack.c.h.b16 %v3102
      %v3148 = vunpack.c.l.b16 %v3103
      %v3149 = vunpack.c.h.b16 %v3103
      %v3150 = vunpack.c.l.b16 %v3104
      %v3151 = vunpack.c.h.b16 %v3104
      %v3152 = vunpack.c.l.b16 %v3105
      %v3153 = vunpack.c.h.b16 %v3105
      %v3154 = vunpack.c.l.b16 %v3106
      %v3155 = vunpack.c.h.b16 %v3106
      %v3156 = vunpack.c.l.b16 %v3107
      %v3157 = vunpack.c.h.b16 %v3107
      %v3158 = vunpack.c.l.b16 %v3108
      %v3159 = vunpack.c.h.b16 %v3108
      %v3160 = vunpack.c.l.b16 %v3109
      %v3161 = vunpack.c.h.b16 %v3109
      %v3162 = vunpack.c.l.b16 %v3110
      %v3163 = vunpack.c.h.b16 %v3110
      %v3164 = vunpack.c.l.b16 %v3111
      %v3165 = vunpack.c.h.b16 %v3111
      %v3166 = vpack.c.b16 %v3136, %v3134
      %v3167 = vpack.c.b16 %v3137, %v3135
      %v3168 = vpack.c.b16 %v3140, %v3138
      %v3169 = vpack.c.b16 %v3141, %v3139
      %v3170 = vpack.c.b16 %v3144, %v3142
      %v3171 = vpack.c.b16 %v3145, %v3143
      %v3172 = vpack.c.b16 %v3148, %v3146
      %v3173 = vpack.c.b16 %v3149, %v3147
      %v3174 = vpack.c.b16 %v3152, %v3150
      %v3175 = vpack.c.b16 %v3153, %v3151
      %v3176 = vpack.c.b16 %v3156, %v3154
      %v3177 = vpack.c.b16 %v3157, %v3155
      %v3178 = vpack.c.b16 %v3160, %v3158
      %v3179 = vpack.c.b16 %v3161, %v3159
      %v3180 = vpack.c.b16 %v3164, %v3162
      %v3181 = vpack.c.b16 %v3165, %v3163
      %3198 = vmatpush.bf16.msra.mxu0 %v3180
      %3199 = vmatpush.bf16.msra.mxu0 %v3178
      %3200 = vmatpush.bf16.msra.mxu0 %v3176
      %3201 = vmatpush.bf16.msra.mxu0 %v3174
      %3202 = vmatpush.bf16.msra.mxu0 %v3172
      %3203 = vmatpush.bf16.msra.mxu0 %v3170
      %3204 = vmatpush.bf16.msra.mxu0 %v3168
      %3205 = vmatpush.bf16.msra.mxu0 %v3166
      %3206 = vmatmul.bf16.gmra.mxu0 %v2772
      %v3207 = vpop.f32.mrf.mxu0
      %v3208 = vadd.f32 %v3114, %v3207
      %v3209 = vpop.f32.mrf.mxu0
      %v3210 = vadd.f32 %v3114, %v3209
      %3211 = vmatmul.bf16.gmra.mxu0 %v2773
      %v3212 = vpop.f32.mrf.mxu0
      %v3213 = vadd.f32 %v3114, %v3212
      %v3214 = vpop.f32.mrf.mxu0
      %v3215 = vadd.f32 %v3114, %v3214
      %3216 = vmatmul.bf16.gmra.mxu0 %v2774
      %v3217 = vpop.f32.mrf.mxu0
      %v3218 = vadd.f32 %v3114, %v3217
      %v3219 = vpop.f32.mrf.mxu0
      %v3220 = vadd.f32 %v3114, %v3219
      %3221 = vmatmul.bf16.gmra.mxu0 %v2775
      %v3222 = vpop.f32.mrf.mxu0
      %v3223 = vadd.f32 %v3114, %v3222
      %v3224 = vpop.f32.mrf.mxu0
      %v3225 = vadd.f32 %v3114, %v3224
      %3226 = vdwg.mxu0
      %3227 = vmatpush.bf16.msra.mxu0 %v3181
      %3228 = vmatpush.bf16.msra.mxu0 %v3179
      %3229 = vmatpush.bf16.msra.mxu0 %v3177
      %3230 = vmatpush.bf16.msra.mxu0 %v3175
      %3231 = vmatpush.bf16.msra.mxu0 %v3173
      %3232 = vmatpush.bf16.msra.mxu0 %v3171
      %3233 = vmatpush.bf16.msra.mxu0 %v3169
      %3234 = vmatpush.bf16.msra.mxu0 %v3167
      %3235 = vmatmul.bf16.gmra.mxu0 %v2772
      %v3236 = vpop.f32.mrf.mxu0
      %v3237 = vadd.f32 %v3115, %v3236
      %v3238 = vpop.f32.mrf.mxu0
      %v3239 = vadd.f32 %v3115, %v3238
      %3240 = vmatmul.bf16.gmra.mxu0 %v2773
      %v3241 = vpop.f32.mrf.mxu0
      %v3242 = vadd.f32 %v3115, %v3241
      %v3243 = vpop.f32.mrf.mxu0
      %v3244 = vadd.f32 %v3115, %v3243
      %3245 = vmatmul.bf16.gmra.mxu0 %v2774
      %v3246 = vpop.f32.mrf.mxu0
      %v3247 = vadd.f32 %v3115, %v3246
      %v3248 = vpop.f32.mrf.mxu0
      %v3249 = vadd.f32 %v3115, %v3248
      %3250 = vmatmul.bf16.gmra.mxu0 %v2775
      %v3251 = vpop.f32.mrf.mxu0
      %v3252 = vadd.f32 %v3115, %v3251
      %v3253 = vpop.f32.mrf.mxu0
      %v3254 = vadd.f32 %v3115, %v3253
      %3255 = vdwg.mxu0
      %v3256 = vmul.f32 %v3208, %v3208
      %v3257 = vmul.f32 %v3237, %v3237
      %v3258 = vmul.f32 %v3210, %v3210
      %v3259 = vmul.f32 %v3239, %v3239
      %v3260 = vmul.f32 %v3213, %v3213
      %v3261 = vmul.f32 %v3242, %v3242
      %v3262 = vmul.f32 %v3215, %v3215
      %v3263 = vmul.f32 %v3244, %v3244
      %v3264 = vmul.f32 %v3218, %v3218
      %v3265 = vmul.f32 %v3247, %v3247
      %v3266 = vmul.f32 %v3220, %v3220
      %v3267 = vmul.f32 %v3249, %v3249
      %v3268 = vmul.f32 %v3223, %v3223
      %v3269 = vmul.f32 %v3252, %v3252
      %v3270 = vmul.f32 %v3225, %v3225
      %v3271 = vmul.f32 %v3254, %v3254
      %v3272 = vmul.f32 %v3208, %v3256
      %v3273 = vmul.f32 %v3237, %v3257
      %v3274 = vmul.f32 %v3210, %v3258
      %v3275 = vmul.f32 %v3239, %v3259
      %v3276 = vmul.f32 %v3213, %v3260
      %v3277 = vmul.f32 %v3242, %v3261
      %v3278 = vmul.f32 %v3215, %v3262
      %v3279 = vmul.f32 %v3244, %v3263
      %v3280 = vmul.f32 %v3218, %v3264
      %v3281 = vmul.f32 %v3247, %v3265
      %v3282 = vmul.f32 %v3220, %v3266
      %v3283 = vmul.f32 %v3249, %v3267
      %v3284 = vmul.f32 %v3223, %v3268
      %v3285 = vmul.f32 %v3252, %v3269
      %v3286 = vmul.f32 %v3225, %v3270
      %v3287 = vmul.f32 %v3254, %v3271
      %v3288 = vmul.f32 %v3272, 0.044715
      %v3289 = vmul.f32 %v3273, 0.044715
      %v3290 = vmul.f32 %v3274, 0.044715
      %v3291 = vmul.f32 %v3275, 0.044715
      %v3292 = vmul.f32 %v3276, 0.044715
      %v3293 = vmul.f32 %v3277, 0.044715
      %v3294 = vmul.f32 %v3278, 0.044715
      %v3295 = vmul.f32 %v3279, 0.044715
      %v3296 = vmul.f32 %v3280, 0.044715
      %v3297 = vmul.f32 %v3281, 0.044715
      %v3298 = vmul.f32 %v3282, 0.044715
      %v3299 = vmul.f32 %v3283, 0.044715
      %v3300 = vmul.f32 %v3284, 0.044715
      %v3301 = vmul.f32 %v3285, 0.044715
      %v3302 = vmul.f32 %v3286, 0.044715
      %v3303 = vmul.f32 %v3287, 0.044715
      %v3304 = vadd.f32 %v3208, %v3288
      %v3305 = vadd.f32 %v3237, %v3289
      %v3306 = vadd.f32 %v3210, %v3290
      %v3307 = vadd.f32 %v3239, %v3291
      %v3308 = vadd.f32 %v3213, %v3292
      %v3309 = vadd.f32 %v3242, %v3293
      %v3310 = vadd.f32 %v3215, %v3294
      %v3311 = vadd.f32 %v3244, %v3295
      %v3312 = vadd.f32 %v3218, %v3296
      %v3313 = vadd.f32 %v3247, %v3297
      %v3314 = vadd.f32 %v3220, %v3298
      %v3315 = vadd.f32 %v3249, %v3299
      %v3316 = vadd.f32 %v3223, %v3300
      %v3317 = vadd.f32 %v3252, %v3301
      %v3318 = vadd.f32 %v3225, %v3302
      %v3319 = vadd.f32 %v3254, %v3303
      %v3320 = vmul.f32 %v3304, 0.7978846
      %v3321 = vmul.f32 %v3305, 0.7978846
      %v3322 = vmul.f32 %v3306, 0.7978846
      %v3323 = vmul.f32 %v3307, 0.7978846
      %v3324 = vmul.f32 %v3308, 0.7978846
      %v3325 = vmul.f32 %v3309, 0.7978846
      %v3326 = vmul.f32 %v3310, 0.7978846
      %v3327 = vmul.f32 %v3311, 0.7978846
      %v3328 = vmul.f32 %v3312, 0.7978846
      %v3329 = vmul.f32 %v3313, 0.7978846
      %v3330 = vmul.f32 %v3314, 0.7978846
      %v3331 = vmul.f32 %v3315, 0.7978846
      %v3332 = vmul.f32 %v3316, 0.7978846
      %v3333 = vmul.f32 %v3317, 0.7978846
      %v3334 = vmul.f32 %v3318, 0.7978846
      %v3335 = vmul.f32 %v3319, 0.7978846
      %v3336 = vtanh.pop %v3320
      %v3337 = vtanh.pop %v3321
      %v3338 = vtanh.pop %v3322
      %v3339 = vtanh.pop %v3323
      %v3340 = vtanh.pop %v3324
      %v3341 = vtanh.pop %v3325
      %v3342 = vtanh.pop %v3326
      %v3343 = vtanh.pop %v3327
      %v3344 = vtanh.pop %v3328
      %v3345 = vtanh.pop %v3329
      %v3346 = vtanh.pop %v3330
      %v3347 = vtanh.pop %v3331
      %v3348 = vtanh.pop %v3332
      %v3349 = vtanh.pop %v3333
      %v3350 = vtanh.pop %v3334
      %v3351 = vtanh.pop %v3335
      %v3352 = vadd.f32 %v3336, 1.0
      %v3353 = vadd.f32 %v3337, 1.0
      %v3354 = vadd.f32 %v3338, 1.0
      %v3355 = vadd.f32 %v3339, 1.0
      %v3356 = vadd.f32 %v3340, 1.0
      %v3357 = vadd.f32 %v3341, 1.0
      %v3358 = vadd.f32 %v3342, 1.0
      %v3359 = vadd.f32 %v3343, 1.0
      %v3360 = vadd.f32 %v3344, 1.0
      %v3361 = vadd.f32 %v3345, 1.0
      %v3362 = vadd.f32 %v3346, 1.0
      %v3363 = vadd.f32 %v3347, 1.0
      %v3364 = vadd.f32 %v3348, 1.0
      %v3365 = vadd.f32 %v3349, 1.0
      %v3366 = vadd.f32 %v3350, 1.0
      %v3367 = vadd.f32 %v3351, 1.0
      %v3368 = vmul.f32 %v3352, 0.5
      %v3369 = vmul.f32 %v3353, 0.5
      %v3370 = vmul.f32 %v3354, 0.5
      %v3371 = vmul.f32 %v3355, 0.5
      %v3372 = vmul.f32 %v3356, 0.5
      %v3373 = vmul.f32 %v3357, 0.5
      %v3374 = vmul.f32 %v3358, 0.5
      %v3375 = vmul.f32 %v3359, 0.5
      %v3376 = vmul.f32 %v3360, 0.5
      %v3377 = vmul.f32 %v3361, 0.5
      %v3378 = vmul.f32 %v3362, 0.5
      %v3379 = vmul.f32 %v3363, 0.5
      %v3380 = vmul.f32 %v3364, 0.5
      %v3381 = vmul.f32 %v3365, 0.5
      %v3382 = vmul.f32 %v3366, 0.5
      %v3383 = vmul.f32 %v3367, 0.5
      %v3384 = vmul.f32 %v3208, %v3368
      %v3385 = vmul.f32 %v3237, %v3369
      %v3386 = vmul.f32 %v3210, %v3370
      %v3387 = vmul.f32 %v3239, %v3371
      %v3388 = vmul.f32 %v3213, %v3372
      %v3389 = vmul.f32 %v3242, %v3373
      %v3390 = vmul.f32 %v3215, %v3374
      %v3391 = vmul.f32 %v3244, %v3375
      %v3392 = vmul.f32 %v3218, %v3376
      %v3393 = vmul.f32 %v3247, %v3377
      %v3394 = vmul.f32 %v3220, %v3378
      %v3395 = vmul.f32 %v3249, %v3379
      %v3396 = vmul.f32 %v3223, %v3380
      %v3397 = vmul.f32 %v3252, %v3381
      %v3398 = vmul.f32 %v3225, %v3382
      %v3399 = vmul.f32 %v3254, %v3383
      %v3400 = vpack.c.bf16 %v3385, %v3384
      %v3401 = vpack.c.bf16 %v3387, %v3386
      %v3402 = vpack.c.bf16 %v3389, %v3388
      %v3403 = vpack.c.bf16 %v3391, %v3390
      %v3404 = vpack.c.bf16 %v3393, %v3392
      %v3405 = vpack.c.bf16 %v3395, %v3394
      %v3406 = vpack.c.bf16 %v3397, %v3396
      %v3407 = vpack.c.bf16 %v3399, %v3398
      %3408 = vst [vmem:[#allocation4 + $0x8] sm:$0xff] %v3400
      %3409 = vst [vmem:[#allocation4 + $0x18] sm:$0xff] %v3401
      %3410 = vst [vmem:[#allocation4 + $0x28] sm:$0xff] %v3402
      %3411 = vst [vmem:[#allocation4 + $0x38] sm:$0xff] %v3403
      %3412 = vst [vmem:[#allocation4 + $0x48] sm:$0xff] %v3404
      %3413 = vst [vmem:[#allocation4 + $0x58] sm:$0xff] %v3405
      %3414 = vst [vmem:[#allocation4 + $0x68] sm:$0xff] %v3406
      %3415 = vst [vmem:[#allocation4 + $0x78] sm:$0xff] %v3407
      %v3416 = vld [vmem:[#allocation4] sm:$0xff]
      %v3417 = vld [vmem:[#allocation4 + $0x8] sm:$0xff]
      %v3418 = vld [vmem:[#allocation4 + $0x10] sm:$0xff]
      %v3419 = vld [vmem:[#allocation4 + $0x18] sm:$0xff]
      %v3420 = vld [vmem:[#allocation4 + $0x20] sm:$0xff]
      %v3421 = vld [vmem:[#allocation4 + $0x28] sm:$0xff]
      %v3422 = vld [vmem:[#allocation4 + $0x30] sm:$0xff]
      %v3423 = vld [vmem:[#allocation4 + $0x38] sm:$0xff]
      %v3424 = vld [vmem:[#allocation4 + $0x40] sm:$0xff]
      %v3425 = vld [vmem:[#allocation4 + $0x48] sm:$0xff]
      %v3426 = vld [vmem:[#allocation4 + $0x50] sm:$0xff]
      %v3427 = vld [vmem:[#allocation4 + $0x58] sm:$0xff]
      %v3428 = vld [vmem:[#allocation4 + $0x60] sm:$0xff]
      %v3429 = vld [vmem:[#allocation4 + $0x68] sm:$0xff]
      %v3430 = vld [vmem:[#allocation4 + $0x70] sm:$0xff]
      %v3431 = vld [vmem:[#allocation4 + $0x78] sm:$0xff]
      %v3432 = vld [vmem:[%s797] sm:$0xf]
      %v3433 = vld [vmem:[%s797 + $0x4] sm:$0xf]
      %v3434 = vld [vmem:[%s797 + $0x8] sm:$0xf]
      %v3435 = vld [vmem:[%s797 + $0xc] sm:$0xf]
      %v3436 = vld [vmem:[%s797 + $0x10] sm:$0xf]
      %v3437 = vld [vmem:[%s797 + $0x14] sm:$0xf]
      %v3438 = vld [vmem:[%s797 + $0x18] sm:$0xf]
      %v3439 = vld [vmem:[%s797 + $0x1c] sm:$0xf]
      %v3440 = vld [vmem:[%s797 + $0x20] sm:$0xf]
      %v3441 = vld [vmem:[%s797 + $0x24] sm:$0xf]
      %v3442 = vld [vmem:[%s797 + $0x28] sm:$0xf]
      %v3443 = vld [vmem:[%s797 + $0x2c] sm:$0xf]
      %v3444 = vld [vmem:[%s797 + $0x30] sm:$0xf]
      %v3445 = vld [vmem:[%s797 + $0x34] sm:$0xf]
      %v3446 = vld [vmem:[%s797 + $0x38] sm:$0xf]
      %v3447 = vld [vmem:[%s797 + $0x3c] sm:$0xf]
      %v3448 = vld [vmem:[%s797 + $0x40] sm:$0xf]
      %v3449 = vld [vmem:[%s797 + $0x44] sm:$0xf]
      %v3450 = vld [vmem:[%s797 + $0x48] sm:$0xf]
      %v3451 = vld [vmem:[%s797 + $0x4c] sm:$0xf]
      %v3452 = vld [vmem:[%s797 + $0x50] sm:$0xf]
      %v3453 = vld [vmem:[%s797 + $0x54] sm:$0xf]
      %v3454 = vld [vmem:[%s797 + $0x58] sm:$0xf]
      %v3455 = vld [vmem:[%s797 + $0x5c] sm:$0xf]
      %v3456 = vld [vmem:[%s797 + $0x60] sm:$0xf]
      %v3457 = vld [vmem:[%s797 + $0x64] sm:$0xf]
      %v3458 = vld [vmem:[%s797 + $0x68] sm:$0xf]
      %v3459 = vld [vmem:[%s797 + $0x6c] sm:$0xf]
      %v3460 = vld [vmem:[%s797 + $0x70] sm:$0xf]
      %v3461 = vld [vmem:[%s797 + $0x74] sm:$0xf]
      %v3462 = vld [vmem:[%s797 + $0x78] sm:$0xf]
      %v3463 = vld [vmem:[%s797 + $0x7c] sm:$0xf]
      %v3464 = vld [vmem:[%s797 + $0x80] sm:$0xf]
      %v3465 = vld [vmem:[%s797 + $0x84] sm:$0xf]
      %v3466 = vld [vmem:[%s797 + $0x88] sm:$0xf]
      %v3467 = vld [vmem:[%s797 + $0x8c] sm:$0xf]
      %v3468 = vld [vmem:[%s797 + $0x90] sm:$0xf]
      %v3469 = vld [vmem:[%s797 + $0x94] sm:$0xf]
      %v3470 = vld [vmem:[%s797 + $0x98] sm:$0xf]
      %v3471 = vld [vmem:[%s797 + $0x9c] sm:$0xf]
      %v3472 = vld [vmem:[%s797 + $0xa0] sm:$0xf]
      %v3473 = vld [vmem:[%s797 + $0xa4] sm:$0xf]
      %v3474 = vld [vmem:[%s797 + $0xa8] sm:$0xf]
      %v3475 = vld [vmem:[%s797 + $0xac] sm:$0xf]
      %v3476 = vld [vmem:[%s797 + $0xb0] sm:$0xf]
      %v3477 = vld [vmem:[%s797 + $0xb4] sm:$0xf]
      %v3478 = vld [vmem:[%s797 + $0xb8] sm:$0xf]
      %v3479 = vld [vmem:[%s797 + $0xbc] sm:$0xf]
      %v3480 = vld [vmem:[%s797 + $0xc0] sm:$0xf]
      %v3481 = vld [vmem:[%s797 + $0xc4] sm:$0xf]
      %v3482 = vld [vmem:[%s797 + $0xc8] sm:$0xf]
      %v3483 = vld [vmem:[%s797 + $0xcc] sm:$0xf]
      %v3484 = vld [vmem:[%s797 + $0xd0] sm:$0xf]
      %v3485 = vld [vmem:[%s797 + $0xd4] sm:$0xf]
      %v3486 = vld [vmem:[%s797 + $0xd8] sm:$0xf]
      %v3487 = vld [vmem:[%s797 + $0xdc] sm:$0xf]
      %v3488 = vld [vmem:[%s797 + $0xe0] sm:$0xf]
      %v3489 = vld [vmem:[%s797 + $0xe4] sm:$0xf]
      %v3490 = vld [vmem:[%s797 + $0xe8] sm:$0xf]
      %v3491 = vld [vmem:[%s797 + $0xec] sm:$0xf]
      %v3492 = vld [vmem:[%s797 + $0xf0] sm:$0xf]
      %v3493 = vld [vmem:[%s797 + $0xf4] sm:$0xf]
      %v3494 = vld [vmem:[%s797 + $0xf8] sm:$0xf]
      %v3495 = vld [vmem:[%s797 + $0xfc] sm:$0xf]
      %v3496 = vld [vmem:[%s800] sm:$0x1]
      %v3498 = vperm.slane %v3496, 0
      %v3516 = vunpack.c.l.b16 %v3416
      %v3517 = vunpack.c.h.b16 %v3416
      %v3518 = vunpack.c.l.b16 %v3417
      %v3519 = vunpack.c.h.b16 %v3417
      %v3520 = vunpack.c.l.b16 %v3418
      %v3521 = vunpack.c.h.b16 %v3418
      %v3522 = vunpack.c.l.b16 %v3419
      %v3523 = vunpack.c.h.b16 %v3419
      %v3524 = vunpack.c.l.b16 %v3420
      %v3525 = vunpack.c.h.b16 %v3420
      %v3526 = vunpack.c.l.b16 %v3421
      %v3527 = vunpack.c.h.b16 %v3421
      %v3528 = vunpack.c.l.b16 %v3422
      %v3529 = vunpack.c.h.b16 %v3422
      %v3530 = vunpack.c.l.b16 %v3423
      %v3531 = vunpack.c.h.b16 %v3423
      %v3532 = vunpack.c.l.b16 %v3424
      %v3533 = vunpack.c.h.b16 %v3424
      %v3534 = vunpack.c.l.b16 %v3425
      %v3535 = vunpack.c.h.b16 %v3425
      %v3536 = vunpack.c.l.b16 %v3426
      %v3537 = vunpack.c.h.b16 %v3426
      %v3538 = vunpack.c.l.b16 %v3427
      %v3539 = vunpack.c.h.b16 %v3427
      %v3540 = vunpack.c.l.b16 %v3428
      %v3541 = vunpack.c.h.b16 %v3428
      %v3542 = vunpack.c.l.b16 %v3429
      %v3543 = vunpack.c.h.b16 %v3429
      %v3544 = vunpack.c.l.b16 %v3430
      %v3545 = vunpack.c.h.b16 %v3430
      %v3546 = vunpack.c.l.b16 %v3431
      %v3547 = vunpack.c.h.b16 %v3431
      %v3548 = vpack.c.b16 %v3520, %v3516
      %v3549 = vpack.c.b16 %v3521, %v3517
      %v3550 = vpack.c.b16 %v3522, %v3518
      %v3551 = vpack.c.b16 %v3523, %v3519
      %v3552 = vpack.c.b16 %v3528, %v3524
      %v3553 = vpack.c.b16 %v3529, %v3525
      %v3554 = vpack.c.b16 %v3530, %v3526
      %v3555 = vpack.c.b16 %v3531, %v3527
      %v3556 = vpack.c.b16 %v3536, %v3532
      %v3557 = vpack.c.b16 %v3537, %v3533
      %v3558 = vpack.c.b16 %v3538, %v3534
      %v3559 = vpack.c.b16 %v3539, %v3535
      %v3560 = vpack.c.b16 %v3544, %v3540
      %v3561 = vpack.c.b16 %v3545, %v3541
      %v3562 = vpack.c.b16 %v3546, %v3542
      %v3563 = vpack.c.b16 %v3547, %v3543
      %v3644 = vunpack.c.l.b16 %v3432
      %v3645 = vunpack.c.l.b16 %v3433
      %v3646 = vunpack.c.l.b16 %v3434
      %v3647 = vunpack.c.l.b16 %v3435
      %v3648 = vunpack.c.l.b16 %v3436
      %v3649 = vunpack.c.l.b16 %v3437
      %v3650 = vunpack.c.l.b16 %v3438
      %v3651 = vunpack.c.l.b16 %v3439
      %v3652 = vunpack.c.l.b16 %v3440
      %v3653 = vunpack.c.l.b16 %v3441
      %v3654 = vunpack.c.l.b16 %v3442
      %v3655 = vunpack.c.l.b16 %v3443
      %v3656 = vunpack.c.l.b16 %v3444
      %v3657 = vunpack.c.l.b16 %v3445
      %v3658 = vunpack.c.l.b16 %v3446
      %v3659 = vunpack.c.l.b16 %v3447
      %v3660 = vunpack.c.l.b16 %v3448
      %v3661 = vunpack.c.l.b16 %v3449
      %v3662 = vunpack.c.l.b16 %v3450
      %v3663 = vunpack.c.l.b16 %v3451
      %v3664 = vunpack.c.l.b16 %v3452
      %v3665 = vunpack.c.l.b16 %v3453
      %v3666 = vunpack.c.l.b16 %v3454
      %v3667 = vunpack.c.l.b16 %v3455
      %v3668 = vunpack.c.l.b16 %v3456
      %v3669 = vunpack.c.l.b16 %v3457
      %v3670 = vunpack.c.l.b16 %v3458
      %v3671 = vunpack.c.l.b16 %v3459
      %v3672 = vunpack.c.l.b16 %v3460
      %v3673 = vunpack.c.l.b16 %v3461
      %v3674 = vunpack.c.l.b16 %v3462
      %v3675 = vunpack.c.l.b16 %v3463
      %v3676 = vunpack.c.l.b16 %v3464
      %v3677 = vunpack.c.l.b16 %v3465
      %v3678 = vunpack.c.l.b16 %v3466
      %v3679 = vunpack.c.l.b16 %v3467
      %v3680 = vunpack.c.l.b16 %v3468
      %v3681 = vunpack.c.l.b16 %v3469
      %v3682 = vunpack.c.l.b16 %v3470
      %v3683 = vunpack.c.l.b16 %v3471
      %v3684 = vunpack.c.l.b16 %v3472
      %v3685 = vunpack.c.l.b16 %v3473
      %v3686 = vunpack.c.l.b16 %v3474
      %v3687 = vunpack.c.l.b16 %v3475
      %v3688 = vunpack.c.l.b16 %v3476
      %v3689 = vunpack.c.l.b16 %v3477
      %v3690 = vunpack.c.l.b16 %v3478
      %v3691 = vunpack.c.l.b16 %v3479
      %v3692 = vunpack.c.l.b16 %v3480
      %v3693 = vunpack.c.l.b16 %v3481
      %v3694 = vunpack.c.l.b16 %v3482
      %v3695 = vunpack.c.l.b16 %v3483
      %v3696 = vunpack.c.l.b16 %v3484
      %v3697 = vunpack.c.l.b16 %v3485
      %v3698 = vunpack.c.l.b16 %v3486
      %v3699 = vunpack.c.l.b16 %v3487
      %v3700 = vunpack.c.l.b16 %v3488
      %v3701 = vunpack.c.l.b16 %v3489
      %v3702 = vunpack.c.l.b16 %v3490
      %v3703 = vunpack.c.l.b16 %v3491
      %v3704 = vunpack.c.l.b16 %v3492
      %v3705 = vunpack.c.l.b16 %v3493
      %v3706 = vunpack.c.l.b16 %v3494
      %v3707 = vunpack.c.l.b16 %v3495
      %v3708 = vpack.c.b16 %v3645, %v3644
      %v3709 = vpack.c.b16 %v3647, %v3646
      %v3710 = vpack.c.b16 %v3649, %v3648
      %v3711 = vpack.c.b16 %v3651, %v3650
      %v3712 = vpack.c.b16 %v3653, %v3652
      %v3713 = vpack.c.b16 %v3655, %v3654
      %v3714 = vpack.c.b16 %v3657, %v3656
      %v3715 = vpack.c.b16 %v3659, %v3658
      %v3716 = vpack.c.b16 %v3661, %v3660
      %v3717 = vpack.c.b16 %v3663, %v3662
      %v3718 = vpack.c.b16 %v3665, %v3664
      %v3719 = vpack.c.b16 %v3667, %v3666
      %v3720 = vpack.c.b16 %v3669, %v3668
      %v3721 = vpack.c.b16 %v3671, %v3670
      %v3722 = vpack.c.b16 %v3673, %v3672
      %v3723 = vpack.c.b16 %v3675, %v3674
      %v3724 = vpack.c.b16 %v3677, %v3676
      %v3725 = vpack.c.b16 %v3679, %v3678
      %v3726 = vpack.c.b16 %v3681, %v3680
      %v3727 = vpack.c.b16 %v3683, %v3682
      %v3728 = vpack.c.b16 %v3685, %v3684
      %v3729 = vpack.c.b16 %v3687, %v3686
      %v3730 = vpack.c.b16 %v3689, %v3688
      %v3731 = vpack.c.b16 %v3691, %v3690
      %v3732 = vpack.c.b16 %v3693, %v3692
      %v3733 = vpack.c.b16 %v3695, %v3694
      %v3734 = vpack.c.b16 %v3697, %v3696
      %v3735 = vpack.c.b16 %v3699, %v3698
      %v3736 = vpack.c.b16 %v3701, %v3700
      %v3737 = vpack.c.b16 %v3703, %v3702
      %v3738 = vpack.c.b16 %v3705, %v3704
      %v3739 = vpack.c.b16 %v3707, %v3706
      %3772 = vmatpush.bf16.msra.mxu0 %v3715
      %3773 = vmatpush.bf16.msra.mxu0 %v3714
      %3774 = vmatpush.bf16.msra.mxu0 %v3713
      %3775 = vmatpush.bf16.msra.mxu0 %v3712
      %3776 = vmatpush.bf16.msra.mxu0 %v3711
      %3777 = vmatpush.bf16.msra.mxu0 %v3710
      %3778 = vmatpush.bf16.msra.mxu0 %v3709
      %3779 = vmatpush.bf16.msra.mxu0 %v3708
      %3780 = vmatmul.bf16.gmra.mxu0 %v3548
      %v3781 = vpop.f32.mrf.mxu0
      %v3782 = vadd.f32 %v3498, %v3781
      %v3783 = vpop.f32.mrf.mxu0
      %v3784 = vadd.f32 %v3498, %v3783
      %3785 = vmatmul.bf16.gmra.mxu0 %v3552
      %v3786 = vpop.f32.mrf.mxu0
      %v3787 = vadd.f32 %v3498, %v3786
      %v3788 = vpop.f32.mrf.mxu0
      %v3789 = vadd.f32 %v3498, %v3788
      %3790 = vmatmul.bf16.gmra.mxu0 %v3556
      %v3791 = vpop.f32.mrf.mxu0
      %v3792 = vadd.f32 %v3498, %v3791
      %v3793 = vpop.f32.mrf.mxu0
      %v3794 = vadd.f32 %v3498, %v3793
      %3795 = vmatmul.bf16.gmra.mxu0 %v3560
      %v3796 = vpop.f32.mrf.mxu0
      %v3797 = vadd.f32 %v3498, %v3796
      %v3798 = vpop.f32.mrf.mxu0
      %v3799 = vadd.f32 %v3498, %v3798
      %3800 = vdwg.mxu0
      %3801 = vmatpush.bf16.msra.mxu0 %v3723
      %3802 = vmatpush.bf16.msra.mxu0 %v3722
      %3803 = vmatpush.bf16.msra.mxu0 %v3721
      %3804 = vmatpush.bf16.msra.mxu0 %v3720
      %3805 = vmatpush.bf16.msra.mxu0 %v3719
      %3806 = vmatpush.bf16.msra.mxu0 %v3718
      %3807 = vmatpush.bf16.msra.mxu0 %v3717
      %3808 = vmatpush.bf16.msra.mxu0 %v3716
      %3809 = vmatmul.bf16.gmra.mxu0 %v3549
      %v3810 = vpop.f32.mrf.mxu0
      %v3811 = vadd.f32 %v3782, %v3810
      %v3812 = vpop.f32.mrf.mxu0
      %v3813 = vadd.f32 %v3784, %v3812
      %3814 = vmatmul.bf16.gmra.mxu0 %v3553
      %v3815 = vpop.f32.mrf.mxu0
      %v3816 = vadd.f32 %v3787, %v3815
      %v3817 = vpop.f32.mrf.mxu0
      %v3818 = vadd.f32 %v3789, %v3817
      %3819 = vmatmul.bf16.gmra.mxu0 %v3557
      %v3820 = vpop.f32.mrf.mxu0
      %v3821 = vadd.f32 %v3792, %v3820
      %v3822 = vpop.f32.mrf.mxu0
      %v3823 = vadd.f32 %v3794, %v3822
      %3824 = vmatmul.bf16.gmra.mxu0 %v3561
      %v3825 = vpop.f32.mrf.mxu0
      %v3826 = vadd.f32 %v3797, %v3825
      %v3827 = vpop.f32.mrf.mxu0
      %v3828 = vadd.f32 %v3799, %v3827
      %3829 = vdwg.mxu0
      %3830 = vmatpush.bf16.msra.mxu0 %v3731
      %3831 = vmatpush.bf16.msra.mxu0 %v3730
      %3832 = vmatpush.bf16.msra.mxu0 %v3729
      %3833 = vmatpush.bf16.msra.mxu0 %v3728
      %3834 = vmatpush.bf16.msra.mxu0 %v3727
      %3835 = vmatpush.bf16.msra.mxu0 %v3726
      %3836 = vmatpush.bf16.msra.mxu0 %v3725
      %3837 = vmatpush.bf16.msra.mxu0 %v3724
      %3838 = vmatmul.bf16.gmra.mxu0 %v3550
      %v3839 = vpop.f32.mrf.mxu0
      %v3840 = vadd.f32 %v3811, %v3839
      %v3841 = vpop.f32.mrf.mxu0
      %v3842 = vadd.f32 %v3813, %v3841
      %3843 = vmatmul.bf16.gmra.mxu0 %v3554
      %v3844 = vpop.f32.mrf.mxu0
      %v3845 = vadd.f32 %v3816, %v3844
      %v3846 = vpop.f32.mrf.mxu0
      %v3847 = vadd.f32 %v3818, %v3846
      %3848 = vmatmul.bf16.gmra.mxu0 %v3558
      %v3849 = vpop.f32.mrf.mxu0
      %v3850 = vadd.f32 %v3821, %v3849
      %v3851 = vpop.f32.mrf.mxu0
      %v3852 = vadd.f32 %v3823, %v3851
      %3853 = vmatmul.bf16.gmra.mxu0 %v3562
      %v3854 = vpop.f32.mrf.mxu0
      %v3855 = vadd.f32 %v3826, %v3854
      %v3856 = vpop.f32.mrf.mxu0
      %v3857 = vadd.f32 %v3828, %v3856
      %3858 = vdwg.mxu0
      %3859 = vmatpush.bf16.msra.mxu0 %v3739
      %3860 = vmatpush.bf16.msra.mxu0 %v3738
      %3861 = vmatpush.bf16.msra.mxu0 %v3737
      %3862 = vmatpush.bf16.msra.mxu0 %v3736
      %3863 = vmatpush.bf16.msra.mxu0 %v3735
      %3864 = vmatpush.bf16.msra.mxu0 %v3734
      %3865 = vmatpush.bf16.msra.mxu0 %v3733
      %3866 = vmatpush.bf16.msra.mxu0 %v3732
      %3867 = vmatmul.bf16.gmra.mxu0 %v3551
      %v3868 = vpop.f32.mrf.mxu0
      %v3869 = vadd.f32 %v3840, %v3868
      %v3870 = vpop.f32.mrf.mxu0
      %v3871 = vadd.f32 %v3842, %v3870
      %3872 = vmatmul.bf16.gmra.mxu0 %v3555
      %v3873 = vpop.f32.mrf.mxu0
      %v3874 = vadd.f32 %v3845, %v3873
      %v3875 = vpop.f32.mrf.mxu0
      %v3876 = vadd.f32 %v3847, %v3875
      %3877 = vmatmul.bf16.gmra.mxu0 %v3559
      %v3878 = vpop.f32.mrf.mxu0
      %v3879 = vadd.f32 %v3850, %v3878
      %v3880 = vpop.f32.mrf.mxu0
      %v3881 = vadd.f32 %v3852, %v3880
      %3882 = vmatmul.bf16.gmra.mxu0 %v3563
      %v3883 = vpop.f32.mrf.mxu0
      %v3884 = vadd.f32 %v3855, %v3883
      %v3885 = vpop.f32.mrf.mxu0
      %v3886 = vadd.f32 %v3857, %v3885
      %3887 = vdwg.mxu0
      %v3888 = vadd.f32 %v2580, %v3869
      %v3889 = vadd.f32 %v2581, %v3871
      %v3890 = vadd.f32 %v2582, %v3874
      %v3891 = vadd.f32 %v2583, %v3876
      %v3892 = vadd.f32 %v2584, %v3879
      %v3893 = vadd.f32 %v2585, %v3881
      %v3894 = vadd.f32 %v2586, %v3884
      %v3895 = vadd.f32 %v2587, %v3886
      %3896 = vst [vmem:[%s805] sm:$0xff] %v3888
      %3897 = vst [vmem:[%s805 + $0x8] sm:$0xff] %v3889
      %3898 = vst [vmem:[%s805 + $0x10] sm:$0xff] %v3890
      %3899 = vst [vmem:[%s805 + $0x18] sm:$0xff] %v3891
      %3900 = vst [vmem:[%s805 + $0x20] sm:$0xff] %v3892
      %3901 = vst [vmem:[%s805 + $0x28] sm:$0xff] %v3893
      %3902 = vst [vmem:[%s805 + $0x30] sm:$0xff] %v3894
      %3903 = vst [vmem:[%s805 + $0x38] sm:$0xff] %v3895
      %p3904 = scmp.lt.s32.totalorder %s33, 1
      %s3905 = scalar_select %p3904, %s33, 1
      %s3906 = smul.addr %s3905, 8
      %s3907 = smul.addr %s3906, 8
      %s3908 = scalar_lea.vmem %s18, %s3907
      // Predicated region
      $region97: #{forward.2} parent=91 // pred_check
        %p3909 = pneg %p507
      $region98: #{forward.2} parent=91 // pred_check_branch
        %3911 = sbr.rel (%p3909) target = $region100
      $region99: #{forward.2} parent=91 // pred_region
        _
      $region100: #{forward.2} parent=91 // pred_fallthru
        _
    $region92: #{forward.2} parent=5 // pred_fallthru
      _
    %p3912 = scmp.le.s32.totalorder 2, %s24
    // Predicated region
    $region101: #{forward.2} parent=5 // pred_check
      %p3913 = pneg %p3912
    $region102: #{forward.2} parent=5 // pred_check_branch
      %3915 = sbr.rel (%p3913) target = $region104
    $region103: #{forward.2} parent=5 // pred_region
      %s3916 = ssub.s32 %s24, 2
      // Predicated region
      $region105: #{forward.2} parent=103 // pred_check
        %p3917 = pneg %p513
      $region106: #{forward.2} parent=103 // pred_check_branch
        %3919 = sbr.rel (%p3917) target = $region108
      $region107: #{forward.2} parent=103 // pred_region
        %p3920 = scmp.lt.s32.totalorder %s35, 1
        %s3921 = scalar_select %p3920, %s35, 1
        %s3922 = smul.addr %s3921, 8
        %s3923 = smul.addr %s3922, 8
        %s3924 = scalar_lea.vmem %s18, %s3923
      $region108: #{forward.2} parent=103 // pred_fallthru
        _
    $region104: #{forward.2} parent=5 // pred_fallthru
      _
  $region6: #{forward.2} parent=0 // loop_footer
    %s28 = sadd.s32 1, %s24
  $region7: #{forward.2} parent=0 // loop_footer_branch
    %23 = sbr.rel target = $region3
  $region8: #{forward.2} parent=0 // loop_exit
    _

</llo_original>
